<compile_context>
chip_gen: v5e
topology: v5e:2x2
jax: 0.10.0
libtpu: 0.0.40
codegen_flags: <defaults>
</compile_context>

<pallas_src>
import functools

import jax
import jax.numpy as jnp
from jax import lax
from jax.experimental import pallas as pl
from jax.experimental.pallas import tpu as pltpu


# ----------------------------------------------------------------------------
# Fused BasicBlock kernel (one image per grid step).
#   x_ref : (H+2, Cin, Wl+2)  f32   zero-padded input (pad=1 + lane padding)
#   w1_ref: (KW, Cout, KH*Cin)  bf16  conv1 weights with bn1 scale folded in
#   b1_ref: (Cout, 1)           f32   bn1 shift
#   w2_ref: (KW, Cout, KH*Cout) bf16  conv2 weights with bn2 scale folded in
#   b2_ref: (Cout, 1)           f32   bn2 shift
#   o_ref : (H, Cout, Wl)       f32   block output (Wl = round_up(W, 128))
#   y1_ref: (H+2, Cout, Wl+2)   bf16  VMEM scratch for conv1 output (padded)
# ----------------------------------------------------------------------------
def basic_block_kernel(x_ref, w1_ref, b1_ref, w2_ref, b2_ref, o_ref, y1_ref,
                       *, kh, kw, real_w, row_unroll):
    Hp, Cin, Wp = x_ref.shape
    H, Cout, Wl = o_ref.shape

    # hoisted loads (tiny)
    w1 = w1_ref[...]            # (kw, Cout, kh*Cin)   bf16
    w2 = w2_ref[...]            # (kw, Cout, kh*Cout)  bf16
    b1 = b1_ref[...]            # (Cout, 1)            f32
    b2 = b2_ref[...]

    # lane mask: zero columns >= real_w so the right padding of the scratch
    # buffer is exactly zero (conv2's "pad=1" right border).
    lane = lax.broadcasted_iota(jnp.int32, (Cout, Wl), 1)
    col_mask = (lane < real_w).astype(jnp.float32)

    # zero-init scratch: border rows/cols act as the zero padding for conv2.
    y1_ref[...] = jnp.zeros_like(y1_ref)

    # ---- conv1 -> bn1 -> relu  (into padded VMEM scratch) -------------------
    def conv1_row(h, carry):
        # (kh, Cin, Wp) -> (kh*Cin, Wp): K = kh*Cin for the MXU
        slab = x_ref[pl.ds(h, kh)].reshape(kh * Cin, Wp).astype(jnp.bfloat16)
        acc = jnp.zeros((Cout, Wl), jnp.float32)
        for dw in range(kw):
            acc += jnp.dot(w1[dw], slab[:, dw:dw + Wl],
                           preferred_element_type=jnp.float32)
        act = jnp.maximum(acc + b1, 0.0) * col_mask
        y1_ref[pl.ds(h + 1, 1), :, pl.ds(1, Wl)] = act[None].astype(y1_ref.dtype)
        return carry

    lax.fori_loop(0, H, conv1_row, 0, unroll=row_unroll)

    # ---- conv2 -> bn2 -> +identity -> relu  (into output block) -------------
    def conv2_row(h, carry):
        slab = y1_ref[pl.ds(h, kh)].reshape(kh * Cout, Wp)   # already bf16
        acc = jnp.zeros((Cout, Wl), jnp.float32)
        for dw in range(kw):
            acc += jnp.dot(w2[dw], slab[:, dw:dw + Wl],
                           preferred_element_type=jnp.float32)
        identity = x_ref[pl.ds(h + 1, 1), :, pl.ds(1, Wl)][0]   # (Cin, Wl) f32
        out = jnp.maximum(acc + b2 + identity, 0.0)
        o_ref[pl.ds(h, 1)] = out[None].astype(o_ref.dtype)
        return carry

    lax.fori_loop(0, H, conv2_row, 0, unroll=row_unroll)


# ----------------------------------------------------------------------------
# Param prep: fold eval-mode BatchNorm into the conv weights / a bias, and
# reshape weights to (KW, Cout, KH*Cin) so the kernel can use K = KH*Cin dots.
# ----------------------------------------------------------------------------
def _fold_bn_into_conv(w, bn, eps=1e-5):
    gamma, beta, mean, var = bn
    scale = gamma / jnp.sqrt(var + eps)                  # (Cout,)
    shift = beta - mean * scale                          # (Cout,)
    wf = w * scale[:, None, None, None]                  # (Cout, Cin, KH, KW)
    cout, cin, kh, kw = w.shape
    # wk[dw, co, dh*Cin + ci] = wf[co, ci, dh, dw]
    wk = jnp.transpose(wf, (3, 0, 2, 1)).reshape(kw, cout, kh * cin)
    return wk.astype(jnp.bfloat16), shift.reshape(cout, 1).astype(jnp.float32)


def basic_block_forward(x_nchw, params, eps=1e-5):
    """Inference-mode BasicBlock forward (stride=1, downsample=None)."""
    # TODO(synk): stride>1 / downsample branch and training-mode (batch-stat)
    # BatchNorm are not implemented; module defaults (stride=1, downsample=None,
    # eval-mode BN with running stats) are what is implemented here.
    N, Cin, H, W = x_nchw.shape
    Cout = params["conv1_w"].shape[0]
    assert Cin == Cout, "identity skip requires inplanes == planes"
    KH, KW = params["conv1_w"].shape[2:]

    w1, s1 = _fold_bn_into_conv(params["conv1_w"], params["bn1"], eps)
    w2, s2 = _fold_bn_into_conv(params["conv2_w"], params["bn2"], eps)

    Wl = ((W + 127) // 128) * 128          # lane-dense output width
    Wp, Hp = Wl + 2, H + 2

    # NCHW -> (N, H, C, W); zero-pad H/W by 1 (pad=1 conv) and round the lane
    # dim up to a multiple of 128.
    xk = jnp.transpose(x_nchw, (0, 2, 1, 3))
    xp = jnp.pad(xk, ((0, 0), (1, 1), (0, 0), (1, 1 + Wl - W)))

    kernel = functools.partial(
        basic_block_kernel, kh=KH, kw=KW, real_w=W, row_unroll=(H <= 64))

    out = pl.pallas_call(
        kernel,
        out_shape=jax.ShapeDtypeStruct((N, H, Cout, Wl), jnp.float32),
        grid_spec=pltpu.PrefetchScalarGridSpec(
            num_scalar_prefetch=0,
            grid=(N,),
            in_specs=[
                pl.BlockSpec((None, Hp, Cin, Wp), lambda n: (n, 0, 0, 0)),
                pl.BlockSpec((KW, Cout, KH * Cin), lambda n: (0, 0, 0)),
                pl.BlockSpec((Cout, 1), lambda n: (0, 0)),
                pl.BlockSpec((KW, Cout, KH * Cout), lambda n: (0, 0, 0)),
                pl.BlockSpec((Cout, 1), lambda n: (0, 0)),
            ],
            out_specs=pl.BlockSpec((None, H, Cout, Wl), lambda n: (n, 0, 0, 0)),
            scratch_shapes=[pltpu.VMEM((Hp, Cout, Wp), jnp.bfloat16)],
        ),
        compiler_params=pltpu.CompilerParams(
            dimension_semantics=("parallel",),           # batch items independent
            vmem_limit_bytes=32 * 1024 * 1024,           # v7x-safe (64 MiB/TC)
        ),
    )(xp, w1, s1, w2, s2)

    # crop the lane padding and return to NCHW
    return jnp.transpose(out[:, :, :, :W], (0, 2, 1, 3))


# ----------------------------------------------------------------------------
# Pure-JAX reference (eval-mode BN), used as a correctness check.
# ----------------------------------------------------------------------------
def _bn_eval(y, gamma, beta, mean, var, eps=1e-5):
    inv = gamma / jnp.sqrt(var + eps)
    return y * inv[None, :, None, None] + (beta - mean * inv)[None, :, None, None]


def reference_forward(x, params, eps=1e-5):
    dn = ("NCHW", "OIHW", "NCHW")
    out = lax.conv_general_dilated(x, params["conv1_w"], (1, 1),
                                   ((1, 1), (1, 1)), dimension_numbers=dn)
    out = jax.nn.relu(_bn_eval(out, *params["bn1"], eps=eps))
    out = lax.conv_general_dilated(out, params["conv2_w"], (1, 1),
                                   ((1, 1), (1, 1)), dimension_numbers=dn)
    out = _bn_eval(out, *params["bn2"], eps=eps) + x
    return jax.nn.relu(out)


if __name__ == "__main__":
    key = jax.random.PRNGKey(0)
    N, C, H, W = 2, 32, 16, 100          # small shapes; planes == inplanes == 32
    keys = jax.random.split(key, 6)

    x = jax.random.normal(keys[0], (N, C, H, W), jnp.float32)

    def conv_w(k, cout, cin):
        return jax.random.normal(k, (cout, cin, 3, 3), jnp.float32) * (2.0 / (cin * 9)) ** 0.5

    def bn_p(k, c):
        k1, k2, k3, k4 = jax.random.split(k, 4)
        gamma = 1.0 + 0.1 * jax.random.normal(k1, (c,), jnp.float32)
        beta = 0.1 * jax.random.normal(k2, (c,), jnp.float32)
        mean = 0.1 * jax.random.normal(k3, (c,), jnp.float32)
        var = jnp.abs(jax.random.normal(k4, (c,), jnp.float32)) + 0.5
        return gamma, beta, mean, var

    params = {
        "conv1_w": conv_w(keys[1], C, C),
        "bn1": bn_p(keys[2], C),
        "conv2_w": conv_w(keys[3], C, C),
        "bn2": bn_p(keys[4], C),
    }

    fwd = jax.jit(functools.partial(basic_block_forward, params=params))
    y = fwd(x)
    jax.block_until_ready(y)
    assert y.shape == (N, C, H, W), y.shape

    ref = jax.jit(functools.partial(reference_forward, params=params))(x)
    jax.block_until_ready(ref)
    err = float(jnp.max(jnp.abs(y - ref)))
    scale = float(jnp.max(jnp.abs(ref))) + 1e-6
    assert err / scale < 5e-2, (err, scale)   # bf16-MXU tolerance

    print("KERNEL_OK")
</pallas_src>

<mosaic_0001>
module attributes {stable_mosaic.version = 11 : i64} {
  func.func @basic_block_kernel(%arg0: i32, %arg1: memref<1x18x32x130xf32, #tpu.memory_space<vmem>>, %arg2: memref<3x32x96xbf16, #tpu.memory_space<vmem>>, %arg3: memref<32x1xf32, #tpu.memory_space<vmem>>, %arg4: memref<3x32x96xbf16, #tpu.memory_space<vmem>>, %arg5: memref<32x1xf32, #tpu.memory_space<vmem>>, %arg6: memref<1x16x32x128xf32, #tpu.memory_space<vmem>>, %arg7: memref<18x32x130xbf16, #tpu.memory_space<vmem>>) attributes {dimension_semantics = [#tpu.dimension_semantics<parallel>], iteration_bounds = array<i64: 2>, scalar_prefetch = 0 : i64, scratch_operands = 1 : i64, tpu.core_type = #tpu.core_type<tc>, window_params = [{transform_indices = @transform_0, window_bounds = array<i64: 1, 18, 32, 130>}, {pipeline_mode = #tpu.pipeline_mode<synchronous>, transform_indices = @transform_1, window_bounds = array<i64: 3, 32, 96>}, {pipeline_mode = #tpu.pipeline_mode<synchronous>, transform_indices = @transform_2, window_bounds = array<i64: 32, 1>}, {pipeline_mode = #tpu.pipeline_mode<synchronous>, transform_indices = @transform_3, window_bounds = array<i64: 3, 32, 96>}, {pipeline_mode = #tpu.pipeline_mode<synchronous>, transform_indices = @transform_4, window_bounds = array<i64: 32, 1>}, {transform_indices = @transform_5, window_bounds = array<i64: 1, 16, 32, 128>}]} {
    %c0 = arith.constant 0 : index
    %c0_0 = arith.constant 0 : index
    %c0_1 = arith.constant 0 : index
    %0 = vector.load %arg2[%c0, %c0_0, %c0_1] : memref<3x32x96xbf16, #tpu.memory_space<vmem>>, vector<3x32x96xbf16>
    %c0_2 = arith.constant 0 : index
    %c0_3 = arith.constant 0 : index
    %c0_4 = arith.constant 0 : index
    %1 = vector.load %arg4[%c0_2, %c0_3, %c0_4] : memref<3x32x96xbf16, #tpu.memory_space<vmem>>, vector<3x32x96xbf16>
    %c0_5 = arith.constant 0 : index
    %c0_6 = arith.constant 0 : index
    %2 = vector.load %arg3[%c0_5, %c0_6] : memref<32x1xf32, #tpu.memory_space<vmem>>, vector<32x1xf32>
    %c0_7 = arith.constant 0 : index
    %c0_8 = arith.constant 0 : index
    %3 = vector.load %arg5[%c0_7, %c0_8] : memref<32x1xf32, #tpu.memory_space<vmem>>, vector<32x1xf32>
    %4 = tpu.iota {dimensions = array<i32: 1>} : vector<32x128xi32>
    %c100_i32 = arith.constant 100 : i32
    %5 = vector.broadcast %c100_i32 : i32 to vector<32x128xi32>
    %6 = arith.cmpi slt, %4, %5 : vector<32x128xi32>
    %7 = arith.extui %6 : vector<32x128xi1> to vector<32x128xi32>
    %8 = arith.sitofp %7 : vector<32x128xi32> to vector<32x128xf32>
    %cst = arith.constant 0.000000e+00 : bf16
    %9 = vector.broadcast %cst : bf16 to vector<18x32x130xbf16>
    %c0_9 = arith.constant 0 : index
    %c0_10 = arith.constant 0 : index
    %c0_11 = arith.constant 0 : index
    %10 = vector.load %arg7[%c0_9, %c0_10, %c0_11] : memref<18x32x130xbf16, #tpu.memory_space<vmem>>, vector<18x32x130xbf16>
    tpu.vector_store %arg7[%c0_9, %c0_10, %c0_11], %9 {strides = array<i32>} : memref<18x32x130xbf16, #tpu.memory_space<vmem>>, vector<18x32x130xbf16>,
    %c0_i32 = arith.constant 0 : i32
    %c0_12 = arith.constant 0 : index
    %11 = arith.index_cast %c0_i32 : i32 to index
    %c0_13 = arith.constant 0 : index
    %c0_14 = arith.constant 0 : index
    %12 = vector.load %arg1[%c0_12, %11, %c0_13, %c0_14] : memref<1x18x32x130xf32, #tpu.memory_space<vmem>>, vector<1x3x32x130xf32>
    %13 = vector.shape_cast %12 : vector<1x3x32x130xf32> to vector<3x32x130xf32>
    %14 = vector.shape_cast %13 : vector<3x32x130xf32> to vector<96x130xf32>
    %15 = arith.truncf %14 : vector<96x130xf32> to vector<96x130xbf16>
    %cst_15 = arith.constant 0.000000e+00 : f32
    %16 = vector.broadcast %cst_15 : f32 to vector<32x128xf32>
    %17 = vector.extract_strided_slice %0 {offsets = [0, 0, 0], sizes = [1, 32, 96], strides = [1, 1, 1]} : vector<3x32x96xbf16> to vector<1x32x96xbf16>
    %18 = vector.shape_cast %17 : vector<1x32x96xbf16> to vector<32x96xbf16>
    %19 = vector.extract_strided_slice %15 {offsets = [0, 0], sizes = [96, 128], strides = [1, 1]} : vector<96x130xbf16> to vector<96x128xbf16>
    %cst_16 = arith.constant dense<0.000000e+00> : vector<32x128xf32>
    %20 = tpu.matmul %18, %19, %cst_16 {dimension_numbers = #tpu.dot_dimension_numbers<[1], [0], [0], [1], [0, 0, 1, 1], [], []>} : vector<32x96xbf16>, vector<96x128xbf16>, vector<32x128xf32> -> vector<32x128xf32>
    %21 = arith.addf %16, %20 : vector<32x128xf32>
    %22 = vector.extract_strided_slice %0 {offsets = [1, 0, 0], sizes = [1, 32, 96], strides = [1, 1, 1]} : vector<3x32x96xbf16> to vector<1x32x96xbf16>
    %23 = vector.shape_cast %22 : vector<1x32x96xbf16> to vector<32x96xbf16>
    %24 = vector.extract_strided_slice %15 {offsets = [0, 1], sizes = [96, 128], strides = [1, 1]} : vector<96x130xbf16> to vector<96x128xbf16>
    %cst_17 = arith.constant dense<0.000000e+00> : vector<32x128xf32>
    %25 = tpu.matmul %23, %24, %cst_17 {dimension_numbers = #tpu.dot_dimension_numbers<[1], [0], [0], [1], [0, 0, 1, 1], [], []>} : vector<32x96xbf16>, vector<96x128xbf16>, vector<32x128xf32> -> vector<32x128xf32>
    %26 = arith.addf %21, %25 : vector<32x128xf32>
    %27 = vector.extract_strided_slice %0 {offsets = [2, 0, 0], sizes = [1, 32, 96], strides = [1, 1, 1]} : vector<3x32x96xbf16> to vector<1x32x96xbf16>
    %28 = vector.shape_cast %27 : vector<1x32x96xbf16> to vector<32x96xbf16>
    %29 = vector.extract_strided_slice %15 {offsets = [0, 2], sizes = [96, 128], strides = [1, 1]} : vector<96x130xbf16> to vector<96x128xbf16>
    %cst_18 = arith.constant dense<0.000000e+00> : vector<32x128xf32>
    %30 = tpu.matmul %28, %29, %cst_18 {dimension_numbers = #tpu.dot_dimension_numbers<[1], [0], [0], [1], [0, 0, 1, 1], [], []>} : vector<32x96xbf16>, vector<96x128xbf16>, vector<32x128xf32> -> vector<32x128xf32>
    %31 = arith.addf %26, %30 : vector<32x128xf32>
    %32 = vector.broadcast %2 : vector<32x1xf32> to vector<32x128xf32>
    %33 = arith.addf %31, %32 : vector<32x128xf32>
    %cst_19 = arith.constant 0.000000e+00 : f32
    %34 = vector.broadcast %cst_19 : f32 to vector<32x128xf32>
    %35 = arith.maximumf %33, %34 : vector<32x128xf32>
    %36 = arith.mulf %35, %8 : vector<32x128xf32>
    %37 = vector.shape_cast %36 : vector<32x128xf32> to vector<1x32x128xf32>
    %38 = arith.truncf %37 : vector<1x32x128xf32> to vector<1x32x128xbf16>
    %c1_i32 = arith.constant 1 : i32
    %39 = arith.addi %c0_i32, %c1_i32 : i32
    %40 = arith.index_cast %39 : i32 to index
    %c0_20 = arith.constant 0 : index
    %c1 = arith.constant 1 : index
    %41 = vector.load %arg7[%40, %c0_20, %c1] : memref<18x32x130xbf16, #tpu.memory_space<vmem>>, vector<1x32x128xbf16>
    tpu.vector_store %arg7[%40, %c0_20, %c1], %38 {strides = array<i32>} : memref<18x32x130xbf16, #tpu.memory_space<vmem>>, vector<1x32x128xbf16>,
    %c1_i32_21 = arith.constant 1 : i32
    %c0_22 = arith.constant 0 : index
    %42 = arith.index_cast %c1_i32_21 : i32 to index
    %c0_23 = arith.constant 0 : index
    %c0_24 = arith.constant 0 : index
    %43 = vector.load %arg1[%c0_22, %42, %c0_23, %c0_24] : memref<1x18x32x130xf32, #tpu.memory_space<vmem>>, vector<1x3x32x130xf32>
    %44 = vector.shape_cast %43 : vector<1x3x32x130xf32> to vector<3x32x130xf32>
    %45 = vector.shape_cast %44 : vector<3x32x130xf32> to vector<96x130xf32>
    %46 = arith.truncf %45 : vector<96x130xf32> to vector<96x130xbf16>
    %cst_25 = arith.constant 0.000000e+00 : f32
    %47 = vector.broadcast %cst_25 : f32 to vector<32x128xf32>
    %48 = vector.extract_strided_slice %0 {offsets = [0, 0, 0], sizes = [1, 32, 96], strides = [1, 1, 1]} : vector<3x32x96xbf16> to vector<1x32x96xbf16>
    %49 = vector.shape_cast %48 : vector<1x32x96xbf16> to vector<32x96xbf16>
    %50 = vector.extract_strided_slice %46 {offsets = [0, 0], sizes = [96, 128], strides = [1, 1]} : vector<96x130xbf16> to vector<96x128xbf16>
    %cst_26 = arith.constant dense<0.000000e+00> : vector<32x128xf32>
    %51 = tpu.matmul %49, %50, %cst_26 {dimension_numbers = #tpu.dot_dimension_numbers<[1], [0], [0], [1], [0, 0, 1, 1], [], []>} : vector<32x96xbf16>, vector<96x128xbf16>, vector<32x128xf32> -> vector<32x128xf32>
    %52 = arith.addf %47, %51 : vector<32x128xf32>
    %53 = vector.extract_strided_slice %0 {offsets = [1, 0, 0], sizes = [1, 32, 96], strides = [1, 1, 1]} : vector<3x32x96xbf16> to vector<1x32x96xbf16>
    %54 = vector.shape_cast %53 : vector<1x32x96xbf16> to vector<32x96xbf16>
    %55 = vector.extract_strided_slice %46 {offsets = [0, 1], sizes = [96, 128], strides = [1, 1]} : vector<96x130xbf16> to vector<96x128xbf16>
    %cst_27 = arith.constant dense<0.000000e+00> : vector<32x128xf32>
    %56 = tpu.matmul %54, %55, %cst_27 {dimension_numbers = #tpu.dot_dimension_numbers<[1], [0], [0], [1], [0, 0, 1, 1], [], []>} : vector<32x96xbf16>, vector<96x128xbf16>, vector<32x128xf32> -> vector<32x128xf32>
    %57 = arith.addf %52, %56 : vector<32x128xf32>
    %58 = vector.extract_strided_slice %0 {offsets = [2, 0, 0], sizes = [1, 32, 96], strides = [1, 1, 1]} : vector<3x32x96xbf16> to vector<1x32x96xbf16>
    %59 = vector.shape_cast %58 : vector<1x32x96xbf16> to vector<32x96xbf16>
    %60 = vector.extract_strided_slice %46 {offsets = [0, 2], sizes = [96, 128], strides = [1, 1]} : vector<96x130xbf16> to vector<96x128xbf16>
    %cst_28 = arith.constant dense<0.000000e+00> : vector<32x128xf32>
    %61 = tpu.matmul %59, %60, %cst_28 {dimension_numbers = #tpu.dot_dimension_numbers<[1], [0], [0], [1], [0, 0, 1, 1], [], []>} : vector<32x96xbf16>, vector<96x128xbf16>, vector<32x128xf32> -> vector<32x128xf32>
    %62 = arith.addf %57, %61 : vector<32x128xf32>
    %63 = vector.broadcast %2 : vector<32x1xf32> to vector<32x128xf32>
    %64 = arith.addf %62, %63 : vector<32x128xf32>
    %cst_29 = arith.constant 0.000000e+00 : f32
    %65 = vector.broadcast %cst_29 : f32 to vector<32x128xf32>
    %66 = arith.maximumf %64, %65 : vector<32x128xf32>
    %67 = arith.mulf %66, %8 : vector<32x128xf32>
    %68 = vector.shape_cast %67 : vector<32x128xf32> to vector<1x32x128xf32>
    %69 = arith.truncf %68 : vector<1x32x128xf32> to vector<1x32x128xbf16>
    %c1_i32_30 = arith.constant 1 : i32
    %70 = arith.addi %c1_i32_21, %c1_i32_30 : i32
    %71 = arith.index_cast %70 : i32 to index
    %c0_31 = arith.constant 0 : index
    %c1_32 = arith.constant 1 : index
    %72 = vector.load %arg7[%71, %c0_31, %c1_32] : memref<18x32x130xbf16, #tpu.memory_space<vmem>>, vector<1x32x128xbf16>
    tpu.vector_store %arg7[%71, %c0_31, %c1_32], %69 {strides = array<i32>} : memref<18x32x130xbf16, #tpu.memory_space<vmem>>, vector<1x32x128xbf16>,
    %c2_i32 = arith.constant 2 : i32
    %c0_33 = arith.constant 0 : index
    %73 = arith.index_cast %c2_i32 : i32 to index
    %c0_34 = arith.constant 0 : index
    %c0_35 = arith.constant 0 : index
    %74 = vector.load %arg1[%c0_33, %73, %c0_34, %c0_35] : memref<1x18x32x130xf32, #tpu.memory_space<vmem>>, vector<1x3x32x130xf32>
    %75 = vector.shape_cast %74 : vector<1x3x32x130xf32> to vector<3x32x130xf32>
    %76 = vector.shape_cast %75 : vector<3x32x130xf32> to vector<96x130xf32>
    %77 = arith.truncf %76 : vector<96x130xf32> to vector<96x130xbf16>
    %cst_36 = arith.constant 0.000000e+00 : f32
    %78 = vector.broadcast %cst_36 : f32 to vector<32x128xf32>
    %79 = vector.extract_strided_slice %0 {offsets = [0, 0, 0], sizes = [1, 32, 96], strides = [1, 1, 1]} : vector<3x32x96xbf16> to vector<1x32x96xbf16>
    %80 = vector.shape_cast %79 : vector<1x32x96xbf16> to vector<32x96xbf16>
    %81 = vector.extract_strided_slice %77 {offsets = [0, 0], sizes = [96, 128], strides = [1, 1]} : vector<96x130xbf16> to vector<96x128xbf16>
    %cst_37 = arith.constant dense<0.000000e+00> : vector<32x128xf32>
    %82 = tpu.matmul %80, %81, %cst_37 {dimension_numbers = #tpu.dot_dimension_numbers<[1], [0], [0], [1], [0, 0, 1, 1], [], []>} : vector<32x96xbf16>, vector<96x128xbf16>, vector<32x128xf32> -> vector<32x128xf32>
    %83 = arith.addf %78, %82 : vector<32x128xf32>
    %84 = vector.extract_strided_slice %0 {offsets = [1, 0, 0], sizes = [1, 32, 96], strides = [1, 1, 1]} : vector<3x32x96xbf16> to vector<1x32x96xbf16>
    %85 = vector.shape_cast %84 : vector<1x32x96xbf16> to vector<32x96xbf16>
    %86 = vector.extract_strided_slice %77 {offsets = [0, 1], sizes = [96, 128], strides = [1, 1]} : vector<96x130xbf16> to vector<96x128xbf16>
    %cst_38 = arith.constant dense<0.000000e+00> : vector<32x128xf32>
    %87 = tpu.matmul %85, %86, %cst_38 {dimension_numbers = #tpu.dot_dimension_numbers<[1], [0], [0], [1], [0, 0, 1, 1], [], []>} : vector<32x96xbf16>, vector<96x128xbf16>, vector<32x128xf32> -> vector<32x128xf32>
    %88 = arith.addf %83, %87 : vector<32x128xf32>
    %89 = vector.extract_strided_slice %0 {offsets = [2, 0, 0], sizes = [1, 32, 96], strides = [1, 1, 1]} : vector<3x32x96xbf16> to vector<1x32x96xbf16>
    %90 = vector.shape_cast %89 : vector<1x32x96xbf16> to vector<32x96xbf16>
    %91 = vector.extract_strided_slice %77 {offsets = [0, 2], sizes = [96, 128], strides = [1, 1]} : vector<96x130xbf16> to vector<96x128xbf16>
    %cst_39 = arith.constant dense<0.000000e+00> : vector<32x128xf32>
    %92 = tpu.matmul %90, %91, %cst_39 {dimension_numbers = #tpu.dot_dimension_numbers<[1], [0], [0], [1], [0, 0, 1, 1], [], []>} : vector<32x96xbf16>, vector<96x128xbf16>, vector<32x128xf32> -> vector<32x128xf32>
    %93 = arith.addf %88, %92 : vector<32x128xf32>
    %94 = vector.broadcast %2 : vector<32x1xf32> to vector<32x128xf32>
    %95 = arith.addf %93, %94 : vector<32x128xf32>
    %cst_40 = arith.constant 0.000000e+00 : f32
    %96 = vector.broadcast %cst_40 : f32 to vector<32x128xf32>
    %97 = arith.maximumf %95, %96 : vector<32x128xf32>
    %98 = arith.mulf %97, %8 : vector<32x128xf32>
    %99 = vector.shape_cast %98 : vector<32x128xf32> to vector<1x32x128xf32>
    %100 = arith.truncf %99 : vector<1x32x128xf32> to vector<1x32x128xbf16>
    %c1_i32_41 = arith.constant 1 : i32
    %101 = arith.addi %c2_i32, %c1_i32_41 : i32
    %102 = arith.index_cast %101 : i32 to index
    %c0_42 = arith.constant 0 : index
    %c1_43 = arith.constant 1 : index
    %103 = vector.load %arg7[%102, %c0_42, %c1_43] : memref<18x32x130xbf16, #tpu.memory_space<vmem>>, vector<1x32x128xbf16>
    tpu.vector_store %arg7[%102, %c0_42, %c1_43], %100 {strides = array<i32>} : memref<18x32x130xbf16, #tpu.memory_space<vmem>>, vector<1x32x128xbf16>,
    %c3_i32 = arith.constant 3 : i32
    %c0_44 = arith.constant 0 : index
    %104 = arith.index_cast %c3_i32 : i32 to index
    %c0_45 = arith.constant 0 : index
    %c0_46 = arith.constant 0 : index
    %105 = vector.load %arg1[%c0_44, %104, %c0_45, %c0_46] : memref<1x18x32x130xf32, #tpu.memory_space<vmem>>, vector<1x3x32x130xf32>
    %106 = vector.shape_cast %105 : vector<1x3x32x130xf32> to vector<3x32x130xf32>
    %107 = vector.shape_cast %106 : vector<3x32x130xf32> to vector<96x130xf32>
    %108 = arith.truncf %107 : vector<96x130xf32> to vector<96x130xbf16>
    %cst_47 = arith.constant 0.000000e+00 : f32
    %109 = vector.broadcast %cst_47 : f32 to vector<32x128xf32>
    %110 = vector.extract_strided_slice %0 {offsets = [0, 0, 0], sizes = [1, 32, 96], strides = [1, 1, 1]} : vector<3x32x96xbf16> to vector<1x32x96xbf16>
    %111 = vector.shape_cast %110 : vector<1x32x96xbf16> to vector<32x96xbf16>
    %112 = vector.extract_strided_slice %108 {offsets = [0, 0], sizes = [96, 128], strides = [1, 1]} : vector<96x130xbf16> to vector<96x128xbf16>
    %cst_48 = arith.constant dense<0.000000e+00> : vector<32x128xf32>
    %113 = tpu.matmul %111, %112, %cst_48 {dimension_numbers = #tpu.dot_dimension_numbers<[1], [0], [0], [1], [0, 0, 1, 1], [], []>} : vector<32x96xbf16>, vector<96x128xbf16>, vector<32x128xf32> -> vector<32x128xf32>
    %114 = arith.addf %109, %113 : vector<32x128xf32>
    %115 = vector.extract_strided_slice %0 {offsets = [1, 0, 0], sizes = [1, 32, 96], strides = [1, 1, 1]} : vector<3x32x96xbf16> to vector<1x32x96xbf16>
    %116 = vector.shape_cast %115 : vector<1x32x96xbf16> to vector<32x96xbf16>
    %117 = vector.extract_strided_slice %108 {offsets = [0, 1], sizes = [96, 128], strides = [1, 1]} : vector<96x130xbf16> to vector<96x128xbf16>
    %cst_49 = arith.constant dense<0.000000e+00> : vector<32x128xf32>
    %118 = tpu.matmul %116, %117, %cst_49 {dimension_numbers = #tpu.dot_dimension_numbers<[1], [0], [0], [1], [0, 0, 1, 1], [], []>} : vector<32x96xbf16>, vector<96x128xbf16>, vector<32x128xf32> -> vector<32x128xf32>
    %119 = arith.addf %114, %118 : vector<32x128xf32>
    %120 = vector.extract_strided_slice %0 {offsets = [2, 0, 0], sizes = [1, 32, 96], strides = [1, 1, 1]} : vector<3x32x96xbf16> to vector<1x32x96xbf16>
    %121 = vector.shape_cast %120 : vector<1x32x96xbf16> to vector<32x96xbf16>
    %122 = vector.extract_strided_slice %108 {offsets = [0, 2], sizes = [96, 128], strides = [1, 1]} : vector<96x130xbf16> to vector<96x128xbf16>
    %cst_50 = arith.constant dense<0.000000e+00> : vector<32x128xf32>
    %123 = tpu.matmul %121, %122, %cst_50 {dimension_numbers = #tpu.dot_dimension_numbers<[1], [0], [0], [1], [0, 0, 1, 1], [], []>} : vector<32x96xbf16>, vector<96x128xbf16>, vector<32x128xf32> -> vector<32x128xf32>
    %124 = arith.addf %119, %123 : vector<32x128xf32>
    %125 = vector.broadcast %2 : vector<32x1xf32> to vector<32x128xf32>
    %126 = arith.addf %124, %125 : vector<32x128xf32>
    %cst_51 = arith.constant 0.000000e+00 : f32
    %127 = vector.broadcast %cst_51 : f32 to vector<32x128xf32>
    %128 = arith.maximumf %126, %127 : vector<32x128xf32>
    %129 = arith.mulf %128, %8 : vector<32x128xf32>
    %130 = vector.shape_cast %129 : vector<32x128xf32> to vector<1x32x128xf32>
    %131 = arith.truncf %130 : vector<1x32x128xf32> to vector<1x32x128xbf16>
    %c1_i32_52 = arith.constant 1 : i32
    %132 = arith.addi %c3_i32, %c1_i32_52 : i32
    %133 = arith.index_cast %132 : i32 to index
    %c0_53 = arith.constant 0 : index
    %c1_54 = arith.constant 1 : index
    %134 = vector.load %arg7[%133, %c0_53, %c1_54] : memref<18x32x130xbf16, #tpu.memory_space<vmem>>, vector<1x32x128xbf16>
    tpu.vector_store %arg7[%133, %c0_53, %c1_54], %131 {strides = array<i32>} : memref<18x32x130xbf16, #tpu.memory_space<vmem>>, vector<1x32x128xbf16>,
    %c4_i32 = arith.constant 4 : i32
    %c0_55 = arith.constant 0 : index
    %135 = arith.index_cast %c4_i32 : i32 to index
    %c0_56 = arith.constant 0 : index
    %c0_57 = arith.constant 0 : index
    %136 = vector.load %arg1[%c0_55, %135, %c0_56, %c0_57] : memref<1x18x32x130xf32, #tpu.memory_space<vmem>>, vector<1x3x32x130xf32>
    %137 = vector.shape_cast %136 : vector<1x3x32x130xf32> to vector<3x32x130xf32>
    %138 = vector.shape_cast %137 : vector<3x32x130xf32> to vector<96x130xf32>
    %139 = arith.truncf %138 : vector<96x130xf32> to vector<96x130xbf16>
    %cst_58 = arith.constant 0.000000e+00 : f32
    %140 = vector.broadcast %cst_58 : f32 to vector<32x128xf32>
    %141 = vector.extract_strided_slice %0 {offsets = [0, 0, 0], sizes = [1, 32, 96], strides = [1, 1, 1]} : vector<3x32x96xbf16> to vector<1x32x96xbf16>
    %142 = vector.shape_cast %141 : vector<1x32x96xbf16> to vector<32x96xbf16>
    %143 = vector.extract_strided_slice %139 {offsets = [0, 0], sizes = [96, 128], strides = [1, 1]} : vector<96x130xbf16> to vector<96x128xbf16>
    %cst_59 = arith.constant dense<0.000000e+00> : vector<32x128xf32>
    %144 = tpu.matmul %142, %143, %cst_59 {dimension_numbers = #tpu.dot_dimension_numbers<[1], [0], [0], [1], [0, 0, 1, 1], [], []>} : vector<32x96xbf16>, vector<96x128xbf16>, vector<32x128xf32> -> vector<32x128xf32>
    %145 = arith.addf %140, %144 : vector<32x128xf32>
    %146 = vector.extract_strided_slice %0 {offsets = [1, 0, 0], sizes = [1, 32, 96], strides = [1, 1, 1]} : vector<3x32x96xbf16> to vector<1x32x96xbf16>
    %147 = vector.shape_cast %146 : vector<1x32x96xbf16> to vector<32x96xbf16>
    %148 = vector.extract_strided_slice %139 {offsets = [0, 1], sizes = [96, 128], strides = [1, 1]} : vector<96x130xbf16> to vector<96x128xbf16>
    %cst_60 = arith.constant dense<0.000000e+00> : vector<32x128xf32>
    %149 = tpu.matmul %147, %148, %cst_60 {dimension_numbers = #tpu.dot_dimension_numbers<[1], [0], [0], [1], [0, 0, 1, 1], [], []>} : vector<32x96xbf16>, vector<96x128xbf16>, vector<32x128xf32> -> vector<32x128xf32>
    %150 = arith.addf %145, %149 : vector<32x128xf32>
    %151 = vector.extract_strided_slice %0 {offsets = [2, 0, 0], sizes = [1, 32, 96], strides = [1, 1, 1]} : vector<3x32x96xbf16> to vector<1x32x96xbf16>
    %152 = vector.shape_cast %151 : vector<1x32x96xbf16> to vector<32x96xbf16>
    %153 = vector.extract_strided_slice %139 {offsets = [0, 2], sizes = [96, 128], strides = [1, 1]} : vector<96x130xbf16> to vector<96x128xbf16>
    %cst_61 = arith.constant dense<0.000000e+00> : vector<32x128xf32>
    %154 = tpu.matmul %152, %153, %cst_61 {dimension_numbers = #tpu.dot_dimension_numbers<[1], [0], [0], [1], [0, 0, 1, 1], [], []>} : vector<32x96xbf16>, vector<96x128xbf16>, vector<32x128xf32> -> vector<32x128xf32>
    %155 = arith.addf %150, %154 : vector<32x128xf32>
    %156 = vector.broadcast %2 : vector<32x1xf32> to vector<32x128xf32>
    %157 = arith.addf %155, %156 : vector<32x128xf32>
    %cst_62 = arith.constant 0.000000e+00 : f32
    %158 = vector.broadcast %cst_62 : f32 to vector<32x128xf32>
    %159 = arith.maximumf %157, %158 : vector<32x128xf32>
    %160 = arith.mulf %159, %8 : vector<32x128xf32>
    %161 = vector.shape_cast %160 : vector<32x128xf32> to vector<1x32x128xf32>
    %162 = arith.truncf %161 : vector<1x32x128xf32> to vector<1x32x128xbf16>
    %c1_i32_63 = arith.constant 1 : i32
    %163 = arith.addi %c4_i32, %c1_i32_63 : i32
    %164 = arith.index_cast %163 : i32 to index
    %c0_64 = arith.constant 0 : index
    %c1_65 = arith.constant 1 : index
    %165 = vector.load %arg7[%164, %c0_64, %c1_65] : memref<18x32x130xbf16, #tpu.memory_space<vmem>>, vector<1x32x128xbf16>
    tpu.vector_store %arg7[%164, %c0_64, %c1_65], %162 {strides = array<i32>} : memref<18x32x130xbf16, #tpu.memory_space<vmem>>, vector<1x32x128xbf16>,
    %c5_i32 = arith.constant 5 : i32
    %c0_66 = arith.constant 0 : index
    %166 = arith.index_cast %c5_i32 : i32 to index
    %c0_67 = arith.constant 0 : index
    %c0_68 = arith.constant 0 : index
    %167 = vector.load %arg1[%c0_66, %166, %c0_67, %c0_68] : memref<1x18x32x130xf32, #tpu.memory_space<vmem>>, vector<1x3x32x130xf32>
    %168 = vector.shape_cast %167 : vector<1x3x32x130xf32> to vector<3x32x130xf32>
    %169 = vector.shape_cast %168 : vector<3x32x130xf32> to vector<96x130xf32>
    %170 = arith.truncf %169 : vector<96x130xf32> to vector<96x130xbf16>
    %cst_69 = arith.constant 0.000000e+00 : f32
    %171 = vector.broadcast %cst_69 : f32 to vector<32x128xf32>
    %172 = vector.extract_strided_slice %0 {offsets = [0, 0, 0], sizes = [1, 32, 96], strides = [1, 1, 1]} : vector<3x32x96xbf16> to vector<1x32x96xbf16>
    %173 = vector.shape_cast %172 : vector<1x32x96xbf16> to vector<32x96xbf16>
    %174 = vector.extract_strided_slice %170 {offsets = [0, 0], sizes = [96, 128], strides = [1, 1]} : vector<96x130xbf16> to vector<96x128xbf16>
    %cst_70 = arith.constant dense<0.000000e+00> : vector<32x128xf32>
    %175 = tpu.matmul %173, %174, %cst_70 {dimension_numbers = #tpu.dot_dimension_numbers<[1], [0], [0], [1], [0, 0, 1, 1], [], []>} : vector<32x96xbf16>, vector<96x128xbf16>, vector<32x128xf32> -> vector<32x128xf32>
    %176 = arith.addf %171, %175 : vector<32x128xf32>
    %177 = vector.extract_strided_slice %0 {offsets = [1, 0, 0], sizes = [1, 32, 96], strides = [1, 1, 1]} : vector<3x32x96xbf16> to vector<1x32x96xbf16>
    %178 = vector.shape_cast %177 : vector<1x32x96xbf16> to vector<32x96xbf16>
    %179 = vector.extract_strided_slice %170 {offsets = [0, 1], sizes = [96, 128], strides = [1, 1]} : vector<96x130xbf16> to vector<96x128xbf16>
    %cst_71 = arith.constant dense<0.000000e+00> : vector<32x128xf32>
    %180 = tpu.matmul %178, %179, %cst_71 {dimension_numbers = #tpu.dot_dimension_numbers<[1], [0], [0], [1], [0, 0, 1, 1], [], []>} : vector<32x96xbf16>, vector<96x128xbf16>, vector<32x128xf32> -> vector<32x128xf32>
    %181 = arith.addf %176, %180 : vector<32x128xf32>
    %182 = vector.extract_strided_slice %0 {offsets = [2, 0, 0], sizes = [1, 32, 96], strides = [1, 1, 1]} : vector<3x32x96xbf16> to vector<1x32x96xbf16>
    %183 = vector.shape_cast %182 : vector<1x32x96xbf16> to vector<32x96xbf16>
    %184 = vector.extract_strided_slice %170 {offsets = [0, 2], sizes = [96, 128], strides = [1, 1]} : vector<96x130xbf16> to vector<96x128xbf16>
    %cst_72 = arith.constant dense<0.000000e+00> : vector<32x128xf32>
    %185 = tpu.matmul %183, %184, %cst_72 {dimension_numbers = #tpu.dot_dimension_numbers<[1], [0], [0], [1], [0, 0, 1, 1], [], []>} : vector<32x96xbf16>, vector<96x128xbf16>, vector<32x128xf32> -> vector<32x128xf32>
    %186 = arith.addf %181, %185 : vector<32x128xf32>
    %187 = vector.broadcast %2 : vector<32x1xf32> to vector<32x128xf32>
    %188 = arith.addf %186, %187 : vector<32x128xf32>
    %cst_73 = arith.constant 0.000000e+00 : f32
    %189 = vector.broadcast %cst_73 : f32 to vector<32x128xf32>
    %190 = arith.maximumf %188, %189 : vector<32x128xf32>
    %191 = arith.mulf %190, %8 : vector<32x128xf32>
    %192 = vector.shape_cast %191 : vector<32x128xf32> to vector<1x32x128xf32>
    %193 = arith.truncf %192 : vector<1x32x128xf32> to vector<1x32x128xbf16>
    %c1_i32_74 = arith.constant 1 : i32
    %194 = arith.addi %c5_i32, %c1_i32_74 : i32
    %195 = arith.index_cast %194 : i32 to index
    %c0_75 = arith.constant 0 : index
    %c1_76 = arith.constant 1 : index
    %196 = vector.load %arg7[%195, %c0_75, %c1_76] : memref<18x32x130xbf16, #tpu.memory_space<vmem>>, vector<1x32x128xbf16>
    tpu.vector_store %arg7[%195, %c0_75, %c1_76], %193 {strides = array<i32>} : memref<18x32x130xbf16, #tpu.memory_space<vmem>>, vector<1x32x128xbf16>,
    %c6_i32 = arith.constant 6 : i32
    %c0_77 = arith.constant 0 : index
    %197 = arith.index_cast %c6_i32 : i32 to index
    %c0_78 = arith.constant 0 : index
    %c0_79 = arith.constant 0 : index
    %198 = vector.load %arg1[%c0_77, %197, %c0_78, %c0_79] : memref<1x18x32x130xf32, #tpu.memory_space<vmem>>, vector<1x3x32x130xf32>
    %199 = vector.shape_cast %198 : vector<1x3x32x130xf32> to vector<3x32x130xf32>
    %200 = vector.shape_cast %199 : vector<3x32x130xf32> to vector<96x130xf32>
    %201 = arith.truncf %200 : vector<96x130xf32> to vector<96x130xbf16>
    %cst_80 = arith.constant 0.000000e+00 : f32
    %202 = vector.broadcast %cst_80 : f32 to vector<32x128xf32>
    %203 = vector.extract_strided_slice %0 {offsets = [0, 0, 0], sizes = [1, 32, 96], strides = [1, 1, 1]} : vector<3x32x96xbf16> to vector<1x32x96xbf16>
    %204 = vector.shape_cast %203 : vector<1x32x96xbf16> to vector<32x96xbf16>
    %205 = vector.extract_strided_slice %201 {offsets = [0, 0], sizes = [96, 128], strides = [1, 1]} : vector<96x130xbf16> to vector<96x128xbf16>
    %cst_81 = arith.constant dense<0.000000e+00> : vector<32x128xf32>
    %206 = tpu.matmul %204, %205, %cst_81 {dimension_numbers = #tpu.dot_dimension_numbers<[1], [0], [0], [1], [0, 0, 1, 1], [], []>} : vector<32x96xbf16>, vector<96x128xbf16>, vector<32x128xf32> -> vector<32x128xf32>
    %207 = arith.addf %202, %206 : vector<32x128xf32>
    %208 = vector.extract_strided_slice %0 {offsets = [1, 0, 0], sizes = [1, 32, 96], strides = [1, 1, 1]} : vector<3x32x96xbf16> to vector<1x32x96xbf16>
    %209 = vector.shape_cast %208 : vector<1x32x96xbf16> to vector<32x96xbf16>
    %210 = vector.extract_strided_slice %201 {offsets = [0, 1], sizes = [96, 128], strides = [1, 1]} : vector<96x130xbf16> to vector<96x128xbf16>
    %cst_82 = arith.constant dense<0.000000e+00> : vector<32x128xf32>
    %211 = tpu.matmul %209, %210, %cst_82 {dimension_numbers = #tpu.dot_dimension_numbers<[1], [0], [0], [1], [0, 0, 1, 1], [], []>} : vector<32x96xbf16>, vector<96x128xbf16>, vector<32x128xf32> -> vector<32x128xf32>
    %212 = arith.addf %207, %211 : vector<32x128xf32>
    %213 = vector.extract_strided_slice %0 {offsets = [2, 0, 0], sizes = [1, 32, 96], strides = [1, 1, 1]} : vector<3x32x96xbf16> to vector<1x32x96xbf16>
    %214 = vector.shape_cast %213 : vector<1x32x96xbf16> to vector<32x96xbf16>
    %215 = vector.extract_strided_slice %201 {offsets = [0, 2], sizes = [96, 128], strides = [1, 1]} : vector<96x130xbf16> to vector<96x128xbf16>
    %cst_83 = arith.constant dense<0.000000e+00> : vector<32x128xf32>
    %216 = tpu.matmul %214, %215, %cst_83 {dimension_numbers = #tpu.dot_dimension_numbers<[1], [0], [0], [1], [0, 0, 1, 1], [], []>} : vector<32x96xbf16>, vector<96x128xbf16>, vector<32x128xf32> -> vector<32x128xf32>
    %217 = arith.addf %212, %216 : vector<32x128xf32>
    %218 = vector.broadcast %2 : vector<32x1xf32> to vector<32x128xf32>
    %219 = arith.addf %217, %218 : vector<32x128xf32>
    %cst_84 = arith.constant 0.000000e+00 : f32
    %220 = vector.broadcast %cst_84 : f32 to vector<32x128xf32>
    %221 = arith.maximumf %219, %220 : vector<32x128xf32>
    %222 = arith.mulf %221, %8 : vector<32x128xf32>
    %223 = vector.shape_cast %222 : vector<32x128xf32> to vector<1x32x128xf32>
    %224 = arith.truncf %223 : vector<1x32x128xf32> to vector<1x32x128xbf16>
    %c1_i32_85 = arith.constant 1 : i32
    %225 = arith.addi %c6_i32, %c1_i32_85 : i32
    %226 = arith.index_cast %225 : i32 to index
    %c0_86 = arith.constant 0 : index
    %c1_87 = arith.constant 1 : index
    %227 = vector.load %arg7[%226, %c0_86, %c1_87] : memref<18x32x130xbf16, #tpu.memory_space<vmem>>, vector<1x32x128xbf16>
    tpu.vector_store %arg7[%226, %c0_86, %c1_87], %224 {strides = array<i32>} : memref<18x32x130xbf16, #tpu.memory_space<vmem>>, vector<1x32x128xbf16>,
    %c7_i32 = arith.constant 7 : i32
    %c0_88 = arith.constant 0 : index
    %228 = arith.index_cast %c7_i32 : i32 to index
    %c0_89 = arith.constant 0 : index
    %c0_90 = arith.constant 0 : index
    %229 = vector.load %arg1[%c0_88, %228, %c0_89, %c0_90] : memref<1x18x32x130xf32, #tpu.memory_space<vmem>>, vector<1x3x32x130xf32>
    %230 = vector.shape_cast %229 : vector<1x3x32x130xf32> to vector<3x32x130xf32>
    %231 = vector.shape_cast %230 : vector<3x32x130xf32> to vector<96x130xf32>
    %232 = arith.truncf %231 : vector<96x130xf32> to vector<96x130xbf16>
    %cst_91 = arith.constant 0.000000e+00 : f32
    %233 = vector.broadcast %cst_91 : f32 to vector<32x128xf32>
    %234 = vector.extract_strided_slice %0 {offsets = [0, 0, 0], sizes = [1, 32, 96], strides = [1, 1, 1]} : vector<3x32x96xbf16> to vector<1x32x96xbf16>
    %235 = vector.shape_cast %234 : vector<1x32x96xbf16> to vector<32x96xbf16>
    %236 = vector.extract_strided_slice %232 {offsets = [0, 0], sizes = [96, 128], strides = [1, 1]} : vector<96x130xbf16> to vector<96x128xbf16>
    %cst_92 = arith.constant dense<0.000000e+00> : vector<32x128xf32>
    %237 = tpu.matmul %235, %236, %cst_92 {dimension_numbers = #tpu.dot_dimension_numbers<[1], [0], [0], [1], [0, 0, 1, 1], [], []>} : vector<32x96xbf16>, vector<96x128xbf16>, vector<32x128xf32> -> vector<32x128xf32>
    %238 = arith.addf %233, %237 : vector<32x128xf32>
    %239 = vector.extract_strided_slice %0 {offsets = [1, 0, 0], sizes = [1, 32, 96], strides = [1, 1, 1]} : vector<3x32x96xbf16> to vector<1x32x96xbf16>
    %240 = vector.shape_cast %239 : vector<1x32x96xbf16> to vector<32x96xbf16>
    %241 = vector.extract_strided_slice %232 {offsets = [0, 1], sizes = [96, 128], strides = [1, 1]} : vector<96x130xbf16> to vector<96x128xbf16>
    %cst_93 = arith.constant dense<0.000000e+00> : vector<32x128xf32>
    %242 = tpu.matmul %240, %241, %cst_93 {dimension_numbers = #tpu.dot_dimension_numbers<[1], [0], [0], [1], [0, 0, 1, 1], [], []>} : vector<32x96xbf16>, vector<96x128xbf16>, vector<32x128xf32> -> vector<32x128xf32>
    %243 = arith.addf %238, %242 : vector<32x128xf32>
    %244 = vector.extract_strided_slice %0 {offsets = [2, 0, 0], sizes = [1, 32, 96], strides = [1, 1, 1]} : vector<3x32x96xbf16> to vector<1x32x96xbf16>
    %245 = vector.shape_cast %244 : vector<1x32x96xbf16> to vector<32x96xbf16>
    %246 = vector.extract_strided_slice %232 {offsets = [0, 2], sizes = [96, 128], strides = [1, 1]} : vector<96x130xbf16> to vector<96x128xbf16>
    %cst_94 = arith.constant dense<0.000000e+00> : vector<32x128xf32>
    %247 = tpu.matmul %245, %246, %cst_94 {dimension_numbers = #tpu.dot_dimension_numbers<[1], [0], [0], [1], [0, 0, 1, 1], [], []>} : vector<32x96xbf16>, vector<96x128xbf16>, vector<32x128xf32> -> vector<32x128xf32>
    %248 = arith.addf %243, %247 : vector<32x128xf32>
    %249 = vector.broadcast %2 : vector<32x1xf32> to vector<32x128xf32>
    %250 = arith.addf %248, %249 : vector<32x128xf32>
    %cst_95 = arith.constant 0.000000e+00 : f32
    %251 = vector.broadcast %cst_95 : f32 to vector<32x128xf32>
    %252 = arith.maximumf %250, %251 : vector<32x128xf32>
    %253 = arith.mulf %252, %8 : vector<32x128xf32>
    %254 = vector.shape_cast %253 : vector<32x128xf32> to vector<1x32x128xf32>
    %255 = arith.truncf %254 : vector<1x32x128xf32> to vector<1x32x128xbf16>
    %c1_i32_96 = arith.constant 1 : i32
    %256 = arith.addi %c7_i32, %c1_i32_96 : i32
    %257 = arith.index_cast %256 : i32 to index
    %c0_97 = arith.constant 0 : index
    %c1_98 = arith.constant 1 : index
    %258 = vector.load %arg7[%257, %c0_97, %c1_98] : memref<18x32x130xbf16, #tpu.memory_space<vmem>>, vector<1x32x128xbf16>
    tpu.vector_store %arg7[%257, %c0_97, %c1_98], %255 {strides = array<i32>} : memref<18x32x130xbf16, #tpu.memory_space<vmem>>, vector<1x32x128xbf16>,
    %c8_i32 = arith.constant 8 : i32
    %c0_99 = arith.constant 0 : index
    %259 = arith.index_cast %c8_i32 : i32 to index
    %c0_100 = arith.constant 0 : index
    %c0_101 = arith.constant 0 : index
    %260 = vector.load %arg1[%c0_99, %259, %c0_100, %c0_101] : memref<1x18x32x130xf32, #tpu.memory_space<vmem>>, vector<1x3x32x130xf32>
    %261 = vector.shape_cast %260 : vector<1x3x32x130xf32> to vector<3x32x130xf32>
    %262 = vector.shape_cast %261 : vector<3x32x130xf32> to vector<96x130xf32>
    %263 = arith.truncf %262 : vector<96x130xf32> to vector<96x130xbf16>
    %cst_102 = arith.constant 0.000000e+00 : f32
    %264 = vector.broadcast %cst_102 : f32 to vector<32x128xf32>
    %265 = vector.extract_strided_slice %0 {offsets = [0, 0, 0], sizes = [1, 32, 96], strides = [1, 1, 1]} : vector<3x32x96xbf16> to vector<1x32x96xbf16>
    %266 = vector.shape_cast %265 : vector<1x32x96xbf16> to vector<32x96xbf16>
    %267 = vector.extract_strided_slice %263 {offsets = [0, 0], sizes = [96, 128], strides = [1, 1]} : vector<96x130xbf16> to vector<96x128xbf16>
    %cst_103 = arith.constant dense<0.000000e+00> : vector<32x128xf32>
    %268 = tpu.matmul %266, %267, %cst_103 {dimension_numbers = #tpu.dot_dimension_numbers<[1], [0], [0], [1], [0, 0, 1, 1], [], []>} : vector<32x96xbf16>, vector<96x128xbf16>, vector<32x128xf32> -> vector<32x128xf32>
    %269 = arith.addf %264, %268 : vector<32x128xf32>
    %270 = vector.extract_strided_slice %0 {offsets = [1, 0, 0], sizes = [1, 32, 96], strides = [1, 1, 1]} : vector<3x32x96xbf16> to vector<1x32x96xbf16>
    %271 = vector.shape_cast %270 : vector<1x32x96xbf16> to vector<32x96xbf16>
    %272 = vector.extract_strided_slice %263 {offsets = [0, 1], sizes = [96, 128], strides = [1, 1]} : vector<96x130xbf16> to vector<96x128xbf16>
    %cst_104 = arith.constant dense<0.000000e+00> : vector<32x128xf32>
    %273 = tpu.matmul %271, %272, %cst_104 {dimension_numbers = #tpu.dot_dimension_numbers<[1], [0], [0], [1], [0, 0, 1, 1], [], []>} : vector<32x96xbf16>, vector<96x128xbf16>, vector<32x128xf32> -> vector<32x128xf32>
    %274 = arith.addf %269, %273 : vector<32x128xf32>
    %275 = vector.extract_strided_slice %0 {offsets = [2, 0, 0], sizes = [1, 32, 96], strides = [1, 1, 1]} : vector<3x32x96xbf16> to vector<1x32x96xbf16>
    %276 = vector.shape_cast %275 : vector<1x32x96xbf16> to vector<32x96xbf16>
    %277 = vector.extract_strided_slice %263 {offsets = [0, 2], sizes = [96, 128], strides = [1, 1]} : vector<96x130xbf16> to vector<96x128xbf16>
    %cst_105 = arith.constant dense<0.000000e+00> : vector<32x128xf32>
    %278 = tpu.matmul %276, %277, %cst_105 {dimension_numbers = #tpu.dot_dimension_numbers<[1], [0], [0], [1], [0, 0, 1, 1], [], []>} : vector<32x96xbf16>, vector<96x128xbf16>, vector<32x128xf32> -> vector<32x128xf32>
    %279 = arith.addf %274, %278 : vector<32x128xf32>
    %280 = vector.broadcast %2 : vector<32x1xf32> to vector<32x128xf32>
    %281 = arith.addf %279, %280 : vector<32x128xf32>
    %cst_106 = arith.constant 0.000000e+00 : f32
    %282 = vector.broadcast %cst_106 : f32 to vector<32x128xf32>
    %283 = arith.maximumf %281, %282 : vector<32x128xf32>
    %284 = arith.mulf %283, %8 : vector<32x128xf32>
    %285 = vector.shape_cast %284 : vector<32x128xf32> to vector<1x32x128xf32>
    %286 = arith.truncf %285 : vector<1x32x128xf32> to vector<1x32x128xbf16>
    %c1_i32_107 = arith.constant 1 : i32
    %287 = arith.addi %c8_i32, %c1_i32_107 : i32
    %288 = arith.index_cast %287 : i32 to index
    %c0_108 = arith.constant 0 : index
    %c1_109 = arith.constant 1 : index
    %289 = vector.load %arg7[%288, %c0_108, %c1_109] : memref<18x32x130xbf16, #tpu.memory_space<vmem>>, vector<1x32x128xbf16>
    tpu.vector_store %arg7[%288, %c0_108, %c1_109], %286 {strides = array<i32>} : memref<18x32x130xbf16, #tpu.memory_space<vmem>>, vector<1x32x128xbf16>,
    %c9_i32 = arith.constant 9 : i32
    %c0_110 = arith.constant 0 : index
    %290 = arith.index_cast %c9_i32 : i32 to index
    %c0_111 = arith.constant 0 : index
    %c0_112 = arith.constant 0 : index
    %291 = vector.load %arg1[%c0_110, %290, %c0_111, %c0_112] : memref<1x18x32x130xf32, #tpu.memory_space<vmem>>, vector<1x3x32x130xf32>
    %292 = vector.shape_cast %291 : vector<1x3x32x130xf32> to vector<3x32x130xf32>
    %293 = vector.shape_cast %292 : vector<3x32x130xf32> to vector<96x130xf32>
    %294 = arith.truncf %293 : vector<96x130xf32> to vector<96x130xbf16>
    %cst_113 = arith.constant 0.000000e+00 : f32
    %295 = vector.broadcast %cst_113 : f32 to vector<32x128xf32>
    %296 = vector.extract_strided_slice %0 {offsets = [0, 0, 0], sizes = [1, 32, 96], strides = [1, 1, 1]} : vector<3x32x96xbf16> to vector<1x32x96xbf16>
    %297 = vector.shape_cast %296 : vector<1x32x96xbf16> to vector<32x96xbf16>
    %298 = vector.extract_strided_slice %294 {offsets = [0, 0], sizes = [96, 128], strides = [1, 1]} : vector<96x130xbf16> to vector<96x128xbf16>
    %cst_114 = arith.constant dense<0.000000e+00> : vector<32x128xf32>
    %299 = tpu.matmul %297, %298, %cst_114 {dimension_numbers = #tpu.dot_dimension_numbers<[1], [0], [0], [1], [0, 0, 1, 1], [], []>} : vector<32x96xbf16>, vector<96x128xbf16>, vector<32x128xf32> -> vector<32x128xf32>
    %300 = arith.addf %295, %299 : vector<32x128xf32>
    %301 = vector.extract_strided_slice %0 {offsets = [1, 0, 0], sizes = [1, 32, 96], strides = [1, 1, 1]} : vector<3x32x96xbf16> to vector<1x32x96xbf16>
    %302 = vector.shape_cast %301 : vector<1x32x96xbf16> to vector<32x96xbf16>
    %303 = vector.extract_strided_slice %294 {offsets = [0, 1], sizes = [96, 128], strides = [1, 1]} : vector<96x130xbf16> to vector<96x128xbf16>
    %cst_115 = arith.constant dense<0.000000e+00> : vector<32x128xf32>
    %304 = tpu.matmul %302, %303, %cst_115 {dimension_numbers = #tpu.dot_dimension_numbers<[1], [0], [0], [1], [0, 0, 1, 1], [], []>} : vector<32x96xbf16>, vector<96x128xbf16>, vector<32x128xf32> -> vector<32x128xf32>
    %305 = arith.addf %300, %304 : vector<32x128xf32>
    %306 = vector.extract_strided_slice %0 {offsets = [2, 0, 0], sizes = [1, 32, 96], strides = [1, 1, 1]} : vector<3x32x96xbf16> to vector<1x32x96xbf16>
    %307 = vector.shape_cast %306 : vector<1x32x96xbf16> to vector<32x96xbf16>
    %308 = vector.extract_strided_slice %294 {offsets = [0, 2], sizes = [96, 128], strides = [1, 1]} : vector<96x130xbf16> to vector<96x128xbf16>
    %cst_116 = arith.constant dense<0.000000e+00> : vector<32x128xf32>
    %309 = tpu.matmul %307, %308, %cst_116 {dimension_numbers = #tpu.dot_dimension_numbers<[1], [0], [0], [1], [0, 0, 1, 1], [], []>} : vector<32x96xbf16>, vector<96x128xbf16>, vector<32x128xf32> -> vector<32x128xf32>
    %310 = arith.addf %305, %309 : vector<32x128xf32>
    %311 = vector.broadcast %2 : vector<32x1xf32> to vector<32x128xf32>
    %312 = arith.addf %310, %311 : vector<32x128xf32>
    %cst_117 = arith.constant 0.000000e+00 : f32
    %313 = vector.broadcast %cst_117 : f32 to vector<32x128xf32>
    %314 = arith.maximumf %312, %313 : vector<32x128xf32>
    %315 = arith.mulf %314, %8 : vector<32x128xf32>
    %316 = vector.shape_cast %315 : vector<32x128xf32> to vector<1x32x128xf32>
    %317 = arith.truncf %316 : vector<1x32x128xf32> to vector<1x32x128xbf16>
    %c1_i32_118 = arith.constant 1 : i32
    %318 = arith.addi %c9_i32, %c1_i32_118 : i32
    %319 = arith.index_cast %318 : i32 to index
    %c0_119 = arith.constant 0 : index
    %c1_120 = arith.constant 1 : index
    %320 = vector.load %arg7[%319, %c0_119, %c1_120] : memref<18x32x130xbf16, #tpu.memory_space<vmem>>, vector<1x32x128xbf16>
    tpu.vector_store %arg7[%319, %c0_119, %c1_120], %317 {strides = array<i32>} : memref<18x32x130xbf16, #tpu.memory_space<vmem>>, vector<1x32x128xbf16>,
    %c10_i32 = arith.constant 10 : i32
    %c0_121 = arith.constant 0 : index
    %321 = arith.index_cast %c10_i32 : i32 to index
    %c0_122 = arith.constant 0 : index
    %c0_123 = arith.constant 0 : index
    %322 = vector.load %arg1[%c0_121, %321, %c0_122, %c0_123] : memref<1x18x32x130xf32, #tpu.memory_space<vmem>>, vector<1x3x32x130xf32>
    %323 = vector.shape_cast %322 : vector<1x3x32x130xf32> to vector<3x32x130xf32>
    %324 = vector.shape_cast %323 : vector<3x32x130xf32> to vector<96x130xf32>
    %325 = arith.truncf %324 : vector<96x130xf32> to vector<96x130xbf16>
    %cst_124 = arith.constant 0.000000e+00 : f32
    %326 = vector.broadcast %cst_124 : f32 to vector<32x128xf32>
    %327 = vector.extract_strided_slice %0 {offsets = [0, 0, 0], sizes = [1, 32, 96], strides = [1, 1, 1]} : vector<3x32x96xbf16> to vector<1x32x96xbf16>
    %328 = vector.shape_cast %327 : vector<1x32x96xbf16> to vector<32x96xbf16>
    %329 = vector.extract_strided_slice %325 {offsets = [0, 0], sizes = [96, 128], strides = [1, 1]} : vector<96x130xbf16> to vector<96x128xbf16>
    %cst_125 = arith.constant dense<0.000000e+00> : vector<32x128xf32>
    %330 = tpu.matmul %328, %329, %cst_125 {dimension_numbers = #tpu.dot_dimension_numbers<[1], [0], [0], [1], [0, 0, 1, 1], [], []>} : vector<32x96xbf16>, vector<96x128xbf16>, vector<32x128xf32> -> vector<32x128xf32>
    %331 = arith.addf %326, %330 : vector<32x128xf32>
    %332 = vector.extract_strided_slice %0 {offsets = [1, 0, 0], sizes = [1, 32, 96], strides = [1, 1, 1]} : vector<3x32x96xbf16> to vector<1x32x96xbf16>
    %333 = vector.shape_cast %332 : vector<1x32x96xbf16> to vector<32x96xbf16>
    %334 = vector.extract_strided_slice %325 {offsets = [0, 1], sizes = [96, 128], strides = [1, 1]} : vector<96x130xbf16> to vector<96x128xbf16>
    %cst_126 = arith.constant dense<0.000000e+00> : vector<32x128xf32>
    %335 = tpu.matmul %333, %334, %cst_126 {dimension_numbers = #tpu.dot_dimension_numbers<[1], [0], [0], [1], [0, 0, 1, 1], [], []>} : vector<32x96xbf16>, vector<96x128xbf16>, vector<32x128xf32> -> vector<32x128xf32>
    %336 = arith.addf %331, %335 : vector<32x128xf32>
    %337 = vector.extract_strided_slice %0 {offsets = [2, 0, 0], sizes = [1, 32, 96], strides = [1, 1, 1]} : vector<3x32x96xbf16> to vector<1x32x96xbf16>
    %338 = vector.shape_cast %337 : vector<1x32x96xbf16> to vector<32x96xbf16>
    %339 = vector.extract_strided_slice %325 {offsets = [0, 2], sizes = [96, 128], strides = [1, 1]} : vector<96x130xbf16> to vector<96x128xbf16>
    %cst_127 = arith.constant dense<0.000000e+00> : vector<32x128xf32>
    %340 = tpu.matmul %338, %339, %cst_127 {dimension_numbers = #tpu.dot_dimension_numbers<[1], [0], [0], [1], [0, 0, 1, 1], [], []>} : vector<32x96xbf16>, vector<96x128xbf16>, vector<32x128xf32> -> vector<32x128xf32>
    %341 = arith.addf %336, %340 : vector<32x128xf32>
    %342 = vector.broadcast %2 : vector<32x1xf32> to vector<32x128xf32>
    %343 = arith.addf %341, %342 : vector<32x128xf32>
    %cst_128 = arith.constant 0.000000e+00 : f32
    %344 = vector.broadcast %cst_128 : f32 to vector<32x128xf32>
    %345 = arith.maximumf %343, %344 : vector<32x128xf32>
    %346 = arith.mulf %345, %8 : vector<32x128xf32>
    %347 = vector.shape_cast %346 : vector<32x128xf32> to vector<1x32x128xf32>
    %348 = arith.truncf %347 : vector<1x32x128xf32> to vector<1x32x128xbf16>
    %c1_i32_129 = arith.constant 1 : i32
    %349 = arith.addi %c10_i32, %c1_i32_129 : i32
    %350 = arith.index_cast %349 : i32 to index
    %c0_130 = arith.constant 0 : index
    %c1_131 = arith.constant 1 : index
    %351 = vector.load %arg7[%350, %c0_130, %c1_131] : memref<18x32x130xbf16, #tpu.memory_space<vmem>>, vector<1x32x128xbf16>
    tpu.vector_store %arg7[%350, %c0_130, %c1_131], %348 {strides = array<i32>} : memref<18x32x130xbf16, #tpu.memory_space<vmem>>, vector<1x32x128xbf16>,
    %c11_i32 = arith.constant 11 : i32
    %c0_132 = arith.constant 0 : index
    %352 = arith.index_cast %c11_i32 : i32 to index
    %c0_133 = arith.constant 0 : index
    %c0_134 = arith.constant 0 : index
    %353 = vector.load %arg1[%c0_132, %352, %c0_133, %c0_134] : memref<1x18x32x130xf32, #tpu.memory_space<vmem>>, vector<1x3x32x130xf32>
    %354 = vector.shape_cast %353 : vector<1x3x32x130xf32> to vector<3x32x130xf32>
    %355 = vector.shape_cast %354 : vector<3x32x130xf32> to vector<96x130xf32>
    %356 = arith.truncf %355 : vector<96x130xf32> to vector<96x130xbf16>
    %cst_135 = arith.constant 0.000000e+00 : f32
    %357 = vector.broadcast %cst_135 : f32 to vector<32x128xf32>
    %358 = vector.extract_strided_slice %0 {offsets = [0, 0, 0], sizes = [1, 32, 96], strides = [1, 1, 1]} : vector<3x32x96xbf16> to vector<1x32x96xbf16>
    %359 = vector.shape_cast %358 : vector<1x32x96xbf16> to vector<32x96xbf16>
    %360 = vector.extract_strided_slice %356 {offsets = [0, 0], sizes = [96, 128], strides = [1, 1]} : vector<96x130xbf16> to vector<96x128xbf16>
    %cst_136 = arith.constant dense<0.000000e+00> : vector<32x128xf32>
    %361 = tpu.matmul %359, %360, %cst_136 {dimension_numbers = #tpu.dot_dimension_numbers<[1], [0], [0], [1], [0, 0, 1, 1], [], []>} : vector<32x96xbf16>, vector<96x128xbf16>, vector<32x128xf32> -> vector<32x128xf32>
    %362 = arith.addf %357, %361 : vector<32x128xf32>
    %363 = vector.extract_strided_slice %0 {offsets = [1, 0, 0], sizes = [1, 32, 96], strides = [1, 1, 1]} : vector<3x32x96xbf16> to vector<1x32x96xbf16>
    %364 = vector.shape_cast %363 : vector<1x32x96xbf16> to vector<32x96xbf16>
    %365 = vector.extract_strided_slice %356 {offsets = [0, 1], sizes = [96, 128], strides = [1, 1]} : vector<96x130xbf16> to vector<96x128xbf16>
    %cst_137 = arith.constant dense<0.000000e+00> : vector<32x128xf32>
    %366 = tpu.matmul %364, %365, %cst_137 {dimension_numbers = #tpu.dot_dimension_numbers<[1], [0], [0], [1], [0, 0, 1, 1], [], []>} : vector<32x96xbf16>, vector<96x128xbf16>, vector<32x128xf32> -> vector<32x128xf32>
    %367 = arith.addf %362, %366 : vector<32x128xf32>
    %368 = vector.extract_strided_slice %0 {offsets = [2, 0, 0], sizes = [1, 32, 96], strides = [1, 1, 1]} : vector<3x32x96xbf16> to vector<1x32x96xbf16>
    %369 = vector.shape_cast %368 : vector<1x32x96xbf16> to vector<32x96xbf16>
    %370 = vector.extract_strided_slice %356 {offsets = [0, 2], sizes = [96, 128], strides = [1, 1]} : vector<96x130xbf16> to vector<96x128xbf16>
    %cst_138 = arith.constant dense<0.000000e+00> : vector<32x128xf32>
    %371 = tpu.matmul %369, %370, %cst_138 {dimension_numbers = #tpu.dot_dimension_numbers<[1], [0], [0], [1], [0, 0, 1, 1], [], []>} : vector<32x96xbf16>, vector<96x128xbf16>, vector<32x128xf32> -> vector<32x128xf32>
    %372 = arith.addf %367, %371 : vector<32x128xf32>
    %373 = vector.broadcast %2 : vector<32x1xf32> to vector<32x128xf32>
    %374 = arith.addf %372, %373 : vector<32x128xf32>
    %cst_139 = arith.constant 0.000000e+00 : f32
    %375 = vector.broadcast %cst_139 : f32 to vector<32x128xf32>
    %376 = arith.maximumf %374, %375 : vector<32x128xf32>
    %377 = arith.mulf %376, %8 : vector<32x128xf32>
    %378 = vector.shape_cast %377 : vector<32x128xf32> to vector<1x32x128xf32>
    %379 = arith.truncf %378 : vector<1x32x128xf32> to vector<1x32x128xbf16>
    %c1_i32_140 = arith.constant 1 : i32
    %380 = arith.addi %c11_i32, %c1_i32_140 : i32
    %381 = arith.index_cast %380 : i32 to index
    %c0_141 = arith.constant 0 : index
    %c1_142 = arith.constant 1 : index
    %382 = vector.load %arg7[%381, %c0_141, %c1_142] : memref<18x32x130xbf16, #tpu.memory_space<vmem>>, vector<1x32x128xbf16>
    tpu.vector_store %arg7[%381, %c0_141, %c1_142], %379 {strides = array<i32>} : memref<18x32x130xbf16, #tpu.memory_space<vmem>>, vector<1x32x128xbf16>,
    %c12_i32 = arith.constant 12 : i32
    %c0_143 = arith.constant 0 : index
    %383 = arith.index_cast %c12_i32 : i32 to index
    %c0_144 = arith.constant 0 : index
    %c0_145 = arith.constant 0 : index
    %384 = vector.load %arg1[%c0_143, %383, %c0_144, %c0_145] : memref<1x18x32x130xf32, #tpu.memory_space<vmem>>, vector<1x3x32x130xf32>
    %385 = vector.shape_cast %384 : vector<1x3x32x130xf32> to vector<3x32x130xf32>
    %386 = vector.shape_cast %385 : vector<3x32x130xf32> to vector<96x130xf32>
    %387 = arith.truncf %386 : vector<96x130xf32> to vector<96x130xbf16>
    %cst_146 = arith.constant 0.000000e+00 : f32
    %388 = vector.broadcast %cst_146 : f32 to vector<32x128xf32>
    %389 = vector.extract_strided_slice %0 {offsets = [0, 0, 0], sizes = [1, 32, 96], strides = [1, 1, 1]} : vector<3x32x96xbf16> to vector<1x32x96xbf16>
    %390 = vector.shape_cast %389 : vector<1x32x96xbf16> to vector<32x96xbf16>
    %391 = vector.extract_strided_slice %387 {offsets = [0, 0], sizes = [96, 128], strides = [1, 1]} : vector<96x130xbf16> to vector<96x128xbf16>
    %cst_147 = arith.constant dense<0.000000e+00> : vector<32x128xf32>
    %392 = tpu.matmul %390, %391, %cst_147 {dimension_numbers = #tpu.dot_dimension_numbers<[1], [0], [0], [1], [0, 0, 1, 1], [], []>} : vector<32x96xbf16>, vector<96x128xbf16>, vector<32x128xf32> -> vector<32x128xf32>
    %393 = arith.addf %388, %392 : vector<32x128xf32>
    %394 = vector.extract_strided_slice %0 {offsets = [1, 0, 0], sizes = [1, 32, 96], strides = [1, 1, 1]} : vector<3x32x96xbf16> to vector<1x32x96xbf16>
    %395 = vector.shape_cast %394 : vector<1x32x96xbf16> to vector<32x96xbf16>
    %396 = vector.extract_strided_slice %387 {offsets = [0, 1], sizes = [96, 128], strides = [1, 1]} : vector<96x130xbf16> to vector<96x128xbf16>
    %cst_148 = arith.constant dense<0.000000e+00> : vector<32x128xf32>
    %397 = tpu.matmul %395, %396, %cst_148 {dimension_numbers = #tpu.dot_dimension_numbers<[1], [0], [0], [1], [0, 0, 1, 1], [], []>} : vector<32x96xbf16>, vector<96x128xbf16>, vector<32x128xf32> -> vector<32x128xf32>
    %398 = arith.addf %393, %397 : vector<32x128xf32>
    %399 = vector.extract_strided_slice %0 {offsets = [2, 0, 0], sizes = [1, 32, 96], strides = [1, 1, 1]} : vector<3x32x96xbf16> to vector<1x32x96xbf16>
    %400 = vector.shape_cast %399 : vector<1x32x96xbf16> to vector<32x96xbf16>
    %401 = vector.extract_strided_slice %387 {offsets = [0, 2], sizes = [96, 128], strides = [1, 1]} : vector<96x130xbf16> to vector<96x128xbf16>
    %cst_149 = arith.constant dense<0.000000e+00> : vector<32x128xf32>
    %402 = tpu.matmul %400, %401, %cst_149 {dimension_numbers = #tpu.dot_dimension_numbers<[1], [0], [0], [1], [0, 0, 1, 1], [], []>} : vector<32x96xbf16>, vector<96x128xbf16>, vector<32x128xf32> -> vector<32x128xf32>
    %403 = arith.addf %398, %402 : vector<32x128xf32>
    %404 = vector.broadcast %2 : vector<32x1xf32> to vector<32x128xf32>
    %405 = arith.addf %403, %404 : vector<32x128xf32>
    %cst_150 = arith.constant 0.000000e+00 : f32
    %406 = vector.broadcast %cst_150 : f32 to vector<32x128xf32>
    %407 = arith.maximumf %405, %406 : vector<32x128xf32>
    %408 = arith.mulf %407, %8 : vector<32x128xf32>
    %409 = vector.shape_cast %408 : vector<32x128xf32> to vector<1x32x128xf32>
    %410 = arith.truncf %409 : vector<1x32x128xf32> to vector<1x32x128xbf16>
    %c1_i32_151 = arith.constant 1 : i32
    %411 = arith.addi %c12_i32, %c1_i32_151 : i32
    %412 = arith.index_cast %411 : i32 to index
    %c0_152 = arith.constant 0 : index
    %c1_153 = arith.constant 1 : index
    %413 = vector.load %arg7[%412, %c0_152, %c1_153] : memref<18x32x130xbf16, #tpu.memory_space<vmem>>, vector<1x32x128xbf16>
    tpu.vector_store %arg7[%412, %c0_152, %c1_153], %410 {strides = array<i32>} : memref<18x32x130xbf16, #tpu.memory_space<vmem>>, vector<1x32x128xbf16>,
    %c13_i32 = arith.constant 13 : i32
    %c0_154 = arith.constant 0 : index
    %414 = arith.index_cast %c13_i32 : i32 to index
    %c0_155 = arith.constant 0 : index
    %c0_156 = arith.constant 0 : index
    %415 = vector.load %arg1[%c0_154, %414, %c0_155, %c0_156] : memref<1x18x32x130xf32, #tpu.memory_space<vmem>>, vector<1x3x32x130xf32>
    %416 = vector.shape_cast %415 : vector<1x3x32x130xf32> to vector<3x32x130xf32>
    %417 = vector.shape_cast %416 : vector<3x32x130xf32> to vector<96x130xf32>
    %418 = arith.truncf %417 : vector<96x130xf32> to vector<96x130xbf16>
    %cst_157 = arith.constant 0.000000e+00 : f32
    %419 = vector.broadcast %cst_157 : f32 to vector<32x128xf32>
    %420 = vector.extract_strided_slice %0 {offsets = [0, 0, 0], sizes = [1, 32, 96], strides = [1, 1, 1]} : vector<3x32x96xbf16> to vector<1x32x96xbf16>
    %421 = vector.shape_cast %420 : vector<1x32x96xbf16> to vector<32x96xbf16>
    %422 = vector.extract_strided_slice %418 {offsets = [0, 0], sizes = [96, 128], strides = [1, 1]} : vector<96x130xbf16> to vector<96x128xbf16>
    %cst_158 = arith.constant dense<0.000000e+00> : vector<32x128xf32>
    %423 = tpu.matmul %421, %422, %cst_158 {dimension_numbers = #tpu.dot_dimension_numbers<[1], [0], [0], [1], [0, 0, 1, 1], [], []>} : vector<32x96xbf16>, vector<96x128xbf16>, vector<32x128xf32> -> vector<32x128xf32>
    %424 = arith.addf %419, %423 : vector<32x128xf32>
    %425 = vector.extract_strided_slice %0 {offsets = [1, 0, 0], sizes = [1, 32, 96], strides = [1, 1, 1]} : vector<3x32x96xbf16> to vector<1x32x96xbf16>
    %426 = vector.shape_cast %425 : vector<1x32x96xbf16> to vector<32x96xbf16>
    %427 = vector.extract_strided_slice %418 {offsets = [0, 1], sizes = [96, 128], strides = [1, 1]} : vector<96x130xbf16> to vector<96x128xbf16>
    %cst_159 = arith.constant dense<0.000000e+00> : vector<32x128xf32>
    %428 = tpu.matmul %426, %427, %cst_159 {dimension_numbers = #tpu.dot_dimension_numbers<[1], [0], [0], [1], [0, 0, 1, 1], [], []>} : vector<32x96xbf16>, vector<96x128xbf16>, vector<32x128xf32> -> vector<32x128xf32>
    %429 = arith.addf %424, %428 : vector<32x128xf32>
    %430 = vector.extract_strided_slice %0 {offsets = [2, 0, 0], sizes = [1, 32, 96], strides = [1, 1, 1]} : vector<3x32x96xbf16> to vector<1x32x96xbf16>
    %431 = vector.shape_cast %430 : vector<1x32x96xbf16> to vector<32x96xbf16>
    %432 = vector.extract_strided_slice %418 {offsets = [0, 2], sizes = [96, 128], strides = [1, 1]} : vector<96x130xbf16> to vector<96x128xbf16>
    %cst_160 = arith.constant dense<0.000000e+00> : vector<32x128xf32>
    %433 = tpu.matmul %431, %432, %cst_160 {dimension_numbers = #tpu.dot_dimension_numbers<[1], [0], [0], [1], [0, 0, 1, 1], [], []>} : vector<32x96xbf16>, vector<96x128xbf16>, vector<32x128xf32> -> vector<32x128xf32>
    %434 = arith.addf %429, %433 : vector<32x128xf32>
    %435 = vector.broadcast %2 : vector<32x1xf32> to vector<32x128xf32>
    %436 = arith.addf %434, %435 : vector<32x128xf32>
    %cst_161 = arith.constant 0.000000e+00 : f32
    %437 = vector.broadcast %cst_161 : f32 to vector<32x128xf32>
    %438 = arith.maximumf %436, %437 : vector<32x128xf32>
    %439 = arith.mulf %438, %8 : vector<32x128xf32>
    %440 = vector.shape_cast %439 : vector<32x128xf32> to vector<1x32x128xf32>
    %441 = arith.truncf %440 : vector<1x32x128xf32> to vector<1x32x128xbf16>
    %c1_i32_162 = arith.constant 1 : i32
    %442 = arith.addi %c13_i32, %c1_i32_162 : i32
    %443 = arith.index_cast %442 : i32 to index
    %c0_163 = arith.constant 0 : index
    %c1_164 = arith.constant 1 : index
    %444 = vector.load %arg7[%443, %c0_163, %c1_164] : memref<18x32x130xbf16, #tpu.memory_space<vmem>>, vector<1x32x128xbf16>
    tpu.vector_store %arg7[%443, %c0_163, %c1_164], %441 {strides = array<i32>} : memref<18x32x130xbf16, #tpu.memory_space<vmem>>, vector<1x32x128xbf16>,
    %c14_i32 = arith.constant 14 : i32
    %c0_165 = arith.constant 0 : index
    %445 = arith.index_cast %c14_i32 : i32 to index
    %c0_166 = arith.constant 0 : index
    %c0_167 = arith.constant 0 : index
    %446 = vector.load %arg1[%c0_165, %445, %c0_166, %c0_167] : memref<1x18x32x130xf32, #tpu.memory_space<vmem>>, vector<1x3x32x130xf32>
    %447 = vector.shape_cast %446 : vector<1x3x32x130xf32> to vector<3x32x130xf32>
    %448 = vector.shape_cast %447 : vector<3x32x130xf32> to vector<96x130xf32>
    %449 = arith.truncf %448 : vector<96x130xf32> to vector<96x130xbf16>
    %cst_168 = arith.constant 0.000000e+00 : f32
    %450 = vector.broadcast %cst_168 : f32 to vector<32x128xf32>
    %451 = vector.extract_strided_slice %0 {offsets = [0, 0, 0], sizes = [1, 32, 96], strides = [1, 1, 1]} : vector<3x32x96xbf16> to vector<1x32x96xbf16>
    %452 = vector.shape_cast %451 : vector<1x32x96xbf16> to vector<32x96xbf16>
    %453 = vector.extract_strided_slice %449 {offsets = [0, 0], sizes = [96, 128], strides = [1, 1]} : vector<96x130xbf16> to vector<96x128xbf16>
    %cst_169 = arith.constant dense<0.000000e+00> : vector<32x128xf32>
    %454 = tpu.matmul %452, %453, %cst_169 {dimension_numbers = #tpu.dot_dimension_numbers<[1], [0], [0], [1], [0, 0, 1, 1], [], []>} : vector<32x96xbf16>, vector<96x128xbf16>, vector<32x128xf32> -> vector<32x128xf32>
    %455 = arith.addf %450, %454 : vector<32x128xf32>
    %456 = vector.extract_strided_slice %0 {offsets = [1, 0, 0], sizes = [1, 32, 96], strides = [1, 1, 1]} : vector<3x32x96xbf16> to vector<1x32x96xbf16>
    %457 = vector.shape_cast %456 : vector<1x32x96xbf16> to vector<32x96xbf16>
    %458 = vector.extract_strided_slice %449 {offsets = [0, 1], sizes = [96, 128], strides = [1, 1]} : vector<96x130xbf16> to vector<96x128xbf16>
    %cst_170 = arith.constant dense<0.000000e+00> : vector<32x128xf32>
    %459 = tpu.matmul %457, %458, %cst_170 {dimension_numbers = #tpu.dot_dimension_numbers<[1], [0], [0], [1], [0, 0, 1, 1], [], []>} : vector<32x96xbf16>, vector<96x128xbf16>, vector<32x128xf32> -> vector<32x128xf32>
    %460 = arith.addf %455, %459 : vector<32x128xf32>
    %461 = vector.extract_strided_slice %0 {offsets = [2, 0, 0], sizes = [1, 32, 96], strides = [1, 1, 1]} : vector<3x32x96xbf16> to vector<1x32x96xbf16>
    %462 = vector.shape_cast %461 : vector<1x32x96xbf16> to vector<32x96xbf16>
    %463 = vector.extract_strided_slice %449 {offsets = [0, 2], sizes = [96, 128], strides = [1, 1]} : vector<96x130xbf16> to vector<96x128xbf16>
    %cst_171 = arith.constant dense<0.000000e+00> : vector<32x128xf32>
    %464 = tpu.matmul %462, %463, %cst_171 {dimension_numbers = #tpu.dot_dimension_numbers<[1], [0], [0], [1], [0, 0, 1, 1], [], []>} : vector<32x96xbf16>, vector<96x128xbf16>, vector<32x128xf32> -> vector<32x128xf32>
    %465 = arith.addf %460, %464 : vector<32x128xf32>
    %466 = vector.broadcast %2 : vector<32x1xf32> to vector<32x128xf32>
    %467 = arith.addf %465, %466 : vector<32x128xf32>
    %cst_172 = arith.constant 0.000000e+00 : f32
    %468 = vector.broadcast %cst_172 : f32 to vector<32x128xf32>
    %469 = arith.maximumf %467, %468 : vector<32x128xf32>
    %470 = arith.mulf %469, %8 : vector<32x128xf32>
    %471 = vector.shape_cast %470 : vector<32x128xf32> to vector<1x32x128xf32>
    %472 = arith.truncf %471 : vector<1x32x128xf32> to vector<1x32x128xbf16>
    %c1_i32_173 = arith.constant 1 : i32
    %473 = arith.addi %c14_i32, %c1_i32_173 : i32
    %474 = arith.index_cast %473 : i32 to index
    %c0_174 = arith.constant 0 : index
    %c1_175 = arith.constant 1 : index
    %475 = vector.load %arg7[%474, %c0_174, %c1_175] : memref<18x32x130xbf16, #tpu.memory_space<vmem>>, vector<1x32x128xbf16>
    tpu.vector_store %arg7[%474, %c0_174, %c1_175], %472 {strides = array<i32>} : memref<18x32x130xbf16, #tpu.memory_space<vmem>>, vector<1x32x128xbf16>,
    %c15_i32 = arith.constant 15 : i32
    %c0_176 = arith.constant 0 : index
    %476 = arith.index_cast %c15_i32 : i32 to index
    %c0_177 = arith.constant 0 : index
    %c0_178 = arith.constant 0 : index
    %477 = vector.load %arg1[%c0_176, %476, %c0_177, %c0_178] : memref<1x18x32x130xf32, #tpu.memory_space<vmem>>, vector<1x3x32x130xf32>
    %478 = vector.shape_cast %477 : vector<1x3x32x130xf32> to vector<3x32x130xf32>
    %479 = vector.shape_cast %478 : vector<3x32x130xf32> to vector<96x130xf32>
    %480 = arith.truncf %479 : vector<96x130xf32> to vector<96x130xbf16>
    %cst_179 = arith.constant 0.000000e+00 : f32
    %481 = vector.broadcast %cst_179 : f32 to vector<32x128xf32>
    %482 = vector.extract_strided_slice %0 {offsets = [0, 0, 0], sizes = [1, 32, 96], strides = [1, 1, 1]} : vector<3x32x96xbf16> to vector<1x32x96xbf16>
    %483 = vector.shape_cast %482 : vector<1x32x96xbf16> to vector<32x96xbf16>
    %484 = vector.extract_strided_slice %480 {offsets = [0, 0], sizes = [96, 128], strides = [1, 1]} : vector<96x130xbf16> to vector<96x128xbf16>
    %cst_180 = arith.constant dense<0.000000e+00> : vector<32x128xf32>
    %485 = tpu.matmul %483, %484, %cst_180 {dimension_numbers = #tpu.dot_dimension_numbers<[1], [0], [0], [1], [0, 0, 1, 1], [], []>} : vector<32x96xbf16>, vector<96x128xbf16>, vector<32x128xf32> -> vector<32x128xf32>
    %486 = arith.addf %481, %485 : vector<32x128xf32>
    %487 = vector.extract_strided_slice %0 {offsets = [1, 0, 0], sizes = [1, 32, 96], strides = [1, 1, 1]} : vector<3x32x96xbf16> to vector<1x32x96xbf16>
    %488 = vector.shape_cast %487 : vector<1x32x96xbf16> to vector<32x96xbf16>
    %489 = vector.extract_strided_slice %480 {offsets = [0, 1], sizes = [96, 128], strides = [1, 1]} : vector<96x130xbf16> to vector<96x128xbf16>
    %cst_181 = arith.constant dense<0.000000e+00> : vector<32x128xf32>
    %490 = tpu.matmul %488, %489, %cst_181 {dimension_numbers = #tpu.dot_dimension_numbers<[1], [0], [0], [1], [0, 0, 1, 1], [], []>} : vector<32x96xbf16>, vector<96x128xbf16>, vector<32x128xf32> -> vector<32x128xf32>
    %491 = arith.addf %486, %490 : vector<32x128xf32>
    %492 = vector.extract_strided_slice %0 {offsets = [2, 0, 0], sizes = [1, 32, 96], strides = [1, 1, 1]} : vector<3x32x96xbf16> to vector<1x32x96xbf16>
    %493 = vector.shape_cast %492 : vector<1x32x96xbf16> to vector<32x96xbf16>
    %494 = vector.extract_strided_slice %480 {offsets = [0, 2], sizes = [96, 128], strides = [1, 1]} : vector<96x130xbf16> to vector<96x128xbf16>
    %cst_182 = arith.constant dense<0.000000e+00> : vector<32x128xf32>
    %495 = tpu.matmul %493, %494, %cst_182 {dimension_numbers = #tpu.dot_dimension_numbers<[1], [0], [0], [1], [0, 0, 1, 1], [], []>} : vector<32x96xbf16>, vector<96x128xbf16>, vector<32x128xf32> -> vector<32x128xf32>
    %496 = arith.addf %491, %495 : vector<32x128xf32>
    %497 = vector.broadcast %2 : vector<32x1xf32> to vector<32x128xf32>
    %498 = arith.addf %496, %497 : vector<32x128xf32>
    %cst_183 = arith.constant 0.000000e+00 : f32
    %499 = vector.broadcast %cst_183 : f32 to vector<32x128xf32>
    %500 = arith.maximumf %498, %499 : vector<32x128xf32>
    %501 = arith.mulf %500, %8 : vector<32x128xf32>
    %502 = vector.shape_cast %501 : vector<32x128xf32> to vector<1x32x128xf32>
    %503 = arith.truncf %502 : vector<1x32x128xf32> to vector<1x32x128xbf16>
    %c1_i32_184 = arith.constant 1 : i32
    %504 = arith.addi %c15_i32, %c1_i32_184 : i32
    %505 = arith.index_cast %504 : i32 to index
    %c0_185 = arith.constant 0 : index
    %c1_186 = arith.constant 1 : index
    %506 = vector.load %arg7[%505, %c0_185, %c1_186] : memref<18x32x130xbf16, #tpu.memory_space<vmem>>, vector<1x32x128xbf16>
    tpu.vector_store %arg7[%505, %c0_185, %c1_186], %503 {strides = array<i32>} : memref<18x32x130xbf16, #tpu.memory_space<vmem>>, vector<1x32x128xbf16>,
    %c16_i32 = arith.constant 16 : i32
    %c0_i32_187 = arith.constant 0 : i32
    %507 = arith.index_cast %c0_i32_187 : i32 to index
    %c0_188 = arith.constant 0 : index
    %c0_189 = arith.constant 0 : index
    %508 = vector.load %arg7[%507, %c0_188, %c0_189] : memref<18x32x130xbf16, #tpu.memory_space<vmem>>, vector<3x32x130xbf16>
    %509 = vector.shape_cast %508 : vector<3x32x130xbf16> to vector<96x130xbf16>
    %cst_190 = arith.constant 0.000000e+00 : f32
    %510 = vector.broadcast %cst_190 : f32 to vector<32x128xf32>
    %511 = vector.extract_strided_slice %1 {offsets = [0, 0, 0], sizes = [1, 32, 96], strides = [1, 1, 1]} : vector<3x32x96xbf16> to vector<1x32x96xbf16>
    %512 = vector.shape_cast %511 : vector<1x32x96xbf16> to vector<32x96xbf16>
    %513 = vector.extract_strided_slice %509 {offsets = [0, 0], sizes = [96, 128], strides = [1, 1]} : vector<96x130xbf16> to vector<96x128xbf16>
    %cst_191 = arith.constant dense<0.000000e+00> : vector<32x128xf32>
    %514 = tpu.matmul %512, %513, %cst_191 {dimension_numbers = #tpu.dot_dimension_numbers<[1], [0], [0], [1], [0, 0, 1, 1], [], []>} : vector<32x96xbf16>, vector<96x128xbf16>, vector<32x128xf32> -> vector<32x128xf32>
    %515 = arith.addf %510, %514 : vector<32x128xf32>
    %516 = vector.extract_strided_slice %1 {offsets = [1, 0, 0], sizes = [1, 32, 96], strides = [1, 1, 1]} : vector<3x32x96xbf16> to vector<1x32x96xbf16>
    %517 = vector.shape_cast %516 : vector<1x32x96xbf16> to vector<32x96xbf16>
    %518 = vector.extract_strided_slice %509 {offsets = [0, 1], sizes = [96, 128], strides = [1, 1]} : vector<96x130xbf16> to vector<96x128xbf16>
    %cst_192 = arith.constant dense<0.000000e+00> : vector<32x128xf32>
    %519 = tpu.matmul %517, %518, %cst_192 {dimension_numbers = #tpu.dot_dimension_numbers<[1], [0], [0], [1], [0, 0, 1, 1], [], []>} : vector<32x96xbf16>, vector<96x128xbf16>, vector<32x128xf32> -> vector<32x128xf32>
    %520 = arith.addf %515, %519 : vector<32x128xf32>
    %521 = vector.extract_strided_slice %1 {offsets = [2, 0, 0], sizes = [1, 32, 96], strides = [1, 1, 1]} : vector<3x32x96xbf16> to vector<1x32x96xbf16>
    %522 = vector.shape_cast %521 : vector<1x32x96xbf16> to vector<32x96xbf16>
    %523 = vector.extract_strided_slice %509 {offsets = [0, 2], sizes = [96, 128], strides = [1, 1]} : vector<96x130xbf16> to vector<96x128xbf16>
    %cst_193 = arith.constant dense<0.000000e+00> : vector<32x128xf32>
    %524 = tpu.matmul %522, %523, %cst_193 {dimension_numbers = #tpu.dot_dimension_numbers<[1], [0], [0], [1], [0, 0, 1, 1], [], []>} : vector<32x96xbf16>, vector<96x128xbf16>, vector<32x128xf32> -> vector<32x128xf32>
    %525 = arith.addf %520, %524 : vector<32x128xf32>
    %c1_i32_194 = arith.constant 1 : i32
    %526 = arith.addi %c0_i32_187, %c1_i32_194 : i32
    %c0_195 = arith.constant 0 : index
    %527 = arith.index_cast %526 : i32 to index
    %c0_196 = arith.constant 0 : index
    %c1_197 = arith.constant 1 : index
    %528 = vector.load %arg1[%c0_195, %527, %c0_196, %c1_197] : memref<1x18x32x130xf32, #tpu.memory_space<vmem>>, vector<1x1x32x128xf32>
    %529 = vector.shape_cast %528 : vector<1x1x32x128xf32> to vector<1x32x128xf32>
    %530 = vector.shape_cast %529 : vector<1x32x128xf32> to vector<32x128xf32>
    %531 = vector.broadcast %3 : vector<32x1xf32> to vector<32x128xf32>
    %532 = arith.addf %525, %531 : vector<32x128xf32>
    %533 = arith.addf %532, %530 : vector<32x128xf32>
    %cst_198 = arith.constant 0.000000e+00 : f32
    %534 = vector.broadcast %cst_198 : f32 to vector<32x128xf32>
    %535 = arith.maximumf %533, %534 : vector<32x128xf32>
    %536 = vector.shape_cast %535 : vector<32x128xf32> to vector<1x32x128xf32>
    %c0_199 = arith.constant 0 : index
    %537 = arith.index_cast %c0_i32_187 : i32 to index
    %c0_200 = arith.constant 0 : index
    %c0_201 = arith.constant 0 : index
    %538 = vector.load %arg6[%c0_199, %537, %c0_200, %c0_201] : memref<1x16x32x128xf32, #tpu.memory_space<vmem>>, vector<1x1x32x128xf32>
    %539 = vector.shape_cast %538 : vector<1x1x32x128xf32> to vector<1x32x128xf32>
    %540 = vector.shape_cast %536 : vector<1x32x128xf32> to vector<1x1x32x128xf32>
    tpu.vector_store %arg6[%c0_199, %537, %c0_200, %c0_201], %540 {strides = array<i32>} : memref<1x16x32x128xf32, #tpu.memory_space<vmem>>, vector<1x1x32x128xf32>,
    %c1_i32_202 = arith.constant 1 : i32
    %541 = arith.index_cast %c1_i32_202 : i32 to index
    %c0_203 = arith.constant 0 : index
    %c0_204 = arith.constant 0 : index
    %542 = vector.load %arg7[%541, %c0_203, %c0_204] : memref<18x32x130xbf16, #tpu.memory_space<vmem>>, vector<3x32x130xbf16>
    %543 = vector.shape_cast %542 : vector<3x32x130xbf16> to vector<96x130xbf16>
    %cst_205 = arith.constant 0.000000e+00 : f32
    %544 = vector.broadcast %cst_205 : f32 to vector<32x128xf32>
    %545 = vector.extract_strided_slice %1 {offsets = [0, 0, 0], sizes = [1, 32, 96], strides = [1, 1, 1]} : vector<3x32x96xbf16> to vector<1x32x96xbf16>
    %546 = vector.shape_cast %545 : vector<1x32x96xbf16> to vector<32x96xbf16>
    %547 = vector.extract_strided_slice %543 {offsets = [0, 0], sizes = [96, 128], strides = [1, 1]} : vector<96x130xbf16> to vector<96x128xbf16>
    %cst_206 = arith.constant dense<0.000000e+00> : vector<32x128xf32>
    %548 = tpu.matmul %546, %547, %cst_206 {dimension_numbers = #tpu.dot_dimension_numbers<[1], [0], [0], [1], [0, 0, 1, 1], [], []>} : vector<32x96xbf16>, vector<96x128xbf16>, vector<32x128xf32> -> vector<32x128xf32>
    %549 = arith.addf %544, %548 : vector<32x128xf32>
    %550 = vector.extract_strided_slice %1 {offsets = [1, 0, 0], sizes = [1, 32, 96], strides = [1, 1, 1]} : vector<3x32x96xbf16> to vector<1x32x96xbf16>
    %551 = vector.shape_cast %550 : vector<1x32x96xbf16> to vector<32x96xbf16>
    %552 = vector.extract_strided_slice %543 {offsets = [0, 1], sizes = [96, 128], strides = [1, 1]} : vector<96x130xbf16> to vector<96x128xbf16>
    %cst_207 = arith.constant dense<0.000000e+00> : vector<32x128xf32>
    %553 = tpu.matmul %551, %552, %cst_207 {dimension_numbers = #tpu.dot_dimension_numbers<[1], [0], [0], [1], [0, 0, 1, 1], [], []>} : vector<32x96xbf16>, vector<96x128xbf16>, vector<32x128xf32> -> vector<32x128xf32>
    %554 = arith.addf %549, %553 : vector<32x128xf32>
    %555 = vector.extract_strided_slice %1 {offsets = [2, 0, 0], sizes = [1, 32, 96], strides = [1, 1, 1]} : vector<3x32x96xbf16> to vector<1x32x96xbf16>
    %556 = vector.shape_cast %555 : vector<1x32x96xbf16> to vector<32x96xbf16>
    %557 = vector.extract_strided_slice %543 {offsets = [0, 2], sizes = [96, 128], strides = [1, 1]} : vector<96x130xbf16> to vector<96x128xbf16>
    %cst_208 = arith.constant dense<0.000000e+00> : vector<32x128xf32>
    %558 = tpu.matmul %556, %557, %cst_208 {dimension_numbers = #tpu.dot_dimension_numbers<[1], [0], [0], [1], [0, 0, 1, 1], [], []>} : vector<32x96xbf16>, vector<96x128xbf16>, vector<32x128xf32> -> vector<32x128xf32>
    %559 = arith.addf %554, %558 : vector<32x128xf32>
    %c1_i32_209 = arith.constant 1 : i32
    %560 = arith.addi %c1_i32_202, %c1_i32_209 : i32
    %c0_210 = arith.constant 0 : index
    %561 = arith.index_cast %560 : i32 to index
    %c0_211 = arith.constant 0 : index
    %c1_212 = arith.constant 1 : index
    %562 = vector.load %arg1[%c0_210, %561, %c0_211, %c1_212] : memref<1x18x32x130xf32, #tpu.memory_space<vmem>>, vector<1x1x32x128xf32>
    %563 = vector.shape_cast %562 : vector<1x1x32x128xf32> to vector<1x32x128xf32>
    %564 = vector.shape_cast %563 : vector<1x32x128xf32> to vector<32x128xf32>
    %565 = vector.broadcast %3 : vector<32x1xf32> to vector<32x128xf32>
    %566 = arith.addf %559, %565 : vector<32x128xf32>
    %567 = arith.addf %566, %564 : vector<32x128xf32>
    %cst_213 = arith.constant 0.000000e+00 : f32
    %568 = vector.broadcast %cst_213 : f32 to vector<32x128xf32>
    %569 = arith.maximumf %567, %568 : vector<32x128xf32>
    %570 = vector.shape_cast %569 : vector<32x128xf32> to vector<1x32x128xf32>
    %c0_214 = arith.constant 0 : index
    %571 = arith.index_cast %c1_i32_202 : i32 to index
    %c0_215 = arith.constant 0 : index
    %c0_216 = arith.constant 0 : index
    %572 = vector.load %arg6[%c0_214, %571, %c0_215, %c0_216] : memref<1x16x32x128xf32, #tpu.memory_space<vmem>>, vector<1x1x32x128xf32>
    %573 = vector.shape_cast %572 : vector<1x1x32x128xf32> to vector<1x32x128xf32>
    %574 = vector.shape_cast %570 : vector<1x32x128xf32> to vector<1x1x32x128xf32>
    tpu.vector_store %arg6[%c0_214, %571, %c0_215, %c0_216], %574 {strides = array<i32>} : memref<1x16x32x128xf32, #tpu.memory_space<vmem>>, vector<1x1x32x128xf32>,
    %c2_i32_217 = arith.constant 2 : i32
    %575 = arith.index_cast %c2_i32_217 : i32 to index
    %c0_218 = arith.constant 0 : index
    %c0_219 = arith.constant 0 : index
    %576 = vector.load %arg7[%575, %c0_218, %c0_219] : memref<18x32x130xbf16, #tpu.memory_space<vmem>>, vector<3x32x130xbf16>
    %577 = vector.shape_cast %576 : vector<3x32x130xbf16> to vector<96x130xbf16>
    %cst_220 = arith.constant 0.000000e+00 : f32
    %578 = vector.broadcast %cst_220 : f32 to vector<32x128xf32>
    %579 = vector.extract_strided_slice %1 {offsets = [0, 0, 0], sizes = [1, 32, 96], strides = [1, 1, 1]} : vector<3x32x96xbf16> to vector<1x32x96xbf16>
    %580 = vector.shape_cast %579 : vector<1x32x96xbf16> to vector<32x96xbf16>
    %581 = vector.extract_strided_slice %577 {offsets = [0, 0], sizes = [96, 128], strides = [1, 1]} : vector<96x130xbf16> to vector<96x128xbf16>
    %cst_221 = arith.constant dense<0.000000e+00> : vector<32x128xf32>
    %582 = tpu.matmul %580, %581, %cst_221 {dimension_numbers = #tpu.dot_dimension_numbers<[1], [0], [0], [1], [0, 0, 1, 1], [], []>} : vector<32x96xbf16>, vector<96x128xbf16>, vector<32x128xf32> -> vector<32x128xf32>
    %583 = arith.addf %578, %582 : vector<32x128xf32>
    %584 = vector.extract_strided_slice %1 {offsets = [1, 0, 0], sizes = [1, 32, 96], strides = [1, 1, 1]} : vector<3x32x96xbf16> to vector<1x32x96xbf16>
    %585 = vector.shape_cast %584 : vector<1x32x96xbf16> to vector<32x96xbf16>
    %586 = vector.extract_strided_slice %577 {offsets = [0, 1], sizes = [96, 128], strides = [1, 1]} : vector<96x130xbf16> to vector<96x128xbf16>
    %cst_222 = arith.constant dense<0.000000e+00> : vector<32x128xf32>
    %587 = tpu.matmul %585, %586, %cst_222 {dimension_numbers = #tpu.dot_dimension_numbers<[1], [0], [0], [1], [0, 0, 1, 1], [], []>} : vector<32x96xbf16>, vector<96x128xbf16>, vector<32x128xf32> -> vector<32x128xf32>
    %588 = arith.addf %583, %587 : vector<32x128xf32>
    %589 = vector.extract_strided_slice %1 {offsets = [2, 0, 0], sizes = [1, 32, 96], strides = [1, 1, 1]} : vector<3x32x96xbf16> to vector<1x32x96xbf16>
    %590 = vector.shape_cast %589 : vector<1x32x96xbf16> to vector<32x96xbf16>
    %591 = vector.extract_strided_slice %577 {offsets = [0, 2], sizes = [96, 128], strides = [1, 1]} : vector<96x130xbf16> to vector<96x128xbf16>
    %cst_223 = arith.constant dense<0.000000e+00> : vector<32x128xf32>
    %592 = tpu.matmul %590, %591, %cst_223 {dimension_numbers = #tpu.dot_dimension_numbers<[1], [0], [0], [1], [0, 0, 1, 1], [], []>} : vector<32x96xbf16>, vector<96x128xbf16>, vector<32x128xf32> -> vector<32x128xf32>
    %593 = arith.addf %588, %592 : vector<32x128xf32>
    %c1_i32_224 = arith.constant 1 : i32
    %594 = arith.addi %c2_i32_217, %c1_i32_224 : i32
    %c0_225 = arith.constant 0 : index
    %595 = arith.index_cast %594 : i32 to index
    %c0_226 = arith.constant 0 : index
    %c1_227 = arith.constant 1 : index
    %596 = vector.load %arg1[%c0_225, %595, %c0_226, %c1_227] : memref<1x18x32x130xf32, #tpu.memory_space<vmem>>, vector<1x1x32x128xf32>
    %597 = vector.shape_cast %596 : vector<1x1x32x128xf32> to vector<1x32x128xf32>
    %598 = vector.shape_cast %597 : vector<1x32x128xf32> to vector<32x128xf32>
    %599 = vector.broadcast %3 : vector<32x1xf32> to vector<32x128xf32>
    %600 = arith.addf %593, %599 : vector<32x128xf32>
    %601 = arith.addf %600, %598 : vector<32x128xf32>
    %cst_228 = arith.constant 0.000000e+00 : f32
    %602 = vector.broadcast %cst_228 : f32 to vector<32x128xf32>
    %603 = arith.maximumf %601, %602 : vector<32x128xf32>
    %604 = vector.shape_cast %603 : vector<32x128xf32> to vector<1x32x128xf32>
    %c0_229 = arith.constant 0 : index
    %605 = arith.index_cast %c2_i32_217 : i32 to index
    %c0_230 = arith.constant 0 : index
    %c0_231 = arith.constant 0 : index
    %606 = vector.load %arg6[%c0_229, %605, %c0_230, %c0_231] : memref<1x16x32x128xf32, #tpu.memory_space<vmem>>, vector<1x1x32x128xf32>
    %607 = vector.shape_cast %606 : vector<1x1x32x128xf32> to vector<1x32x128xf32>
    %608 = vector.shape_cast %604 : vector<1x32x128xf32> to vector<1x1x32x128xf32>
    tpu.vector_store %arg6[%c0_229, %605, %c0_230, %c0_231], %608 {strides = array<i32>} : memref<1x16x32x128xf32, #tpu.memory_space<vmem>>, vector<1x1x32x128xf32>,
    %c3_i32_232 = arith.constant 3 : i32
    %609 = arith.index_cast %c3_i32_232 : i32 to index
    %c0_233 = arith.constant 0 : index
    %c0_234 = arith.constant 0 : index
    %610 = vector.load %arg7[%609, %c0_233, %c0_234] : memref<18x32x130xbf16, #tpu.memory_space<vmem>>, vector<3x32x130xbf16>
    %611 = vector.shape_cast %610 : vector<3x32x130xbf16> to vector<96x130xbf16>
    %cst_235 = arith.constant 0.000000e+00 : f32
    %612 = vector.broadcast %cst_235 : f32 to vector<32x128xf32>
    %613 = vector.extract_strided_slice %1 {offsets = [0, 0, 0], sizes = [1, 32, 96], strides = [1, 1, 1]} : vector<3x32x96xbf16> to vector<1x32x96xbf16>
    %614 = vector.shape_cast %613 : vector<1x32x96xbf16> to vector<32x96xbf16>
    %615 = vector.extract_strided_slice %611 {offsets = [0, 0], sizes = [96, 128], strides = [1, 1]} : vector<96x130xbf16> to vector<96x128xbf16>
    %cst_236 = arith.constant dense<0.000000e+00> : vector<32x128xf32>
    %616 = tpu.matmul %614, %615, %cst_236 {dimension_numbers = #tpu.dot_dimension_numbers<[1], [0], [0], [1], [0, 0, 1, 1], [], []>} : vector<32x96xbf16>, vector<96x128xbf16>, vector<32x128xf32> -> vector<32x128xf32>
    %617 = arith.addf %612, %616 : vector<32x128xf32>
    %618 = vector.extract_strided_slice %1 {offsets = [1, 0, 0], sizes = [1, 32, 96], strides = [1, 1, 1]} : vector<3x32x96xbf16> to vector<1x32x96xbf16>
    %619 = vector.shape_cast %618 : vector<1x32x96xbf16> to vector<32x96xbf16>
    %620 = vector.extract_strided_slice %611 {offsets = [0, 1], sizes = [96, 128], strides = [1, 1]} : vector<96x130xbf16> to vector<96x128xbf16>
    %cst_237 = arith.constant dense<0.000000e+00> : vector<32x128xf32>
    %621 = tpu.matmul %619, %620, %cst_237 {dimension_numbers = #tpu.dot_dimension_numbers<[1], [0], [0], [1], [0, 0, 1, 1], [], []>} : vector<32x96xbf16>, vector<96x128xbf16>, vector<32x128xf32> -> vector<32x128xf32>
    %622 = arith.addf %617, %621 : vector<32x128xf32>
    %623 = vector.extract_strided_slice %1 {offsets = [2, 0, 0], sizes = [1, 32, 96], strides = [1, 1, 1]} : vector<3x32x96xbf16> to vector<1x32x96xbf16>
    %624 = vector.shape_cast %623 : vector<1x32x96xbf16> to vector<32x96xbf16>
    %625 = vector.extract_strided_slice %611 {offsets = [0, 2], sizes = [96, 128], strides = [1, 1]} : vector<96x130xbf16> to vector<96x128xbf16>
    %cst_238 = arith.constant dense<0.000000e+00> : vector<32x128xf32>
    %626 = tpu.matmul %624, %625, %cst_238 {dimension_numbers = #tpu.dot_dimension_numbers<[1], [0], [0], [1], [0, 0, 1, 1], [], []>} : vector<32x96xbf16>, vector<96x128xbf16>, vector<32x128xf32> -> vector<32x128xf32>
    %627 = arith.addf %622, %626 : vector<32x128xf32>
    %c1_i32_239 = arith.constant 1 : i32
    %628 = arith.addi %c3_i32_232, %c1_i32_239 : i32
    %c0_240 = arith.constant 0 : index
    %629 = arith.index_cast %628 : i32 to index
    %c0_241 = arith.constant 0 : index
    %c1_242 = arith.constant 1 : index
    %630 = vector.load %arg1[%c0_240, %629, %c0_241, %c1_242] : memref<1x18x32x130xf32, #tpu.memory_space<vmem>>, vector<1x1x32x128xf32>
    %631 = vector.shape_cast %630 : vector<1x1x32x128xf32> to vector<1x32x128xf32>
    %632 = vector.shape_cast %631 : vector<1x32x128xf32> to vector<32x128xf32>
    %633 = vector.broadcast %3 : vector<32x1xf32> to vector<32x128xf32>
    %634 = arith.addf %627, %633 : vector<32x128xf32>
    %635 = arith.addf %634, %632 : vector<32x128xf32>
    %cst_243 = arith.constant 0.000000e+00 : f32
    %636 = vector.broadcast %cst_243 : f32 to vector<32x128xf32>
    %637 = arith.maximumf %635, %636 : vector<32x128xf32>
    %638 = vector.shape_cast %637 : vector<32x128xf32> to vector<1x32x128xf32>
    %c0_244 = arith.constant 0 : index
    %639 = arith.index_cast %c3_i32_232 : i32 to index
    %c0_245 = arith.constant 0 : index
    %c0_246 = arith.constant 0 : index
    %640 = vector.load %arg6[%c0_244, %639, %c0_245, %c0_246] : memref<1x16x32x128xf32, #tpu.memory_space<vmem>>, vector<1x1x32x128xf32>
    %641 = vector.shape_cast %640 : vector<1x1x32x128xf32> to vector<1x32x128xf32>
    %642 = vector.shape_cast %638 : vector<1x32x128xf32> to vector<1x1x32x128xf32>
    tpu.vector_store %arg6[%c0_244, %639, %c0_245, %c0_246], %642 {strides = array<i32>} : memref<1x16x32x128xf32, #tpu.memory_space<vmem>>, vector<1x1x32x128xf32>,
    %c4_i32_247 = arith.constant 4 : i32
    %643 = arith.index_cast %c4_i32_247 : i32 to index
    %c0_248 = arith.constant 0 : index
    %c0_249 = arith.constant 0 : index
    %644 = vector.load %arg7[%643, %c0_248, %c0_249] : memref<18x32x130xbf16, #tpu.memory_space<vmem>>, vector<3x32x130xbf16>
    %645 = vector.shape_cast %644 : vector<3x32x130xbf16> to vector<96x130xbf16>
    %cst_250 = arith.constant 0.000000e+00 : f32
    %646 = vector.broadcast %cst_250 : f32 to vector<32x128xf32>
    %647 = vector.extract_strided_slice %1 {offsets = [0, 0, 0], sizes = [1, 32, 96], strides = [1, 1, 1]} : vector<3x32x96xbf16> to vector<1x32x96xbf16>
    %648 = vector.shape_cast %647 : vector<1x32x96xbf16> to vector<32x96xbf16>
    %649 = vector.extract_strided_slice %645 {offsets = [0, 0], sizes = [96, 128], strides = [1, 1]} : vector<96x130xbf16> to vector<96x128xbf16>
    %cst_251 = arith.constant dense<0.000000e+00> : vector<32x128xf32>
    %650 = tpu.matmul %648, %649, %cst_251 {dimension_numbers = #tpu.dot_dimension_numbers<[1], [0], [0], [1], [0, 0, 1, 1], [], []>} : vector<32x96xbf16>, vector<96x128xbf16>, vector<32x128xf32> -> vector<32x128xf32>
    %651 = arith.addf %646, %650 : vector<32x128xf32>
    %652 = vector.extract_strided_slice %1 {offsets = [1, 0, 0], sizes = [1, 32, 96], strides = [1, 1, 1]} : vector<3x32x96xbf16> to vector<1x32x96xbf16>
    %653 = vector.shape_cast %652 : vector<1x32x96xbf16> to vector<32x96xbf16>
    %654 = vector.extract_strided_slice %645 {offsets = [0, 1], sizes = [96, 128], strides = [1, 1]} : vector<96x130xbf16> to vector<96x128xbf16>
    %cst_252 = arith.constant dense<0.000000e+00> : vector<32x128xf32>
    %655 = tpu.matmul %653, %654, %cst_252 {dimension_numbers = #tpu.dot_dimension_numbers<[1], [0], [0], [1], [0, 0, 1, 1], [], []>} : vector<32x96xbf16>, vector<96x128xbf16>, vector<32x128xf32> -> vector<32x128xf32>
    %656 = arith.addf %651, %655 : vector<32x128xf32>
    %657 = vector.extract_strided_slice %1 {offsets = [2, 0, 0], sizes = [1, 32, 96], strides = [1, 1, 1]} : vector<3x32x96xbf16> to vector<1x32x96xbf16>
    %658 = vector.shape_cast %657 : vector<1x32x96xbf16> to vector<32x96xbf16>
    %659 = vector.extract_strided_slice %645 {offsets = [0, 2], sizes = [96, 128], strides = [1, 1]} : vector<96x130xbf16> to vector<96x128xbf16>
    %cst_253 = arith.constant dense<0.000000e+00> : vector<32x128xf32>
    %660 = tpu.matmul %658, %659, %cst_253 {dimension_numbers = #tpu.dot_dimension_numbers<[1], [0], [0], [1], [0, 0, 1, 1], [], []>} : vector<32x96xbf16>, vector<96x128xbf16>, vector<32x128xf32> -> vector<32x128xf32>
    %661 = arith.addf %656, %660 : vector<32x128xf32>
    %c1_i32_254 = arith.constant 1 : i32
    %662 = arith.addi %c4_i32_247, %c1_i32_254 : i32
    %c0_255 = arith.constant 0 : index
    %663 = arith.index_cast %662 : i32 to index
    %c0_256 = arith.constant 0 : index
    %c1_257 = arith.constant 1 : index
    %664 = vector.load %arg1[%c0_255, %663, %c0_256, %c1_257] : memref<1x18x32x130xf32, #tpu.memory_space<vmem>>, vector<1x1x32x128xf32>
    %665 = vector.shape_cast %664 : vector<1x1x32x128xf32> to vector<1x32x128xf32>
    %666 = vector.shape_cast %665 : vector<1x32x128xf32> to vector<32x128xf32>
    %667 = vector.broadcast %3 : vector<32x1xf32> to vector<32x128xf32>
    %668 = arith.addf %661, %667 : vector<32x128xf32>
    %669 = arith.addf %668, %666 : vector<32x128xf32>
    %cst_258 = arith.constant 0.000000e+00 : f32
    %670 = vector.broadcast %cst_258 : f32 to vector<32x128xf32>
    %671 = arith.maximumf %669, %670 : vector<32x128xf32>
    %672 = vector.shape_cast %671 : vector<32x128xf32> to vector<1x32x128xf32>
    %c0_259 = arith.constant 0 : index
    %673 = arith.index_cast %c4_i32_247 : i32 to index
    %c0_260 = arith.constant 0 : index
    %c0_261 = arith.constant 0 : index
    %674 = vector.load %arg6[%c0_259, %673, %c0_260, %c0_261] : memref<1x16x32x128xf32, #tpu.memory_space<vmem>>, vector<1x1x32x128xf32>
    %675 = vector.shape_cast %674 : vector<1x1x32x128xf32> to vector<1x32x128xf32>
    %676 = vector.shape_cast %672 : vector<1x32x128xf32> to vector<1x1x32x128xf32>
    tpu.vector_store %arg6[%c0_259, %673, %c0_260, %c0_261], %676 {strides = array<i32>} : memref<1x16x32x128xf32, #tpu.memory_space<vmem>>, vector<1x1x32x128xf32>,
    %c5_i32_262 = arith.constant 5 : i32
    %677 = arith.index_cast %c5_i32_262 : i32 to index
    %c0_263 = arith.constant 0 : index
    %c0_264 = arith.constant 0 : index
    %678 = vector.load %arg7[%677, %c0_263, %c0_264] : memref<18x32x130xbf16, #tpu.memory_space<vmem>>, vector<3x32x130xbf16>
    %679 = vector.shape_cast %678 : vector<3x32x130xbf16> to vector<96x130xbf16>
    %cst_265 = arith.constant 0.000000e+00 : f32
    %680 = vector.broadcast %cst_265 : f32 to vector<32x128xf32>
    %681 = vector.extract_strided_slice %1 {offsets = [0, 0, 0], sizes = [1, 32, 96], strides = [1, 1, 1]} : vector<3x32x96xbf16> to vector<1x32x96xbf16>
    %682 = vector.shape_cast %681 : vector<1x32x96xbf16> to vector<32x96xbf16>
    %683 = vector.extract_strided_slice %679 {offsets = [0, 0], sizes = [96, 128], strides = [1, 1]} : vector<96x130xbf16> to vector<96x128xbf16>
    %cst_266 = arith.constant dense<0.000000e+00> : vector<32x128xf32>
    %684 = tpu.matmul %682, %683, %cst_266 {dimension_numbers = #tpu.dot_dimension_numbers<[1], [0], [0], [1], [0, 0, 1, 1], [], []>} : vector<32x96xbf16>, vector<96x128xbf16>, vector<32x128xf32> -> vector<32x128xf32>
    %685 = arith.addf %680, %684 : vector<32x128xf32>
    %686 = vector.extract_strided_slice %1 {offsets = [1, 0, 0], sizes = [1, 32, 96], strides = [1, 1, 1]} : vector<3x32x96xbf16> to vector<1x32x96xbf16>
    %687 = vector.shape_cast %686 : vector<1x32x96xbf16> to vector<32x96xbf16>
    %688 = vector.extract_strided_slice %679 {offsets = [0, 1], sizes = [96, 128], strides = [1, 1]} : vector<96x130xbf16> to vector<96x128xbf16>
    %cst_267 = arith.constant dense<0.000000e+00> : vector<32x128xf32>
    %689 = tpu.matmul %687, %688, %cst_267 {dimension_numbers = #tpu.dot_dimension_numbers<[1], [0], [0], [1], [0, 0, 1, 1], [], []>} : vector<32x96xbf16>, vector<96x128xbf16>, vector<32x128xf32> -> vector<32x128xf32>
    %690 = arith.addf %685, %689 : vector<32x128xf32>
    %691 = vector.extract_strided_slice %1 {offsets = [2, 0, 0], sizes = [1, 32, 96], strides = [1, 1, 1]} : vector<3x32x96xbf16> to vector<1x32x96xbf16>
    %692 = vector.shape_cast %691 : vector<1x32x96xbf16> to vector<32x96xbf16>
    %693 = vector.extract_strided_slice %679 {offsets = [0, 2], sizes = [96, 128], strides = [1, 1]} : vector<96x130xbf16> to vector<96x128xbf16>
    %cst_268 = arith.constant dense<0.000000e+00> : vector<32x128xf32>
    %694 = tpu.matmul %692, %693, %cst_268 {dimension_numbers = #tpu.dot_dimension_numbers<[1], [0], [0], [1], [0, 0, 1, 1], [], []>} : vector<32x96xbf16>, vector<96x128xbf16>, vector<32x128xf32> -> vector<32x128xf32>
    %695 = arith.addf %690, %694 : vector<32x128xf32>
    %c1_i32_269 = arith.constant 1 : i32
    %696 = arith.addi %c5_i32_262, %c1_i32_269 : i32
    %c0_270 = arith.constant 0 : index
    %697 = arith.index_cast %696 : i32 to index
    %c0_271 = arith.constant 0 : index
    %c1_272 = arith.constant 1 : index
    %698 = vector.load %arg1[%c0_270, %697, %c0_271, %c1_272] : memref<1x18x32x130xf32, #tpu.memory_space<vmem>>, vector<1x1x32x128xf32>
    %699 = vector.shape_cast %698 : vector<1x1x32x128xf32> to vector<1x32x128xf32>
    %700 = vector.shape_cast %699 : vector<1x32x128xf32> to vector<32x128xf32>
    %701 = vector.broadcast %3 : vector<32x1xf32> to vector<32x128xf32>
    %702 = arith.addf %695, %701 : vector<32x128xf32>
    %703 = arith.addf %702, %700 : vector<32x128xf32>
    %cst_273 = arith.constant 0.000000e+00 : f32
    %704 = vector.broadcast %cst_273 : f32 to vector<32x128xf32>
    %705 = arith.maximumf %703, %704 : vector<32x128xf32>
    %706 = vector.shape_cast %705 : vector<32x128xf32> to vector<1x32x128xf32>
    %c0_274 = arith.constant 0 : index
    %707 = arith.index_cast %c5_i32_262 : i32 to index
    %c0_275 = arith.constant 0 : index
    %c0_276 = arith.constant 0 : index
    %708 = vector.load %arg6[%c0_274, %707, %c0_275, %c0_276] : memref<1x16x32x128xf32, #tpu.memory_space<vmem>>, vector<1x1x32x128xf32>
    %709 = vector.shape_cast %708 : vector<1x1x32x128xf32> to vector<1x32x128xf32>
    %710 = vector.shape_cast %706 : vector<1x32x128xf32> to vector<1x1x32x128xf32>
    tpu.vector_store %arg6[%c0_274, %707, %c0_275, %c0_276], %710 {strides = array<i32>} : memref<1x16x32x128xf32, #tpu.memory_space<vmem>>, vector<1x1x32x128xf32>,
    %c6_i32_277 = arith.constant 6 : i32
    %711 = arith.index_cast %c6_i32_277 : i32 to index
    %c0_278 = arith.constant 0 : index
    %c0_279 = arith.constant 0 : index
    %712 = vector.load %arg7[%711, %c0_278, %c0_279] : memref<18x32x130xbf16, #tpu.memory_space<vmem>>, vector<3x32x130xbf16>
    %713 = vector.shape_cast %712 : vector<3x32x130xbf16> to vector<96x130xbf16>
    %cst_280 = arith.constant 0.000000e+00 : f32
    %714 = vector.broadcast %cst_280 : f32 to vector<32x128xf32>
    %715 = vector.extract_strided_slice %1 {offsets = [0, 0, 0], sizes = [1, 32, 96], strides = [1, 1, 1]} : vector<3x32x96xbf16> to vector<1x32x96xbf16>
    %716 = vector.shape_cast %715 : vector<1x32x96xbf16> to vector<32x96xbf16>
    %717 = vector.extract_strided_slice %713 {offsets = [0, 0], sizes = [96, 128], strides = [1, 1]} : vector<96x130xbf16> to vector<96x128xbf16>
    %cst_281 = arith.constant dense<0.000000e+00> : vector<32x128xf32>
    %718 = tpu.matmul %716, %717, %cst_281 {dimension_numbers = #tpu.dot_dimension_numbers<[1], [0], [0], [1], [0, 0, 1, 1], [], []>} : vector<32x96xbf16>, vector<96x128xbf16>, vector<32x128xf32> -> vector<32x128xf32>
    %719 = arith.addf %714, %718 : vector<32x128xf32>
    %720 = vector.extract_strided_slice %1 {offsets = [1, 0, 0], sizes = [1, 32, 96], strides = [1, 1, 1]} : vector<3x32x96xbf16> to vector<1x32x96xbf16>
    %721 = vector.shape_cast %720 : vector<1x32x96xbf16> to vector<32x96xbf16>
    %722 = vector.extract_strided_slice %713 {offsets = [0, 1], sizes = [96, 128], strides = [1, 1]} : vector<96x130xbf16> to vector<96x128xbf16>
    %cst_282 = arith.constant dense<0.000000e+00> : vector<32x128xf32>
    %723 = tpu.matmul %721, %722, %cst_282 {dimension_numbers = #tpu.dot_dimension_numbers<[1], [0], [0], [1], [0, 0, 1, 1], [], []>} : vector<32x96xbf16>, vector<96x128xbf16>, vector<32x128xf32> -> vector<32x128xf32>
    %724 = arith.addf %719, %723 : vector<32x128xf32>
    %725 = vector.extract_strided_slice %1 {offsets = [2, 0, 0], sizes = [1, 32, 96], strides = [1, 1, 1]} : vector<3x32x96xbf16> to vector<1x32x96xbf16>
    %726 = vector.shape_cast %725 : vector<1x32x96xbf16> to vector<32x96xbf16>
    %727 = vector.extract_strided_slice %713 {offsets = [0, 2], sizes = [96, 128], strides = [1, 1]} : vector<96x130xbf16> to vector<96x128xbf16>
    %cst_283 = arith.constant dense<0.000000e+00> : vector<32x128xf32>
    %728 = tpu.matmul %726, %727, %cst_283 {dimension_numbers = #tpu.dot_dimension_numbers<[1], [0], [0], [1], [0, 0, 1, 1], [], []>} : vector<32x96xbf16>, vector<96x128xbf16>, vector<32x128xf32> -> vector<32x128xf32>
    %729 = arith.addf %724, %728 : vector<32x128xf32>
    %c1_i32_284 = arith.constant 1 : i32
    %730 = arith.addi %c6_i32_277, %c1_i32_284 : i32
    %c0_285 = arith.constant 0 : index
    %731 = arith.index_cast %730 : i32 to index
    %c0_286 = arith.constant 0 : index
    %c1_287 = arith.constant 1 : index
    %732 = vector.load %arg1[%c0_285, %731, %c0_286, %c1_287] : memref<1x18x32x130xf32, #tpu.memory_space<vmem>>, vector<1x1x32x128xf32>
    %733 = vector.shape_cast %732 : vector<1x1x32x128xf32> to vector<1x32x128xf32>
    %734 = vector.shape_cast %733 : vector<1x32x128xf32> to vector<32x128xf32>
    %735 = vector.broadcast %3 : vector<32x1xf32> to vector<32x128xf32>
    %736 = arith.addf %729, %735 : vector<32x128xf32>
    %737 = arith.addf %736, %734 : vector<32x128xf32>
    %cst_288 = arith.constant 0.000000e+00 : f32
    %738 = vector.broadcast %cst_288 : f32 to vector<32x128xf32>
    %739 = arith.maximumf %737, %738 : vector<32x128xf32>
    %740 = vector.shape_cast %739 : vector<32x128xf32> to vector<1x32x128xf32>
    %c0_289 = arith.constant 0 : index
    %741 = arith.index_cast %c6_i32_277 : i32 to index
    %c0_290 = arith.constant 0 : index
    %c0_291 = arith.constant 0 : index
    %742 = vector.load %arg6[%c0_289, %741, %c0_290, %c0_291] : memref<1x16x32x128xf32, #tpu.memory_space<vmem>>, vector<1x1x32x128xf32>
    %743 = vector.shape_cast %742 : vector<1x1x32x128xf32> to vector<1x32x128xf32>
    %744 = vector.shape_cast %740 : vector<1x32x128xf32> to vector<1x1x32x128xf32>
    tpu.vector_store %arg6[%c0_289, %741, %c0_290, %c0_291], %744 {strides = array<i32>} : memref<1x16x32x128xf32, #tpu.memory_space<vmem>>, vector<1x1x32x128xf32>,
    %c7_i32_292 = arith.constant 7 : i32
    %745 = arith.index_cast %c7_i32_292 : i32 to index
    %c0_293 = arith.constant 0 : index
    %c0_294 = arith.constant 0 : index
    %746 = vector.load %arg7[%745, %c0_293, %c0_294] : memref<18x32x130xbf16, #tpu.memory_space<vmem>>, vector<3x32x130xbf16>
    %747 = vector.shape_cast %746 : vector<3x32x130xbf16> to vector<96x130xbf16>
    %cst_295 = arith.constant 0.000000e+00 : f32
    %748 = vector.broadcast %cst_295 : f32 to vector<32x128xf32>
    %749 = vector.extract_strided_slice %1 {offsets = [0, 0, 0], sizes = [1, 32, 96], strides = [1, 1, 1]} : vector<3x32x96xbf16> to vector<1x32x96xbf16>
    %750 = vector.shape_cast %749 : vector<1x32x96xbf16> to vector<32x96xbf16>
    %751 = vector.extract_strided_slice %747 {offsets = [0, 0], sizes = [96, 128], strides = [1, 1]} : vector<96x130xbf16> to vector<96x128xbf16>
    %cst_296 = arith.constant dense<0.000000e+00> : vector<32x128xf32>
    %752 = tpu.matmul %750, %751, %cst_296 {dimension_numbers = #tpu.dot_dimension_numbers<[1], [0], [0], [1], [0, 0, 1, 1], [], []>} : vector<32x96xbf16>, vector<96x128xbf16>, vector<32x128xf32> -> vector<32x128xf32>
    %753 = arith.addf %748, %752 : vector<32x128xf32>
    %754 = vector.extract_strided_slice %1 {offsets = [1, 0, 0], sizes = [1, 32, 96], strides = [1, 1, 1]} : vector<3x32x96xbf16> to vector<1x32x96xbf16>
    %755 = vector.shape_cast %754 : vector<1x32x96xbf16> to vector<32x96xbf16>
    %756 = vector.extract_strided_slice %747 {offsets = [0, 1], sizes = [96, 128], strides = [1, 1]} : vector<96x130xbf16> to vector<96x128xbf16>
    %cst_297 = arith.constant dense<0.000000e+00> : vector<32x128xf32>
    %757 = tpu.matmul %755, %756, %cst_297 {dimension_numbers = #tpu.dot_dimension_numbers<[1], [0], [0], [1], [0, 0, 1, 1], [], []>} : vector<32x96xbf16>, vector<96x128xbf16>, vector<32x128xf32> -> vector<32x128xf32>
    %758 = arith.addf %753, %757 : vector<32x128xf32>
    %759 = vector.extract_strided_slice %1 {offsets = [2, 0, 0], sizes = [1, 32, 96], strides = [1, 1, 1]} : vector<3x32x96xbf16> to vector<1x32x96xbf16>
    %760 = vector.shape_cast %759 : vector<1x32x96xbf16> to vector<32x96xbf16>
    %761 = vector.extract_strided_slice %747 {offsets = [0, 2], sizes = [96, 128], strides = [1, 1]} : vector<96x130xbf16> to vector<96x128xbf16>
    %cst_298 = arith.constant dense<0.000000e+00> : vector<32x128xf32>
    %762 = tpu.matmul %760, %761, %cst_298 {dimension_numbers = #tpu.dot_dimension_numbers<[1], [0], [0], [1], [0, 0, 1, 1], [], []>} : vector<32x96xbf16>, vector<96x128xbf16>, vector<32x128xf32> -> vector<32x128xf32>
    %763 = arith.addf %758, %762 : vector<32x128xf32>
    %c1_i32_299 = arith.constant 1 : i32
    %764 = arith.addi %c7_i32_292, %c1_i32_299 : i32
    %c0_300 = arith.constant 0 : index
    %765 = arith.index_cast %764 : i32 to index
    %c0_301 = arith.constant 0 : index
    %c1_302 = arith.constant 1 : index
    %766 = vector.load %arg1[%c0_300, %765, %c0_301, %c1_302] : memref<1x18x32x130xf32, #tpu.memory_space<vmem>>, vector<1x1x32x128xf32>
    %767 = vector.shape_cast %766 : vector<1x1x32x128xf32> to vector<1x32x128xf32>
    %768 = vector.shape_cast %767 : vector<1x32x128xf32> to vector<32x128xf32>
    %769 = vector.broadcast %3 : vector<32x1xf32> to vector<32x128xf32>
    %770 = arith.addf %763, %769 : vector<32x128xf32>
    %771 = arith.addf %770, %768 : vector<32x128xf32>
    %cst_303 = arith.constant 0.000000e+00 : f32
    %772 = vector.broadcast %cst_303 : f32 to vector<32x128xf32>
    %773 = arith.maximumf %771, %772 : vector<32x128xf32>
    %774 = vector.shape_cast %773 : vector<32x128xf32> to vector<1x32x128xf32>
    %c0_304 = arith.constant 0 : index
    %775 = arith.index_cast %c7_i32_292 : i32 to index
    %c0_305 = arith.constant 0 : index
    %c0_306 = arith.constant 0 : index
    %776 = vector.load %arg6[%c0_304, %775, %c0_305, %c0_306] : memref<1x16x32x128xf32, #tpu.memory_space<vmem>>, vector<1x1x32x128xf32>
    %777 = vector.shape_cast %776 : vector<1x1x32x128xf32> to vector<1x32x128xf32>
    %778 = vector.shape_cast %774 : vector<1x32x128xf32> to vector<1x1x32x128xf32>
    tpu.vector_store %arg6[%c0_304, %775, %c0_305, %c0_306], %778 {strides = array<i32>} : memref<1x16x32x128xf32, #tpu.memory_space<vmem>>, vector<1x1x32x128xf32>,
    %c8_i32_307 = arith.constant 8 : i32
    %779 = arith.index_cast %c8_i32_307 : i32 to index
    %c0_308 = arith.constant 0 : index
    %c0_309 = arith.constant 0 : index
    %780 = vector.load %arg7[%779, %c0_308, %c0_309] : memref<18x32x130xbf16, #tpu.memory_space<vmem>>, vector<3x32x130xbf16>
    %781 = vector.shape_cast %780 : vector<3x32x130xbf16> to vector<96x130xbf16>
    %cst_310 = arith.constant 0.000000e+00 : f32
    %782 = vector.broadcast %cst_310 : f32 to vector<32x128xf32>
    %783 = vector.extract_strided_slice %1 {offsets = [0, 0, 0], sizes = [1, 32, 96], strides = [1, 1, 1]} : vector<3x32x96xbf16> to vector<1x32x96xbf16>
    %784 = vector.shape_cast %783 : vector<1x32x96xbf16> to vector<32x96xbf16>
    %785 = vector.extract_strided_slice %781 {offsets = [0, 0], sizes = [96, 128], strides = [1, 1]} : vector<96x130xbf16> to vector<96x128xbf16>
    %cst_311 = arith.constant dense<0.000000e+00> : vector<32x128xf32>
    %786 = tpu.matmul %784, %785, %cst_311 {dimension_numbers = #tpu.dot_dimension_numbers<[1], [0], [0], [1], [0, 0, 1, 1], [], []>} : vector<32x96xbf16>, vector<96x128xbf16>, vector<32x128xf32> -> vector<32x128xf32>
    %787 = arith.addf %782, %786 : vector<32x128xf32>
    %788 = vector.extract_strided_slice %1 {offsets = [1, 0, 0], sizes = [1, 32, 96], strides = [1, 1, 1]} : vector<3x32x96xbf16> to vector<1x32x96xbf16>
    %789 = vector.shape_cast %788 : vector<1x32x96xbf16> to vector<32x96xbf16>
    %790 = vector.extract_strided_slice %781 {offsets = [0, 1], sizes = [96, 128], strides = [1, 1]} : vector<96x130xbf16> to vector<96x128xbf16>
    %cst_312 = arith.constant dense<0.000000e+00> : vector<32x128xf32>
    %791 = tpu.matmul %789, %790, %cst_312 {dimension_numbers = #tpu.dot_dimension_numbers<[1], [0], [0], [1], [0, 0, 1, 1], [], []>} : vector<32x96xbf16>, vector<96x128xbf16>, vector<32x128xf32> -> vector<32x128xf32>
    %792 = arith.addf %787, %791 : vector<32x128xf32>
    %793 = vector.extract_strided_slice %1 {offsets = [2, 0, 0], sizes = [1, 32, 96], strides = [1, 1, 1]} : vector<3x32x96xbf16> to vector<1x32x96xbf16>
    %794 = vector.shape_cast %793 : vector<1x32x96xbf16> to vector<32x96xbf16>
    %795 = vector.extract_strided_slice %781 {offsets = [0, 2], sizes = [96, 128], strides = [1, 1]} : vector<96x130xbf16> to vector<96x128xbf16>
    %cst_313 = arith.constant dense<0.000000e+00> : vector<32x128xf32>
    %796 = tpu.matmul %794, %795, %cst_313 {dimension_numbers = #tpu.dot_dimension_numbers<[1], [0], [0], [1], [0, 0, 1, 1], [], []>} : vector<32x96xbf16>, vector<96x128xbf16>, vector<32x128xf32> -> vector<32x128xf32>
    %797 = arith.addf %792, %796 : vector<32x128xf32>
    %c1_i32_314 = arith.constant 1 : i32
    %798 = arith.addi %c8_i32_307, %c1_i32_314 : i32
    %c0_315 = arith.constant 0 : index
    %799 = arith.index_cast %798 : i32 to index
    %c0_316 = arith.constant 0 : index
    %c1_317 = arith.constant 1 : index
    %800 = vector.load %arg1[%c0_315, %799, %c0_316, %c1_317] : memref<1x18x32x130xf32, #tpu.memory_space<vmem>>, vector<1x1x32x128xf32>
    %801 = vector.shape_cast %800 : vector<1x1x32x128xf32> to vector<1x32x128xf32>
    %802 = vector.shape_cast %801 : vector<1x32x128xf32> to vector<32x128xf32>
    %803 = vector.broadcast %3 : vector<32x1xf32> to vector<32x128xf32>
    %804 = arith.addf %797, %803 : vector<32x128xf32>
    %805 = arith.addf %804, %802 : vector<32x128xf32>
    %cst_318 = arith.constant 0.000000e+00 : f32
    %806 = vector.broadcast %cst_318 : f32 to vector<32x128xf32>
    %807 = arith.maximumf %805, %806 : vector<32x128xf32>
    %808 = vector.shape_cast %807 : vector<32x128xf32> to vector<1x32x128xf32>
    %c0_319 = arith.constant 0 : index
    %809 = arith.index_cast %c8_i32_307 : i32 to index
    %c0_320 = arith.constant 0 : index
    %c0_321 = arith.constant 0 : index
    %810 = vector.load %arg6[%c0_319, %809, %c0_320, %c0_321] : memref<1x16x32x128xf32, #tpu.memory_space<vmem>>, vector<1x1x32x128xf32>
    %811 = vector.shape_cast %810 : vector<1x1x32x128xf32> to vector<1x32x128xf32>
    %812 = vector.shape_cast %808 : vector<1x32x128xf32> to vector<1x1x32x128xf32>
    tpu.vector_store %arg6[%c0_319, %809, %c0_320, %c0_321], %812 {strides = array<i32>} : memref<1x16x32x128xf32, #tpu.memory_space<vmem>>, vector<1x1x32x128xf32>,
    %c9_i32_322 = arith.constant 9 : i32
    %813 = arith.index_cast %c9_i32_322 : i32 to index
    %c0_323 = arith.constant 0 : index
    %c0_324 = arith.constant 0 : index
    %814 = vector.load %arg7[%813, %c0_323, %c0_324] : memref<18x32x130xbf16, #tpu.memory_space<vmem>>, vector<3x32x130xbf16>
    %815 = vector.shape_cast %814 : vector<3x32x130xbf16> to vector<96x130xbf16>
    %cst_325 = arith.constant 0.000000e+00 : f32
    %816 = vector.broadcast %cst_325 : f32 to vector<32x128xf32>
    %817 = vector.extract_strided_slice %1 {offsets = [0, 0, 0], sizes = [1, 32, 96], strides = [1, 1, 1]} : vector<3x32x96xbf16> to vector<1x32x96xbf16>
    %818 = vector.shape_cast %817 : vector<1x32x96xbf16> to vector<32x96xbf16>
    %819 = vector.extract_strided_slice %815 {offsets = [0, 0], sizes = [96, 128], strides = [1, 1]} : vector<96x130xbf16> to vector<96x128xbf16>
    %cst_326 = arith.constant dense<0.000000e+00> : vector<32x128xf32>
    %820 = tpu.matmul %818, %819, %cst_326 {dimension_numbers = #tpu.dot_dimension_numbers<[1], [0], [0], [1], [0, 0, 1, 1], [], []>} : vector<32x96xbf16>, vector<96x128xbf16>, vector<32x128xf32> -> vector<32x128xf32>
    %821 = arith.addf %816, %820 : vector<32x128xf32>
    %822 = vector.extract_strided_slice %1 {offsets = [1, 0, 0], sizes = [1, 32, 96], strides = [1, 1, 1]} : vector<3x32x96xbf16> to vector<1x32x96xbf16>
    %823 = vector.shape_cast %822 : vector<1x32x96xbf16> to vector<32x96xbf16>
    %824 = vector.extract_strided_slice %815 {offsets = [0, 1], sizes = [96, 128], strides = [1, 1]} : vector<96x130xbf16> to vector<96x128xbf16>
    %cst_327 = arith.constant dense<0.000000e+00> : vector<32x128xf32>
    %825 = tpu.matmul %823, %824, %cst_327 {dimension_numbers = #tpu.dot_dimension_numbers<[1], [0], [0], [1], [0, 0, 1, 1], [], []>} : vector<32x96xbf16>, vector<96x128xbf16>, vector<32x128xf32> -> vector<32x128xf32>
    %826 = arith.addf %821, %825 : vector<32x128xf32>
    %827 = vector.extract_strided_slice %1 {offsets = [2, 0, 0], sizes = [1, 32, 96], strides = [1, 1, 1]} : vector<3x32x96xbf16> to vector<1x32x96xbf16>
    %828 = vector.shape_cast %827 : vector<1x32x96xbf16> to vector<32x96xbf16>
    %829 = vector.extract_strided_slice %815 {offsets = [0, 2], sizes = [96, 128], strides = [1, 1]} : vector<96x130xbf16> to vector<96x128xbf16>
    %cst_328 = arith.constant dense<0.000000e+00> : vector<32x128xf32>
    %830 = tpu.matmul %828, %829, %cst_328 {dimension_numbers = #tpu.dot_dimension_numbers<[1], [0], [0], [1], [0, 0, 1, 1], [], []>} : vector<32x96xbf16>, vector<96x128xbf16>, vector<32x128xf32> -> vector<32x128xf32>
    %831 = arith.addf %826, %830 : vector<32x128xf32>
    %c1_i32_329 = arith.constant 1 : i32
    %832 = arith.addi %c9_i32_322, %c1_i32_329 : i32
    %c0_330 = arith.constant 0 : index
    %833 = arith.index_cast %832 : i32 to index
    %c0_331 = arith.constant 0 : index
    %c1_332 = arith.constant 1 : index
    %834 = vector.load %arg1[%c0_330, %833, %c0_331, %c1_332] : memref<1x18x32x130xf32, #tpu.memory_space<vmem>>, vector<1x1x32x128xf32>
    %835 = vector.shape_cast %834 : vector<1x1x32x128xf32> to vector<1x32x128xf32>
    %836 = vector.shape_cast %835 : vector<1x32x128xf32> to vector<32x128xf32>
    %837 = vector.broadcast %3 : vector<32x1xf32> to vector<32x128xf32>
    %838 = arith.addf %831, %837 : vector<32x128xf32>
    %839 = arith.addf %838, %836 : vector<32x128xf32>
    %cst_333 = arith.constant 0.000000e+00 : f32
    %840 = vector.broadcast %cst_333 : f32 to vector<32x128xf32>
    %841 = arith.maximumf %839, %840 : vector<32x128xf32>
    %842 = vector.shape_cast %841 : vector<32x128xf32> to vector<1x32x128xf32>
    %c0_334 = arith.constant 0 : index
    %843 = arith.index_cast %c9_i32_322 : i32 to index
    %c0_335 = arith.constant 0 : index
    %c0_336 = arith.constant 0 : index
    %844 = vector.load %arg6[%c0_334, %843, %c0_335, %c0_336] : memref<1x16x32x128xf32, #tpu.memory_space<vmem>>, vector<1x1x32x128xf32>
    %845 = vector.shape_cast %844 : vector<1x1x32x128xf32> to vector<1x32x128xf32>
    %846 = vector.shape_cast %842 : vector<1x32x128xf32> to vector<1x1x32x128xf32>
    tpu.vector_store %arg6[%c0_334, %843, %c0_335, %c0_336], %846 {strides = array<i32>} : memref<1x16x32x128xf32, #tpu.memory_space<vmem>>, vector<1x1x32x128xf32>,
    %c10_i32_337 = arith.constant 10 : i32
    %847 = arith.index_cast %c10_i32_337 : i32 to index
    %c0_338 = arith.constant 0 : index
    %c0_339 = arith.constant 0 : index
    %848 = vector.load %arg7[%847, %c0_338, %c0_339] : memref<18x32x130xbf16, #tpu.memory_space<vmem>>, vector<3x32x130xbf16>
    %849 = vector.shape_cast %848 : vector<3x32x130xbf16> to vector<96x130xbf16>
    %cst_340 = arith.constant 0.000000e+00 : f32
    %850 = vector.broadcast %cst_340 : f32 to vector<32x128xf32>
    %851 = vector.extract_strided_slice %1 {offsets = [0, 0, 0], sizes = [1, 32, 96], strides = [1, 1, 1]} : vector<3x32x96xbf16> to vector<1x32x96xbf16>
    %852 = vector.shape_cast %851 : vector<1x32x96xbf16> to vector<32x96xbf16>
    %853 = vector.extract_strided_slice %849 {offsets = [0, 0], sizes = [96, 128], strides = [1, 1]} : vector<96x130xbf16> to vector<96x128xbf16>
    %cst_341 = arith.constant dense<0.000000e+00> : vector<32x128xf32>
    %854 = tpu.matmul %852, %853, %cst_341 {dimension_numbers = #tpu.dot_dimension_numbers<[1], [0], [0], [1], [0, 0, 1, 1], [], []>} : vector<32x96xbf16>, vector<96x128xbf16>, vector<32x128xf32> -> vector<32x128xf32>
    %855 = arith.addf %850, %854 : vector<32x128xf32>
    %856 = vector.extract_strided_slice %1 {offsets = [1, 0, 0], sizes = [1, 32, 96], strides = [1, 1, 1]} : vector<3x32x96xbf16> to vector<1x32x96xbf16>
    %857 = vector.shape_cast %856 : vector<1x32x96xbf16> to vector<32x96xbf16>
    %858 = vector.extract_strided_slice %849 {offsets = [0, 1], sizes = [96, 128], strides = [1, 1]} : vector<96x130xbf16> to vector<96x128xbf16>
    %cst_342 = arith.constant dense<0.000000e+00> : vector<32x128xf32>
    %859 = tpu.matmul %857, %858, %cst_342 {dimension_numbers = #tpu.dot_dimension_numbers<[1], [0], [0], [1], [0, 0, 1, 1], [], []>} : vector<32x96xbf16>, vector<96x128xbf16>, vector<32x128xf32> -> vector<32x128xf32>
    %860 = arith.addf %855, %859 : vector<32x128xf32>
    %861 = vector.extract_strided_slice %1 {offsets = [2, 0, 0], sizes = [1, 32, 96], strides = [1, 1, 1]} : vector<3x32x96xbf16> to vector<1x32x96xbf16>
    %862 = vector.shape_cast %861 : vector<1x32x96xbf16> to vector<32x96xbf16>
    %863 = vector.extract_strided_slice %849 {offsets = [0, 2], sizes = [96, 128], strides = [1, 1]} : vector<96x130xbf16> to vector<96x128xbf16>
    %cst_343 = arith.constant dense<0.000000e+00> : vector<32x128xf32>
    %864 = tpu.matmul %862, %863, %cst_343 {dimension_numbers = #tpu.dot_dimension_numbers<[1], [0], [0], [1], [0, 0, 1, 1], [], []>} : vector<32x96xbf16>, vector<96x128xbf16>, vector<32x128xf32> -> vector<32x128xf32>
    %865 = arith.addf %860, %864 : vector<32x128xf32>
    %c1_i32_344 = arith.constant 1 : i32
    %866 = arith.addi %c10_i32_337, %c1_i32_344 : i32
    %c0_345 = arith.constant 0 : index
    %867 = arith.index_cast %866 : i32 to index
    %c0_346 = arith.constant 0 : index
    %c1_347 = arith.constant 1 : index
    %868 = vector.load %arg1[%c0_345, %867, %c0_346, %c1_347] : memref<1x18x32x130xf32, #tpu.memory_space<vmem>>, vector<1x1x32x128xf32>
    %869 = vector.shape_cast %868 : vector<1x1x32x128xf32> to vector<1x32x128xf32>
    %870 = vector.shape_cast %869 : vector<1x32x128xf32> to vector<32x128xf32>
    %871 = vector.broadcast %3 : vector<32x1xf32> to vector<32x128xf32>
    %872 = arith.addf %865, %871 : vector<32x128xf32>
    %873 = arith.addf %872, %870 : vector<32x128xf32>
    %cst_348 = arith.constant 0.000000e+00 : f32
    %874 = vector.broadcast %cst_348 : f32 to vector<32x128xf32>
    %875 = arith.maximumf %873, %874 : vector<32x128xf32>
    %876 = vector.shape_cast %875 : vector<32x128xf32> to vector<1x32x128xf32>
    %c0_349 = arith.constant 0 : index
    %877 = arith.index_cast %c10_i32_337 : i32 to index
    %c0_350 = arith.constant 0 : index
    %c0_351 = arith.constant 0 : index
    %878 = vector.load %arg6[%c0_349, %877, %c0_350, %c0_351] : memref<1x16x32x128xf32, #tpu.memory_space<vmem>>, vector<1x1x32x128xf32>
    %879 = vector.shape_cast %878 : vector<1x1x32x128xf32> to vector<1x32x128xf32>
    %880 = vector.shape_cast %876 : vector<1x32x128xf32> to vector<1x1x32x128xf32>
    tpu.vector_store %arg6[%c0_349, %877, %c0_350, %c0_351], %880 {strides = array<i32>} : memref<1x16x32x128xf32, #tpu.memory_space<vmem>>, vector<1x1x32x128xf32>,
    %c11_i32_352 = arith.constant 11 : i32
    %881 = arith.index_cast %c11_i32_352 : i32 to index
    %c0_353 = arith.constant 0 : index
    %c0_354 = arith.constant 0 : index
    %882 = vector.load %arg7[%881, %c0_353, %c0_354] : memref<18x32x130xbf16, #tpu.memory_space<vmem>>, vector<3x32x130xbf16>
    %883 = vector.shape_cast %882 : vector<3x32x130xbf16> to vector<96x130xbf16>
    %cst_355 = arith.constant 0.000000e+00 : f32
    %884 = vector.broadcast %cst_355 : f32 to vector<32x128xf32>
    %885 = vector.extract_strided_slice %1 {offsets = [0, 0, 0], sizes = [1, 32, 96], strides = [1, 1, 1]} : vector<3x32x96xbf16> to vector<1x32x96xbf16>
    %886 = vector.shape_cast %885 : vector<1x32x96xbf16> to vector<32x96xbf16>
    %887 = vector.extract_strided_slice %883 {offsets = [0, 0], sizes = [96, 128], strides = [1, 1]} : vector<96x130xbf16> to vector<96x128xbf16>
    %cst_356 = arith.constant dense<0.000000e+00> : vector<32x128xf32>
    %888 = tpu.matmul %886, %887, %cst_356 {dimension_numbers = #tpu.dot_dimension_numbers<[1], [0], [0], [1], [0, 0, 1, 1], [], []>} : vector<32x96xbf16>, vector<96x128xbf16>, vector<32x128xf32> -> vector<32x128xf32>
    %889 = arith.addf %884, %888 : vector<32x128xf32>
    %890 = vector.extract_strided_slice %1 {offsets = [1, 0, 0], sizes = [1, 32, 96], strides = [1, 1, 1]} : vector<3x32x96xbf16> to vector<1x32x96xbf16>
    %891 = vector.shape_cast %890 : vector<1x32x96xbf16> to vector<32x96xbf16>
    %892 = vector.extract_strided_slice %883 {offsets = [0, 1], sizes = [96, 128], strides = [1, 1]} : vector<96x130xbf16> to vector<96x128xbf16>
    %cst_357 = arith.constant dense<0.000000e+00> : vector<32x128xf32>
    %893 = tpu.matmul %891, %892, %cst_357 {dimension_numbers = #tpu.dot_dimension_numbers<[1], [0], [0], [1], [0, 0, 1, 1], [], []>} : vector<32x96xbf16>, vector<96x128xbf16>, vector<32x128xf32> -> vector<32x128xf32>
    %894 = arith.addf %889, %893 : vector<32x128xf32>
    %895 = vector.extract_strided_slice %1 {offsets = [2, 0, 0], sizes = [1, 32, 96], strides = [1, 1, 1]} : vector<3x32x96xbf16> to vector<1x32x96xbf16>
    %896 = vector.shape_cast %895 : vector<1x32x96xbf16> to vector<32x96xbf16>
    %897 = vector.extract_strided_slice %883 {offsets = [0, 2], sizes = [96, 128], strides = [1, 1]} : vector<96x130xbf16> to vector<96x128xbf16>
    %cst_358 = arith.constant dense<0.000000e+00> : vector<32x128xf32>
    %898 = tpu.matmul %896, %897, %cst_358 {dimension_numbers = #tpu.dot_dimension_numbers<[1], [0], [0], [1], [0, 0, 1, 1], [], []>} : vector<32x96xbf16>, vector<96x128xbf16>, vector<32x128xf32> -> vector<32x128xf32>
    %899 = arith.addf %894, %898 : vector<32x128xf32>
    %c1_i32_359 = arith.constant 1 : i32
    %900 = arith.addi %c11_i32_352, %c1_i32_359 : i32
    %c0_360 = arith.constant 0 : index
    %901 = arith.index_cast %900 : i32 to index
    %c0_361 = arith.constant 0 : index
    %c1_362 = arith.constant 1 : index
    %902 = vector.load %arg1[%c0_360, %901, %c0_361, %c1_362] : memref<1x18x32x130xf32, #tpu.memory_space<vmem>>, vector<1x1x32x128xf32>
    %903 = vector.shape_cast %902 : vector<1x1x32x128xf32> to vector<1x32x128xf32>
    %904 = vector.shape_cast %903 : vector<1x32x128xf32> to vector<32x128xf32>
    %905 = vector.broadcast %3 : vector<32x1xf32> to vector<32x128xf32>
    %906 = arith.addf %899, %905 : vector<32x128xf32>
    %907 = arith.addf %906, %904 : vector<32x128xf32>
    %cst_363 = arith.constant 0.000000e+00 : f32
    %908 = vector.broadcast %cst_363 : f32 to vector<32x128xf32>
    %909 = arith.maximumf %907, %908 : vector<32x128xf32>
    %910 = vector.shape_cast %909 : vector<32x128xf32> to vector<1x32x128xf32>
    %c0_364 = arith.constant 0 : index
    %911 = arith.index_cast %c11_i32_352 : i32 to index
    %c0_365 = arith.constant 0 : index
    %c0_366 = arith.constant 0 : index
    %912 = vector.load %arg6[%c0_364, %911, %c0_365, %c0_366] : memref<1x16x32x128xf32, #tpu.memory_space<vmem>>, vector<1x1x32x128xf32>
    %913 = vector.shape_cast %912 : vector<1x1x32x128xf32> to vector<1x32x128xf32>
    %914 = vector.shape_cast %910 : vector<1x32x128xf32> to vector<1x1x32x128xf32>
    tpu.vector_store %arg6[%c0_364, %911, %c0_365, %c0_366], %914 {strides = array<i32>} : memref<1x16x32x128xf32, #tpu.memory_space<vmem>>, vector<1x1x32x128xf32>,
    %c12_i32_367 = arith.constant 12 : i32
    %915 = arith.index_cast %c12_i32_367 : i32 to index
    %c0_368 = arith.constant 0 : index
    %c0_369 = arith.constant 0 : index
    %916 = vector.load %arg7[%915, %c0_368, %c0_369] : memref<18x32x130xbf16, #tpu.memory_space<vmem>>, vector<3x32x130xbf16>
    %917 = vector.shape_cast %916 : vector<3x32x130xbf16> to vector<96x130xbf16>
    %cst_370 = arith.constant 0.000000e+00 : f32
    %918 = vector.broadcast %cst_370 : f32 to vector<32x128xf32>
    %919 = vector.extract_strided_slice %1 {offsets = [0, 0, 0], sizes = [1, 32, 96], strides = [1, 1, 1]} : vector<3x32x96xbf16> to vector<1x32x96xbf16>
    %920 = vector.shape_cast %919 : vector<1x32x96xbf16> to vector<32x96xbf16>
    %921 = vector.extract_strided_slice %917 {offsets = [0, 0], sizes = [96, 128], strides = [1, 1]} : vector<96x130xbf16> to vector<96x128xbf16>
    %cst_371 = arith.constant dense<0.000000e+00> : vector<32x128xf32>
    %922 = tpu.matmul %920, %921, %cst_371 {dimension_numbers = #tpu.dot_dimension_numbers<[1], [0], [0], [1], [0, 0, 1, 1], [], []>} : vector<32x96xbf16>, vector<96x128xbf16>, vector<32x128xf32> -> vector<32x128xf32>
    %923 = arith.addf %918, %922 : vector<32x128xf32>
    %924 = vector.extract_strided_slice %1 {offsets = [1, 0, 0], sizes = [1, 32, 96], strides = [1, 1, 1]} : vector<3x32x96xbf16> to vector<1x32x96xbf16>
    %925 = vector.shape_cast %924 : vector<1x32x96xbf16> to vector<32x96xbf16>
    %926 = vector.extract_strided_slice %917 {offsets = [0, 1], sizes = [96, 128], strides = [1, 1]} : vector<96x130xbf16> to vector<96x128xbf16>
    %cst_372 = arith.constant dense<0.000000e+00> : vector<32x128xf32>
    %927 = tpu.matmul %925, %926, %cst_372 {dimension_numbers = #tpu.dot_dimension_numbers<[1], [0], [0], [1], [0, 0, 1, 1], [], []>} : vector<32x96xbf16>, vector<96x128xbf16>, vector<32x128xf32> -> vector<32x128xf32>
    %928 = arith.addf %923, %927 : vector<32x128xf32>
    %929 = vector.extract_strided_slice %1 {offsets = [2, 0, 0], sizes = [1, 32, 96], strides = [1, 1, 1]} : vector<3x32x96xbf16> to vector<1x32x96xbf16>
    %930 = vector.shape_cast %929 : vector<1x32x96xbf16> to vector<32x96xbf16>
    %931 = vector.extract_strided_slice %917 {offsets = [0, 2], sizes = [96, 128], strides = [1, 1]} : vector<96x130xbf16> to vector<96x128xbf16>
    %cst_373 = arith.constant dense<0.000000e+00> : vector<32x128xf32>
    %932 = tpu.matmul %930, %931, %cst_373 {dimension_numbers = #tpu.dot_dimension_numbers<[1], [0], [0], [1], [0, 0, 1, 1], [], []>} : vector<32x96xbf16>, vector<96x128xbf16>, vector<32x128xf32> -> vector<32x128xf32>
    %933 = arith.addf %928, %932 : vector<32x128xf32>
    %c1_i32_374 = arith.constant 1 : i32
    %934 = arith.addi %c12_i32_367, %c1_i32_374 : i32
    %c0_375 = arith.constant 0 : index
    %935 = arith.index_cast %934 : i32 to index
    %c0_376 = arith.constant 0 : index
    %c1_377 = arith.constant 1 : index
    %936 = vector.load %arg1[%c0_375, %935, %c0_376, %c1_377] : memref<1x18x32x130xf32, #tpu.memory_space<vmem>>, vector<1x1x32x128xf32>
    %937 = vector.shape_cast %936 : vector<1x1x32x128xf32> to vector<1x32x128xf32>
    %938 = vector.shape_cast %937 : vector<1x32x128xf32> to vector<32x128xf32>
    %939 = vector.broadcast %3 : vector<32x1xf32> to vector<32x128xf32>
    %940 = arith.addf %933, %939 : vector<32x128xf32>
    %941 = arith.addf %940, %938 : vector<32x128xf32>
    %cst_378 = arith.constant 0.000000e+00 : f32
    %942 = vector.broadcast %cst_378 : f32 to vector<32x128xf32>
    %943 = arith.maximumf %941, %942 : vector<32x128xf32>
    %944 = vector.shape_cast %943 : vector<32x128xf32> to vector<1x32x128xf32>
    %c0_379 = arith.constant 0 : index
    %945 = arith.index_cast %c12_i32_367 : i32 to index
    %c0_380 = arith.constant 0 : index
    %c0_381 = arith.constant 0 : index
    %946 = vector.load %arg6[%c0_379, %945, %c0_380, %c0_381] : memref<1x16x32x128xf32, #tpu.memory_space<vmem>>, vector<1x1x32x128xf32>
    %947 = vector.shape_cast %946 : vector<1x1x32x128xf32> to vector<1x32x128xf32>
    %948 = vector.shape_cast %944 : vector<1x32x128xf32> to vector<1x1x32x128xf32>
    tpu.vector_store %arg6[%c0_379, %945, %c0_380, %c0_381], %948 {strides = array<i32>} : memref<1x16x32x128xf32, #tpu.memory_space<vmem>>, vector<1x1x32x128xf32>,
    %c13_i32_382 = arith.constant 13 : i32
    %949 = arith.index_cast %c13_i32_382 : i32 to index
    %c0_383 = arith.constant 0 : index
    %c0_384 = arith.constant 0 : index
    %950 = vector.load %arg7[%949, %c0_383, %c0_384] : memref<18x32x130xbf16, #tpu.memory_space<vmem>>, vector<3x32x130xbf16>
    %951 = vector.shape_cast %950 : vector<3x32x130xbf16> to vector<96x130xbf16>
    %cst_385 = arith.constant 0.000000e+00 : f32
    %952 = vector.broadcast %cst_385 : f32 to vector<32x128xf32>
    %953 = vector.extract_strided_slice %1 {offsets = [0, 0, 0], sizes = [1, 32, 96], strides = [1, 1, 1]} : vector<3x32x96xbf16> to vector<1x32x96xbf16>
    %954 = vector.shape_cast %953 : vector<1x32x96xbf16> to vector<32x96xbf16>
    %955 = vector.extract_strided_slice %951 {offsets = [0, 0], sizes = [96, 128], strides = [1, 1]} : vector<96x130xbf16> to vector<96x128xbf16>
    %cst_386 = arith.constant dense<0.000000e+00> : vector<32x128xf32>
    %956 = tpu.matmul %954, %955, %cst_386 {dimension_numbers = #tpu.dot_dimension_numbers<[1], [0], [0], [1], [0, 0, 1, 1], [], []>} : vector<32x96xbf16>, vector<96x128xbf16>, vector<32x128xf32> -> vector<32x128xf32>
    %957 = arith.addf %952, %956 : vector<32x128xf32>
    %958 = vector.extract_strided_slice %1 {offsets = [1, 0, 0], sizes = [1, 32, 96], strides = [1, 1, 1]} : vector<3x32x96xbf16> to vector<1x32x96xbf16>
    %959 = vector.shape_cast %958 : vector<1x32x96xbf16> to vector<32x96xbf16>
    %960 = vector.extract_strided_slice %951 {offsets = [0, 1], sizes = [96, 128], strides = [1, 1]} : vector<96x130xbf16> to vector<96x128xbf16>
    %cst_387 = arith.constant dense<0.000000e+00> : vector<32x128xf32>
    %961 = tpu.matmul %959, %960, %cst_387 {dimension_numbers = #tpu.dot_dimension_numbers<[1], [0], [0], [1], [0, 0, 1, 1], [], []>} : vector<32x96xbf16>, vector<96x128xbf16>, vector<32x128xf32> -> vector<32x128xf32>
    %962 = arith.addf %957, %961 : vector<32x128xf32>
    %963 = vector.extract_strided_slice %1 {offsets = [2, 0, 0], sizes = [1, 32, 96], strides = [1, 1, 1]} : vector<3x32x96xbf16> to vector<1x32x96xbf16>
    %964 = vector.shape_cast %963 : vector<1x32x96xbf16> to vector<32x96xbf16>
    %965 = vector.extract_strided_slice %951 {offsets = [0, 2], sizes = [96, 128], strides = [1, 1]} : vector<96x130xbf16> to vector<96x128xbf16>
    %cst_388 = arith.constant dense<0.000000e+00> : vector<32x128xf32>
    %966 = tpu.matmul %964, %965, %cst_388 {dimension_numbers = #tpu.dot_dimension_numbers<[1], [0], [0], [1], [0, 0, 1, 1], [], []>} : vector<32x96xbf16>, vector<96x128xbf16>, vector<32x128xf32> -> vector<32x128xf32>
    %967 = arith.addf %962, %966 : vector<32x128xf32>
    %c1_i32_389 = arith.constant 1 : i32
    %968 = arith.addi %c13_i32_382, %c1_i32_389 : i32
    %c0_390 = arith.constant 0 : index
    %969 = arith.index_cast %968 : i32 to index
    %c0_391 = arith.constant 0 : index
    %c1_392 = arith.constant 1 : index
    %970 = vector.load %arg1[%c0_390, %969, %c0_391, %c1_392] : memref<1x18x32x130xf32, #tpu.memory_space<vmem>>, vector<1x1x32x128xf32>
    %971 = vector.shape_cast %970 : vector<1x1x32x128xf32> to vector<1x32x128xf32>
    %972 = vector.shape_cast %971 : vector<1x32x128xf32> to vector<32x128xf32>
    %973 = vector.broadcast %3 : vector<32x1xf32> to vector<32x128xf32>
    %974 = arith.addf %967, %973 : vector<32x128xf32>
    %975 = arith.addf %974, %972 : vector<32x128xf32>
    %cst_393 = arith.constant 0.000000e+00 : f32
    %976 = vector.broadcast %cst_393 : f32 to vector<32x128xf32>
    %977 = arith.maximumf %975, %976 : vector<32x128xf32>
    %978 = vector.shape_cast %977 : vector<32x128xf32> to vector<1x32x128xf32>
    %c0_394 = arith.constant 0 : index
    %979 = arith.index_cast %c13_i32_382 : i32 to index
    %c0_395 = arith.constant 0 : index
    %c0_396 = arith.constant 0 : index
    %980 = vector.load %arg6[%c0_394, %979, %c0_395, %c0_396] : memref<1x16x32x128xf32, #tpu.memory_space<vmem>>, vector<1x1x32x128xf32>
    %981 = vector.shape_cast %980 : vector<1x1x32x128xf32> to vector<1x32x128xf32>
    %982 = vector.shape_cast %978 : vector<1x32x128xf32> to vector<1x1x32x128xf32>
    tpu.vector_store %arg6[%c0_394, %979, %c0_395, %c0_396], %982 {strides = array<i32>} : memref<1x16x32x128xf32, #tpu.memory_space<vmem>>, vector<1x1x32x128xf32>,
    %c14_i32_397 = arith.constant 14 : i32
    %983 = arith.index_cast %c14_i32_397 : i32 to index
    %c0_398 = arith.constant 0 : index
    %c0_399 = arith.constant 0 : index
    %984 = vector.load %arg7[%983, %c0_398, %c0_399] : memref<18x32x130xbf16, #tpu.memory_space<vmem>>, vector<3x32x130xbf16>
    %985 = vector.shape_cast %984 : vector<3x32x130xbf16> to vector<96x130xbf16>
    %cst_400 = arith.constant 0.000000e+00 : f32
    %986 = vector.broadcast %cst_400 : f32 to vector<32x128xf32>
    %987 = vector.extract_strided_slice %1 {offsets = [0, 0, 0], sizes = [1, 32, 96], strides = [1, 1, 1]} : vector<3x32x96xbf16> to vector<1x32x96xbf16>
    %988 = vector.shape_cast %987 : vector<1x32x96xbf16> to vector<32x96xbf16>
    %989 = vector.extract_strided_slice %985 {offsets = [0, 0], sizes = [96, 128], strides = [1, 1]} : vector<96x130xbf16> to vector<96x128xbf16>
    %cst_401 = arith.constant dense<0.000000e+00> : vector<32x128xf32>
    %990 = tpu.matmul %988, %989, %cst_401 {dimension_numbers = #tpu.dot_dimension_numbers<[1], [0], [0], [1], [0, 0, 1, 1], [], []>} : vector<32x96xbf16>, vector<96x128xbf16>, vector<32x128xf32> -> vector<32x128xf32>
    %991 = arith.addf %986, %990 : vector<32x128xf32>
    %992 = vector.extract_strided_slice %1 {offsets = [1, 0, 0], sizes = [1, 32, 96], strides = [1, 1, 1]} : vector<3x32x96xbf16> to vector<1x32x96xbf16>
    %993 = vector.shape_cast %992 : vector<1x32x96xbf16> to vector<32x96xbf16>
    %994 = vector.extract_strided_slice %985 {offsets = [0, 1], sizes = [96, 128], strides = [1, 1]} : vector<96x130xbf16> to vector<96x128xbf16>
    %cst_402 = arith.constant dense<0.000000e+00> : vector<32x128xf32>
    %995 = tpu.matmul %993, %994, %cst_402 {dimension_numbers = #tpu.dot_dimension_numbers<[1], [0], [0], [1], [0, 0, 1, 1], [], []>} : vector<32x96xbf16>, vector<96x128xbf16>, vector<32x128xf32> -> vector<32x128xf32>
    %996 = arith.addf %991, %995 : vector<32x128xf32>
    %997 = vector.extract_strided_slice %1 {offsets = [2, 0, 0], sizes = [1, 32, 96], strides = [1, 1, 1]} : vector<3x32x96xbf16> to vector<1x32x96xbf16>
    %998 = vector.shape_cast %997 : vector<1x32x96xbf16> to vector<32x96xbf16>
    %999 = vector.extract_strided_slice %985 {offsets = [0, 2], sizes = [96, 128], strides = [1, 1]} : vector<96x130xbf16> to vector<96x128xbf16>
    %cst_403 = arith.constant dense<0.000000e+00> : vector<32x128xf32>
    %1000 = tpu.matmul %998, %999, %cst_403 {dimension_numbers = #tpu.dot_dimension_numbers<[1], [0], [0], [1], [0, 0, 1, 1], [], []>} : vector<32x96xbf16>, vector<96x128xbf16>, vector<32x128xf32> -> vector<32x128xf32>
    %1001 = arith.addf %996, %1000 : vector<32x128xf32>
    %c1_i32_404 = arith.constant 1 : i32
    %1002 = arith.addi %c14_i32_397, %c1_i32_404 : i32
    %c0_405 = arith.constant 0 : index
    %1003 = arith.index_cast %1002 : i32 to index
    %c0_406 = arith.constant 0 : index
    %c1_407 = arith.constant 1 : index
    %1004 = vector.load %arg1[%c0_405, %1003, %c0_406, %c1_407] : memref<1x18x32x130xf32, #tpu.memory_space<vmem>>, vector<1x1x32x128xf32>
    %1005 = vector.shape_cast %1004 : vector<1x1x32x128xf32> to vector<1x32x128xf32>
    %1006 = vector.shape_cast %1005 : vector<1x32x128xf32> to vector<32x128xf32>
    %1007 = vector.broadcast %3 : vector<32x1xf32> to vector<32x128xf32>
    %1008 = arith.addf %1001, %1007 : vector<32x128xf32>
    %1009 = arith.addf %1008, %1006 : vector<32x128xf32>
    %cst_408 = arith.constant 0.000000e+00 : f32
    %1010 = vector.broadcast %cst_408 : f32 to vector<32x128xf32>
    %1011 = arith.maximumf %1009, %1010 : vector<32x128xf32>
    %1012 = vector.shape_cast %1011 : vector<32x128xf32> to vector<1x32x128xf32>
    %c0_409 = arith.constant 0 : index
    %1013 = arith.index_cast %c14_i32_397 : i32 to index
    %c0_410 = arith.constant 0 : index
    %c0_411 = arith.constant 0 : index
    %1014 = vector.load %arg6[%c0_409, %1013, %c0_410, %c0_411] : memref<1x16x32x128xf32, #tpu.memory_space<vmem>>, vector<1x1x32x128xf32>
    %1015 = vector.shape_cast %1014 : vector<1x1x32x128xf32> to vector<1x32x128xf32>
    %1016 = vector.shape_cast %1012 : vector<1x32x128xf32> to vector<1x1x32x128xf32>
    tpu.vector_store %arg6[%c0_409, %1013, %c0_410, %c0_411], %1016 {strides = array<i32>} : memref<1x16x32x128xf32, #tpu.memory_space<vmem>>, vector<1x1x32x128xf32>,
    %c15_i32_412 = arith.constant 15 : i32
    %1017 = arith.index_cast %c15_i32_412 : i32 to index
    %c0_413 = arith.constant 0 : index
    %c0_414 = arith.constant 0 : index
    %1018 = vector.load %arg7[%1017, %c0_413, %c0_414] : memref<18x32x130xbf16, #tpu.memory_space<vmem>>, vector<3x32x130xbf16>
    %1019 = vector.shape_cast %1018 : vector<3x32x130xbf16> to vector<96x130xbf16>
    %cst_415 = arith.constant 0.000000e+00 : f32
    %1020 = vector.broadcast %cst_415 : f32 to vector<32x128xf32>
    %1021 = vector.extract_strided_slice %1 {offsets = [0, 0, 0], sizes = [1, 32, 96], strides = [1, 1, 1]} : vector<3x32x96xbf16> to vector<1x32x96xbf16>
    %1022 = vector.shape_cast %1021 : vector<1x32x96xbf16> to vector<32x96xbf16>
    %1023 = vector.extract_strided_slice %1019 {offsets = [0, 0], sizes = [96, 128], strides = [1, 1]} : vector<96x130xbf16> to vector<96x128xbf16>
    %cst_416 = arith.constant dense<0.000000e+00> : vector<32x128xf32>
    %1024 = tpu.matmul %1022, %1023, %cst_416 {dimension_numbers = #tpu.dot_dimension_numbers<[1], [0], [0], [1], [0, 0, 1, 1], [], []>} : vector<32x96xbf16>, vector<96x128xbf16>, vector<32x128xf32> -> vector<32x128xf32>
    %1025 = arith.addf %1020, %1024 : vector<32x128xf32>
    %1026 = vector.extract_strided_slice %1 {offsets = [1, 0, 0], sizes = [1, 32, 96], strides = [1, 1, 1]} : vector<3x32x96xbf16> to vector<1x32x96xbf16>
    %1027 = vector.shape_cast %1026 : vector<1x32x96xbf16> to vector<32x96xbf16>
    %1028 = vector.extract_strided_slice %1019 {offsets = [0, 1], sizes = [96, 128], strides = [1, 1]} : vector<96x130xbf16> to vector<96x128xbf16>
    %cst_417 = arith.constant dense<0.000000e+00> : vector<32x128xf32>
    %1029 = tpu.matmul %1027, %1028, %cst_417 {dimension_numbers = #tpu.dot_dimension_numbers<[1], [0], [0], [1], [0, 0, 1, 1], [], []>} : vector<32x96xbf16>, vector<96x128xbf16>, vector<32x128xf32> -> vector<32x128xf32>
    %1030 = arith.addf %1025, %1029 : vector<32x128xf32>
    %1031 = vector.extract_strided_slice %1 {offsets = [2, 0, 0], sizes = [1, 32, 96], strides = [1, 1, 1]} : vector<3x32x96xbf16> to vector<1x32x96xbf16>
    %1032 = vector.shape_cast %1031 : vector<1x32x96xbf16> to vector<32x96xbf16>
    %1033 = vector.extract_strided_slice %1019 {offsets = [0, 2], sizes = [96, 128], strides = [1, 1]} : vector<96x130xbf16> to vector<96x128xbf16>
    %cst_418 = arith.constant dense<0.000000e+00> : vector<32x128xf32>
    %1034 = tpu.matmul %1032, %1033, %cst_418 {dimension_numbers = #tpu.dot_dimension_numbers<[1], [0], [0], [1], [0, 0, 1, 1], [], []>} : vector<32x96xbf16>, vector<96x128xbf16>, vector<32x128xf32> -> vector<32x128xf32>
    %1035 = arith.addf %1030, %1034 : vector<32x128xf32>
    %c1_i32_419 = arith.constant 1 : i32
    %1036 = arith.addi %c15_i32_412, %c1_i32_419 : i32
    %c0_420 = arith.constant 0 : index
    %1037 = arith.index_cast %1036 : i32 to index
    %c0_421 = arith.constant 0 : index
    %c1_422 = arith.constant 1 : index
    %1038 = vector.load %arg1[%c0_420, %1037, %c0_421, %c1_422] : memref<1x18x32x130xf32, #tpu.memory_space<vmem>>, vector<1x1x32x128xf32>
    %1039 = vector.shape_cast %1038 : vector<1x1x32x128xf32> to vector<1x32x128xf32>
    %1040 = vector.shape_cast %1039 : vector<1x32x128xf32> to vector<32x128xf32>
    %1041 = vector.broadcast %3 : vector<32x1xf32> to vector<32x128xf32>
    %1042 = arith.addf %1035, %1041 : vector<32x128xf32>
    %1043 = arith.addf %1042, %1040 : vector<32x128xf32>
    %cst_423 = arith.constant 0.000000e+00 : f32
    %1044 = vector.broadcast %cst_423 : f32 to vector<32x128xf32>
    %1045 = arith.maximumf %1043, %1044 : vector<32x128xf32>
    %1046 = vector.shape_cast %1045 : vector<32x128xf32> to vector<1x32x128xf32>
    %c0_424 = arith.constant 0 : index
    %1047 = arith.index_cast %c15_i32_412 : i32 to index
    %c0_425 = arith.constant 0 : index
    %c0_426 = arith.constant 0 : index
    %1048 = vector.load %arg6[%c0_424, %1047, %c0_425, %c0_426] : memref<1x16x32x128xf32, #tpu.memory_space<vmem>>, vector<1x1x32x128xf32>
    %1049 = vector.shape_cast %1048 : vector<1x1x32x128xf32> to vector<1x32x128xf32>
    %1050 = vector.shape_cast %1046 : vector<1x32x128xf32> to vector<1x1x32x128xf32>
    tpu.vector_store %arg6[%c0_424, %1047, %c0_425, %c0_426], %1050 {strides = array<i32>} : memref<1x16x32x128xf32, #tpu.memory_space<vmem>>, vector<1x1x32x128xf32>,
    %c16_i32_427 = arith.constant 16 : i32
    return
  }
  func.func @transform_0(%arg0: i32) -> (i32, i32, i32, i32) {
    %c0_i32 = arith.constant 0 : i32
    %c0_i32_0 = arith.constant 0 : i32
    %c0_i32_1 = arith.constant 0 : i32
    %c0_i32_2 = arith.constant 0 : i32
    return %arg0, %c0_i32, %c0_i32_0, %c0_i32_1 : i32, i32, i32, i32
  }
  func.func @transform_1(%arg0: i32) -> (i32, i32, i32) {
    %c0_i32 = arith.constant 0 : i32
    %c0_i32_0 = arith.constant 0 : i32
    %c0_i32_1 = arith.constant 0 : i32
    %c0_i32_2 = arith.constant 0 : i32
    return %c0_i32, %c0_i32_0, %c0_i32_1 : i32, i32, i32
  }
  func.func @transform_2(%arg0: i32) -> (i32, i32) {
    %c0_i32 = arith.constant 0 : i32
    %c0_i32_0 = arith.constant 0 : i32
    %c0_i32_1 = arith.constant 0 : i32
    return %c0_i32, %c0_i32_0 : i32, i32
  }
  func.func @transform_3(%arg0: i32) -> (i32, i32, i32) {
    %c0_i32 = arith.constant 0 : i32
    %c0_i32_0 = arith.constant 0 : i32
    %c0_i32_1 = arith.constant 0 : i32
    %c0_i32_2 = arith.constant 0 : i32
    return %c0_i32, %c0_i32_0, %c0_i32_1 : i32, i32, i32
  }
  func.func @transform_4(%arg0: i32) -> (i32, i32) {
    %c0_i32 = arith.constant 0 : i32
    %c0_i32_0 = arith.constant 0 : i32
    %c0_i32_1 = arith.constant 0 : i32
    return %c0_i32, %c0_i32_0 : i32, i32
  }
  func.func @transform_5(%arg0: i32) -> (i32, i32, i32, i32) {
    %c0_i32 = arith.constant 0 : i32
    %c0_i32_0 = arith.constant 0 : i32
    %c0_i32_1 = arith.constant 0 : i32
    %c0_i32_2 = arith.constant 0 : i32
    return %arg0, %c0_i32, %c0_i32_0, %c0_i32_1 : i32, i32, i32, i32
  }
}

</mosaic_0001>

<llo_original>
// kernel: basic_block_forward.1
$region0: #{basic_block_forward.1}
  #allocation0 [shape = 'u32[]', space=smem, size = 0x4, offset = 0x4, fixed_abs, tag = 'smem constant byte address 0x4 - core index']
  #allocation1 [shape = 'u32[72,128]{1,0:T(1,128)}', space=vmem, size = 0x9000, scoped, tag = 'internal scratch']
  #allocation2 [shape = 'bf16[18,32,130]{2,1,0:T(8,128)(2,1)}', space=vmem, size = 0x48000, scoped, tag = 'scratch operand']
  %s0 = inlined_call_operand.vmem [shape: f32[2,18,32,130], index: 0, kind: input, shape index: {}]
  %s1 = inlined_call_operand.vmem [shape: bf16[3,32,96], index: 1, kind: input, shape index: {}]
  %s2 = inlined_call_operand.vmem [shape: f32[32,1], index: 2, kind: input, shape index: {}]
  %s3 = inlined_call_operand.vmem [shape: bf16[3,32,96], index: 3, kind: input, shape index: {}]
  %s4 = inlined_call_operand.vmem [shape: f32[32,1], index: 4, kind: input, shape index: {}]
  %s5 = inlined_call_operand.vmem [shape: f32[2,16,32,128], index: 5, kind: output, shape index: {}]
  %s6 = sld [smem:[#allocation0]]
  $region53: #{basic_block_forward.1} parent=0
    _
  %s8 = ssub.s32 1, %s6
  %s9 = scalar_select 0, %s8, %s6
  loop: start=0, step=1, limit=4
  $region2: #{basic_block_forward.1} parent=0 // loop_pre_header
    _
  $region3: #{basic_block_forward.1} parent=0 // loop_header
    %s11 = sphi 0, %s15
    %p12 = scmp.ge.s32.totalorder %s11, 4
    %s21 = sphi 0, %s23
    %s24 = sphi 0, %s21
    %s25 = sphi 0, %s24
    %s41 = sphi 0, %s25
    %s45 = sphi 0, %s45
    %s47 = sphi 0, %s45
    %s48 = sphi 0, %s47
    %s62 = sphi 0, %s48
    %s66 = sphi 0, %s66
    %s68 = sphi 0, %s66
    %s69 = sphi 0, %s68
    %s83 = sphi 0, %s69
    %s87 = sphi 0, %s87
    %s89 = sphi 0, %s87
    %s90 = sphi 0, %s89
    %s104 = sphi 0, %s90
    %s108 = sphi 0, %s108
    %s110 = sphi 0, %s108
    %s111 = sphi 0, %s110
    %s125 = sphi 0, %s111
    %s131 = sphi 0, %s133
    %s134 = sphi 0, %s131
    %s135 = sphi 0, %s134
    %s151 = sphi 0, %s135
  $region4: #{basic_block_forward.1} parent=0 // loop_header_branch
    %14 = sbr.rel (%p12) target = $region8
  $region5: #{basic_block_forward.1} parent=0 // loop_body
    %s16 = ssub.s32 %s11, 1
    %s17 = ssub.s32 %s11, 2
    %s18 = sadd.s32 %s11, 1
    %s19 = ssub.s32 %s11, %s18
    %p20 = scmp.eq.s32.totalorder %s19, 0
    %s22 = sadd.s32 %s21, 1
    %s23 = scalar_select %p20, %s21, %s22
    %p26 = pneg %p20
    %p27 = scmp.eq.s32.totalorder %s11, 1
    %p28 = por %p26, %p27
    %p29 = scmp.ne.s32.totalorder %s21, %s24
    %p30 = scmp.eq.s32.totalorder %s11, 0
    %p31 = por %p29, %p30
    %p32 = scmp.ne.s32.totalorder %s21, %s24
    %p33 = scmp.eq.s32.totalorder %s16, 1
    %p34 = por %p32, %p33
    %p35 = scmp.ne.s32.totalorder %s24, %s25
    %p36 = scmp.eq.s32.totalorder %s16, 0
    %p37 = por %p35, %p36
    %p38 = scmp.ne.s32.totalorder %s24, %s25
    %p39 = scmp.eq.s32.totalorder %s17, 1
    %p40 = por %p38, %p39
    %p42 = scmp.ne.s32.totalorder %s25, %s41
    %p43 = scmp.eq.s32.totalorder %s17, 0
    %p44 = por %p42, %p43
    %s46 = sadd.s32 %s45, 1
    %p49 = scmp.eq.s32.totalorder %s11, 1
    %p50 = scmp.ne.s32.totalorder %s45, %s47
    %p51 = scmp.eq.s32.totalorder %s11, 0
    %p52 = por %p50, %p51
    %p53 = scmp.ne.s32.totalorder %s45, %s47
    %p54 = scmp.eq.s32.totalorder %s16, 1
    %p55 = por %p53, %p54
    %p56 = scmp.ne.s32.totalorder %s47, %s48
    %p57 = scmp.eq.s32.totalorder %s16, 0
    %p58 = por %p56, %p57
    %p59 = scmp.ne.s32.totalorder %s47, %s48
    %p60 = scmp.eq.s32.totalorder %s17, 1
    %p61 = por %p59, %p60
    %p63 = scmp.ne.s32.totalorder %s48, %s62
    %p64 = scmp.eq.s32.totalorder %s17, 0
    %p65 = por %p63, %p64
    %s67 = sadd.s32 %s66, 1
    %p70 = scmp.eq.s32.totalorder %s11, 1
    %p71 = scmp.ne.s32.totalorder %s66, %s68
    %p72 = scmp.eq.s32.totalorder %s11, 0
    %p73 = por %p71, %p72
    %p74 = scmp.ne.s32.totalorder %s66, %s68
    %p75 = scmp.eq.s32.totalorder %s16, 1
    %p76 = por %p74, %p75
    %p77 = scmp.ne.s32.totalorder %s68, %s69
    %p78 = scmp.eq.s32.totalorder %s16, 0
    %p79 = por %p77, %p78
    %p80 = scmp.ne.s32.totalorder %s68, %s69
    %p81 = scmp.eq.s32.totalorder %s17, 1
    %p82 = por %p80, %p81
    %p84 = scmp.ne.s32.totalorder %s69, %s83
    %p85 = scmp.eq.s32.totalorder %s17, 0
    %p86 = por %p84, %p85
    %s88 = sadd.s32 %s87, 1
    %p91 = scmp.eq.s32.totalorder %s11, 1
    %p92 = scmp.ne.s32.totalorder %s87, %s89
    %p93 = scmp.eq.s32.totalorder %s11, 0
    %p94 = por %p92, %p93
    %p95 = scmp.ne.s32.totalorder %s87, %s89
    %p96 = scmp.eq.s32.totalorder %s16, 1
    %p97 = por %p95, %p96
    %p98 = scmp.ne.s32.totalorder %s89, %s90
    %p99 = scmp.eq.s32.totalorder %s16, 0
    %p100 = por %p98, %p99
    %p101 = scmp.ne.s32.totalorder %s89, %s90
    %p102 = scmp.eq.s32.totalorder %s17, 1
    %p103 = por %p101, %p102
    %p105 = scmp.ne.s32.totalorder %s90, %s104
    %p106 = scmp.eq.s32.totalorder %s17, 0
    %p107 = por %p105, %p106
    %s109 = sadd.s32 %s108, 1
    %p112 = scmp.eq.s32.totalorder %s11, 1
    %p113 = scmp.ne.s32.totalorder %s108, %s110
    %p114 = scmp.eq.s32.totalorder %s11, 0
    %p115 = por %p113, %p114
    %p116 = scmp.ne.s32.totalorder %s108, %s110
    %p117 = scmp.eq.s32.totalorder %s16, 1
    %p118 = por %p116, %p117
    %p119 = scmp.ne.s32.totalorder %s110, %s111
    %p120 = scmp.eq.s32.totalorder %s16, 0
    %p121 = por %p119, %p120
    %p122 = scmp.ne.s32.totalorder %s110, %s111
    %p123 = scmp.eq.s32.totalorder %s17, 1
    %p124 = por %p122, %p123
    %p126 = scmp.ne.s32.totalorder %s111, %s125
    %p127 = scmp.eq.s32.totalorder %s17, 0
    %p128 = por %p126, %p127
    %s129 = ssub.s32 %s11, %s18
    %p130 = scmp.eq.s32.totalorder %s129, 0
    %s132 = sadd.s32 %s131, 1
    %s133 = scalar_select %p130, %s131, %s132
    %p136 = pneg %p130
    %p137 = scmp.eq.s32.totalorder %s11, 1
    %p138 = por %p136, %p137
    %p139 = scmp.ne.s32.totalorder %s131, %s134
    %p140 = scmp.eq.s32.totalorder %s11, 0
    %p141 = por %p139, %p140
    %p142 = scmp.ne.s32.totalorder %s131, %s134
    %p143 = scmp.eq.s32.totalorder %s16, 1
    %p144 = por %p142, %p143
    %p145 = scmp.ne.s32.totalorder %s134, %s135
    %p146 = scmp.eq.s32.totalorder %s16, 0
    %p147 = por %p145, %p146
    %p148 = scmp.ne.s32.totalorder %s134, %s135
    %p149 = scmp.eq.s32.totalorder %s17, 1
    %p150 = por %p148, %p149
    %p152 = scmp.ne.s32.totalorder %s135, %s151
    %p153 = scmp.eq.s32.totalorder %s17, 0
    %p154 = por %p152, %p153
    %p155 = scmp.le.s32.totalorder 1, %s11
    %p156 = scmp.lt.s32.totalorder %s11, 3
    %p157 = pnand %p155, %p156
    %p158 = pneg %p157
    // Predicated region
    $region9: #{basic_block_forward.1} parent=5 // pred_check
      _
    $region10: #{basic_block_forward.1} parent=5 // pred_check_branch
      %160 = sbr.rel (%p157) target = $region12
    $region11: #{basic_block_forward.1} parent=5 // pred_region
      %s161 = ssub.s32 %s11, 1
      // Predicated region
      $region13: #{basic_block_forward.1} parent=11 // pred_check
        %p162 = pneg %p58
      $region14: #{basic_block_forward.1} parent=11 // pred_check_branch
        %164 = sbr.rel (%p162) target = $region16
      $region15: #{basic_block_forward.1} parent=11 // pred_region
        _
      $region16: #{basic_block_forward.1} parent=11 // pred_fallthru
        _
      // Predicated region
      $region17: #{basic_block_forward.1} parent=11 // pred_check
        %p165 = pneg %p79
      $region18: #{basic_block_forward.1} parent=11 // pred_check_branch
        %167 = sbr.rel (%p165) target = $region20
      $region19: #{basic_block_forward.1} parent=11 // pred_region
        _
      $region20: #{basic_block_forward.1} parent=11 // pred_fallthru
        _
      // Predicated region
      $region21: #{basic_block_forward.1} parent=11 // pred_check
        %p168 = pneg %p100
      $region22: #{basic_block_forward.1} parent=11 // pred_check_branch
        %170 = sbr.rel (%p168) target = $region24
      $region23: #{basic_block_forward.1} parent=11 // pred_region
        _
      $region24: #{basic_block_forward.1} parent=11 // pred_fallthru
        _
      // Predicated region
      $region25: #{basic_block_forward.1} parent=11 // pred_check
        %p171 = pneg %p121
      $region26: #{basic_block_forward.1} parent=11 // pred_check_branch
        %173 = sbr.rel (%p171) target = $region28
      $region27: #{basic_block_forward.1} parent=11 // pred_region
        _
      $region28: #{basic_block_forward.1} parent=11 // pred_fallthru
        _
    $region12: #{basic_block_forward.1} parent=5 // pred_fallthru
      _
    %p174 = scmp.lt.s32.totalorder %s11, 2
    // Predicated region
    $region29: #{basic_block_forward.1} parent=5 // pred_check
      %p175 = pneg %p174
    $region30: #{basic_block_forward.1} parent=5 // pred_check_branch
      %177 = sbr.rel (%p175) target = $region32
    $region31: #{basic_block_forward.1} parent=5 // pred_region
      // Predicated region
      $region33: #{basic_block_forward.1} parent=31 // pred_check
        %p178 = pneg %p31
      $region34: #{basic_block_forward.1} parent=31 // pred_check_branch
        %180 = sbr.rel (%p178) target = $region36
      $region35: #{basic_block_forward.1} parent=31 // pred_region
        %p181 = scmp.lt.s32.totalorder %s11, 1
        %s182 = scalar_select %p181, %s11, 1
        %s183 = smul.addr %s182, 144
        %s184 = smul.addr %s183, 8
        %s185 = scalar_lea.vmem %s0, %s184
      $region36: #{basic_block_forward.1} parent=31 // pred_fallthru
        _
    $region32: #{basic_block_forward.1} parent=5 // pred_fallthru
      _
    %p186 = scmp.le.s32.totalorder 1, %s11
    %p187 = scmp.lt.s32.totalorder %s11, 3
    %p188 = pnand %p186, %p187
    %p189 = pneg %p188
    // Predicated region
    $region37: #{basic_block_forward.1} parent=5 // pred_check
      _
    $region38: #{basic_block_forward.1} parent=5 // pred_check_branch
      %191 = sbr.rel (%p188) target = $region40
    $region39: #{basic_block_forward.1} parent=5 // pred_region
      %s192 = ssub.s32 %s11, 1
      %p193 = scmp.lt.s32.totalorder %s16, 1
      %s194 = scalar_select %p193, %s16, 1
      %s195 = smul.addr %s194, 144
      %s196 = smul.addr %s195, 8
      %s197 = scalar_lea.vmem %s0, %s196
      %p198 = pneg %p37
      %p199 = pneg %p34
      %p200 = pneg %p58
      %p201 = pneg %p55
      %p202 = pneg %p79
      %p203 = pneg %p76
      %p204 = pneg %p100
      %p205 = pneg %p97
      %p206 = pneg %p121
      %p207 = pneg %p118
      %p208 = pneg %p147
      %p209 = pneg %p144
      %p210 = scmp.lt.s32.totalorder %s16, 1
      %s211 = scalar_select %p210, %s16, 1
      %s212 = smul.addr %s211, 64
      %s213 = smul.addr %s212, 8
      %s214 = scalar_lea.vmem %s5, %s213
      %p215 = scmp.lt.s32.totalorder %s16, 1
      %s216 = scalar_select %p215, %s16, 1
      %s217 = smul.addr %s216, 144
      %s218 = smul.addr %s217, 8
      %s219 = scalar_lea.vmem %s0, %s218
      %p220 = scmp.lt.s32.totalorder %s16, 1
      %s221 = scalar_select %p220, %s16, 1
      %s222 = smul.addr %s221, 64
      %s223 = smul.addr %s222, 8
      %s224 = scalar_lea.vmem %s5, %s223
      %v226 = vld [vmem:[%s1] sm:$0xf]
      %v227 = vld [vmem:[%s1 + $0x4] sm:$0xf]
      %v228 = vld [vmem:[%s1 + $0x8] sm:$0xf]
      %v229 = vld [vmem:[%s1 + $0xc] sm:$0xf]
      %v230 = vld [vmem:[%s1 + $0x10] sm:$0xf]
      %v231 = vld [vmem:[%s1 + $0x14] sm:$0xf]
      %v232 = vld [vmem:[%s1 + $0x18] sm:$0xf]
      %v233 = vld [vmem:[%s1 + $0x1c] sm:$0xf]
      %v234 = vld [vmem:[%s1 + $0x20] sm:$0xf]
      %v235 = vld [vmem:[%s1 + $0x24] sm:$0xf]
      %v236 = vld [vmem:[%s1 + $0x28] sm:$0xf]
      %v237 = vld [vmem:[%s1 + $0x2c] sm:$0xf]
      %v238 = vld [vmem:[%s3] sm:$0xf]
      %v239 = vld [vmem:[%s3 + $0x4] sm:$0xf]
      %v240 = vld [vmem:[%s3 + $0x8] sm:$0xf]
      %v241 = vld [vmem:[%s3 + $0xc] sm:$0xf]
      %v242 = vld [vmem:[%s3 + $0x10] sm:$0xf]
      %v243 = vld [vmem:[%s3 + $0x14] sm:$0xf]
      %v244 = vld [vmem:[%s3 + $0x18] sm:$0xf]
      %v245 = vld [vmem:[%s3 + $0x1c] sm:$0xf]
      %v246 = vld [vmem:[%s3 + $0x20] sm:$0xf]
      %v247 = vld [vmem:[%s3 + $0x24] sm:$0xf]
      %v248 = vld [vmem:[%s3 + $0x28] sm:$0xf]
      %v249 = vld [vmem:[%s3 + $0x2c] sm:$0xf]
      %v250 = vld [vmem:[%s2] sm:$0xff]
      %v251 = vld [vmem:[%s2 + $0x8] sm:$0xff]
      %v252 = vld [vmem:[%s2 + $0x10] sm:$0xff]
      %v253 = vld [vmem:[%s2 + $0x18] sm:$0xff]
      %v254 = vld [vmem:[%s4] sm:$0xff]
      %v255 = vld [vmem:[%s4 + $0x8] sm:$0xff]
      %v256 = vld [vmem:[%s4 + $0x10] sm:$0xff]
      %v257 = vld [vmem:[%s4 + $0x18] sm:$0xff]
      %v258 = vlaneseq
      %v259 = vand.u32 %v258, 127
      %vm260 = vcmp.lt.s32.totalorder %v259, 100
      %v261 = vsel %vm260, 1, 0
      %v262 = vcvt.s32.f32 %v261
      %vm263 = vcmask 1043456
      %vm264 = vcmask 15364
      %vm265 = vmor %vm264, %vm263
      %266 = vst.msk [vmem:[#allocation2] sm:$0xff] %vm265, 0
      %267 = vst.msk [vmem:[#allocation2 + $0x8] sm:$0xff] %vm265, 0
      %268 = vst.msk [vmem:[#allocation2 + $0x10] sm:$0xff] %vm265, 0
      %269 = vst.msk [vmem:[#allocation2 + $0x18] sm:$0xff] %vm265, 0
      %270 = vst.msk [vmem:[#allocation2 + $0x20] sm:$0xff] %vm265, 0
      %271 = vst.msk [vmem:[#allocation2 + $0x28] sm:$0xff] %vm265, 0
      %272 = vst.msk [vmem:[#allocation2 + $0x30] sm:$0xff] %vm265, 0
      %273 = vst.msk [vmem:[#allocation2 + $0x38] sm:$0xff] %vm265, 0
      %274 = vst.msk [vmem:[#allocation2 + $0x40] sm:$0xff] %vm265, 0
      %275 = vst.msk [vmem:[#allocation2 + $0x48] sm:$0xff] %vm265, 0
      %276 = vst.msk [vmem:[#allocation2 + $0x50] sm:$0xff] %vm265, 0
      %277 = vst.msk [vmem:[#allocation2 + $0x58] sm:$0xff] %vm265, 0
      %278 = vst.msk [vmem:[#allocation2 + $0x60] sm:$0xff] %vm265, 0
      %279 = vst.msk [vmem:[#allocation2 + $0x68] sm:$0xff] %vm265, 0
      %280 = vst.msk [vmem:[#allocation2 + $0x70] sm:$0xff] %vm265, 0
      %281 = vst.msk [vmem:[#allocation2 + $0x78] sm:$0xff] %vm265, 0
      %282 = vst.msk [vmem:[#allocation2 + $0x80] sm:$0xff] %vm265, 0
      %283 = vst.msk [vmem:[#allocation2 + $0x88] sm:$0xff] %vm265, 0
      %284 = vst.msk [vmem:[#allocation2 + $0x90] sm:$0xff] %vm265, 0
      %285 = vst.msk [vmem:[#allocation2 + $0x98] sm:$0xff] %vm265, 0
      %286 = vst.msk [vmem:[#allocation2 + $0xa0] sm:$0xff] %vm265, 0
      %287 = vst.msk [vmem:[#allocation2 + $0xa8] sm:$0xff] %vm265, 0
      %288 = vst.msk [vmem:[#allocation2 + $0xb0] sm:$0xff] %vm265, 0
      %289 = vst.msk [vmem:[#allocation2 + $0xb8] sm:$0xff] %vm265, 0
      %290 = vst.msk [vmem:[#allocation2 + $0xc0] sm:$0xff] %vm265, 0
      %291 = vst.msk [vmem:[#allocation2 + $0xc8] sm:$0xff] %vm265, 0
      %292 = vst.msk [vmem:[#allocation2 + $0xd0] sm:$0xff] %vm265, 0
      %293 = vst.msk [vmem:[#allocation2 + $0xd8] sm:$0xff] %vm265, 0
      %294 = vst.msk [vmem:[#allocation2 + $0xe0] sm:$0xff] %vm265, 0
      %295 = vst.msk [vmem:[#allocation2 + $0xe8] sm:$0xff] %vm265, 0
      %296 = vst.msk [vmem:[#allocation2 + $0xf0] sm:$0xff] %vm265, 0
      %297 = vst.msk [vmem:[#allocation2 + $0xf8] sm:$0xff] %vm265, 0
      %298 = vst.msk [vmem:[#allocation2 + $0x100] sm:$0xff] %vm265, 0
      %299 = vst.msk [vmem:[#allocation2 + $0x108] sm:$0xff] %vm265, 0
      %300 = vst.msk [vmem:[#allocation2 + $0x110] sm:$0xff] %vm265, 0
      %301 = vst.msk [vmem:[#allocation2 + $0x118] sm:$0xff] %vm265, 0
      %302 = vst.msk [vmem:[#allocation2 + $0x120] sm:$0xff] %vm265, 0
      %303 = vst.msk [vmem:[#allocation2 + $0x128] sm:$0xff] %vm265, 0
      %304 = vst.msk [vmem:[#allocation2 + $0x130] sm:$0xff] %vm265, 0
      %305 = vst.msk [vmem:[#allocation2 + $0x138] sm:$0xff] %vm265, 0
      %306 = vst.msk [vmem:[#allocation2 + $0x140] sm:$0xff] %vm265, 0
      %307 = vst.msk [vmem:[#allocation2 + $0x148] sm:$0xff] %vm265, 0
      %308 = vst.msk [vmem:[#allocation2 + $0x150] sm:$0xff] %vm265, 0
      %309 = vst.msk [vmem:[#allocation2 + $0x158] sm:$0xff] %vm265, 0
      %310 = vst.msk [vmem:[#allocation2 + $0x160] sm:$0xff] %vm265, 0
      %311 = vst.msk [vmem:[#allocation2 + $0x168] sm:$0xff] %vm265, 0
      %312 = vst.msk [vmem:[#allocation2 + $0x170] sm:$0xff] %vm265, 0
      %313 = vst.msk [vmem:[#allocation2 + $0x178] sm:$0xff] %vm265, 0
      %314 = vst.msk [vmem:[#allocation2 + $0x180] sm:$0xff] %vm265, 0
      %315 = vst.msk [vmem:[#allocation2 + $0x188] sm:$0xff] %vm265, 0
      %316 = vst.msk [vmem:[#allocation2 + $0x190] sm:$0xff] %vm265, 0
      %317 = vst.msk [vmem:[#allocation2 + $0x198] sm:$0xff] %vm265, 0
      %318 = vst.msk [vmem:[#allocation2 + $0x1a0] sm:$0xff] %vm265, 0
      %319 = vst.msk [vmem:[#allocation2 + $0x1a8] sm:$0xff] %vm265, 0
      %320 = vst.msk [vmem:[#allocation2 + $0x1b0] sm:$0xff] %vm265, 0
      %321 = vst.msk [vmem:[#allocation2 + $0x1b8] sm:$0xff] %vm265, 0
      %322 = vst.msk [vmem:[#allocation2 + $0x1c0] sm:$0xff] %vm265, 0
      %323 = vst.msk [vmem:[#allocation2 + $0x1c8] sm:$0xff] %vm265, 0
      %324 = vst.msk [vmem:[#allocation2 + $0x1d0] sm:$0xff] %vm265, 0
      %325 = vst.msk [vmem:[#allocation2 + $0x1d8] sm:$0xff] %vm265, 0
      %326 = vst.msk [vmem:[#allocation2 + $0x1e0] sm:$0xff] %vm265, 0
      %327 = vst.msk [vmem:[#allocation2 + $0x1e8] sm:$0xff] %vm265, 0
      %328 = vst.msk [vmem:[#allocation2 + $0x1f0] sm:$0xff] %vm265, 0
      %329 = vst.msk [vmem:[#allocation2 + $0x1f8] sm:$0xff] %vm265, 0
      %330 = vst.msk [vmem:[#allocation2 + $0x200] sm:$0xff] %vm265, 0
      %331 = vst.msk [vmem:[#allocation2 + $0x208] sm:$0xff] %vm265, 0
      %332 = vst.msk [vmem:[#allocation2 + $0x210] sm:$0xff] %vm265, 0
      %333 = vst.msk [vmem:[#allocation2 + $0x218] sm:$0xff] %vm265, 0
      %334 = vst.msk [vmem:[#allocation2 + $0x220] sm:$0xff] %vm265, 0
      %335 = vst.msk [vmem:[#allocation2 + $0x228] sm:$0xff] %vm265, 0
      %336 = vst.msk [vmem:[#allocation2 + $0x230] sm:$0xff] %vm265, 0
      %337 = vst.msk [vmem:[#allocation2 + $0x238] sm:$0xff] %vm265, 0
      %v338 = vld [vmem:[%s219] sm:$0xff]
      %v339 = vld [vmem:[%s219 + $0x8] sm:$0xff]
      %v340 = vld [vmem:[%s219 + $0x10] sm:$0xff]
      %v341 = vld [vmem:[%s219 + $0x18] sm:$0xff]
      %v342 = vld [vmem:[%s219 + $0x20] sm:$0xff]
      %v343 = vld [vmem:[%s219 + $0x28] sm:$0xff]
      %v344 = vld [vmem:[%s219 + $0x30] sm:$0xff]
      %v345 = vld [vmem:[%s219 + $0x38] sm:$0xff]
      %v346 = vld [vmem:[%s219 + $0x40] sm:$0xff]
      %v347 = vld [vmem:[%s219 + $0x48] sm:$0xff]
      %v348 = vld [vmem:[%s219 + $0x50] sm:$0xff]
      %v349 = vld [vmem:[%s219 + $0x58] sm:$0xff]
      %v350 = vld [vmem:[%s219 + $0x60] sm:$0xff]
      %v351 = vld [vmem:[%s219 + $0x68] sm:$0xff]
      %v352 = vld [vmem:[%s219 + $0x70] sm:$0xff]
      %v353 = vld [vmem:[%s219 + $0x78] sm:$0xff]
      %v354 = vld [vmem:[%s219 + $0x80] sm:$0xff]
      %v355 = vld [vmem:[%s219 + $0x88] sm:$0xff]
      %v356 = vld [vmem:[%s219 + $0x90] sm:$0xff]
      %v357 = vld [vmem:[%s219 + $0x98] sm:$0xff]
      %v358 = vld [vmem:[%s219 + $0xa0] sm:$0xff]
      %v359 = vld [vmem:[%s219 + $0xa8] sm:$0xff]
      %v360 = vld [vmem:[%s219 + $0xb0] sm:$0xff]
      %v361 = vld [vmem:[%s219 + $0xb8] sm:$0xff]
      %v362 = vpack.c.bf16 %v339, %v338
      %v363 = vpack.c.bf16 %v341, %v340
      %v364 = vpack.c.bf16 %v343, %v342
      %v365 = vpack.c.bf16 %v345, %v344
      %v366 = vpack.c.bf16 %v347, %v346
      %v367 = vpack.c.bf16 %v349, %v348
      %v368 = vpack.c.bf16 %v351, %v350
      %v369 = vpack.c.bf16 %v353, %v352
      %v370 = vpack.c.bf16 %v355, %v354
      %v371 = vpack.c.bf16 %v357, %v356
      %v372 = vpack.c.bf16 %v359, %v358
      %v373 = vpack.c.bf16 %v361, %v360
      %v378 = vunpack.c.l.b16 %v230
      %v379 = vunpack.c.l.b16 %v231
      %v380 = vunpack.c.l.b16 %v232
      %v381 = vunpack.c.l.b16 %v233
      %v382 = vpack.c.b16 %v379, %v378
      %v383 = vpack.c.b16 %v381, %v380
      %v396 = vunpack.c.l.b16 %v362
      %v397 = vunpack.c.h.b16 %v362
      %v398 = vunpack.c.l.b16 %v363
      %v399 = vunpack.c.h.b16 %v363
      %v400 = vunpack.c.l.b16 %v364
      %v401 = vunpack.c.h.b16 %v364
      %v402 = vunpack.c.l.b16 %v365
      %v403 = vunpack.c.h.b16 %v365
      %v404 = vunpack.c.l.b16 %v366
      %v405 = vunpack.c.h.b16 %v366
      %v406 = vunpack.c.l.b16 %v367
      %v407 = vunpack.c.h.b16 %v367
      %v408 = vunpack.c.l.b16 %v368
      %v409 = vunpack.c.h.b16 %v368
      %v410 = vunpack.c.l.b16 %v369
      %v411 = vunpack.c.h.b16 %v369
      %v412 = vunpack.c.l.b16 %v370
      %v413 = vunpack.c.h.b16 %v370
      %v414 = vunpack.c.l.b16 %v371
      %v415 = vunpack.c.h.b16 %v371
      %v416 = vunpack.c.l.b16 %v372
      %v417 = vunpack.c.h.b16 %v372
      %v418 = vunpack.c.l.b16 %v373
      %v419 = vunpack.c.h.b16 %v373
      %v420 = vpack.c.b16 %v398, %v396
      %v421 = vpack.c.b16 %v399, %v397
      %v422 = vpack.c.b16 %v402, %v400
      %v423 = vpack.c.b16 %v403, %v401
      %v424 = vpack.c.b16 %v406, %v404
      %v425 = vpack.c.b16 %v407, %v405
      %v426 = vpack.c.b16 %v410, %v408
      %v427 = vpack.c.b16 %v411, %v409
      %v428 = vpack.c.b16 %v414, %v412
      %v429 = vpack.c.b16 %v415, %v413
      %v430 = vpack.c.b16 %v418, %v416
      %v431 = vpack.c.b16 %v419, %v417
      %432 = vrot.lane.b32.xlu0 %v420, 127
      %v433 = vpop.permute.xlu0 %432
      %434 = vrot.lane.b32.xlu0 %v421, 127
      %v435 = vpop.permute.xlu0 %434
      %436 = vrot.lane.b32.xlu0 %v422, 127
      %v437 = vpop.permute.xlu0 %436
      %438 = vrot.lane.b32.xlu0 %v423, 127
      %v439 = vpop.permute.xlu0 %438
      %440 = vrot.lane.b32.xlu0 %v424, 127
      %v441 = vpop.permute.xlu0 %440
      %442 = vrot.lane.b32.xlu0 %v425, 127
      %v443 = vpop.permute.xlu0 %442
      %444 = vrot.lane.b32.xlu0 %v426, 127
      %v445 = vpop.permute.xlu0 %444
      %446 = vrot.lane.b32.xlu0 %v427, 127
      %v447 = vpop.permute.xlu0 %446
      %448 = vrot.lane.b32.xlu0 %v428, 127
      %v449 = vpop.permute.xlu0 %448
      %450 = vrot.lane.b32.xlu0 %v429, 127
      %v451 = vpop.permute.xlu0 %450
      %452 = vrot.lane.b32.xlu0 %v430, 127
      %v453 = vpop.permute.xlu0 %452
      %454 = vrot.lane.b32.xlu0 %v431, 127
      %v455 = vpop.permute.xlu0 %454
      %vm456 = vcmask 1039360
      %v457 = vsel %vm456, %v433, %v435
      %v458 = vsel %vm456, %v437, %v439
      %v459 = vsel %vm456, %v441, %v443
      %v460 = vsel %vm456, %v445, %v447
      %v461 = vsel %vm456, %v449, %v451
      %v462 = vsel %vm456, %v453, %v455
      %vm469 = vcmask 785408
      %v471 = vsel %vm469, %v382, 0
      %v474 = vsel %vm469, %v383, 0
      %476 = vmatpush.bf16.msra.mxu0 0
      %477 = vmatpush.bf16.msra.mxu0 0
      %478 = vmatpush.bf16.msra.mxu0 %v462
      %479 = vmatpush.bf16.msra.mxu0 %v461
      %480 = vmatpush.bf16.msra.mxu0 %v460
      %481 = vmatpush.bf16.msra.mxu0 %v459
      %482 = vmatpush.bf16.msra.mxu0 %v458
      %483 = vmatpush.bf16.msra.mxu0 %v457
      %484 = vmatmul.bf16.gmra.mxu0 %v471
      %v485 = vpop.f32.mrf.mxu0
      %v486 = vadd.f32 0.0, %v485
      %v487 = vpop.f32.mrf.mxu0
      %v488 = vadd.f32 0.0, %v487
      %489 = vmatmul.bf16.gmra.mxu0 %v474
      %v490 = vpop.f32.mrf.mxu0
      %v491 = vadd.f32 0.0, %v490
      %v492 = vpop.f32.mrf.mxu0
      %v493 = vadd.f32 0.0, %v492
      %494 = vdwg.mxu0
      %v499 = vunpack.c.l.b16 %v226
      %v500 = vunpack.c.l.b16 %v227
      %v501 = vunpack.c.l.b16 %v228
      %v502 = vunpack.c.l.b16 %v229
      %v503 = vpack.c.b16 %v500, %v499
      %v504 = vpack.c.b16 %v502, %v501
      %v512 = vsel %vm469, %v503, 0
      %v515 = vsel %vm469, %v504, 0
      %517 = vmatpush.bf16.msra.mxu0 0
      %518 = vmatpush.bf16.msra.mxu0 0
      %519 = vmatpush.bf16.msra.mxu0 %v430
      %520 = vmatpush.bf16.msra.mxu0 %v428
      %521 = vmatpush.bf16.msra.mxu0 %v426
      %522 = vmatpush.bf16.msra.mxu0 %v424
      %523 = vmatpush.bf16.msra.mxu0 %v422
      %524 = vmatpush.bf16.msra.mxu0 %v420
      %525 = vmatmul.bf16.gmra.mxu0 %v512
      %v526 = vpop.f32.mrf.mxu0
      %v527 = vadd.f32 %v486, %v526
      %v528 = vpop.f32.mrf.mxu0
      %v529 = vadd.f32 %v488, %v528
      %530 = vmatmul.bf16.gmra.mxu0 %v515
      %v531 = vpop.f32.mrf.mxu0
      %v532 = vadd.f32 %v491, %v531
      %v533 = vpop.f32.mrf.mxu0
      %v534 = vadd.f32 %v493, %v533
      %535 = vdwg.mxu0
      %v540 = vunpack.c.l.b16 %v234
      %v541 = vunpack.c.l.b16 %v235
      %v542 = vunpack.c.l.b16 %v236
      %v543 = vunpack.c.l.b16 %v237
      %v544 = vpack.c.b16 %v541, %v540
      %v545 = vpack.c.b16 %v543, %v542
      %546 = vrot.lane.b32.xlu0 %v420, 126
      %v547 = vpop.permute.xlu0 %546
      %548 = vrot.lane.b32.xlu0 %v421, 126
      %v549 = vpop.permute.xlu0 %548
      %550 = vrot.lane.b32.xlu0 %v422, 126
      %v551 = vpop.permute.xlu0 %550
      %552 = vrot.lane.b32.xlu0 %v423, 126
      %v553 = vpop.permute.xlu0 %552
      %554 = vrot.lane.b32.xlu0 %v424, 126
      %v555 = vpop.permute.xlu0 %554
      %556 = vrot.lane.b32.xlu0 %v425, 126
      %v557 = vpop.permute.xlu0 %556
      %558 = vrot.lane.b32.xlu0 %v426, 126
      %v559 = vpop.permute.xlu0 %558
      %560 = vrot.lane.b32.xlu0 %v427, 126
      %v561 = vpop.permute.xlu0 %560
      %562 = vrot.lane.b32.xlu0 %v428, 126
      %v563 = vpop.permute.xlu0 %562
      %564 = vrot.lane.b32.xlu0 %v429, 126
      %v565 = vpop.permute.xlu0 %564
      %566 = vrot.lane.b32.xlu0 %v430, 126
      %v567 = vpop.permute.xlu0 %566
      %568 = vrot.lane.b32.xlu0 %v431, 126
      %v569 = vpop.permute.xlu0 %568
      %vm570 = vcmask 1031168
      %v571 = vsel %vm570, %v547, %v549
      %v572 = vsel %vm570, %v551, %v553
      %v573 = vsel %vm570, %v555, %v557
      %v574 = vsel %vm570, %v559, %v561
      %v575 = vsel %vm570, %v563, %v565
      %v576 = vsel %vm570, %v567, %v569
      %v584 = vsel %vm469, %v544, 0
      %v587 = vsel %vm469, %v545, 0
      %589 = vmatpush.bf16.msra.mxu0 0
      %590 = vmatpush.bf16.msra.mxu0 0
      %591 = vmatpush.bf16.msra.mxu0 %v576
      %592 = vmatpush.bf16.msra.mxu0 %v575
      %593 = vmatpush.bf16.msra.mxu0 %v574
      %594 = vmatpush.bf16.msra.mxu0 %v573
      %595 = vmatpush.bf16.msra.mxu0 %v572
      %596 = vmatpush.bf16.msra.mxu0 %v571
      %597 = vmatmul.bf16.gmra.mxu0 %v584
      %v598 = vpop.f32.mrf.mxu0
      %v599 = vadd.f32 0.0, %v598
      %v600 = vpop.f32.mrf.mxu0
      %v601 = vadd.f32 0.0, %v600
      %602 = vmatmul.bf16.gmra.mxu0 %v587
      %v603 = vpop.f32.mrf.mxu0
      %v604 = vadd.f32 0.0, %v603
      %v605 = vpop.f32.mrf.mxu0
      %v606 = vadd.f32 0.0, %v605
      %607 = vdwg.mxu0
      %v608 = vadd.f32 %v527, %v599
      %v609 = vadd.f32 %v529, %v601
      %v610 = vadd.f32 %v532, %v604
      %v611 = vadd.f32 %v534, %v606
      %613 = vset.pattern.permute.xlu0 0
      %614 = vperm.xlu0 %613, %v250
      %v615 = vpop.permute.xlu0 %614
      %618 = vset.pattern.permute.xlu0 0
      %619 = vperm.xlu0 %618, %v251
      %v620 = vpop.permute.xlu0 %619
      %623 = vset.pattern.permute.xlu0 0
      %624 = vperm.xlu0 %623, %v252
      %v625 = vpop.permute.xlu0 %624
      %628 = vset.pattern.permute.xlu0 0
      %629 = vperm.xlu0 %628, %v253
      %v630 = vpop.permute.xlu0 %629
      %v632 = vadd.f32 %v608, %v615
      %v633 = vadd.f32 %v609, %v620
      %v634 = vadd.f32 %v610, %v625
      %v635 = vadd.f32 %v611, %v630
      %v636 = vmax.f32 %v632, 0.0
      %v637 = vmax.f32 %v633, 0.0
      %v638 = vmax.f32 %v634, 0.0
      %v639 = vmax.f32 %v635, 0.0
      %v640 = vmul.f32 %v636, %v262
      %v641 = vmul.f32 %v637, %v262
      %v642 = vmul.f32 %v638, %v262
      %v643 = vmul.f32 %v639, %v262
      %v644 = vpack.c.bf16 %v640, %v640
      %v645 = vpack.c.bf16 %v641, %v641
      %v646 = vpack.c.bf16 %v642, %v642
      %v647 = vpack.c.bf16 %v643, %v643
      %652 = vrot.lane.b32.xlu0 %v644, 1
      %v653 = vpop.permute.xlu0 %652
      %654 = vrot.lane.b32.xlu0 %v645, 1
      %v655 = vpop.permute.xlu0 %654
      %656 = vrot.lane.b32.xlu0 %v646, 1
      %v657 = vpop.permute.xlu0 %656
      %658 = vrot.lane.b32.xlu0 %v647, 1
      %v659 = vpop.permute.xlu0 %658
      %v660 = vrot.slane %v653, 4
      %v661 = vrot.slane %v655, 4
      %v662 = vrot.slane %v657, 4
      %v663 = vrot.slane %v659, 4
      %vm664 = vcmask 7168
      %v665 = vsel %vm664, %v660, %v653
      %v666 = vsel %vm664, %v661, %v655
      %v667 = vsel %vm664, %v662, %v657
      %v668 = vsel %vm664, %v663, %v659
      %s673 = scalar_lea.vmem [#allocation2], 32
      %vm674 = vcmask 1043464
      %vm675 = vcmask 7172
      %vm676 = vmor %vm675, %vm674
      %677 = vst.msk [vmem:[%s673] sm:$0xff] %vm676, %v665
      %678 = vst.msk [vmem:[%s673 + $0x8] sm:$0xff] %vm676, %v666
      %679 = vst.msk [vmem:[%s673 + $0x10] sm:$0xff] %vm676, %v667
      %680 = vst.msk [vmem:[%s673 + $0x18] sm:$0xff] %vm676, %v668
      %s681 = scalar_lea.vmem %s219, 64
      %v682 = vld [vmem:[%s681] sm:$0xff]
      %v683 = vld [vmem:[%s681 + $0x8] sm:$0xff]
      %v684 = vld [vmem:[%s681 + $0x10] sm:$0xff]
      %v685 = vld [vmem:[%s681 + $0x18] sm:$0xff]
      %v686 = vld [vmem:[%s681 + $0x20] sm:$0xff]
      %v687 = vld [vmem:[%s681 + $0x28] sm:$0xff]
      %v688 = vld [vmem:[%s681 + $0x30] sm:$0xff]
      %v689 = vld [vmem:[%s681 + $0x38] sm:$0xff]
      %v690 = vld [vmem:[%s681 + $0x40] sm:$0xff]
      %v691 = vld [vmem:[%s681 + $0x48] sm:$0xff]
      %v692 = vld [vmem:[%s681 + $0x50] sm:$0xff]
      %v693 = vld [vmem:[%s681 + $0x58] sm:$0xff]
      %v694 = vld [vmem:[%s681 + $0x60] sm:$0xff]
      %v695 = vld [vmem:[%s681 + $0x68] sm:$0xff]
      %v696 = vld [vmem:[%s681 + $0x70] sm:$0xff]
      %v697 = vld [vmem:[%s681 + $0x78] sm:$0xff]
      %v698 = vld [vmem:[%s681 + $0x80] sm:$0xff]
      %v699 = vld [vmem:[%s681 + $0x88] sm:$0xff]
      %v700 = vld [vmem:[%s681 + $0x90] sm:$0xff]
      %v701 = vld [vmem:[%s681 + $0x98] sm:$0xff]
      %v702 = vld [vmem:[%s681 + $0xa0] sm:$0xff]
      %v703 = vld [vmem:[%s681 + $0xa8] sm:$0xff]
      %v704 = vld [vmem:[%s681 + $0xb0] sm:$0xff]
      %v705 = vld [vmem:[%s681 + $0xb8] sm:$0xff]
      %v706 = vpack.c.bf16 %v683, %v682
      %v707 = vpack.c.bf16 %v685, %v684
      %v708 = vpack.c.bf16 %v687, %v686
      %v709 = vpack.c.bf16 %v689, %v688
      %v710 = vpack.c.bf16 %v691, %v690
      %v711 = vpack.c.bf16 %v693, %v692
      %v712 = vpack.c.bf16 %v695, %v694
      %v713 = vpack.c.bf16 %v697, %v696
      %v714 = vpack.c.bf16 %v699, %v698
      %v715 = vpack.c.bf16 %v701, %v700
      %v716 = vpack.c.bf16 %v703, %v702
      %v717 = vpack.c.bf16 %v705, %v704
      %v730 = vunpack.c.l.b16 %v706
      %v731 = vunpack.c.h.b16 %v706
      %v732 = vunpack.c.l.b16 %v707
      %v733 = vunpack.c.h.b16 %v707
      %v734 = vunpack.c.l.b16 %v708
      %v735 = vunpack.c.h.b16 %v708
      %v736 = vunpack.c.l.b16 %v709
      %v737 = vunpack.c.h.b16 %v709
      %v738 = vunpack.c.l.b16 %v710
      %v739 = vunpack.c.h.b16 %v710
      %v740 = vunpack.c.l.b16 %v711
      %v741 = vunpack.c.h.b16 %v711
      %v742 = vunpack.c.l.b16 %v712
      %v743 = vunpack.c.h.b16 %v712
      %v744 = vunpack.c.l.b16 %v713
      %v745 = vunpack.c.h.b16 %v713
      %v746 = vunpack.c.l.b16 %v714
      %v747 = vunpack.c.h.b16 %v714
      %v748 = vunpack.c.l.b16 %v715
      %v749 = vunpack.c.h.b16 %v715
      %v750 = vunpack.c.l.b16 %v716
      %v751 = vunpack.c.h.b16 %v716
      %v752 = vunpack.c.l.b16 %v717
      %v753 = vunpack.c.h.b16 %v717
      %v754 = vpack.c.b16 %v732, %v730
      %v755 = vpack.c.b16 %v733, %v731
      %v756 = vpack.c.b16 %v736, %v734
      %v757 = vpack.c.b16 %v737, %v735
      %v758 = vpack.c.b16 %v740, %v738
      %v759 = vpack.c.b16 %v741, %v739
      %v760 = vpack.c.b16 %v744, %v742
      %v761 = vpack.c.b16 %v745, %v743
      %v762 = vpack.c.b16 %v748, %v746
      %v763 = vpack.c.b16 %v749, %v747
      %v764 = vpack.c.b16 %v752, %v750
      %v765 = vpack.c.b16 %v753, %v751
      %766 = vrot.lane.b32.xlu0 %v754, 127
      %v767 = vpop.permute.xlu0 %766
      %768 = vrot.lane.b32.xlu0 %v755, 127
      %v769 = vpop.permute.xlu0 %768
      %770 = vrot.lane.b32.xlu0 %v756, 127
      %v771 = vpop.permute.xlu0 %770
      %772 = vrot.lane.b32.xlu0 %v757, 127
      %v773 = vpop.permute.xlu0 %772
      %774 = vrot.lane.b32.xlu0 %v758, 127
      %v775 = vpop.permute.xlu0 %774
      %776 = vrot.lane.b32.xlu0 %v759, 127
      %v777 = vpop.permute.xlu0 %776
      %778 = vrot.lane.b32.xlu0 %v760, 127
      %v779 = vpop.permute.xlu0 %778
      %780 = vrot.lane.b32.xlu0 %v761, 127
      %v781 = vpop.permute.xlu0 %780
      %782 = vrot.lane.b32.xlu0 %v762, 127
      %v783 = vpop.permute.xlu0 %782
      %784 = vrot.lane.b32.xlu0 %v763, 127
      %v785 = vpop.permute.xlu0 %784
      %786 = vrot.lane.b32.xlu0 %v764, 127
      %v787 = vpop.permute.xlu0 %786
      %788 = vrot.lane.b32.xlu0 %v765, 127
      %v789 = vpop.permute.xlu0 %788
      %v790 = vsel %vm456, %v767, %v769
      %v791 = vsel %vm456, %v771, %v773
      %v792 = vsel %vm456, %v775, %v777
      %v793 = vsel %vm456, %v779, %v781
      %v794 = vsel %vm456, %v783, %v785
      %v795 = vsel %vm456, %v787, %v789
      %802 = vmatpush.bf16.msra.mxu0 0
      %803 = vmatpush.bf16.msra.mxu0 0
      %804 = vmatpush.bf16.msra.mxu0 %v795
      %805 = vmatpush.bf16.msra.mxu0 %v794
      %806 = vmatpush.bf16.msra.mxu0 %v793
      %807 = vmatpush.bf16.msra.mxu0 %v792
      %808 = vmatpush.bf16.msra.mxu0 %v791
      %809 = vmatpush.bf16.msra.mxu0 %v790
      %810 = vmatmul.bf16.gmra.mxu0 %v471
      %v811 = vpop.f32.mrf.mxu0
      %v812 = vadd.f32 0.0, %v811
      %v813 = vpop.f32.mrf.mxu0
      %v814 = vadd.f32 0.0, %v813
      %815 = vmatmul.bf16.gmra.mxu0 %v474
      %v816 = vpop.f32.mrf.mxu0
      %v817 = vadd.f32 0.0, %v816
      %v818 = vpop.f32.mrf.mxu0
      %v819 = vadd.f32 0.0, %v818
      %820 = vdwg.mxu0
      %827 = vmatpush.bf16.msra.mxu0 0
      %828 = vmatpush.bf16.msra.mxu0 0
      %829 = vmatpush.bf16.msra.mxu0 %v764
      %830 = vmatpush.bf16.msra.mxu0 %v762
      %831 = vmatpush.bf16.msra.mxu0 %v760
      %832 = vmatpush.bf16.msra.mxu0 %v758
      %833 = vmatpush.bf16.msra.mxu0 %v756
      %834 = vmatpush.bf16.msra.mxu0 %v754
      %835 = vmatmul.bf16.gmra.mxu0 %v512
      %v836 = vpop.f32.mrf.mxu0
      %v837 = vadd.f32 %v812, %v836
      %v838 = vpop.f32.mrf.mxu0
      %v839 = vadd.f32 %v814, %v838
      %840 = vmatmul.bf16.gmra.mxu0 %v515
      %v841 = vpop.f32.mrf.mxu0
      %v842 = vadd.f32 %v817, %v841
      %v843 = vpop.f32.mrf.mxu0
      %v844 = vadd.f32 %v819, %v843
      %845 = vdwg.mxu0
      %846 = vrot.lane.b32.xlu0 %v754, 126
      %v847 = vpop.permute.xlu0 %846
      %848 = vrot.lane.b32.xlu0 %v755, 126
      %v849 = vpop.permute.xlu0 %848
      %850 = vrot.lane.b32.xlu0 %v756, 126
      %v851 = vpop.permute.xlu0 %850
      %852 = vrot.lane.b32.xlu0 %v757, 126
      %v853 = vpop.permute.xlu0 %852
      %854 = vrot.lane.b32.xlu0 %v758, 126
      %v855 = vpop.permute.xlu0 %854
      %856 = vrot.lane.b32.xlu0 %v759, 126
      %v857 = vpop.permute.xlu0 %856
      %858 = vrot.lane.b32.xlu0 %v760, 126
      %v859 = vpop.permute.xlu0 %858
      %860 = vrot.lane.b32.xlu0 %v761, 126
      %v861 = vpop.permute.xlu0 %860
      %862 = vrot.lane.b32.xlu0 %v762, 126
      %v863 = vpop.permute.xlu0 %862
      %864 = vrot.lane.b32.xlu0 %v763, 126
      %v865 = vpop.permute.xlu0 %864
      %866 = vrot.lane.b32.xlu0 %v764, 126
      %v867 = vpop.permute.xlu0 %866
      %868 = vrot.lane.b32.xlu0 %v765, 126
      %v869 = vpop.permute.xlu0 %868
      %v870 = vsel %vm570, %v847, %v849
      %v871 = vsel %vm570, %v851, %v853
      %v872 = vsel %vm570, %v855, %v857
      %v873 = vsel %vm570, %v859, %v861
      %v874 = vsel %vm570, %v863, %v865
      %v875 = vsel %vm570, %v867, %v869
      %882 = vmatpush.bf16.msra.mxu0 0
      %883 = vmatpush.bf16.msra.mxu0 0
      %884 = vmatpush.bf16.msra.mxu0 %v875
      %885 = vmatpush.bf16.msra.mxu0 %v874
      %886 = vmatpush.bf16.msra.mxu0 %v873
      %887 = vmatpush.bf16.msra.mxu0 %v872
      %888 = vmatpush.bf16.msra.mxu0 %v871
      %889 = vmatpush.bf16.msra.mxu0 %v870
      %890 = vmatmul.bf16.gmra.mxu0 %v584
      %v891 = vpop.f32.mrf.mxu0
      %v892 = vadd.f32 0.0, %v891
      %v893 = vpop.f32.mrf.mxu0
      %v894 = vadd.f32 0.0, %v893
      %895 = vmatmul.bf16.gmra.mxu0 %v587
      %v896 = vpop.f32.mrf.mxu0
      %v897 = vadd.f32 0.0, %v896
      %v898 = vpop.f32.mrf.mxu0
      %v899 = vadd.f32 0.0, %v898
      %900 = vdwg.mxu0
      %v901 = vadd.f32 %v837, %v892
      %v902 = vadd.f32 %v839, %v894
      %v903 = vadd.f32 %v842, %v897
      %v904 = vadd.f32 %v844, %v899
      %v905 = vadd.f32 %v901, %v615
      %v906 = vadd.f32 %v902, %v620
      %v907 = vadd.f32 %v903, %v625
      %v908 = vadd.f32 %v904, %v630
      %v909 = vmax.f32 %v905, 0.0
      %v910 = vmax.f32 %v906, 0.0
      %v911 = vmax.f32 %v907, 0.0
      %v912 = vmax.f32 %v908, 0.0
      %v913 = vmul.f32 %v909, %v262
      %v914 = vmul.f32 %v910, %v262
      %v915 = vmul.f32 %v911, %v262
      %v916 = vmul.f32 %v912, %v262
      %v917 = vpack.c.bf16 %v913, %v913
      %v918 = vpack.c.bf16 %v914, %v914
      %v919 = vpack.c.bf16 %v915, %v915
      %v920 = vpack.c.bf16 %v916, %v916
      %925 = vrot.lane.b32.xlu0 %v917, 1
      %v926 = vpop.permute.xlu0 %925
      %927 = vrot.lane.b32.xlu0 %v918, 1
      %v928 = vpop.permute.xlu0 %927
      %929 = vrot.lane.b32.xlu0 %v919, 1
      %v930 = vpop.permute.xlu0 %929
      %931 = vrot.lane.b32.xlu0 %v920, 1
      %v932 = vpop.permute.xlu0 %931
      %v933 = vrot.slane %v926, 4
      %v934 = vrot.slane %v928, 4
      %v935 = vrot.slane %v930, 4
      %v936 = vrot.slane %v932, 4
      %v937 = vsel %vm664, %v933, %v926
      %v938 = vsel %vm664, %v934, %v928
      %v939 = vsel %vm664, %v935, %v930
      %v940 = vsel %vm664, %v936, %v932
      %s945 = scalar_lea.vmem [#allocation2], 64
      %946 = vst.msk [vmem:[%s945] sm:$0xff] %vm676, %v937
      %947 = vst.msk [vmem:[%s945 + $0x8] sm:$0xff] %vm676, %v938
      %948 = vst.msk [vmem:[%s945 + $0x10] sm:$0xff] %vm676, %v939
      %949 = vst.msk [vmem:[%s945 + $0x18] sm:$0xff] %vm676, %v940
      %s950 = scalar_lea.vmem %s219, 128
      %v951 = vld [vmem:[%s950] sm:$0xff]
      %v952 = vld [vmem:[%s950 + $0x8] sm:$0xff]
      %v953 = vld [vmem:[%s950 + $0x10] sm:$0xff]
      %v954 = vld [vmem:[%s950 + $0x18] sm:$0xff]
      %v955 = vld [vmem:[%s950 + $0x20] sm:$0xff]
      %v956 = vld [vmem:[%s950 + $0x28] sm:$0xff]
      %v957 = vld [vmem:[%s950 + $0x30] sm:$0xff]
      %v958 = vld [vmem:[%s950 + $0x38] sm:$0xff]
      %v959 = vld [vmem:[%s950 + $0x40] sm:$0xff]
      %v960 = vld [vmem:[%s950 + $0x48] sm:$0xff]
      %v961 = vld [vmem:[%s950 + $0x50] sm:$0xff]
      %v962 = vld [vmem:[%s950 + $0x58] sm:$0xff]
      %v963 = vld [vmem:[%s950 + $0x60] sm:$0xff]
      %v964 = vld [vmem:[%s950 + $0x68] sm:$0xff]
      %v965 = vld [vmem:[%s950 + $0x70] sm:$0xff]
      %v966 = vld [vmem:[%s950 + $0x78] sm:$0xff]
      %v967 = vld [vmem:[%s950 + $0x80] sm:$0xff]
      %v968 = vld [vmem:[%s950 + $0x88] sm:$0xff]
      %v969 = vld [vmem:[%s950 + $0x90] sm:$0xff]
      %v970 = vld [vmem:[%s950 + $0x98] sm:$0xff]
      %v971 = vld [vmem:[%s950 + $0xa0] sm:$0xff]
      %v972 = vld [vmem:[%s950 + $0xa8] sm:$0xff]
      %v973 = vld [vmem:[%s950 + $0xb0] sm:$0xff]
      %v974 = vld [vmem:[%s950 + $0xb8] sm:$0xff]
      %v975 = vpack.c.bf16 %v952, %v951
      %v976 = vpack.c.bf16 %v954, %v953
      %v977 = vpack.c.bf16 %v956, %v955
      %v978 = vpack.c.bf16 %v958, %v957
      %v979 = vpack.c.bf16 %v960, %v959
      %v980 = vpack.c.bf16 %v962, %v961
      %v981 = vpack.c.bf16 %v964, %v963
      %v982 = vpack.c.bf16 %v966, %v965
      %v983 = vpack.c.bf16 %v968, %v967
      %v984 = vpack.c.bf16 %v970, %v969
      %v985 = vpack.c.bf16 %v972, %v971
      %v986 = vpack.c.bf16 %v974, %v973
      %v999 = vunpack.c.l.b16 %v975
      %v1000 = vunpack.c.h.b16 %v975
      %v1001 = vunpack.c.l.b16 %v976
      %v1002 = vunpack.c.h.b16 %v976
      %v1003 = vunpack.c.l.b16 %v977
      %v1004 = vunpack.c.h.b16 %v977
      %v1005 = vunpack.c.l.b16 %v978
      %v1006 = vunpack.c.h.b16 %v978
      %v1007 = vunpack.c.l.b16 %v979
      %v1008 = vunpack.c.h.b16 %v979
      %v1009 = vunpack.c.l.b16 %v980
      %v1010 = vunpack.c.h.b16 %v980
      %v1011 = vunpack.c.l.b16 %v981
      %v1012 = vunpack.c.h.b16 %v981
      %v1013 = vunpack.c.l.b16 %v982
      %v1014 = vunpack.c.h.b16 %v982
      %v1015 = vunpack.c.l.b16 %v983
      %v1016 = vunpack.c.h.b16 %v983
      %v1017 = vunpack.c.l.b16 %v984
      %v1018 = vunpack.c.h.b16 %v984
      %v1019 = vunpack.c.l.b16 %v985
      %v1020 = vunpack.c.h.b16 %v985
      %v1021 = vunpack.c.l.b16 %v986
      %v1022 = vunpack.c.h.b16 %v986
      %v1023 = vpack.c.b16 %v1001, %v999
      %v1024 = vpack.c.b16 %v1002, %v1000
      %v1025 = vpack.c.b16 %v1005, %v1003
      %v1026 = vpack.c.b16 %v1006, %v1004
      %v1027 = vpack.c.b16 %v1009, %v1007
      %v1028 = vpack.c.b16 %v1010, %v1008
      %v1029 = vpack.c.b16 %v1013, %v1011
      %v1030 = vpack.c.b16 %v1014, %v1012
      %v1031 = vpack.c.b16 %v1017, %v1015
      %v1032 = vpack.c.b16 %v1018, %v1016
      %v1033 = vpack.c.b16 %v1021, %v1019
      %v1034 = vpack.c.b16 %v1022, %v1020
      %1035 = vrot.lane.b32.xlu0 %v1023, 127
      %v1036 = vpop.permute.xlu0 %1035
      %1037 = vrot.lane.b32.xlu0 %v1024, 127
      %v1038 = vpop.permute.xlu0 %1037
      %1039 = vrot.lane.b32.xlu0 %v1025, 127
      %v1040 = vpop.permute.xlu0 %1039
      %1041 = vrot.lane.b32.xlu0 %v1026, 127
      %v1042 = vpop.permute.xlu0 %1041
      %1043 = vrot.lane.b32.xlu0 %v1027, 127
      %v1044 = vpop.permute.xlu0 %1043
      %1045 = vrot.lane.b32.xlu0 %v1028, 127
      %v1046 = vpop.permute.xlu0 %1045
      %1047 = vrot.lane.b32.xlu0 %v1029, 127
      %v1048 = vpop.permute.xlu0 %1047
      %1049 = vrot.lane.b32.xlu0 %v1030, 127
      %v1050 = vpop.permute.xlu0 %1049
      %1051 = vrot.lane.b32.xlu0 %v1031, 127
      %v1052 = vpop.permute.xlu0 %1051
      %1053 = vrot.lane.b32.xlu0 %v1032, 127
      %v1054 = vpop.permute.xlu0 %1053
      %1055 = vrot.lane.b32.xlu0 %v1033, 127
      %v1056 = vpop.permute.xlu0 %1055
      %1057 = vrot.lane.b32.xlu0 %v1034, 127
      %v1058 = vpop.permute.xlu0 %1057
      %v1059 = vsel %vm456, %v1036, %v1038
      %v1060 = vsel %vm456, %v1040, %v1042
      %v1061 = vsel %vm456, %v1044, %v1046
      %v1062 = vsel %vm456, %v1048, %v1050
      %v1063 = vsel %vm456, %v1052, %v1054
      %v1064 = vsel %vm456, %v1056, %v1058
      %1071 = vmatpush.bf16.msra.mxu0 0
      %1072 = vmatpush.bf16.msra.mxu0 0
      %1073 = vmatpush.bf16.msra.mxu0 %v1064
      %1074 = vmatpush.bf16.msra.mxu0 %v1063
      %1075 = vmatpush.bf16.msra.mxu0 %v1062
      %1076 = vmatpush.bf16.msra.mxu0 %v1061
      %1077 = vmatpush.bf16.msra.mxu0 %v1060
      %1078 = vmatpush.bf16.msra.mxu0 %v1059
      %1079 = vmatmul.bf16.gmra.mxu0 %v471
      %v1080 = vpop.f32.mrf.mxu0
      %v1081 = vadd.f32 0.0, %v1080
      %v1082 = vpop.f32.mrf.mxu0
      %v1083 = vadd.f32 0.0, %v1082
      %1084 = vmatmul.bf16.gmra.mxu0 %v474
      %v1085 = vpop.f32.mrf.mxu0
      %v1086 = vadd.f32 0.0, %v1085
      %v1087 = vpop.f32.mrf.mxu0
      %v1088 = vadd.f32 0.0, %v1087
      %1089 = vdwg.mxu0
      %1096 = vmatpush.bf16.msra.mxu0 0
      %1097 = vmatpush.bf16.msra.mxu0 0
      %1098 = vmatpush.bf16.msra.mxu0 %v1033
      %1099 = vmatpush.bf16.msra.mxu0 %v1031
      %1100 = vmatpush.bf16.msra.mxu0 %v1029
      %1101 = vmatpush.bf16.msra.mxu0 %v1027
      %1102 = vmatpush.bf16.msra.mxu0 %v1025
      %1103 = vmatpush.bf16.msra.mxu0 %v1023
      %1104 = vmatmul.bf16.gmra.mxu0 %v512
      %v1105 = vpop.f32.mrf.mxu0
      %v1106 = vadd.f32 %v1081, %v1105
      %v1107 = vpop.f32.mrf.mxu0
      %v1108 = vadd.f32 %v1083, %v1107
      %1109 = vmatmul.bf16.gmra.mxu0 %v515
      %v1110 = vpop.f32.mrf.mxu0
      %v1111 = vadd.f32 %v1086, %v1110
      %v1112 = vpop.f32.mrf.mxu0
      %v1113 = vadd.f32 %v1088, %v1112
      %1114 = vdwg.mxu0
      %1115 = vrot.lane.b32.xlu0 %v1023, 126
      %v1116 = vpop.permute.xlu0 %1115
      %1117 = vrot.lane.b32.xlu0 %v1024, 126
      %v1118 = vpop.permute.xlu0 %1117
      %1119 = vrot.lane.b32.xlu0 %v1025, 126
      %v1120 = vpop.permute.xlu0 %1119
      %1121 = vrot.lane.b32.xlu0 %v1026, 126
      %v1122 = vpop.permute.xlu0 %1121
      %1123 = vrot.lane.b32.xlu0 %v1027, 126
      %v1124 = vpop.permute.xlu0 %1123
      %1125 = vrot.lane.b32.xlu0 %v1028, 126
      %v1126 = vpop.permute.xlu0 %1125
      %1127 = vrot.lane.b32.xlu0 %v1029, 126
      %v1128 = vpop.permute.xlu0 %1127
      %1129 = vrot.lane.b32.xlu0 %v1030, 126
      %v1130 = vpop.permute.xlu0 %1129
      %1131 = vrot.lane.b32.xlu0 %v1031, 126
      %v1132 = vpop.permute.xlu0 %1131
      %1133 = vrot.lane.b32.xlu0 %v1032, 126
      %v1134 = vpop.permute.xlu0 %1133
      %1135 = vrot.lane.b32.xlu0 %v1033, 126
      %v1136 = vpop.permute.xlu0 %1135
      %1137 = vrot.lane.b32.xlu0 %v1034, 126
      %v1138 = vpop.permute.xlu0 %1137
      %v1139 = vsel %vm570, %v1116, %v1118
      %v1140 = vsel %vm570, %v1120, %v1122
      %v1141 = vsel %vm570, %v1124, %v1126
      %v1142 = vsel %vm570, %v1128, %v1130
      %v1143 = vsel %vm570, %v1132, %v1134
      %v1144 = vsel %vm570, %v1136, %v1138
      %1151 = vmatpush.bf16.msra.mxu0 0
      %1152 = vmatpush.bf16.msra.mxu0 0
      %1153 = vmatpush.bf16.msra.mxu0 %v1144
      %1154 = vmatpush.bf16.msra.mxu0 %v1143
      %1155 = vmatpush.bf16.msra.mxu0 %v1142
      %1156 = vmatpush.bf16.msra.mxu0 %v1141
      %1157 = vmatpush.bf16.msra.mxu0 %v1140
      %1158 = vmatpush.bf16.msra.mxu0 %v1139
      %1159 = vmatmul.bf16.gmra.mxu0 %v584
      %v1160 = vpop.f32.mrf.mxu0
      %v1161 = vadd.f32 0.0, %v1160
      %v1162 = vpop.f32.mrf.mxu0
      %v1163 = vadd.f32 0.0, %v1162
      %1164 = vmatmul.bf16.gmra.mxu0 %v587
      %v1165 = vpop.f32.mrf.mxu0
      %v1166 = vadd.f32 0.0, %v1165
      %v1167 = vpop.f32.mrf.mxu0
      %v1168 = vadd.f32 0.0, %v1167
      %1169 = vdwg.mxu0
      %v1170 = vadd.f32 %v1106, %v1161
      %v1171 = vadd.f32 %v1108, %v1163
      %v1172 = vadd.f32 %v1111, %v1166
      %v1173 = vadd.f32 %v1113, %v1168
      %v1174 = vadd.f32 %v1170, %v615
      %v1175 = vadd.f32 %v1171, %v620
      %v1176 = vadd.f32 %v1172, %v625
      %v1177 = vadd.f32 %v1173, %v630
      %v1178 = vmax.f32 %v1174, 0.0
      %v1179 = vmax.f32 %v1175, 0.0
      %v1180 = vmax.f32 %v1176, 0.0
      %v1181 = vmax.f32 %v1177, 0.0
      %v1182 = vmul.f32 %v1178, %v262
      %v1183 = vmul.f32 %v1179, %v262
      %v1184 = vmul.f32 %v1180, %v262
      %v1185 = vmul.f32 %v1181, %v262
      %v1186 = vpack.c.bf16 %v1182, %v1182
      %v1187 = vpack.c.bf16 %v1183, %v1183
      %v1188 = vpack.c.bf16 %v1184, %v1184
      %v1189 = vpack.c.bf16 %v1185, %v1185
      %1194 = vrot.lane.b32.xlu0 %v1186, 1
      %v1195 = vpop.permute.xlu0 %1194
      %1196 = vrot.lane.b32.xlu0 %v1187, 1
      %v1197 = vpop.permute.xlu0 %1196
      %1198 = vrot.lane.b32.xlu0 %v1188, 1
      %v1199 = vpop.permute.xlu0 %1198
      %1200 = vrot.lane.b32.xlu0 %v1189, 1
      %v1201 = vpop.permute.xlu0 %1200
      %v1202 = vrot.slane %v1195, 4
      %v1203 = vrot.slane %v1197, 4
      %v1204 = vrot.slane %v1199, 4
      %v1205 = vrot.slane %v1201, 4
      %v1206 = vsel %vm664, %v1202, %v1195
      %v1207 = vsel %vm664, %v1203, %v1197
      %v1208 = vsel %vm664, %v1204, %v1199
      %v1209 = vsel %vm664, %v1205, %v1201
      %s1214 = scalar_lea.vmem [#allocation2], 96
      %1215 = vst.msk [vmem:[%s1214] sm:$0xff] %vm676, %v1206
      %1216 = vst.msk [vmem:[%s1214 + $0x8] sm:$0xff] %vm676, %v1207
      %1217 = vst.msk [vmem:[%s1214 + $0x10] sm:$0xff] %vm676, %v1208
      %1218 = vst.msk [vmem:[%s1214 + $0x18] sm:$0xff] %vm676, %v1209
      %s1219 = scalar_lea.vmem %s219, 192
      %v1220 = vld [vmem:[%s1219] sm:$0xff]
      %v1221 = vld [vmem:[%s1219 + $0x8] sm:$0xff]
      %v1222 = vld [vmem:[%s1219 + $0x10] sm:$0xff]
      %v1223 = vld [vmem:[%s1219 + $0x18] sm:$0xff]
      %v1224 = vld [vmem:[%s1219 + $0x20] sm:$0xff]
      %v1225 = vld [vmem:[%s1219 + $0x28] sm:$0xff]
      %v1226 = vld [vmem:[%s1219 + $0x30] sm:$0xff]
      %v1227 = vld [vmem:[%s1219 + $0x38] sm:$0xff]
      %v1228 = vld [vmem:[%s1219 + $0x40] sm:$0xff]
      %v1229 = vld [vmem:[%s1219 + $0x48] sm:$0xff]
      %v1230 = vld [vmem:[%s1219 + $0x50] sm:$0xff]
      %v1231 = vld [vmem:[%s1219 + $0x58] sm:$0xff]
      %v1232 = vld [vmem:[%s1219 + $0x60] sm:$0xff]
      %v1233 = vld [vmem:[%s1219 + $0x68] sm:$0xff]
      %v1234 = vld [vmem:[%s1219 + $0x70] sm:$0xff]
      %v1235 = vld [vmem:[%s1219 + $0x78] sm:$0xff]
      %v1236 = vld [vmem:[%s1219 + $0x80] sm:$0xff]
      %v1237 = vld [vmem:[%s1219 + $0x88] sm:$0xff]
      %v1238 = vld [vmem:[%s1219 + $0x90] sm:$0xff]
      %v1239 = vld [vmem:[%s1219 + $0x98] sm:$0xff]
      %v1240 = vld [vmem:[%s1219 + $0xa0] sm:$0xff]
      %v1241 = vld [vmem:[%s1219 + $0xa8] sm:$0xff]
      %v1242 = vld [vmem:[%s1219 + $0xb0] sm:$0xff]
      %v1243 = vld [vmem:[%s1219 + $0xb8] sm:$0xff]
      %v1244 = vpack.c.bf16 %v1221, %v1220
      %v1245 = vpack.c.bf16 %v1223, %v1222
      %v1246 = vpack.c.bf16 %v1225, %v1224
      %v1247 = vpack.c.bf16 %v1227, %v1226
      %v1248 = vpack.c.bf16 %v1229, %v1228
      %v1249 = vpack.c.bf16 %v1231, %v1230
      %v1250 = vpack.c.bf16 %v1233, %v1232
      %v1251 = vpack.c.bf16 %v1235, %v1234
      %v1252 = vpack.c.bf16 %v1237, %v1236
      %v1253 = vpack.c.bf16 %v1239, %v1238
      %v1254 = vpack.c.bf16 %v1241, %v1240
      %v1255 = vpack.c.bf16 %v1243, %v1242
      %v1268 = vunpack.c.l.b16 %v1244
      %v1269 = vunpack.c.h.b16 %v1244
      %v1270 = vunpack.c.l.b16 %v1245
      %v1271 = vunpack.c.h.b16 %v1245
      %v1272 = vunpack.c.l.b16 %v1246
      %v1273 = vunpack.c.h.b16 %v1246
      %v1274 = vunpack.c.l.b16 %v1247
      %v1275 = vunpack.c.h.b16 %v1247
      %v1276 = vunpack.c.l.b16 %v1248
      %v1277 = vunpack.c.h.b16 %v1248
      %v1278 = vunpack.c.l.b16 %v1249
      %v1279 = vunpack.c.h.b16 %v1249
      %v1280 = vunpack.c.l.b16 %v1250
      %v1281 = vunpack.c.h.b16 %v1250
      %v1282 = vunpack.c.l.b16 %v1251
      %v1283 = vunpack.c.h.b16 %v1251
      %v1284 = vunpack.c.l.b16 %v1252
      %v1285 = vunpack.c.h.b16 %v1252
      %v1286 = vunpack.c.l.b16 %v1253
      %v1287 = vunpack.c.h.b16 %v1253
      %v1288 = vunpack.c.l.b16 %v1254
      %v1289 = vunpack.c.h.b16 %v1254
      %v1290 = vunpack.c.l.b16 %v1255
      %v1291 = vunpack.c.h.b16 %v1255
      %v1292 = vpack.c.b16 %v1270, %v1268
      %v1293 = vpack.c.b16 %v1271, %v1269
      %v1294 = vpack.c.b16 %v1274, %v1272
      %v1295 = vpack.c.b16 %v1275, %v1273
      %v1296 = vpack.c.b16 %v1278, %v1276
      %v1297 = vpack.c.b16 %v1279, %v1277
      %v1298 = vpack.c.b16 %v1282, %v1280
      %v1299 = vpack.c.b16 %v1283, %v1281
      %v1300 = vpack.c.b16 %v1286, %v1284
      %v1301 = vpack.c.b16 %v1287, %v1285
      %v1302 = vpack.c.b16 %v1290, %v1288
      %v1303 = vpack.c.b16 %v1291, %v1289
      %1304 = vrot.lane.b32.xlu0 %v1292, 127
      %v1305 = vpop.permute.xlu0 %1304
      %1306 = vrot.lane.b32.xlu0 %v1293, 127
      %v1307 = vpop.permute.xlu0 %1306
      %1308 = vrot.lane.b32.xlu0 %v1294, 127
      %v1309 = vpop.permute.xlu0 %1308
      %1310 = vrot.lane.b32.xlu0 %v1295, 127
      %v1311 = vpop.permute.xlu0 %1310
      %1312 = vrot.lane.b32.xlu0 %v1296, 127
      %v1313 = vpop.permute.xlu0 %1312
      %1314 = vrot.lane.b32.xlu0 %v1297, 127
      %v1315 = vpop.permute.xlu0 %1314
      %1316 = vrot.lane.b32.xlu0 %v1298, 127
      %v1317 = vpop.permute.xlu0 %1316
      %1318 = vrot.lane.b32.xlu0 %v1299, 127
      %v1319 = vpop.permute.xlu0 %1318
      %1320 = vrot.lane.b32.xlu0 %v1300, 127
      %v1321 = vpop.permute.xlu0 %1320
      %1322 = vrot.lane.b32.xlu0 %v1301, 127
      %v1323 = vpop.permute.xlu0 %1322
      %1324 = vrot.lane.b32.xlu0 %v1302, 127
      %v1325 = vpop.permute.xlu0 %1324
      %1326 = vrot.lane.b32.xlu0 %v1303, 127
      %v1327 = vpop.permute.xlu0 %1326
      %v1328 = vsel %vm456, %v1305, %v1307
      %v1329 = vsel %vm456, %v1309, %v1311
      %v1330 = vsel %vm456, %v1313, %v1315
      %v1331 = vsel %vm456, %v1317, %v1319
      %v1332 = vsel %vm456, %v1321, %v1323
      %v1333 = vsel %vm456, %v1325, %v1327
      %1340 = vmatpush.bf16.msra.mxu0 0
      %1341 = vmatpush.bf16.msra.mxu0 0
      %1342 = vmatpush.bf16.msra.mxu0 %v1333
      %1343 = vmatpush.bf16.msra.mxu0 %v1332
      %1344 = vmatpush.bf16.msra.mxu0 %v1331
      %1345 = vmatpush.bf16.msra.mxu0 %v1330
      %1346 = vmatpush.bf16.msra.mxu0 %v1329
      %1347 = vmatpush.bf16.msra.mxu0 %v1328
      %1348 = vmatmul.bf16.gmra.mxu0 %v471
      %v1349 = vpop.f32.mrf.mxu0
      %v1350 = vadd.f32 0.0, %v1349
      %v1351 = vpop.f32.mrf.mxu0
      %v1352 = vadd.f32 0.0, %v1351
      %1353 = vmatmul.bf16.gmra.mxu0 %v474
      %v1354 = vpop.f32.mrf.mxu0
      %v1355 = vadd.f32 0.0, %v1354
      %v1356 = vpop.f32.mrf.mxu0
      %v1357 = vadd.f32 0.0, %v1356
      %1358 = vdwg.mxu0
      %1365 = vmatpush.bf16.msra.mxu0 0
      %1366 = vmatpush.bf16.msra.mxu0 0
      %1367 = vmatpush.bf16.msra.mxu0 %v1302
      %1368 = vmatpush.bf16.msra.mxu0 %v1300
      %1369 = vmatpush.bf16.msra.mxu0 %v1298
      %1370 = vmatpush.bf16.msra.mxu0 %v1296
      %1371 = vmatpush.bf16.msra.mxu0 %v1294
      %1372 = vmatpush.bf16.msra.mxu0 %v1292
      %1373 = vmatmul.bf16.gmra.mxu0 %v512
      %v1374 = vpop.f32.mrf.mxu0
      %v1375 = vadd.f32 %v1350, %v1374
      %v1376 = vpop.f32.mrf.mxu0
      %v1377 = vadd.f32 %v1352, %v1376
      %1378 = vmatmul.bf16.gmra.mxu0 %v515
      %v1379 = vpop.f32.mrf.mxu0
      %v1380 = vadd.f32 %v1355, %v1379
      %v1381 = vpop.f32.mrf.mxu0
      %v1382 = vadd.f32 %v1357, %v1381
      %1383 = vdwg.mxu0
      %1384 = vrot.lane.b32.xlu0 %v1292, 126
      %v1385 = vpop.permute.xlu0 %1384
      %1386 = vrot.lane.b32.xlu0 %v1293, 126
      %v1387 = vpop.permute.xlu0 %1386
      %1388 = vrot.lane.b32.xlu0 %v1294, 126
      %v1389 = vpop.permute.xlu0 %1388
      %1390 = vrot.lane.b32.xlu0 %v1295, 126
      %v1391 = vpop.permute.xlu0 %1390
      %1392 = vrot.lane.b32.xlu0 %v1296, 126
      %v1393 = vpop.permute.xlu0 %1392
      %1394 = vrot.lane.b32.xlu0 %v1297, 126
      %v1395 = vpop.permute.xlu0 %1394
      %1396 = vrot.lane.b32.xlu0 %v1298, 126
      %v1397 = vpop.permute.xlu0 %1396
      %1398 = vrot.lane.b32.xlu0 %v1299, 126
      %v1399 = vpop.permute.xlu0 %1398
      %1400 = vrot.lane.b32.xlu0 %v1300, 126
      %v1401 = vpop.permute.xlu0 %1400
      %1402 = vrot.lane.b32.xlu0 %v1301, 126
      %v1403 = vpop.permute.xlu0 %1402
      %1404 = vrot.lane.b32.xlu0 %v1302, 126
      %v1405 = vpop.permute.xlu0 %1404
      %1406 = vrot.lane.b32.xlu0 %v1303, 126
      %v1407 = vpop.permute.xlu0 %1406
      %v1408 = vsel %vm570, %v1385, %v1387
      %v1409 = vsel %vm570, %v1389, %v1391
      %v1410 = vsel %vm570, %v1393, %v1395
      %v1411 = vsel %vm570, %v1397, %v1399
      %v1412 = vsel %vm570, %v1401, %v1403
      %v1413 = vsel %vm570, %v1405, %v1407
      %1420 = vmatpush.bf16.msra.mxu0 0
      %1421 = vmatpush.bf16.msra.mxu0 0
      %1422 = vmatpush.bf16.msra.mxu0 %v1413
      %1423 = vmatpush.bf16.msra.mxu0 %v1412
      %1424 = vmatpush.bf16.msra.mxu0 %v1411
      %1425 = vmatpush.bf16.msra.mxu0 %v1410
      %1426 = vmatpush.bf16.msra.mxu0 %v1409
      %1427 = vmatpush.bf16.msra.mxu0 %v1408
      %1428 = vmatmul.bf16.gmra.mxu0 %v584
      %v1429 = vpop.f32.mrf.mxu0
      %v1430 = vadd.f32 0.0, %v1429
      %v1431 = vpop.f32.mrf.mxu0
      %v1432 = vadd.f32 0.0, %v1431
      %1433 = vmatmul.bf16.gmra.mxu0 %v587
      %v1434 = vpop.f32.mrf.mxu0
      %v1435 = vadd.f32 0.0, %v1434
      %v1436 = vpop.f32.mrf.mxu0
      %v1437 = vadd.f32 0.0, %v1436
      %1438 = vdwg.mxu0
      %v1439 = vadd.f32 %v1375, %v1430
      %v1440 = vadd.f32 %v1377, %v1432
      %v1441 = vadd.f32 %v1380, %v1435
      %v1442 = vadd.f32 %v1382, %v1437
      %v1443 = vadd.f32 %v1439, %v615
      %v1444 = vadd.f32 %v1440, %v620
      %v1445 = vadd.f32 %v1441, %v625
      %v1446 = vadd.f32 %v1442, %v630
      %v1447 = vmax.f32 %v1443, 0.0
      %v1448 = vmax.f32 %v1444, 0.0
      %v1449 = vmax.f32 %v1445, 0.0
      %v1450 = vmax.f32 %v1446, 0.0
      %v1451 = vmul.f32 %v1447, %v262
      %v1452 = vmul.f32 %v1448, %v262
      %v1453 = vmul.f32 %v1449, %v262
      %v1454 = vmul.f32 %v1450, %v262
      %v1455 = vpack.c.bf16 %v1451, %v1451
      %v1456 = vpack.c.bf16 %v1452, %v1452
      %v1457 = vpack.c.bf16 %v1453, %v1453
      %v1458 = vpack.c.bf16 %v1454, %v1454
      %1463 = vrot.lane.b32.xlu0 %v1455, 1
      %v1464 = vpop.permute.xlu0 %1463
      %1465 = vrot.lane.b32.xlu0 %v1456, 1
      %v1466 = vpop.permute.xlu0 %1465
      %1467 = vrot.lane.b32.xlu0 %v1457, 1
      %v1468 = vpop.permute.xlu0 %1467
      %1469 = vrot.lane.b32.xlu0 %v1458, 1
      %v1470 = vpop.permute.xlu0 %1469
      %v1471 = vrot.slane %v1464, 4
      %v1472 = vrot.slane %v1466, 4
      %v1473 = vrot.slane %v1468, 4
      %v1474 = vrot.slane %v1470, 4
      %v1475 = vsel %vm664, %v1471, %v1464
      %v1476 = vsel %vm664, %v1472, %v1466
      %v1477 = vsel %vm664, %v1473, %v1468
      %v1478 = vsel %vm664, %v1474, %v1470
      %s1483 = scalar_lea.vmem [#allocation2], 128
      %1484 = vst.msk [vmem:[%s1483] sm:$0xff] %vm676, %v1475
      %1485 = vst.msk [vmem:[%s1483 + $0x8] sm:$0xff] %vm676, %v1476
      %1486 = vst.msk [vmem:[%s1483 + $0x10] sm:$0xff] %vm676, %v1477
      %1487 = vst.msk [vmem:[%s1483 + $0x18] sm:$0xff] %vm676, %v1478
      %s1488 = scalar_lea.vmem %s219, 256
      %v1489 = vld [vmem:[%s1488] sm:$0xff]
      %v1490 = vld [vmem:[%s1488 + $0x8] sm:$0xff]
      %v1491 = vld [vmem:[%s1488 + $0x10] sm:$0xff]
      %v1492 = vld [vmem:[%s1488 + $0x18] sm:$0xff]
      %v1493 = vld [vmem:[%s1488 + $0x20] sm:$0xff]
      %v1494 = vld [vmem:[%s1488 + $0x28] sm:$0xff]
      %v1495 = vld [vmem:[%s1488 + $0x30] sm:$0xff]
      %v1496 = vld [vmem:[%s1488 + $0x38] sm:$0xff]
      %v1497 = vld [vmem:[%s1488 + $0x40] sm:$0xff]
      %v1498 = vld [vmem:[%s1488 + $0x48] sm:$0xff]
      %v1499 = vld [vmem:[%s1488 + $0x50] sm:$0xff]
      %v1500 = vld [vmem:[%s1488 + $0x58] sm:$0xff]
      %v1501 = vld [vmem:[%s1488 + $0x60] sm:$0xff]
      %v1502 = vld [vmem:[%s1488 + $0x68] sm:$0xff]
      %v1503 = vld [vmem:[%s1488 + $0x70] sm:$0xff]
      %v1504 = vld [vmem:[%s1488 + $0x78] sm:$0xff]
      %v1505 = vld [vmem:[%s1488 + $0x80] sm:$0xff]
      %v1506 = vld [vmem:[%s1488 + $0x88] sm:$0xff]
      %v1507 = vld [vmem:[%s1488 + $0x90] sm:$0xff]
      %v1508 = vld [vmem:[%s1488 + $0x98] sm:$0xff]
      %v1509 = vld [vmem:[%s1488 + $0xa0] sm:$0xff]
      %v1510 = vld [vmem:[%s1488 + $0xa8] sm:$0xff]
      %v1511 = vld [vmem:[%s1488 + $0xb0] sm:$0xff]
      %v1512 = vld [vmem:[%s1488 + $0xb8] sm:$0xff]
      %v1513 = vpack.c.bf16 %v1490, %v1489
      %v1514 = vpack.c.bf16 %v1492, %v1491
      %v1515 = vpack.c.bf16 %v1494, %v1493
      %v1516 = vpack.c.bf16 %v1496, %v1495
      %v1517 = vpack.c.bf16 %v1498, %v1497
      %v1518 = vpack.c.bf16 %v1500, %v1499
      %v1519 = vpack.c.bf16 %v1502, %v1501
      %v1520 = vpack.c.bf16 %v1504, %v1503
      %v1521 = vpack.c.bf16 %v1506, %v1505
      %v1522 = vpack.c.bf16 %v1508, %v1507
      %v1523 = vpack.c.bf16 %v1510, %v1509
      %v1524 = vpack.c.bf16 %v1512, %v1511
      %v1537 = vunpack.c.l.b16 %v1513
      %v1538 = vunpack.c.h.b16 %v1513
      %v1539 = vunpack.c.l.b16 %v1514
      %v1540 = vunpack.c.h.b16 %v1514
      %v1541 = vunpack.c.l.b16 %v1515
      %v1542 = vunpack.c.h.b16 %v1515
      %v1543 = vunpack.c.l.b16 %v1516
      %v1544 = vunpack.c.h.b16 %v1516
      %v1545 = vunpack.c.l.b16 %v1517
      %v1546 = vunpack.c.h.b16 %v1517
      %v1547 = vunpack.c.l.b16 %v1518
      %v1548 = vunpack.c.h.b16 %v1518
      %v1549 = vunpack.c.l.b16 %v1519
      %v1550 = vunpack.c.h.b16 %v1519
      %v1551 = vunpack.c.l.b16 %v1520
      %v1552 = vunpack.c.h.b16 %v1520
      %v1553 = vunpack.c.l.b16 %v1521
      %v1554 = vunpack.c.h.b16 %v1521
      %v1555 = vunpack.c.l.b16 %v1522
      %v1556 = vunpack.c.h.b16 %v1522
      %v1557 = vunpack.c.l.b16 %v1523
      %v1558 = vunpack.c.h.b16 %v1523
      %v1559 = vunpack.c.l.b16 %v1524
      %v1560 = vunpack.c.h.b16 %v1524
      %v1561 = vpack.c.b16 %v1539, %v1537
      %v1562 = vpack.c.b16 %v1540, %v1538
      %v1563 = vpack.c.b16 %v1543, %v1541
      %v1564 = vpack.c.b16 %v1544, %v1542
      %v1565 = vpack.c.b16 %v1547, %v1545
      %v1566 = vpack.c.b16 %v1548, %v1546
      %v1567 = vpack.c.b16 %v1551, %v1549
      %v1568 = vpack.c.b16 %v1552, %v1550
      %v1569 = vpack.c.b16 %v1555, %v1553
      %v1570 = vpack.c.b16 %v1556, %v1554
      %v1571 = vpack.c.b16 %v1559, %v1557
      %v1572 = vpack.c.b16 %v1560, %v1558
      %1573 = vrot.lane.b32.xlu0 %v1561, 127
      %v1574 = vpop.permute.xlu0 %1573
      %1575 = vrot.lane.b32.xlu0 %v1562, 127
      %v1576 = vpop.permute.xlu0 %1575
      %1577 = vrot.lane.b32.xlu0 %v1563, 127
      %v1578 = vpop.permute.xlu0 %1577
      %1579 = vrot.lane.b32.xlu0 %v1564, 127
      %v1580 = vpop.permute.xlu0 %1579
      %1581 = vrot.lane.b32.xlu0 %v1565, 127
      %v1582 = vpop.permute.xlu0 %1581
      %1583 = vrot.lane.b32.xlu0 %v1566, 127
      %v1584 = vpop.permute.xlu0 %1583
      %1585 = vrot.lane.b32.xlu0 %v1567, 127
      %v1586 = vpop.permute.xlu0 %1585
      %1587 = vrot.lane.b32.xlu0 %v1568, 127
      %v1588 = vpop.permute.xlu0 %1587
      %1589 = vrot.lane.b32.xlu0 %v1569, 127
      %v1590 = vpop.permute.xlu0 %1589
      %1591 = vrot.lane.b32.xlu0 %v1570, 127
      %v1592 = vpop.permute.xlu0 %1591
      %1593 = vrot.lane.b32.xlu0 %v1571, 127
      %v1594 = vpop.permute.xlu0 %1593
      %1595 = vrot.lane.b32.xlu0 %v1572, 127
      %v1596 = vpop.permute.xlu0 %1595
      %v1597 = vsel %vm456, %v1574, %v1576
      %v1598 = vsel %vm456, %v1578, %v1580
      %v1599 = vsel %vm456, %v1582, %v1584
      %v1600 = vsel %vm456, %v1586, %v1588
      %v1601 = vsel %vm456, %v1590, %v1592
      %v1602 = vsel %vm456, %v1594, %v1596
      %1609 = vmatpush.bf16.msra.mxu0 0
      %1610 = vmatpush.bf16.msra.mxu0 0
      %1611 = vmatpush.bf16.msra.mxu0 %v1602
      %1612 = vmatpush.bf16.msra.mxu0 %v1601
      %1613 = vmatpush.bf16.msra.mxu0 %v1600
      %1614 = vmatpush.bf16.msra.mxu0 %v1599
      %1615 = vmatpush.bf16.msra.mxu0 %v1598
      %1616 = vmatpush.bf16.msra.mxu0 %v1597
      %1617 = vmatmul.bf16.gmra.mxu0 %v471
      %v1618 = vpop.f32.mrf.mxu0
      %v1619 = vadd.f32 0.0, %v1618
      %v1620 = vpop.f32.mrf.mxu0
      %v1621 = vadd.f32 0.0, %v1620
      %1622 = vmatmul.bf16.gmra.mxu0 %v474
      %v1623 = vpop.f32.mrf.mxu0
      %v1624 = vadd.f32 0.0, %v1623
      %v1625 = vpop.f32.mrf.mxu0
      %v1626 = vadd.f32 0.0, %v1625
      %1627 = vdwg.mxu0
      %1634 = vmatpush.bf16.msra.mxu0 0
      %1635 = vmatpush.bf16.msra.mxu0 0
      %1636 = vmatpush.bf16.msra.mxu0 %v1571
      %1637 = vmatpush.bf16.msra.mxu0 %v1569
      %1638 = vmatpush.bf16.msra.mxu0 %v1567
      %1639 = vmatpush.bf16.msra.mxu0 %v1565
      %1640 = vmatpush.bf16.msra.mxu0 %v1563
      %1641 = vmatpush.bf16.msra.mxu0 %v1561
      %1642 = vmatmul.bf16.gmra.mxu0 %v512
      %v1643 = vpop.f32.mrf.mxu0
      %v1644 = vadd.f32 %v1619, %v1643
      %v1645 = vpop.f32.mrf.mxu0
      %v1646 = vadd.f32 %v1621, %v1645
      %1647 = vmatmul.bf16.gmra.mxu0 %v515
      %v1648 = vpop.f32.mrf.mxu0
      %v1649 = vadd.f32 %v1624, %v1648
      %v1650 = vpop.f32.mrf.mxu0
      %v1651 = vadd.f32 %v1626, %v1650
      %1652 = vdwg.mxu0
      %1653 = vrot.lane.b32.xlu0 %v1561, 126
      %v1654 = vpop.permute.xlu0 %1653
      %1655 = vrot.lane.b32.xlu0 %v1562, 126
      %v1656 = vpop.permute.xlu0 %1655
      %1657 = vrot.lane.b32.xlu0 %v1563, 126
      %v1658 = vpop.permute.xlu0 %1657
      %1659 = vrot.lane.b32.xlu0 %v1564, 126
      %v1660 = vpop.permute.xlu0 %1659
      %1661 = vrot.lane.b32.xlu0 %v1565, 126
      %v1662 = vpop.permute.xlu0 %1661
      %1663 = vrot.lane.b32.xlu0 %v1566, 126
      %v1664 = vpop.permute.xlu0 %1663
      %1665 = vrot.lane.b32.xlu0 %v1567, 126
      %v1666 = vpop.permute.xlu0 %1665
      %1667 = vrot.lane.b32.xlu0 %v1568, 126
      %v1668 = vpop.permute.xlu0 %1667
      %1669 = vrot.lane.b32.xlu0 %v1569, 126
      %v1670 = vpop.permute.xlu0 %1669
      %1671 = vrot.lane.b32.xlu0 %v1570, 126
      %v1672 = vpop.permute.xlu0 %1671
      %1673 = vrot.lane.b32.xlu0 %v1571, 126
      %v1674 = vpop.permute.xlu0 %1673
      %1675 = vrot.lane.b32.xlu0 %v1572, 126
      %v1676 = vpop.permute.xlu0 %1675
      %v1677 = vsel %vm570, %v1654, %v1656
      %v1678 = vsel %vm570, %v1658, %v1660
      %v1679 = vsel %vm570, %v1662, %v1664
      %v1680 = vsel %vm570, %v1666, %v1668
      %v1681 = vsel %vm570, %v1670, %v1672
      %v1682 = vsel %vm570, %v1674, %v1676
      %1689 = vmatpush.bf16.msra.mxu0 0
      %1690 = vmatpush.bf16.msra.mxu0 0
      %1691 = vmatpush.bf16.msra.mxu0 %v1682
      %1692 = vmatpush.bf16.msra.mxu0 %v1681
      %1693 = vmatpush.bf16.msra.mxu0 %v1680
      %1694 = vmatpush.bf16.msra.mxu0 %v1679
      %1695 = vmatpush.bf16.msra.mxu0 %v1678
      %1696 = vmatpush.bf16.msra.mxu0 %v1677
      %1697 = vmatmul.bf16.gmra.mxu0 %v584
      %v1698 = vpop.f32.mrf.mxu0
      %v1699 = vadd.f32 0.0, %v1698
      %v1700 = vpop.f32.mrf.mxu0
      %v1701 = vadd.f32 0.0, %v1700
      %1702 = vmatmul.bf16.gmra.mxu0 %v587
      %v1703 = vpop.f32.mrf.mxu0
      %v1704 = vadd.f32 0.0, %v1703
      %v1705 = vpop.f32.mrf.mxu0
      %v1706 = vadd.f32 0.0, %v1705
      %1707 = vdwg.mxu0
      %v1708 = vadd.f32 %v1644, %v1699
      %v1709 = vadd.f32 %v1646, %v1701
      %v1710 = vadd.f32 %v1649, %v1704
      %v1711 = vadd.f32 %v1651, %v1706
      %v1712 = vadd.f32 %v1708, %v615
      %v1713 = vadd.f32 %v1709, %v620
      %v1714 = vadd.f32 %v1710, %v625
      %v1715 = vadd.f32 %v1711, %v630
      %v1716 = vmax.f32 %v1712, 0.0
      %v1717 = vmax.f32 %v1713, 0.0
      %v1718 = vmax.f32 %v1714, 0.0
      %v1719 = vmax.f32 %v1715, 0.0
      %v1720 = vmul.f32 %v1716, %v262
      %v1721 = vmul.f32 %v1717, %v262
      %v1722 = vmul.f32 %v1718, %v262
      %v1723 = vmul.f32 %v1719, %v262
      %v1724 = vpack.c.bf16 %v1720, %v1720
      %v1725 = vpack.c.bf16 %v1721, %v1721
      %v1726 = vpack.c.bf16 %v1722, %v1722
      %v1727 = vpack.c.bf16 %v1723, %v1723
      %1732 = vrot.lane.b32.xlu0 %v1724, 1
      %v1733 = vpop.permute.xlu0 %1732
      %1734 = vrot.lane.b32.xlu0 %v1725, 1
      %v1735 = vpop.permute.xlu0 %1734
      %1736 = vrot.lane.b32.xlu0 %v1726, 1
      %v1737 = vpop.permute.xlu0 %1736
      %1738 = vrot.lane.b32.xlu0 %v1727, 1
      %v1739 = vpop.permute.xlu0 %1738
      %v1740 = vrot.slane %v1733, 4
      %v1741 = vrot.slane %v1735, 4
      %v1742 = vrot.slane %v1737, 4
      %v1743 = vrot.slane %v1739, 4
      %v1744 = vsel %vm664, %v1740, %v1733
      %v1745 = vsel %vm664, %v1741, %v1735
      %v1746 = vsel %vm664, %v1742, %v1737
      %v1747 = vsel %vm664, %v1743, %v1739
      %s1752 = scalar_lea.vmem [#allocation2], 160
      %1753 = vst.msk [vmem:[%s1752] sm:$0xff] %vm676, %v1744
      %1754 = vst.msk [vmem:[%s1752 + $0x8] sm:$0xff] %vm676, %v1745
      %1755 = vst.msk [vmem:[%s1752 + $0x10] sm:$0xff] %vm676, %v1746
      %1756 = vst.msk [vmem:[%s1752 + $0x18] sm:$0xff] %vm676, %v1747
      %s1757 = scalar_lea.vmem %s219, 320
      %v1758 = vld [vmem:[%s1757] sm:$0xff]
      %v1759 = vld [vmem:[%s1757 + $0x8] sm:$0xff]
      %v1760 = vld [vmem:[%s1757 + $0x10] sm:$0xff]
      %v1761 = vld [vmem:[%s1757 + $0x18] sm:$0xff]
      %v1762 = vld [vmem:[%s1757 + $0x20] sm:$0xff]
      %v1763 = vld [vmem:[%s1757 + $0x28] sm:$0xff]
      %v1764 = vld [vmem:[%s1757 + $0x30] sm:$0xff]
      %v1765 = vld [vmem:[%s1757 + $0x38] sm:$0xff]
      %v1766 = vld [vmem:[%s1757 + $0x40] sm:$0xff]
      %v1767 = vld [vmem:[%s1757 + $0x48] sm:$0xff]
      %v1768 = vld [vmem:[%s1757 + $0x50] sm:$0xff]
      %v1769 = vld [vmem:[%s1757 + $0x58] sm:$0xff]
      %v1770 = vld [vmem:[%s1757 + $0x60] sm:$0xff]
      %v1771 = vld [vmem:[%s1757 + $0x68] sm:$0xff]
      %v1772 = vld [vmem:[%s1757 + $0x70] sm:$0xff]
      %v1773 = vld [vmem:[%s1757 + $0x78] sm:$0xff]
      %v1774 = vld [vmem:[%s1757 + $0x80] sm:$0xff]
      %v1775 = vld [vmem:[%s1757 + $0x88] sm:$0xff]
      %v1776 = vld [vmem:[%s1757 + $0x90] sm:$0xff]
      %v1777 = vld [vmem:[%s1757 + $0x98] sm:$0xff]
      %v1778 = vld [vmem:[%s1757 + $0xa0] sm:$0xff]
      %v1779 = vld [vmem:[%s1757 + $0xa8] sm:$0xff]
      %v1780 = vld [vmem:[%s1757 + $0xb0] sm:$0xff]
      %v1781 = vld [vmem:[%s1757 + $0xb8] sm:$0xff]
      %v1782 = vpack.c.bf16 %v1759, %v1758
      %v1783 = vpack.c.bf16 %v1761, %v1760
      %v1784 = vpack.c.bf16 %v1763, %v1762
      %v1785 = vpack.c.bf16 %v1765, %v1764
      %v1786 = vpack.c.bf16 %v1767, %v1766
      %v1787 = vpack.c.bf16 %v1769, %v1768
      %v1788 = vpack.c.bf16 %v1771, %v1770
      %v1789 = vpack.c.bf16 %v1773, %v1772
      %v1790 = vpack.c.bf16 %v1775, %v1774
      %v1791 = vpack.c.bf16 %v1777, %v1776
      %v1792 = vpack.c.bf16 %v1779, %v1778
      %v1793 = vpack.c.bf16 %v1781, %v1780
      %v1806 = vunpack.c.l.b16 %v1782
      %v1807 = vunpack.c.h.b16 %v1782
      %v1808 = vunpack.c.l.b16 %v1783
      %v1809 = vunpack.c.h.b16 %v1783
      %v1810 = vunpack.c.l.b16 %v1784
      %v1811 = vunpack.c.h.b16 %v1784
      %v1812 = vunpack.c.l.b16 %v1785
      %v1813 = vunpack.c.h.b16 %v1785
      %v1814 = vunpack.c.l.b16 %v1786
      %v1815 = vunpack.c.h.b16 %v1786
      %v1816 = vunpack.c.l.b16 %v1787
      %v1817 = vunpack.c.h.b16 %v1787
      %v1818 = vunpack.c.l.b16 %v1788
      %v1819 = vunpack.c.h.b16 %v1788
      %v1820 = vunpack.c.l.b16 %v1789
      %v1821 = vunpack.c.h.b16 %v1789
      %v1822 = vunpack.c.l.b16 %v1790
      %v1823 = vunpack.c.h.b16 %v1790
      %v1824 = vunpack.c.l.b16 %v1791
      %v1825 = vunpack.c.h.b16 %v1791
      %v1826 = vunpack.c.l.b16 %v1792
      %v1827 = vunpack.c.h.b16 %v1792
      %v1828 = vunpack.c.l.b16 %v1793
      %v1829 = vunpack.c.h.b16 %v1793
      %v1830 = vpack.c.b16 %v1808, %v1806
      %v1831 = vpack.c.b16 %v1809, %v1807
      %v1832 = vpack.c.b16 %v1812, %v1810
      %v1833 = vpack.c.b16 %v1813, %v1811
      %v1834 = vpack.c.b16 %v1816, %v1814
      %v1835 = vpack.c.b16 %v1817, %v1815
      %v1836 = vpack.c.b16 %v1820, %v1818
      %v1837 = vpack.c.b16 %v1821, %v1819
      %v1838 = vpack.c.b16 %v1824, %v1822
      %v1839 = vpack.c.b16 %v1825, %v1823
      %v1840 = vpack.c.b16 %v1828, %v1826
      %v1841 = vpack.c.b16 %v1829, %v1827
      %1842 = vrot.lane.b32.xlu0 %v1830, 127
      %v1843 = vpop.permute.xlu0 %1842
      %1844 = vrot.lane.b32.xlu0 %v1831, 127
      %v1845 = vpop.permute.xlu0 %1844
      %1846 = vrot.lane.b32.xlu0 %v1832, 127
      %v1847 = vpop.permute.xlu0 %1846
      %1848 = vrot.lane.b32.xlu0 %v1833, 127
      %v1849 = vpop.permute.xlu0 %1848
      %1850 = vrot.lane.b32.xlu0 %v1834, 127
      %v1851 = vpop.permute.xlu0 %1850
      %1852 = vrot.lane.b32.xlu0 %v1835, 127
      %v1853 = vpop.permute.xlu0 %1852
      %1854 = vrot.lane.b32.xlu0 %v1836, 127
      %v1855 = vpop.permute.xlu0 %1854
      %1856 = vrot.lane.b32.xlu0 %v1837, 127
      %v1857 = vpop.permute.xlu0 %1856
      %1858 = vrot.lane.b32.xlu0 %v1838, 127
      %v1859 = vpop.permute.xlu0 %1858
      %1860 = vrot.lane.b32.xlu0 %v1839, 127
      %v1861 = vpop.permute.xlu0 %1860
      %1862 = vrot.lane.b32.xlu0 %v1840, 127
      %v1863 = vpop.permute.xlu0 %1862
      %1864 = vrot.lane.b32.xlu0 %v1841, 127
      %v1865 = vpop.permute.xlu0 %1864
      %v1866 = vsel %vm456, %v1843, %v1845
      %v1867 = vsel %vm456, %v1847, %v1849
      %v1868 = vsel %vm456, %v1851, %v1853
      %v1869 = vsel %vm456, %v1855, %v1857
      %v1870 = vsel %vm456, %v1859, %v1861
      %v1871 = vsel %vm456, %v1863, %v1865
      %1878 = vmatpush.bf16.msra.mxu0 0
      %1879 = vmatpush.bf16.msra.mxu0 0
      %1880 = vmatpush.bf16.msra.mxu0 %v1871
      %1881 = vmatpush.bf16.msra.mxu0 %v1870
      %1882 = vmatpush.bf16.msra.mxu0 %v1869
      %1883 = vmatpush.bf16.msra.mxu0 %v1868
      %1884 = vmatpush.bf16.msra.mxu0 %v1867
      %1885 = vmatpush.bf16.msra.mxu0 %v1866
      %1886 = vmatmul.bf16.gmra.mxu0 %v471
      %v1887 = vpop.f32.mrf.mxu0
      %v1888 = vadd.f32 0.0, %v1887
      %v1889 = vpop.f32.mrf.mxu0
      %v1890 = vadd.f32 0.0, %v1889
      %1891 = vmatmul.bf16.gmra.mxu0 %v474
      %v1892 = vpop.f32.mrf.mxu0
      %v1893 = vadd.f32 0.0, %v1892
      %v1894 = vpop.f32.mrf.mxu0
      %v1895 = vadd.f32 0.0, %v1894
      %1896 = vdwg.mxu0
      %1903 = vmatpush.bf16.msra.mxu0 0
      %1904 = vmatpush.bf16.msra.mxu0 0
      %1905 = vmatpush.bf16.msra.mxu0 %v1840
      %1906 = vmatpush.bf16.msra.mxu0 %v1838
      %1907 = vmatpush.bf16.msra.mxu0 %v1836
      %1908 = vmatpush.bf16.msra.mxu0 %v1834
      %1909 = vmatpush.bf16.msra.mxu0 %v1832
      %1910 = vmatpush.bf16.msra.mxu0 %v1830
      %1911 = vmatmul.bf16.gmra.mxu0 %v512
      %v1912 = vpop.f32.mrf.mxu0
      %v1913 = vadd.f32 %v1888, %v1912
      %v1914 = vpop.f32.mrf.mxu0
      %v1915 = vadd.f32 %v1890, %v1914
      %1916 = vmatmul.bf16.gmra.mxu0 %v515
      %v1917 = vpop.f32.mrf.mxu0
      %v1918 = vadd.f32 %v1893, %v1917
      %v1919 = vpop.f32.mrf.mxu0
      %v1920 = vadd.f32 %v1895, %v1919
      %1921 = vdwg.mxu0
      %1922 = vrot.lane.b32.xlu0 %v1830, 126
      %v1923 = vpop.permute.xlu0 %1922
      %1924 = vrot.lane.b32.xlu0 %v1831, 126
      %v1925 = vpop.permute.xlu0 %1924
      %1926 = vrot.lane.b32.xlu0 %v1832, 126
      %v1927 = vpop.permute.xlu0 %1926
      %1928 = vrot.lane.b32.xlu0 %v1833, 126
      %v1929 = vpop.permute.xlu0 %1928
      %1930 = vrot.lane.b32.xlu0 %v1834, 126
      %v1931 = vpop.permute.xlu0 %1930
      %1932 = vrot.lane.b32.xlu0 %v1835, 126
      %v1933 = vpop.permute.xlu0 %1932
      %1934 = vrot.lane.b32.xlu0 %v1836, 126
      %v1935 = vpop.permute.xlu0 %1934
      %1936 = vrot.lane.b32.xlu0 %v1837, 126
      %v1937 = vpop.permute.xlu0 %1936
      %1938 = vrot.lane.b32.xlu0 %v1838, 126
      %v1939 = vpop.permute.xlu0 %1938
      %1940 = vrot.lane.b32.xlu0 %v1839, 126
      %v1941 = vpop.permute.xlu0 %1940
      %1942 = vrot.lane.b32.xlu0 %v1840, 126
      %v1943 = vpop.permute.xlu0 %1942
      %1944 = vrot.lane.b32.xlu0 %v1841, 126
      %v1945 = vpop.permute.xlu0 %1944
      %v1946 = vsel %vm570, %v1923, %v1925
      %v1947 = vsel %vm570, %v1927, %v1929
      %v1948 = vsel %vm570, %v1931, %v1933
      %v1949 = vsel %vm570, %v1935, %v1937
      %v1950 = vsel %vm570, %v1939, %v1941
      %v1951 = vsel %vm570, %v1943, %v1945
      %1958 = vmatpush.bf16.msra.mxu0 0
      %1959 = vmatpush.bf16.msra.mxu0 0
      %1960 = vmatpush.bf16.msra.mxu0 %v1951
      %1961 = vmatpush.bf16.msra.mxu0 %v1950
      %1962 = vmatpush.bf16.msra.mxu0 %v1949
      %1963 = vmatpush.bf16.msra.mxu0 %v1948
      %1964 = vmatpush.bf16.msra.mxu0 %v1947
      %1965 = vmatpush.bf16.msra.mxu0 %v1946
      %1966 = vmatmul.bf16.gmra.mxu0 %v584
      %v1967 = vpop.f32.mrf.mxu0
      %v1968 = vadd.f32 0.0, %v1967
      %v1969 = vpop.f32.mrf.mxu0
      %v1970 = vadd.f32 0.0, %v1969
      %1971 = vmatmul.bf16.gmra.mxu0 %v587
      %v1972 = vpop.f32.mrf.mxu0
      %v1973 = vadd.f32 0.0, %v1972
      %v1974 = vpop.f32.mrf.mxu0
      %v1975 = vadd.f32 0.0, %v1974
      %1976 = vdwg.mxu0
      %v1977 = vadd.f32 %v1913, %v1968
      %v1978 = vadd.f32 %v1915, %v1970
      %v1979 = vadd.f32 %v1918, %v1973
      %v1980 = vadd.f32 %v1920, %v1975
      %v1981 = vadd.f32 %v1977, %v615
      %v1982 = vadd.f32 %v1978, %v620
      %v1983 = vadd.f32 %v1979, %v625
      %v1984 = vadd.f32 %v1980, %v630
      %v1985 = vmax.f32 %v1981, 0.0
      %v1986 = vmax.f32 %v1982, 0.0
      %v1987 = vmax.f32 %v1983, 0.0
      %v1988 = vmax.f32 %v1984, 0.0
      %v1989 = vmul.f32 %v1985, %v262
      %v1990 = vmul.f32 %v1986, %v262
      %v1991 = vmul.f32 %v1987, %v262
      %v1992 = vmul.f32 %v1988, %v262
      %v1993 = vpack.c.bf16 %v1989, %v1989
      %v1994 = vpack.c.bf16 %v1990, %v1990
      %v1995 = vpack.c.bf16 %v1991, %v1991
      %v1996 = vpack.c.bf16 %v1992, %v1992
      %2001 = vrot.lane.b32.xlu0 %v1993, 1
      %v2002 = vpop.permute.xlu0 %2001
      %2003 = vrot.lane.b32.xlu0 %v1994, 1
      %v2004 = vpop.permute.xlu0 %2003
      %2005 = vrot.lane.b32.xlu0 %v1995, 1
      %v2006 = vpop.permute.xlu0 %2005
      %2007 = vrot.lane.b32.xlu0 %v1996, 1
      %v2008 = vpop.permute.xlu0 %2007
      %v2009 = vrot.slane %v2002, 4
      %v2010 = vrot.slane %v2004, 4
      %v2011 = vrot.slane %v2006, 4
      %v2012 = vrot.slane %v2008, 4
      %v2013 = vsel %vm664, %v2009, %v2002
      %v2014 = vsel %vm664, %v2010, %v2004
      %v2015 = vsel %vm664, %v2011, %v2006
      %v2016 = vsel %vm664, %v2012, %v2008
      %s2021 = scalar_lea.vmem [#allocation2], 192
      %2022 = vst.msk [vmem:[%s2021] sm:$0xff] %vm676, %v2013
      %2023 = vst.msk [vmem:[%s2021 + $0x8] sm:$0xff] %vm676, %v2014
      %2024 = vst.msk [vmem:[%s2021 + $0x10] sm:$0xff] %vm676, %v2015
      %2025 = vst.msk [vmem:[%s2021 + $0x18] sm:$0xff] %vm676, %v2016
      %s2026 = scalar_lea.vmem %s219, 384
      %v2027 = vld [vmem:[%s2026] sm:$0xff]
      %v2028 = vld [vmem:[%s2026 + $0x8] sm:$0xff]
      %v2029 = vld [vmem:[%s2026 + $0x10] sm:$0xff]
      %v2030 = vld [vmem:[%s2026 + $0x18] sm:$0xff]
      %v2031 = vld [vmem:[%s2026 + $0x20] sm:$0xff]
      %v2032 = vld [vmem:[%s2026 + $0x28] sm:$0xff]
      %v2033 = vld [vmem:[%s2026 + $0x30] sm:$0xff]
      %v2034 = vld [vmem:[%s2026 + $0x38] sm:$0xff]
      %v2035 = vld [vmem:[%s2026 + $0x40] sm:$0xff]
      %v2036 = vld [vmem:[%s2026 + $0x48] sm:$0xff]
      %v2037 = vld [vmem:[%s2026 + $0x50] sm:$0xff]
      %v2038 = vld [vmem:[%s2026 + $0x58] sm:$0xff]
      %v2039 = vld [vmem:[%s2026 + $0x60] sm:$0xff]
      %v2040 = vld [vmem:[%s2026 + $0x68] sm:$0xff]
      %v2041 = vld [vmem:[%s2026 + $0x70] sm:$0xff]
      %v2042 = vld [vmem:[%s2026 + $0x78] sm:$0xff]
      %v2043 = vld [vmem:[%s2026 + $0x80] sm:$0xff]
      %v2044 = vld [vmem:[%s2026 + $0x88] sm:$0xff]
      %v2045 = vld [vmem:[%s2026 + $0x90] sm:$0xff]
      %v2046 = vld [vmem:[%s2026 + $0x98] sm:$0xff]
      %v2047 = vld [vmem:[%s2026 + $0xa0] sm:$0xff]
      %v2048 = vld [vmem:[%s2026 + $0xa8] sm:$0xff]
      %v2049 = vld [vmem:[%s2026 + $0xb0] sm:$0xff]
      %v2050 = vld [vmem:[%s2026 + $0xb8] sm:$0xff]
      %v2051 = vpack.c.bf16 %v2028, %v2027
      %v2052 = vpack.c.bf16 %v2030, %v2029
      %v2053 = vpack.c.bf16 %v2032, %v2031
      %v2054 = vpack.c.bf16 %v2034, %v2033
      %v2055 = vpack.c.bf16 %v2036, %v2035
      %v2056 = vpack.c.bf16 %v2038, %v2037
      %v2057 = vpack.c.bf16 %v2040, %v2039
      %v2058 = vpack.c.bf16 %v2042, %v2041
      %v2059 = vpack.c.bf16 %v2044, %v2043
      %v2060 = vpack.c.bf16 %v2046, %v2045
      %v2061 = vpack.c.bf16 %v2048, %v2047
      %v2062 = vpack.c.bf16 %v2050, %v2049
      %v2075 = vunpack.c.l.b16 %v2051
      %v2076 = vunpack.c.h.b16 %v2051
      %v2077 = vunpack.c.l.b16 %v2052
      %v2078 = vunpack.c.h.b16 %v2052
      %v2079 = vunpack.c.l.b16 %v2053
      %v2080 = vunpack.c.h.b16 %v2053
      %v2081 = vunpack.c.l.b16 %v2054
      %v2082 = vunpack.c.h.b16 %v2054
      %v2083 = vunpack.c.l.b16 %v2055
      %v2084 = vunpack.c.h.b16 %v2055
      %v2085 = vunpack.c.l.b16 %v2056
      %v2086 = vunpack.c.h.b16 %v2056
      %v2087 = vunpack.c.l.b16 %v2057
      %v2088 = vunpack.c.h.b16 %v2057
      %v2089 = vunpack.c.l.b16 %v2058
      %v2090 = vunpack.c.h.b16 %v2058
      %v2091 = vunpack.c.l.b16 %v2059
      %v2092 = vunpack.c.h.b16 %v2059
      %v2093 = vunpack.c.l.b16 %v2060
      %v2094 = vunpack.c.h.b16 %v2060
      %v2095 = vunpack.c.l.b16 %v2061
      %v2096 = vunpack.c.h.b16 %v2061
      %v2097 = vunpack.c.l.b16 %v2062
      %v2098 = vunpack.c.h.b16 %v2062
      %v2099 = vpack.c.b16 %v2077, %v2075
      %v2100 = vpack.c.b16 %v2078, %v2076
      %v2101 = vpack.c.b16 %v2081, %v2079
      %v2102 = vpack.c.b16 %v2082, %v2080
      %v2103 = vpack.c.b16 %v2085, %v2083
      %v2104 = vpack.c.b16 %v2086, %v2084
      %v2105 = vpack.c.b16 %v2089, %v2087
      %v2106 = vpack.c.b16 %v2090, %v2088
      %v2107 = vpack.c.b16 %v2093, %v2091
      %v2108 = vpack.c.b16 %v2094, %v2092
      %v2109 = vpack.c.b16 %v2097, %v2095
      %v2110 = vpack.c.b16 %v2098, %v2096
      %2111 = vrot.lane.b32.xlu0 %v2099, 127
      %v2112 = vpop.permute.xlu0 %2111
      %2113 = vrot.lane.b32.xlu0 %v2100, 127
      %v2114 = vpop.permute.xlu0 %2113
      %2115 = vrot.lane.b32.xlu0 %v2101, 127
      %v2116 = vpop.permute.xlu0 %2115
      %2117 = vrot.lane.b32.xlu0 %v2102, 127
      %v2118 = vpop.permute.xlu0 %2117
      %2119 = vrot.lane.b32.xlu0 %v2103, 127
      %v2120 = vpop.permute.xlu0 %2119
      %2121 = vrot.lane.b32.xlu0 %v2104, 127
      %v2122 = vpop.permute.xlu0 %2121
      %2123 = vrot.lane.b32.xlu0 %v2105, 127
      %v2124 = vpop.permute.xlu0 %2123
      %2125 = vrot.lane.b32.xlu0 %v2106, 127
      %v2126 = vpop.permute.xlu0 %2125
      %2127 = vrot.lane.b32.xlu0 %v2107, 127
      %v2128 = vpop.permute.xlu0 %2127
      %2129 = vrot.lane.b32.xlu0 %v2108, 127
      %v2130 = vpop.permute.xlu0 %2129
      %2131 = vrot.lane.b32.xlu0 %v2109, 127
      %v2132 = vpop.permute.xlu0 %2131
      %2133 = vrot.lane.b32.xlu0 %v2110, 127
      %v2134 = vpop.permute.xlu0 %2133
      %v2135 = vsel %vm456, %v2112, %v2114
      %v2136 = vsel %vm456, %v2116, %v2118
      %v2137 = vsel %vm456, %v2120, %v2122
      %v2138 = vsel %vm456, %v2124, %v2126
      %v2139 = vsel %vm456, %v2128, %v2130
      %v2140 = vsel %vm456, %v2132, %v2134
      %2147 = vmatpush.bf16.msra.mxu0 0
      %2148 = vmatpush.bf16.msra.mxu0 0
      %2149 = vmatpush.bf16.msra.mxu0 %v2140
      %2150 = vmatpush.bf16.msra.mxu0 %v2139
      %2151 = vmatpush.bf16.msra.mxu0 %v2138
      %2152 = vmatpush.bf16.msra.mxu0 %v2137
      %2153 = vmatpush.bf16.msra.mxu0 %v2136
      %2154 = vmatpush.bf16.msra.mxu0 %v2135
      %2155 = vmatmul.bf16.gmra.mxu0 %v471
      %v2156 = vpop.f32.mrf.mxu0
      %v2157 = vadd.f32 0.0, %v2156
      %v2158 = vpop.f32.mrf.mxu0
      %v2159 = vadd.f32 0.0, %v2158
      %2160 = vmatmul.bf16.gmra.mxu0 %v474
      %v2161 = vpop.f32.mrf.mxu0
      %v2162 = vadd.f32 0.0, %v2161
      %v2163 = vpop.f32.mrf.mxu0
      %v2164 = vadd.f32 0.0, %v2163
      %2165 = vdwg.mxu0
      %2172 = vmatpush.bf16.msra.mxu0 0
      %2173 = vmatpush.bf16.msra.mxu0 0
      %2174 = vmatpush.bf16.msra.mxu0 %v2109
      %2175 = vmatpush.bf16.msra.mxu0 %v2107
      %2176 = vmatpush.bf16.msra.mxu0 %v2105
      %2177 = vmatpush.bf16.msra.mxu0 %v2103
      %2178 = vmatpush.bf16.msra.mxu0 %v2101
      %2179 = vmatpush.bf16.msra.mxu0 %v2099
      %2180 = vmatmul.bf16.gmra.mxu0 %v512
      %v2181 = vpop.f32.mrf.mxu0
      %v2182 = vadd.f32 %v2157, %v2181
      %v2183 = vpop.f32.mrf.mxu0
      %v2184 = vadd.f32 %v2159, %v2183
      %2185 = vmatmul.bf16.gmra.mxu0 %v515
      %v2186 = vpop.f32.mrf.mxu0
      %v2187 = vadd.f32 %v2162, %v2186
      %v2188 = vpop.f32.mrf.mxu0
      %v2189 = vadd.f32 %v2164, %v2188
      %2190 = vdwg.mxu0
      %2191 = vrot.lane.b32.xlu0 %v2099, 126
      %v2192 = vpop.permute.xlu0 %2191
      %2193 = vrot.lane.b32.xlu0 %v2100, 126
      %v2194 = vpop.permute.xlu0 %2193
      %2195 = vrot.lane.b32.xlu0 %v2101, 126
      %v2196 = vpop.permute.xlu0 %2195
      %2197 = vrot.lane.b32.xlu0 %v2102, 126
      %v2198 = vpop.permute.xlu0 %2197
      %2199 = vrot.lane.b32.xlu0 %v2103, 126
      %v2200 = vpop.permute.xlu0 %2199
      %2201 = vrot.lane.b32.xlu0 %v2104, 126
      %v2202 = vpop.permute.xlu0 %2201
      %2203 = vrot.lane.b32.xlu0 %v2105, 126
      %v2204 = vpop.permute.xlu0 %2203
      %2205 = vrot.lane.b32.xlu0 %v2106, 126
      %v2206 = vpop.permute.xlu0 %2205
      %2207 = vrot.lane.b32.xlu0 %v2107, 126
      %v2208 = vpop.permute.xlu0 %2207
      %2209 = vrot.lane.b32.xlu0 %v2108, 126
      %v2210 = vpop.permute.xlu0 %2209
      %2211 = vrot.lane.b32.xlu0 %v2109, 126
      %v2212 = vpop.permute.xlu0 %2211
      %2213 = vrot.lane.b32.xlu0 %v2110, 126
      %v2214 = vpop.permute.xlu0 %2213
      %v2215 = vsel %vm570, %v2192, %v2194
      %v2216 = vsel %vm570, %v2196, %v2198
      %v2217 = vsel %vm570, %v2200, %v2202
      %v2218 = vsel %vm570, %v2204, %v2206
      %v2219 = vsel %vm570, %v2208, %v2210
      %v2220 = vsel %vm570, %v2212, %v2214
      %2227 = vmatpush.bf16.msra.mxu0 0
      %2228 = vmatpush.bf16.msra.mxu0 0
      %2229 = vmatpush.bf16.msra.mxu0 %v2220
      %2230 = vmatpush.bf16.msra.mxu0 %v2219
      %2231 = vmatpush.bf16.msra.mxu0 %v2218
      %2232 = vmatpush.bf16.msra.mxu0 %v2217
      %2233 = vmatpush.bf16.msra.mxu0 %v2216
      %2234 = vmatpush.bf16.msra.mxu0 %v2215
      %2235 = vmatmul.bf16.gmra.mxu0 %v584
      %v2236 = vpop.f32.mrf.mxu0
      %v2237 = vadd.f32 0.0, %v2236
      %v2238 = vpop.f32.mrf.mxu0
      %v2239 = vadd.f32 0.0, %v2238
      %2240 = vmatmul.bf16.gmra.mxu0 %v587
      %v2241 = vpop.f32.mrf.mxu0
      %v2242 = vadd.f32 0.0, %v2241
      %v2243 = vpop.f32.mrf.mxu0
      %v2244 = vadd.f32 0.0, %v2243
      %2245 = vdwg.mxu0
      %v2246 = vadd.f32 %v2182, %v2237
      %v2247 = vadd.f32 %v2184, %v2239
      %v2248 = vadd.f32 %v2187, %v2242
      %v2249 = vadd.f32 %v2189, %v2244
      %v2250 = vadd.f32 %v2246, %v615
      %v2251 = vadd.f32 %v2247, %v620
      %v2252 = vadd.f32 %v2248, %v625
      %v2253 = vadd.f32 %v2249, %v630
      %v2254 = vmax.f32 %v2250, 0.0
      %v2255 = vmax.f32 %v2251, 0.0
      %v2256 = vmax.f32 %v2252, 0.0
      %v2257 = vmax.f32 %v2253, 0.0
      %v2258 = vmul.f32 %v2254, %v262
      %v2259 = vmul.f32 %v2255, %v262
      %v2260 = vmul.f32 %v2256, %v262
      %v2261 = vmul.f32 %v2257, %v262
      %v2262 = vpack.c.bf16 %v2258, %v2258
      %v2263 = vpack.c.bf16 %v2259, %v2259
      %v2264 = vpack.c.bf16 %v2260, %v2260
      %v2265 = vpack.c.bf16 %v2261, %v2261
      %2270 = vrot.lane.b32.xlu0 %v2262, 1
      %v2271 = vpop.permute.xlu0 %2270
      %2272 = vrot.lane.b32.xlu0 %v2263, 1
      %v2273 = vpop.permute.xlu0 %2272
      %2274 = vrot.lane.b32.xlu0 %v2264, 1
      %v2275 = vpop.permute.xlu0 %2274
      %2276 = vrot.lane.b32.xlu0 %v2265, 1
      %v2277 = vpop.permute.xlu0 %2276
      %v2278 = vrot.slane %v2271, 4
      %v2279 = vrot.slane %v2273, 4
      %v2280 = vrot.slane %v2275, 4
      %v2281 = vrot.slane %v2277, 4
      %v2282 = vsel %vm664, %v2278, %v2271
      %v2283 = vsel %vm664, %v2279, %v2273
      %v2284 = vsel %vm664, %v2280, %v2275
      %v2285 = vsel %vm664, %v2281, %v2277
      %s2290 = scalar_lea.vmem [#allocation2], 224
      %2291 = vst.msk [vmem:[%s2290] sm:$0xff] %vm676, %v2282
      %2292 = vst.msk [vmem:[%s2290 + $0x8] sm:$0xff] %vm676, %v2283
      %2293 = vst.msk [vmem:[%s2290 + $0x10] sm:$0xff] %vm676, %v2284
      %2294 = vst.msk [vmem:[%s2290 + $0x18] sm:$0xff] %vm676, %v2285
      %s2295 = scalar_lea.vmem %s219, 448
      %v2296 = vld [vmem:[%s2295] sm:$0xff]
      %v2297 = vld [vmem:[%s2295 + $0x8] sm:$0xff]
      %v2298 = vld [vmem:[%s2295 + $0x10] sm:$0xff]
      %v2299 = vld [vmem:[%s2295 + $0x18] sm:$0xff]
      %v2300 = vld [vmem:[%s2295 + $0x20] sm:$0xff]
      %v2301 = vld [vmem:[%s2295 + $0x28] sm:$0xff]
      %v2302 = vld [vmem:[%s2295 + $0x30] sm:$0xff]
      %v2303 = vld [vmem:[%s2295 + $0x38] sm:$0xff]
      %v2304 = vld [vmem:[%s2295 + $0x40] sm:$0xff]
      %v2305 = vld [vmem:[%s2295 + $0x48] sm:$0xff]
      %v2306 = vld [vmem:[%s2295 + $0x50] sm:$0xff]
      %v2307 = vld [vmem:[%s2295 + $0x58] sm:$0xff]
      %v2308 = vld [vmem:[%s2295 + $0x60] sm:$0xff]
      %v2309 = vld [vmem:[%s2295 + $0x68] sm:$0xff]
      %v2310 = vld [vmem:[%s2295 + $0x70] sm:$0xff]
      %v2311 = vld [vmem:[%s2295 + $0x78] sm:$0xff]
      %v2312 = vld [vmem:[%s2295 + $0x80] sm:$0xff]
      %v2313 = vld [vmem:[%s2295 + $0x88] sm:$0xff]
      %v2314 = vld [vmem:[%s2295 + $0x90] sm:$0xff]
      %v2315 = vld [vmem:[%s2295 + $0x98] sm:$0xff]
      %v2316 = vld [vmem:[%s2295 + $0xa0] sm:$0xff]
      %v2317 = vld [vmem:[%s2295 + $0xa8] sm:$0xff]
      %v2318 = vld [vmem:[%s2295 + $0xb0] sm:$0xff]
      %v2319 = vld [vmem:[%s2295 + $0xb8] sm:$0xff]
      %v2320 = vpack.c.bf16 %v2297, %v2296
      %v2321 = vpack.c.bf16 %v2299, %v2298
      %v2322 = vpack.c.bf16 %v2301, %v2300
      %v2323 = vpack.c.bf16 %v2303, %v2302
      %v2324 = vpack.c.bf16 %v2305, %v2304
      %v2325 = vpack.c.bf16 %v2307, %v2306
      %v2326 = vpack.c.bf16 %v2309, %v2308
      %v2327 = vpack.c.bf16 %v2311, %v2310
      %v2328 = vpack.c.bf16 %v2313, %v2312
      %v2329 = vpack.c.bf16 %v2315, %v2314
      %v2330 = vpack.c.bf16 %v2317, %v2316
      %v2331 = vpack.c.bf16 %v2319, %v2318
      %v2344 = vunpack.c.l.b16 %v2320
      %v2345 = vunpack.c.h.b16 %v2320
      %v2346 = vunpack.c.l.b16 %v2321
      %v2347 = vunpack.c.h.b16 %v2321
      %v2348 = vunpack.c.l.b16 %v2322
      %v2349 = vunpack.c.h.b16 %v2322
      %v2350 = vunpack.c.l.b16 %v2323
      %v2351 = vunpack.c.h.b16 %v2323
      %v2352 = vunpack.c.l.b16 %v2324
      %v2353 = vunpack.c.h.b16 %v2324
      %v2354 = vunpack.c.l.b16 %v2325
      %v2355 = vunpack.c.h.b16 %v2325
      %v2356 = vunpack.c.l.b16 %v2326
      %v2357 = vunpack.c.h.b16 %v2326
      %v2358 = vunpack.c.l.b16 %v2327
      %v2359 = vunpack.c.h.b16 %v2327
      %v2360 = vunpack.c.l.b16 %v2328
      %v2361 = vunpack.c.h.b16 %v2328
      %v2362 = vunpack.c.l.b16 %v2329
      %v2363 = vunpack.c.h.b16 %v2329
      %v2364 = vunpack.c.l.b16 %v2330
      %v2365 = vunpack.c.h.b16 %v2330
      %v2366 = vunpack.c.l.b16 %v2331
      %v2367 = vunpack.c.h.b16 %v2331
      %v2368 = vpack.c.b16 %v2346, %v2344
      %v2369 = vpack.c.b16 %v2347, %v2345
      %v2370 = vpack.c.b16 %v2350, %v2348
      %v2371 = vpack.c.b16 %v2351, %v2349
      %v2372 = vpack.c.b16 %v2354, %v2352
      %v2373 = vpack.c.b16 %v2355, %v2353
      %v2374 = vpack.c.b16 %v2358, %v2356
      %v2375 = vpack.c.b16 %v2359, %v2357
      %v2376 = vpack.c.b16 %v2362, %v2360
      %v2377 = vpack.c.b16 %v2363, %v2361
      %v2378 = vpack.c.b16 %v2366, %v2364
      %v2379 = vpack.c.b16 %v2367, %v2365
      %2380 = vrot.lane.b32.xlu0 %v2368, 127
      %v2381 = vpop.permute.xlu0 %2380
      %2382 = vrot.lane.b32.xlu0 %v2369, 127
      %v2383 = vpop.permute.xlu0 %2382
      %2384 = vrot.lane.b32.xlu0 %v2370, 127
      %v2385 = vpop.permute.xlu0 %2384
      %2386 = vrot.lane.b32.xlu0 %v2371, 127
      %v2387 = vpop.permute.xlu0 %2386
      %2388 = vrot.lane.b32.xlu0 %v2372, 127
      %v2389 = vpop.permute.xlu0 %2388
      %2390 = vrot.lane.b32.xlu0 %v2373, 127
      %v2391 = vpop.permute.xlu0 %2390
      %2392 = vrot.lane.b32.xlu0 %v2374, 127
      %v2393 = vpop.permute.xlu0 %2392
      %2394 = vrot.lane.b32.xlu0 %v2375, 127
      %v2395 = vpop.permute.xlu0 %2394
      %2396 = vrot.lane.b32.xlu0 %v2376, 127
      %v2397 = vpop.permute.xlu0 %2396
      %2398 = vrot.lane.b32.xlu0 %v2377, 127
      %v2399 = vpop.permute.xlu0 %2398
      %2400 = vrot.lane.b32.xlu0 %v2378, 127
      %v2401 = vpop.permute.xlu0 %2400
      %2402 = vrot.lane.b32.xlu0 %v2379, 127
      %v2403 = vpop.permute.xlu0 %2402
      %v2404 = vsel %vm456, %v2381, %v2383
      %v2405 = vsel %vm456, %v2385, %v2387
      %v2406 = vsel %vm456, %v2389, %v2391
      %v2407 = vsel %vm456, %v2393, %v2395
      %v2408 = vsel %vm456, %v2397, %v2399
      %v2409 = vsel %vm456, %v2401, %v2403
      %2416 = vmatpush.bf16.msra.mxu0 0
      %2417 = vmatpush.bf16.msra.mxu0 0
      %2418 = vmatpush.bf16.msra.mxu0 %v2409
      %2419 = vmatpush.bf16.msra.mxu0 %v2408
      %2420 = vmatpush.bf16.msra.mxu0 %v2407
      %2421 = vmatpush.bf16.msra.mxu0 %v2406
      %2422 = vmatpush.bf16.msra.mxu0 %v2405
      %2423 = vmatpush.bf16.msra.mxu0 %v2404
      %2424 = vmatmul.bf16.gmra.mxu0 %v471
      %v2425 = vpop.f32.mrf.mxu0
      %v2426 = vadd.f32 0.0, %v2425
      %v2427 = vpop.f32.mrf.mxu0
      %v2428 = vadd.f32 0.0, %v2427
      %2429 = vmatmul.bf16.gmra.mxu0 %v474
      %v2430 = vpop.f32.mrf.mxu0
      %v2431 = vadd.f32 0.0, %v2430
      %v2432 = vpop.f32.mrf.mxu0
      %v2433 = vadd.f32 0.0, %v2432
      %2434 = vdwg.mxu0
      %2441 = vmatpush.bf16.msra.mxu0 0
      %2442 = vmatpush.bf16.msra.mxu0 0
      %2443 = vmatpush.bf16.msra.mxu0 %v2378
      %2444 = vmatpush.bf16.msra.mxu0 %v2376
      %2445 = vmatpush.bf16.msra.mxu0 %v2374
      %2446 = vmatpush.bf16.msra.mxu0 %v2372
      %2447 = vmatpush.bf16.msra.mxu0 %v2370
      %2448 = vmatpush.bf16.msra.mxu0 %v2368
      %2449 = vmatmul.bf16.gmra.mxu0 %v512
      %v2450 = vpop.f32.mrf.mxu0
      %v2451 = vadd.f32 %v2426, %v2450
      %v2452 = vpop.f32.mrf.mxu0
      %v2453 = vadd.f32 %v2428, %v2452
      %2454 = vmatmul.bf16.gmra.mxu0 %v515
      %v2455 = vpop.f32.mrf.mxu0
      %v2456 = vadd.f32 %v2431, %v2455
      %v2457 = vpop.f32.mrf.mxu0
      %v2458 = vadd.f32 %v2433, %v2457
      %2459 = vdwg.mxu0
      %2460 = vrot.lane.b32.xlu0 %v2368, 126
      %v2461 = vpop.permute.xlu0 %2460
      %2462 = vrot.lane.b32.xlu0 %v2369, 126
      %v2463 = vpop.permute.xlu0 %2462
      %2464 = vrot.lane.b32.xlu0 %v2370, 126
      %v2465 = vpop.permute.xlu0 %2464
      %2466 = vrot.lane.b32.xlu0 %v2371, 126
      %v2467 = vpop.permute.xlu0 %2466
      %2468 = vrot.lane.b32.xlu0 %v2372, 126
      %v2469 = vpop.permute.xlu0 %2468
      %2470 = vrot.lane.b32.xlu0 %v2373, 126
      %v2471 = vpop.permute.xlu0 %2470
      %2472 = vrot.lane.b32.xlu0 %v2374, 126
      %v2473 = vpop.permute.xlu0 %2472
      %2474 = vrot.lane.b32.xlu0 %v2375, 126
      %v2475 = vpop.permute.xlu0 %2474
      %2476 = vrot.lane.b32.xlu0 %v2376, 126
      %v2477 = vpop.permute.xlu0 %2476
      %2478 = vrot.lane.b32.xlu0 %v2377, 126
      %v2479 = vpop.permute.xlu0 %2478
      %2480 = vrot.lane.b32.xlu0 %v2378, 126
      %v2481 = vpop.permute.xlu0 %2480
      %2482 = vrot.lane.b32.xlu0 %v2379, 126
      %v2483 = vpop.permute.xlu0 %2482
      %v2484 = vsel %vm570, %v2461, %v2463
      %v2485 = vsel %vm570, %v2465, %v2467
      %v2486 = vsel %vm570, %v2469, %v2471
      %v2487 = vsel %vm570, %v2473, %v2475
      %v2488 = vsel %vm570, %v2477, %v2479
      %v2489 = vsel %vm570, %v2481, %v2483
      %2496 = vmatpush.bf16.msra.mxu0 0
      %2497 = vmatpush.bf16.msra.mxu0 0
      %2498 = vmatpush.bf16.msra.mxu0 %v2489
      %2499 = vmatpush.bf16.msra.mxu0 %v2488
      %2500 = vmatpush.bf16.msra.mxu0 %v2487
      %2501 = vmatpush.bf16.msra.mxu0 %v2486
      %2502 = vmatpush.bf16.msra.mxu0 %v2485
      %2503 = vmatpush.bf16.msra.mxu0 %v2484
      %2504 = vmatmul.bf16.gmra.mxu0 %v584
      %v2505 = vpop.f32.mrf.mxu0
      %v2506 = vadd.f32 0.0, %v2505
      %v2507 = vpop.f32.mrf.mxu0
      %v2508 = vadd.f32 0.0, %v2507
      %2509 = vmatmul.bf16.gmra.mxu0 %v587
      %v2510 = vpop.f32.mrf.mxu0
      %v2511 = vadd.f32 0.0, %v2510
      %v2512 = vpop.f32.mrf.mxu0
      %v2513 = vadd.f32 0.0, %v2512
      %2514 = vdwg.mxu0
      %v2515 = vadd.f32 %v2451, %v2506
      %v2516 = vadd.f32 %v2453, %v2508
      %v2517 = vadd.f32 %v2456, %v2511
      %v2518 = vadd.f32 %v2458, %v2513
      %v2519 = vadd.f32 %v2515, %v615
      %v2520 = vadd.f32 %v2516, %v620
      %v2521 = vadd.f32 %v2517, %v625
      %v2522 = vadd.f32 %v2518, %v630
      %v2523 = vmax.f32 %v2519, 0.0
      %v2524 = vmax.f32 %v2520, 0.0
      %v2525 = vmax.f32 %v2521, 0.0
      %v2526 = vmax.f32 %v2522, 0.0
      %v2527 = vmul.f32 %v2523, %v262
      %v2528 = vmul.f32 %v2524, %v262
      %v2529 = vmul.f32 %v2525, %v262
      %v2530 = vmul.f32 %v2526, %v262
      %v2531 = vpack.c.bf16 %v2527, %v2527
      %v2532 = vpack.c.bf16 %v2528, %v2528
      %v2533 = vpack.c.bf16 %v2529, %v2529
      %v2534 = vpack.c.bf16 %v2530, %v2530
      %2539 = vrot.lane.b32.xlu0 %v2531, 1
      %v2540 = vpop.permute.xlu0 %2539
      %2541 = vrot.lane.b32.xlu0 %v2532, 1
      %v2542 = vpop.permute.xlu0 %2541
      %2543 = vrot.lane.b32.xlu0 %v2533, 1
      %v2544 = vpop.permute.xlu0 %2543
      %2545 = vrot.lane.b32.xlu0 %v2534, 1
      %v2546 = vpop.permute.xlu0 %2545
      %v2547 = vrot.slane %v2540, 4
      %v2548 = vrot.slane %v2542, 4
      %v2549 = vrot.slane %v2544, 4
      %v2550 = vrot.slane %v2546, 4
      %v2551 = vsel %vm664, %v2547, %v2540
      %v2552 = vsel %vm664, %v2548, %v2542
      %v2553 = vsel %vm664, %v2549, %v2544
      %v2554 = vsel %vm664, %v2550, %v2546
      %s2559 = scalar_lea.vmem [#allocation2], 256
      %2560 = vst.msk [vmem:[%s2559] sm:$0xff] %vm676, %v2551
      %2561 = vst.msk [vmem:[%s2559 + $0x8] sm:$0xff] %vm676, %v2552
      %2562 = vst.msk [vmem:[%s2559 + $0x10] sm:$0xff] %vm676, %v2553
      %2563 = vst.msk [vmem:[%s2559 + $0x18] sm:$0xff] %vm676, %v2554
      %s2564 = scalar_lea.vmem %s219, 512
      %v2565 = vld [vmem:[%s2564] sm:$0xff]
      %v2566 = vld [vmem:[%s2564 + $0x8] sm:$0xff]
      %v2567 = vld [vmem:[%s2564 + $0x10] sm:$0xff]
      %v2568 = vld [vmem:[%s2564 + $0x18] sm:$0xff]
      %v2569 = vld [vmem:[%s2564 + $0x20] sm:$0xff]
      %v2570 = vld [vmem:[%s2564 + $0x28] sm:$0xff]
      %v2571 = vld [vmem:[%s2564 + $0x30] sm:$0xff]
      %v2572 = vld [vmem:[%s2564 + $0x38] sm:$0xff]
      %v2573 = vld [vmem:[%s2564 + $0x40] sm:$0xff]
      %v2574 = vld [vmem:[%s2564 + $0x48] sm:$0xff]
      %v2575 = vld [vmem:[%s2564 + $0x50] sm:$0xff]
      %v2576 = vld [vmem:[%s2564 + $0x58] sm:$0xff]
      %v2577 = vld [vmem:[%s2564 + $0x60] sm:$0xff]
      %v2578 = vld [vmem:[%s2564 + $0x68] sm:$0xff]
      %v2579 = vld [vmem:[%s2564 + $0x70] sm:$0xff]
      %v2580 = vld [vmem:[%s2564 + $0x78] sm:$0xff]
      %v2581 = vld [vmem:[%s2564 + $0x80] sm:$0xff]
      %v2582 = vld [vmem:[%s2564 + $0x88] sm:$0xff]
      %v2583 = vld [vmem:[%s2564 + $0x90] sm:$0xff]
      %v2584 = vld [vmem:[%s2564 + $0x98] sm:$0xff]
      %v2585 = vld [vmem:[%s2564 + $0xa0] sm:$0xff]
      %v2586 = vld [vmem:[%s2564 + $0xa8] sm:$0xff]
      %v2587 = vld [vmem:[%s2564 + $0xb0] sm:$0xff]
      %v2588 = vld [vmem:[%s2564 + $0xb8] sm:$0xff]
      %v2589 = vpack.c.bf16 %v2566, %v2565
      %v2590 = vpack.c.bf16 %v2568, %v2567
      %v2591 = vpack.c.bf16 %v2570, %v2569
      %v2592 = vpack.c.bf16 %v2572, %v2571
      %v2593 = vpack.c.bf16 %v2574, %v2573
      %v2594 = vpack.c.bf16 %v2576, %v2575
      %v2595 = vpack.c.bf16 %v2578, %v2577
      %v2596 = vpack.c.bf16 %v2580, %v2579
      %v2597 = vpack.c.bf16 %v2582, %v2581
      %v2598 = vpack.c.bf16 %v2584, %v2583
      %v2599 = vpack.c.bf16 %v2586, %v2585
      %v2600 = vpack.c.bf16 %v2588, %v2587
      %v2613 = vunpack.c.l.b16 %v2589
      %v2614 = vunpack.c.h.b16 %v2589
      %v2615 = vunpack.c.l.b16 %v2590
      %v2616 = vunpack.c.h.b16 %v2590
      %v2617 = vunpack.c.l.b16 %v2591
      %v2618 = vunpack.c.h.b16 %v2591
      %v2619 = vunpack.c.l.b16 %v2592
      %v2620 = vunpack.c.h.b16 %v2592
      %v2621 = vunpack.c.l.b16 %v2593
      %v2622 = vunpack.c.h.b16 %v2593
      %v2623 = vunpack.c.l.b16 %v2594
      %v2624 = vunpack.c.h.b16 %v2594
      %v2625 = vunpack.c.l.b16 %v2595
      %v2626 = vunpack.c.h.b16 %v2595
      %v2627 = vunpack.c.l.b16 %v2596
      %v2628 = vunpack.c.h.b16 %v2596
      %v2629 = vunpack.c.l.b16 %v2597
      %v2630 = vunpack.c.h.b16 %v2597
      %v2631 = vunpack.c.l.b16 %v2598
      %v2632 = vunpack.c.h.b16 %v2598
      %v2633 = vunpack.c.l.b16 %v2599
      %v2634 = vunpack.c.h.b16 %v2599
      %v2635 = vunpack.c.l.b16 %v2600
      %v2636 = vunpack.c.h.b16 %v2600
      %v2637 = vpack.c.b16 %v2615, %v2613
      %v2638 = vpack.c.b16 %v2616, %v2614
      %v2639 = vpack.c.b16 %v2619, %v2617
      %v2640 = vpack.c.b16 %v2620, %v2618
      %v2641 = vpack.c.b16 %v2623, %v2621
      %v2642 = vpack.c.b16 %v2624, %v2622
      %v2643 = vpack.c.b16 %v2627, %v2625
      %v2644 = vpack.c.b16 %v2628, %v2626
      %v2645 = vpack.c.b16 %v2631, %v2629
      %v2646 = vpack.c.b16 %v2632, %v2630
      %v2647 = vpack.c.b16 %v2635, %v2633
      %v2648 = vpack.c.b16 %v2636, %v2634
      %2649 = vrot.lane.b32.xlu0 %v2637, 127
      %v2650 = vpop.permute.xlu0 %2649
      %2651 = vrot.lane.b32.xlu0 %v2638, 127
      %v2652 = vpop.permute.xlu0 %2651
      %2653 = vrot.lane.b32.xlu0 %v2639, 127
      %v2654 = vpop.permute.xlu0 %2653
      %2655 = vrot.lane.b32.xlu0 %v2640, 127
      %v2656 = vpop.permute.xlu0 %2655
      %2657 = vrot.lane.b32.xlu0 %v2641, 127
      %v2658 = vpop.permute.xlu0 %2657
      %2659 = vrot.lane.b32.xlu0 %v2642, 127
      %v2660 = vpop.permute.xlu0 %2659
      %2661 = vrot.lane.b32.xlu0 %v2643, 127
      %v2662 = vpop.permute.xlu0 %2661
      %2663 = vrot.lane.b32.xlu0 %v2644, 127
      %v2664 = vpop.permute.xlu0 %2663
      %2665 = vrot.lane.b32.xlu0 %v2645, 127
      %v2666 = vpop.permute.xlu0 %2665
      %2667 = vrot.lane.b32.xlu0 %v2646, 127
      %v2668 = vpop.permute.xlu0 %2667
      %2669 = vrot.lane.b32.xlu0 %v2647, 127
      %v2670 = vpop.permute.xlu0 %2669
      %2671 = vrot.lane.b32.xlu0 %v2648, 127
      %v2672 = vpop.permute.xlu0 %2671
      %v2673 = vsel %vm456, %v2650, %v2652
      %v2674 = vsel %vm456, %v2654, %v2656
      %v2675 = vsel %vm456, %v2658, %v2660
      %v2676 = vsel %vm456, %v2662, %v2664
      %v2677 = vsel %vm456, %v2666, %v2668
      %v2678 = vsel %vm456, %v2670, %v2672
      %2685 = vmatpush.bf16.msra.mxu0 0
      %2686 = vmatpush.bf16.msra.mxu0 0
      %2687 = vmatpush.bf16.msra.mxu0 %v2678
      %2688 = vmatpush.bf16.msra.mxu0 %v2677
      %2689 = vmatpush.bf16.msra.mxu0 %v2676
      %2690 = vmatpush.bf16.msra.mxu0 %v2675
      %2691 = vmatpush.bf16.msra.mxu0 %v2674
      %2692 = vmatpush.bf16.msra.mxu0 %v2673
      %2693 = vmatmul.bf16.gmra.mxu0 %v471
      %v2694 = vpop.f32.mrf.mxu0
      %v2695 = vadd.f32 0.0, %v2694
      %v2696 = vpop.f32.mrf.mxu0
      %v2697 = vadd.f32 0.0, %v2696
      %2698 = vmatmul.bf16.gmra.mxu0 %v474
      %v2699 = vpop.f32.mrf.mxu0
      %v2700 = vadd.f32 0.0, %v2699
      %v2701 = vpop.f32.mrf.mxu0
      %v2702 = vadd.f32 0.0, %v2701
      %2703 = vdwg.mxu0
      %2710 = vmatpush.bf16.msra.mxu0 0
      %2711 = vmatpush.bf16.msra.mxu0 0
      %2712 = vmatpush.bf16.msra.mxu0 %v2647
      %2713 = vmatpush.bf16.msra.mxu0 %v2645
      %2714 = vmatpush.bf16.msra.mxu0 %v2643
      %2715 = vmatpush.bf16.msra.mxu0 %v2641
      %2716 = vmatpush.bf16.msra.mxu0 %v2639
      %2717 = vmatpush.bf16.msra.mxu0 %v2637
      %2718 = vmatmul.bf16.gmra.mxu0 %v512
      %v2719 = vpop.f32.mrf.mxu0
      %v2720 = vadd.f32 %v2695, %v2719
      %v2721 = vpop.f32.mrf.mxu0
      %v2722 = vadd.f32 %v2697, %v2721
      %2723 = vmatmul.bf16.gmra.mxu0 %v515
      %v2724 = vpop.f32.mrf.mxu0
      %v2725 = vadd.f32 %v2700, %v2724
      %v2726 = vpop.f32.mrf.mxu0
      %v2727 = vadd.f32 %v2702, %v2726
      %2728 = vdwg.mxu0
      %2729 = vrot.lane.b32.xlu0 %v2637, 126
      %v2730 = vpop.permute.xlu0 %2729
      %2731 = vrot.lane.b32.xlu0 %v2638, 126
      %v2732 = vpop.permute.xlu0 %2731
      %2733 = vrot.lane.b32.xlu0 %v2639, 126
      %v2734 = vpop.permute.xlu0 %2733
      %2735 = vrot.lane.b32.xlu0 %v2640, 126
      %v2736 = vpop.permute.xlu0 %2735
      %2737 = vrot.lane.b32.xlu0 %v2641, 126
      %v2738 = vpop.permute.xlu0 %2737
      %2739 = vrot.lane.b32.xlu0 %v2642, 126
      %v2740 = vpop.permute.xlu0 %2739
      %2741 = vrot.lane.b32.xlu0 %v2643, 126
      %v2742 = vpop.permute.xlu0 %2741
      %2743 = vrot.lane.b32.xlu0 %v2644, 126
      %v2744 = vpop.permute.xlu0 %2743
      %2745 = vrot.lane.b32.xlu0 %v2645, 126
      %v2746 = vpop.permute.xlu0 %2745
      %2747 = vrot.lane.b32.xlu0 %v2646, 126
      %v2748 = vpop.permute.xlu0 %2747
      %2749 = vrot.lane.b32.xlu0 %v2647, 126
      %v2750 = vpop.permute.xlu0 %2749
      %2751 = vrot.lane.b32.xlu0 %v2648, 126
      %v2752 = vpop.permute.xlu0 %2751
      %v2753 = vsel %vm570, %v2730, %v2732
      %v2754 = vsel %vm570, %v2734, %v2736
      %v2755 = vsel %vm570, %v2738, %v2740
      %v2756 = vsel %vm570, %v2742, %v2744
      %v2757 = vsel %vm570, %v2746, %v2748
      %v2758 = vsel %vm570, %v2750, %v2752
      %2765 = vmatpush.bf16.msra.mxu0 0
      %2766 = vmatpush.bf16.msra.mxu0 0
      %2767 = vmatpush.bf16.msra.mxu0 %v2758
      %2768 = vmatpush.bf16.msra.mxu0 %v2757
      %2769 = vmatpush.bf16.msra.mxu0 %v2756
      %2770 = vmatpush.bf16.msra.mxu0 %v2755
      %2771 = vmatpush.bf16.msra.mxu0 %v2754
      %2772 = vmatpush.bf16.msra.mxu0 %v2753
      %2773 = vmatmul.bf16.gmra.mxu0 %v584
      %v2774 = vpop.f32.mrf.mxu0
      %v2775 = vadd.f32 0.0, %v2774
      %v2776 = vpop.f32.mrf.mxu0
      %v2777 = vadd.f32 0.0, %v2776
      %2778 = vmatmul.bf16.gmra.mxu0 %v587
      %v2779 = vpop.f32.mrf.mxu0
      %v2780 = vadd.f32 0.0, %v2779
      %v2781 = vpop.f32.mrf.mxu0
      %v2782 = vadd.f32 0.0, %v2781
      %2783 = vdwg.mxu0
      %v2784 = vadd.f32 %v2720, %v2775
      %v2785 = vadd.f32 %v2722, %v2777
      %v2786 = vadd.f32 %v2725, %v2780
      %v2787 = vadd.f32 %v2727, %v2782
      %v2788 = vadd.f32 %v2784, %v615
      %v2789 = vadd.f32 %v2785, %v620
      %v2790 = vadd.f32 %v2786, %v625
      %v2791 = vadd.f32 %v2787, %v630
      %v2792 = vmax.f32 %v2788, 0.0
      %v2793 = vmax.f32 %v2789, 0.0
      %v2794 = vmax.f32 %v2790, 0.0
      %v2795 = vmax.f32 %v2791, 0.0
      %v2796 = vmul.f32 %v2792, %v262
      %v2797 = vmul.f32 %v2793, %v262
      %v2798 = vmul.f32 %v2794, %v262
      %v2799 = vmul.f32 %v2795, %v262
      %v2800 = vpack.c.bf16 %v2796, %v2796
      %v2801 = vpack.c.bf16 %v2797, %v2797
      %v2802 = vpack.c.bf16 %v2798, %v2798
      %v2803 = vpack.c.bf16 %v2799, %v2799
      %2808 = vrot.lane.b32.xlu0 %v2800, 1
      %v2809 = vpop.permute.xlu0 %2808
      %2810 = vrot.lane.b32.xlu0 %v2801, 1
      %v2811 = vpop.permute.xlu0 %2810
      %2812 = vrot.lane.b32.xlu0 %v2802, 1
      %v2813 = vpop.permute.xlu0 %2812
      %2814 = vrot.lane.b32.xlu0 %v2803, 1
      %v2815 = vpop.permute.xlu0 %2814
      %v2816 = vrot.slane %v2809, 4
      %v2817 = vrot.slane %v2811, 4
      %v2818 = vrot.slane %v2813, 4
      %v2819 = vrot.slane %v2815, 4
      %v2820 = vsel %vm664, %v2816, %v2809
      %v2821 = vsel %vm664, %v2817, %v2811
      %v2822 = vsel %vm664, %v2818, %v2813
      %v2823 = vsel %vm664, %v2819, %v2815
      %s2828 = scalar_lea.vmem [#allocation2], 288
      %2829 = vst.msk [vmem:[%s2828] sm:$0xff] %vm676, %v2820
      %2830 = vst.msk [vmem:[%s2828 + $0x8] sm:$0xff] %vm676, %v2821
      %2831 = vst.msk [vmem:[%s2828 + $0x10] sm:$0xff] %vm676, %v2822
      %2832 = vst.msk [vmem:[%s2828 + $0x18] sm:$0xff] %vm676, %v2823
      %s2833 = scalar_lea.vmem %s219, 576
      %v2834 = vld [vmem:[%s2833] sm:$0xff]
      %v2835 = vld [vmem:[%s2833 + $0x8] sm:$0xff]
      %v2836 = vld [vmem:[%s2833 + $0x10] sm:$0xff]
      %v2837 = vld [vmem:[%s2833 + $0x18] sm:$0xff]
      %v2838 = vld [vmem:[%s2833 + $0x20] sm:$0xff]
      %v2839 = vld [vmem:[%s2833 + $0x28] sm:$0xff]
      %v2840 = vld [vmem:[%s2833 + $0x30] sm:$0xff]
      %v2841 = vld [vmem:[%s2833 + $0x38] sm:$0xff]
      %v2842 = vld [vmem:[%s2833 + $0x40] sm:$0xff]
      %v2843 = vld [vmem:[%s2833 + $0x48] sm:$0xff]
      %v2844 = vld [vmem:[%s2833 + $0x50] sm:$0xff]
      %v2845 = vld [vmem:[%s2833 + $0x58] sm:$0xff]
      %v2846 = vld [vmem:[%s2833 + $0x60] sm:$0xff]
      %v2847 = vld [vmem:[%s2833 + $0x68] sm:$0xff]
      %v2848 = vld [vmem:[%s2833 + $0x70] sm:$0xff]
      %v2849 = vld [vmem:[%s2833 + $0x78] sm:$0xff]
      %v2850 = vld [vmem:[%s2833 + $0x80] sm:$0xff]
      %v2851 = vld [vmem:[%s2833 + $0x88] sm:$0xff]
      %v2852 = vld [vmem:[%s2833 + $0x90] sm:$0xff]
      %v2853 = vld [vmem:[%s2833 + $0x98] sm:$0xff]
      %v2854 = vld [vmem:[%s2833 + $0xa0] sm:$0xff]
      %v2855 = vld [vmem:[%s2833 + $0xa8] sm:$0xff]
      %v2856 = vld [vmem:[%s2833 + $0xb0] sm:$0xff]
      %v2857 = vld [vmem:[%s2833 + $0xb8] sm:$0xff]
      %v2858 = vpack.c.bf16 %v2835, %v2834
      %v2859 = vpack.c.bf16 %v2837, %v2836
      %v2860 = vpack.c.bf16 %v2839, %v2838
      %v2861 = vpack.c.bf16 %v2841, %v2840
      %v2862 = vpack.c.bf16 %v2843, %v2842
      %v2863 = vpack.c.bf16 %v2845, %v2844
      %v2864 = vpack.c.bf16 %v2847, %v2846
      %v2865 = vpack.c.bf16 %v2849, %v2848
      %v2866 = vpack.c.bf16 %v2851, %v2850
      %v2867 = vpack.c.bf16 %v2853, %v2852
      %v2868 = vpack.c.bf16 %v2855, %v2854
      %v2869 = vpack.c.bf16 %v2857, %v2856
      %v2882 = vunpack.c.l.b16 %v2858
      %v2883 = vunpack.c.h.b16 %v2858
      %v2884 = vunpack.c.l.b16 %v2859
      %v2885 = vunpack.c.h.b16 %v2859
      %v2886 = vunpack.c.l.b16 %v2860
      %v2887 = vunpack.c.h.b16 %v2860
      %v2888 = vunpack.c.l.b16 %v2861
      %v2889 = vunpack.c.h.b16 %v2861
      %v2890 = vunpack.c.l.b16 %v2862
      %v2891 = vunpack.c.h.b16 %v2862
      %v2892 = vunpack.c.l.b16 %v2863
      %v2893 = vunpack.c.h.b16 %v2863
      %v2894 = vunpack.c.l.b16 %v2864
      %v2895 = vunpack.c.h.b16 %v2864
      %v2896 = vunpack.c.l.b16 %v2865
      %v2897 = vunpack.c.h.b16 %v2865
      %v2898 = vunpack.c.l.b16 %v2866
      %v2899 = vunpack.c.h.b16 %v2866
      %v2900 = vunpack.c.l.b16 %v2867
      %v2901 = vunpack.c.h.b16 %v2867
      %v2902 = vunpack.c.l.b16 %v2868
      %v2903 = vunpack.c.h.b16 %v2868
      %v2904 = vunpack.c.l.b16 %v2869
      %v2905 = vunpack.c.h.b16 %v2869
      %v2906 = vpack.c.b16 %v2884, %v2882
      %v2907 = vpack.c.b16 %v2885, %v2883
      %v2908 = vpack.c.b16 %v2888, %v2886
      %v2909 = vpack.c.b16 %v2889, %v2887
      %v2910 = vpack.c.b16 %v2892, %v2890
      %v2911 = vpack.c.b16 %v2893, %v2891
      %v2912 = vpack.c.b16 %v2896, %v2894
      %v2913 = vpack.c.b16 %v2897, %v2895
      %v2914 = vpack.c.b16 %v2900, %v2898
      %v2915 = vpack.c.b16 %v2901, %v2899
      %v2916 = vpack.c.b16 %v2904, %v2902
      %v2917 = vpack.c.b16 %v2905, %v2903
      %2918 = vrot.lane.b32.xlu0 %v2906, 127
      %v2919 = vpop.permute.xlu0 %2918
      %2920 = vrot.lane.b32.xlu0 %v2907, 127
      %v2921 = vpop.permute.xlu0 %2920
      %2922 = vrot.lane.b32.xlu0 %v2908, 127
      %v2923 = vpop.permute.xlu0 %2922
      %2924 = vrot.lane.b32.xlu0 %v2909, 127
      %v2925 = vpop.permute.xlu0 %2924
      %2926 = vrot.lane.b32.xlu0 %v2910, 127
      %v2927 = vpop.permute.xlu0 %2926
      %2928 = vrot.lane.b32.xlu0 %v2911, 127
      %v2929 = vpop.permute.xlu0 %2928
      %2930 = vrot.lane.b32.xlu0 %v2912, 127
      %v2931 = vpop.permute.xlu0 %2930
      %2932 = vrot.lane.b32.xlu0 %v2913, 127
      %v2933 = vpop.permute.xlu0 %2932
      %2934 = vrot.lane.b32.xlu0 %v2914, 127
      %v2935 = vpop.permute.xlu0 %2934
      %2936 = vrot.lane.b32.xlu0 %v2915, 127
      %v2937 = vpop.permute.xlu0 %2936
      %2938 = vrot.lane.b32.xlu0 %v2916, 127
      %v2939 = vpop.permute.xlu0 %2938
      %2940 = vrot.lane.b32.xlu0 %v2917, 127
      %v2941 = vpop.permute.xlu0 %2940
      %v2942 = vsel %vm456, %v2919, %v2921
      %v2943 = vsel %vm456, %v2923, %v2925
      %v2944 = vsel %vm456, %v2927, %v2929
      %v2945 = vsel %vm456, %v2931, %v2933
      %v2946 = vsel %vm456, %v2935, %v2937
      %v2947 = vsel %vm456, %v2939, %v2941
      %2954 = vmatpush.bf16.msra.mxu0 0
      %2955 = vmatpush.bf16.msra.mxu0 0
      %2956 = vmatpush.bf16.msra.mxu0 %v2947
      %2957 = vmatpush.bf16.msra.mxu0 %v2946
      %2958 = vmatpush.bf16.msra.mxu0 %v2945
      %2959 = vmatpush.bf16.msra.mxu0 %v2944
      %2960 = vmatpush.bf16.msra.mxu0 %v2943
      %2961 = vmatpush.bf16.msra.mxu0 %v2942
      %2962 = vmatmul.bf16.gmra.mxu0 %v471
      %v2963 = vpop.f32.mrf.mxu0
      %v2964 = vadd.f32 0.0, %v2963
      %v2965 = vpop.f32.mrf.mxu0
      %v2966 = vadd.f32 0.0, %v2965
      %2967 = vmatmul.bf16.gmra.mxu0 %v474
      %v2968 = vpop.f32.mrf.mxu0
      %v2969 = vadd.f32 0.0, %v2968
      %v2970 = vpop.f32.mrf.mxu0
      %v2971 = vadd.f32 0.0, %v2970
      %2972 = vdwg.mxu0
      %2979 = vmatpush.bf16.msra.mxu0 0
      %2980 = vmatpush.bf16.msra.mxu0 0
      %2981 = vmatpush.bf16.msra.mxu0 %v2916
      %2982 = vmatpush.bf16.msra.mxu0 %v2914
      %2983 = vmatpush.bf16.msra.mxu0 %v2912
      %2984 = vmatpush.bf16.msra.mxu0 %v2910
      %2985 = vmatpush.bf16.msra.mxu0 %v2908
      %2986 = vmatpush.bf16.msra.mxu0 %v2906
      %2987 = vmatmul.bf16.gmra.mxu0 %v512
      %v2988 = vpop.f32.mrf.mxu0
      %v2989 = vadd.f32 %v2964, %v2988
      %v2990 = vpop.f32.mrf.mxu0
      %v2991 = vadd.f32 %v2966, %v2990
      %2992 = vmatmul.bf16.gmra.mxu0 %v515
      %v2993 = vpop.f32.mrf.mxu0
      %v2994 = vadd.f32 %v2969, %v2993
      %v2995 = vpop.f32.mrf.mxu0
      %v2996 = vadd.f32 %v2971, %v2995
      %2997 = vdwg.mxu0
      %2998 = vrot.lane.b32.xlu0 %v2906, 126
      %v2999 = vpop.permute.xlu0 %2998
      %3000 = vrot.lane.b32.xlu0 %v2907, 126
      %v3001 = vpop.permute.xlu0 %3000
      %3002 = vrot.lane.b32.xlu0 %v2908, 126
      %v3003 = vpop.permute.xlu0 %3002
      %3004 = vrot.lane.b32.xlu0 %v2909, 126
      %v3005 = vpop.permute.xlu0 %3004
      %3006 = vrot.lane.b32.xlu0 %v2910, 126
      %v3007 = vpop.permute.xlu0 %3006
      %3008 = vrot.lane.b32.xlu0 %v2911, 126
      %v3009 = vpop.permute.xlu0 %3008
      %3010 = vrot.lane.b32.xlu0 %v2912, 126
      %v3011 = vpop.permute.xlu0 %3010
      %3012 = vrot.lane.b32.xlu0 %v2913, 126
      %v3013 = vpop.permute.xlu0 %3012
      %3014 = vrot.lane.b32.xlu0 %v2914, 126
      %v3015 = vpop.permute.xlu0 %3014
      %3016 = vrot.lane.b32.xlu0 %v2915, 126
      %v3017 = vpop.permute.xlu0 %3016
      %3018 = vrot.lane.b32.xlu0 %v2916, 126
      %v3019 = vpop.permute.xlu0 %3018
      %3020 = vrot.lane.b32.xlu0 %v2917, 126
      %v3021 = vpop.permute.xlu0 %3020
      %v3022 = vsel %vm570, %v2999, %v3001
      %v3023 = vsel %vm570, %v3003, %v3005
      %v3024 = vsel %vm570, %v3007, %v3009
      %v3025 = vsel %vm570, %v3011, %v3013
      %v3026 = vsel %vm570, %v3015, %v3017
      %v3027 = vsel %vm570, %v3019, %v3021
      %3034 = vmatpush.bf16.msra.mxu0 0
      %3035 = vmatpush.bf16.msra.mxu0 0
      %3036 = vmatpush.bf16.msra.mxu0 %v3027
      %3037 = vmatpush.bf16.msra.mxu0 %v3026
      %3038 = vmatpush.bf16.msra.mxu0 %v3025
      %3039 = vmatpush.bf16.msra.mxu0 %v3024
      %3040 = vmatpush.bf16.msra.mxu0 %v3023
      %3041 = vmatpush.bf16.msra.mxu0 %v3022
      %3042 = vmatmul.bf16.gmra.mxu0 %v584
      %v3043 = vpop.f32.mrf.mxu0
      %v3044 = vadd.f32 0.0, %v3043
      %v3045 = vpop.f32.mrf.mxu0
      %v3046 = vadd.f32 0.0, %v3045
      %3047 = vmatmul.bf16.gmra.mxu0 %v587
      %v3048 = vpop.f32.mrf.mxu0
      %v3049 = vadd.f32 0.0, %v3048
      %v3050 = vpop.f32.mrf.mxu0
      %v3051 = vadd.f32 0.0, %v3050
      %3052 = vdwg.mxu0
      %v3053 = vadd.f32 %v2989, %v3044
      %v3054 = vadd.f32 %v2991, %v3046
      %v3055 = vadd.f32 %v2994, %v3049
      %v3056 = vadd.f32 %v2996, %v3051
      %v3057 = vadd.f32 %v3053, %v615
      %v3058 = vadd.f32 %v3054, %v620
      %v3059 = vadd.f32 %v3055, %v625
      %v3060 = vadd.f32 %v3056, %v630
      %v3061 = vmax.f32 %v3057, 0.0
      %v3062 = vmax.f32 %v3058, 0.0
      %v3063 = vmax.f32 %v3059, 0.0
      %v3064 = vmax.f32 %v3060, 0.0
      %v3065 = vmul.f32 %v3061, %v262
      %v3066 = vmul.f32 %v3062, %v262
      %v3067 = vmul.f32 %v3063, %v262
      %v3068 = vmul.f32 %v3064, %v262
      %v3069 = vpack.c.bf16 %v3065, %v3065
      %v3070 = vpack.c.bf16 %v3066, %v3066
      %v3071 = vpack.c.bf16 %v3067, %v3067
      %v3072 = vpack.c.bf16 %v3068, %v3068
      %3077 = vrot.lane.b32.xlu0 %v3069, 1
      %v3078 = vpop.permute.xlu0 %3077
      %3079 = vrot.lane.b32.xlu0 %v3070, 1
      %v3080 = vpop.permute.xlu0 %3079
      %3081 = vrot.lane.b32.xlu0 %v3071, 1
      %v3082 = vpop.permute.xlu0 %3081
      %3083 = vrot.lane.b32.xlu0 %v3072, 1
      %v3084 = vpop.permute.xlu0 %3083
      %v3085 = vrot.slane %v3078, 4
      %v3086 = vrot.slane %v3080, 4
      %v3087 = vrot.slane %v3082, 4
      %v3088 = vrot.slane %v3084, 4
      %v3089 = vsel %vm664, %v3085, %v3078
      %v3090 = vsel %vm664, %v3086, %v3080
      %v3091 = vsel %vm664, %v3087, %v3082
      %v3092 = vsel %vm664, %v3088, %v3084
      %s3097 = scalar_lea.vmem [#allocation2], 320
      %3098 = vst.msk [vmem:[%s3097] sm:$0xff] %vm676, %v3089
      %3099 = vst.msk [vmem:[%s3097 + $0x8] sm:$0xff] %vm676, %v3090
      %3100 = vst.msk [vmem:[%s3097 + $0x10] sm:$0xff] %vm676, %v3091
      %3101 = vst.msk [vmem:[%s3097 + $0x18] sm:$0xff] %vm676, %v3092
      %s3102 = scalar_lea.vmem %s219, 640
      %v3103 = vld [vmem:[%s3102] sm:$0xff]
      %v3104 = vld [vmem:[%s3102 + $0x8] sm:$0xff]
      %v3105 = vld [vmem:[%s3102 + $0x10] sm:$0xff]
      %v3106 = vld [vmem:[%s3102 + $0x18] sm:$0xff]
      %v3107 = vld [vmem:[%s3102 + $0x20] sm:$0xff]
      %v3108 = vld [vmem:[%s3102 + $0x28] sm:$0xff]
      %v3109 = vld [vmem:[%s3102 + $0x30] sm:$0xff]
      %v3110 = vld [vmem:[%s3102 + $0x38] sm:$0xff]
      %v3111 = vld [vmem:[%s3102 + $0x40] sm:$0xff]
      %v3112 = vld [vmem:[%s3102 + $0x48] sm:$0xff]
      %v3113 = vld [vmem:[%s3102 + $0x50] sm:$0xff]
      %v3114 = vld [vmem:[%s3102 + $0x58] sm:$0xff]
      %v3115 = vld [vmem:[%s3102 + $0x60] sm:$0xff]
      %v3116 = vld [vmem:[%s3102 + $0x68] sm:$0xff]
      %v3117 = vld [vmem:[%s3102 + $0x70] sm:$0xff]
      %v3118 = vld [vmem:[%s3102 + $0x78] sm:$0xff]
      %v3119 = vld [vmem:[%s3102 + $0x80] sm:$0xff]
      %v3120 = vld [vmem:[%s3102 + $0x88] sm:$0xff]
      %v3121 = vld [vmem:[%s3102 + $0x90] sm:$0xff]
      %v3122 = vld [vmem:[%s3102 + $0x98] sm:$0xff]
      %v3123 = vld [vmem:[%s3102 + $0xa0] sm:$0xff]
      %v3124 = vld [vmem:[%s3102 + $0xa8] sm:$0xff]
      %v3125 = vld [vmem:[%s3102 + $0xb0] sm:$0xff]
      %v3126 = vld [vmem:[%s3102 + $0xb8] sm:$0xff]
      %v3127 = vpack.c.bf16 %v3104, %v3103
      %v3128 = vpack.c.bf16 %v3106, %v3105
      %v3129 = vpack.c.bf16 %v3108, %v3107
      %v3130 = vpack.c.bf16 %v3110, %v3109
      %v3131 = vpack.c.bf16 %v3112, %v3111
      %v3132 = vpack.c.bf16 %v3114, %v3113
      %v3133 = vpack.c.bf16 %v3116, %v3115
      %v3134 = vpack.c.bf16 %v3118, %v3117
      %v3135 = vpack.c.bf16 %v3120, %v3119
      %v3136 = vpack.c.bf16 %v3122, %v3121
      %v3137 = vpack.c.bf16 %v3124, %v3123
      %v3138 = vpack.c.bf16 %v3126, %v3125
      %v3151 = vunpack.c.l.b16 %v3127
      %v3152 = vunpack.c.h.b16 %v3127
      %v3153 = vunpack.c.l.b16 %v3128
      %v3154 = vunpack.c.h.b16 %v3128
      %v3155 = vunpack.c.l.b16 %v3129
      %v3156 = vunpack.c.h.b16 %v3129
      %v3157 = vunpack.c.l.b16 %v3130
      %v3158 = vunpack.c.h.b16 %v3130
      %v3159 = vunpack.c.l.b16 %v3131
      %v3160 = vunpack.c.h.b16 %v3131
      %v3161 = vunpack.c.l.b16 %v3132
      %v3162 = vunpack.c.h.b16 %v3132
      %v3163 = vunpack.c.l.b16 %v3133
      %v3164 = vunpack.c.h.b16 %v3133
      %v3165 = vunpack.c.l.b16 %v3134
      %v3166 = vunpack.c.h.b16 %v3134
      %v3167 = vunpack.c.l.b16 %v3135
      %v3168 = vunpack.c.h.b16 %v3135
      %v3169 = vunpack.c.l.b16 %v3136
      %v3170 = vunpack.c.h.b16 %v3136
      %v3171 = vunpack.c.l.b16 %v3137
      %v3172 = vunpack.c.h.b16 %v3137
      %v3173 = vunpack.c.l.b16 %v3138
      %v3174 = vunpack.c.h.b16 %v3138
      %v3175 = vpack.c.b16 %v3153, %v3151
      %v3176 = vpack.c.b16 %v3154, %v3152
      %v3177 = vpack.c.b16 %v3157, %v3155
      %v3178 = vpack.c.b16 %v3158, %v3156
      %v3179 = vpack.c.b16 %v3161, %v3159
      %v3180 = vpack.c.b16 %v3162, %v3160
      %v3181 = vpack.c.b16 %v3165, %v3163
      %v3182 = vpack.c.b16 %v3166, %v3164
      %v3183 = vpack.c.b16 %v3169, %v3167
      %v3184 = vpack.c.b16 %v3170, %v3168
      %v3185 = vpack.c.b16 %v3173, %v3171
      %v3186 = vpack.c.b16 %v3174, %v3172
      %3187 = vrot.lane.b32.xlu0 %v3175, 127
      %v3188 = vpop.permute.xlu0 %3187
      %3189 = vrot.lane.b32.xlu0 %v3176, 127
      %v3190 = vpop.permute.xlu0 %3189
      %3191 = vrot.lane.b32.xlu0 %v3177, 127
      %v3192 = vpop.permute.xlu0 %3191
      %3193 = vrot.lane.b32.xlu0 %v3178, 127
      %v3194 = vpop.permute.xlu0 %3193
      %3195 = vrot.lane.b32.xlu0 %v3179, 127
      %v3196 = vpop.permute.xlu0 %3195
      %3197 = vrot.lane.b32.xlu0 %v3180, 127
      %v3198 = vpop.permute.xlu0 %3197
      %3199 = vrot.lane.b32.xlu0 %v3181, 127
      %v3200 = vpop.permute.xlu0 %3199
      %3201 = vrot.lane.b32.xlu0 %v3182, 127
      %v3202 = vpop.permute.xlu0 %3201
      %3203 = vrot.lane.b32.xlu0 %v3183, 127
      %v3204 = vpop.permute.xlu0 %3203
      %3205 = vrot.lane.b32.xlu0 %v3184, 127
      %v3206 = vpop.permute.xlu0 %3205
      %3207 = vrot.lane.b32.xlu0 %v3185, 127
      %v3208 = vpop.permute.xlu0 %3207
      %3209 = vrot.lane.b32.xlu0 %v3186, 127
      %v3210 = vpop.permute.xlu0 %3209
      %v3211 = vsel %vm456, %v3188, %v3190
      %v3212 = vsel %vm456, %v3192, %v3194
      %v3213 = vsel %vm456, %v3196, %v3198
      %v3214 = vsel %vm456, %v3200, %v3202
      %v3215 = vsel %vm456, %v3204, %v3206
      %v3216 = vsel %vm456, %v3208, %v3210
      %3223 = vmatpush.bf16.msra.mxu0 0
      %3224 = vmatpush.bf16.msra.mxu0 0
      %3225 = vmatpush.bf16.msra.mxu0 %v3216
      %3226 = vmatpush.bf16.msra.mxu0 %v3215
      %3227 = vmatpush.bf16.msra.mxu0 %v3214
      %3228 = vmatpush.bf16.msra.mxu0 %v3213
      %3229 = vmatpush.bf16.msra.mxu0 %v3212
      %3230 = vmatpush.bf16.msra.mxu0 %v3211
      %3231 = vmatmul.bf16.gmra.mxu0 %v471
      %v3232 = vpop.f32.mrf.mxu0
      %v3233 = vadd.f32 0.0, %v3232
      %v3234 = vpop.f32.mrf.mxu0
      %v3235 = vadd.f32 0.0, %v3234
      %3236 = vmatmul.bf16.gmra.mxu0 %v474
      %v3237 = vpop.f32.mrf.mxu0
      %v3238 = vadd.f32 0.0, %v3237
      %v3239 = vpop.f32.mrf.mxu0
      %v3240 = vadd.f32 0.0, %v3239
      %3241 = vdwg.mxu0
      %3248 = vmatpush.bf16.msra.mxu0 0
      %3249 = vmatpush.bf16.msra.mxu0 0
      %3250 = vmatpush.bf16.msra.mxu0 %v3185
      %3251 = vmatpush.bf16.msra.mxu0 %v3183
      %3252 = vmatpush.bf16.msra.mxu0 %v3181
      %3253 = vmatpush.bf16.msra.mxu0 %v3179
      %3254 = vmatpush.bf16.msra.mxu0 %v3177
      %3255 = vmatpush.bf16.msra.mxu0 %v3175
      %3256 = vmatmul.bf16.gmra.mxu0 %v512
      %v3257 = vpop.f32.mrf.mxu0
      %v3258 = vadd.f32 %v3233, %v3257
      %v3259 = vpop.f32.mrf.mxu0
      %v3260 = vadd.f32 %v3235, %v3259
      %3261 = vmatmul.bf16.gmra.mxu0 %v515
      %v3262 = vpop.f32.mrf.mxu0
      %v3263 = vadd.f32 %v3238, %v3262
      %v3264 = vpop.f32.mrf.mxu0
      %v3265 = vadd.f32 %v3240, %v3264
      %3266 = vdwg.mxu0
      %3267 = vrot.lane.b32.xlu0 %v3175, 126
      %v3268 = vpop.permute.xlu0 %3267
      %3269 = vrot.lane.b32.xlu0 %v3176, 126
      %v3270 = vpop.permute.xlu0 %3269
      %3271 = vrot.lane.b32.xlu0 %v3177, 126
      %v3272 = vpop.permute.xlu0 %3271
      %3273 = vrot.lane.b32.xlu0 %v3178, 126
      %v3274 = vpop.permute.xlu0 %3273
      %3275 = vrot.lane.b32.xlu0 %v3179, 126
      %v3276 = vpop.permute.xlu0 %3275
      %3277 = vrot.lane.b32.xlu0 %v3180, 126
      %v3278 = vpop.permute.xlu0 %3277
      %3279 = vrot.lane.b32.xlu0 %v3181, 126
      %v3280 = vpop.permute.xlu0 %3279
      %3281 = vrot.lane.b32.xlu0 %v3182, 126
      %v3282 = vpop.permute.xlu0 %3281
      %3283 = vrot.lane.b32.xlu0 %v3183, 126
      %v3284 = vpop.permute.xlu0 %3283
      %3285 = vrot.lane.b32.xlu0 %v3184, 126
      %v3286 = vpop.permute.xlu0 %3285
      %3287 = vrot.lane.b32.xlu0 %v3185, 126
      %v3288 = vpop.permute.xlu0 %3287
      %3289 = vrot.lane.b32.xlu0 %v3186, 126
      %v3290 = vpop.permute.xlu0 %3289
      %v3291 = vsel %vm570, %v3268, %v3270
      %v3292 = vsel %vm570, %v3272, %v3274
      %v3293 = vsel %vm570, %v3276, %v3278
      %v3294 = vsel %vm570, %v3280, %v3282
      %v3295 = vsel %vm570, %v3284, %v3286
      %v3296 = vsel %vm570, %v3288, %v3290
      %3303 = vmatpush.bf16.msra.mxu0 0
      %3304 = vmatpush.bf16.msra.mxu0 0
      %3305 = vmatpush.bf16.msra.mxu0 %v3296
      %3306 = vmatpush.bf16.msra.mxu0 %v3295
      %3307 = vmatpush.bf16.msra.mxu0 %v3294
      %3308 = vmatpush.bf16.msra.mxu0 %v3293
      %3309 = vmatpush.bf16.msra.mxu0 %v3292
      %3310 = vmatpush.bf16.msra.mxu0 %v3291
      %3311 = vmatmul.bf16.gmra.mxu0 %v584
      %v3312 = vpop.f32.mrf.mxu0
      %v3313 = vadd.f32 0.0, %v3312
      %v3314 = vpop.f32.mrf.mxu0
      %v3315 = vadd.f32 0.0, %v3314
      %3316 = vmatmul.bf16.gmra.mxu0 %v587
      %v3317 = vpop.f32.mrf.mxu0
      %v3318 = vadd.f32 0.0, %v3317
      %v3319 = vpop.f32.mrf.mxu0
      %v3320 = vadd.f32 0.0, %v3319
      %3321 = vdwg.mxu0
      %v3322 = vadd.f32 %v3258, %v3313
      %v3323 = vadd.f32 %v3260, %v3315
      %v3324 = vadd.f32 %v3263, %v3318
      %v3325 = vadd.f32 %v3265, %v3320
      %v3326 = vadd.f32 %v3322, %v615
      %v3327 = vadd.f32 %v3323, %v620
      %v3328 = vadd.f32 %v3324, %v625
      %v3329 = vadd.f32 %v3325, %v630
      %v3330 = vmax.f32 %v3326, 0.0
      %v3331 = vmax.f32 %v3327, 0.0
      %v3332 = vmax.f32 %v3328, 0.0
      %v3333 = vmax.f32 %v3329, 0.0
      %v3334 = vmul.f32 %v3330, %v262
      %v3335 = vmul.f32 %v3331, %v262
      %v3336 = vmul.f32 %v3332, %v262
      %v3337 = vmul.f32 %v3333, %v262
      %v3338 = vpack.c.bf16 %v3334, %v3334
      %v3339 = vpack.c.bf16 %v3335, %v3335
      %v3340 = vpack.c.bf16 %v3336, %v3336
      %v3341 = vpack.c.bf16 %v3337, %v3337
      %3346 = vrot.lane.b32.xlu0 %v3338, 1
      %v3347 = vpop.permute.xlu0 %3346
      %3348 = vrot.lane.b32.xlu0 %v3339, 1
      %v3349 = vpop.permute.xlu0 %3348
      %3350 = vrot.lane.b32.xlu0 %v3340, 1
      %v3351 = vpop.permute.xlu0 %3350
      %3352 = vrot.lane.b32.xlu0 %v3341, 1
      %v3353 = vpop.permute.xlu0 %3352
      %v3354 = vrot.slane %v3347, 4
      %v3355 = vrot.slane %v3349, 4
      %v3356 = vrot.slane %v3351, 4
      %v3357 = vrot.slane %v3353, 4
      %v3358 = vsel %vm664, %v3354, %v3347
      %v3359 = vsel %vm664, %v3355, %v3349
      %v3360 = vsel %vm664, %v3356, %v3351
      %v3361 = vsel %vm664, %v3357, %v3353
      %s3366 = scalar_lea.vmem [#allocation2], 352
      %3367 = vst.msk [vmem:[%s3366] sm:$0xff] %vm676, %v3358
      %3368 = vst.msk [vmem:[%s3366 + $0x8] sm:$0xff] %vm676, %v3359
      %3369 = vst.msk [vmem:[%s3366 + $0x10] sm:$0xff] %vm676, %v3360
      %3370 = vst.msk [vmem:[%s3366 + $0x18] sm:$0xff] %vm676, %v3361
      %s3371 = scalar_lea.vmem %s219, 704
      %v3372 = vld [vmem:[%s3371] sm:$0xff]
      %v3373 = vld [vmem:[%s3371 + $0x8] sm:$0xff]
      %v3374 = vld [vmem:[%s3371 + $0x10] sm:$0xff]
      %v3375 = vld [vmem:[%s3371 + $0x18] sm:$0xff]
      %v3376 = vld [vmem:[%s3371 + $0x20] sm:$0xff]
      %v3377 = vld [vmem:[%s3371 + $0x28] sm:$0xff]
      %v3378 = vld [vmem:[%s3371 + $0x30] sm:$0xff]
      %v3379 = vld [vmem:[%s3371 + $0x38] sm:$0xff]
      %v3380 = vld [vmem:[%s3371 + $0x40] sm:$0xff]
      %v3381 = vld [vmem:[%s3371 + $0x48] sm:$0xff]
      %v3382 = vld [vmem:[%s3371 + $0x50] sm:$0xff]
      %v3383 = vld [vmem:[%s3371 + $0x58] sm:$0xff]
      %v3384 = vld [vmem:[%s3371 + $0x60] sm:$0xff]
      %v3385 = vld [vmem:[%s3371 + $0x68] sm:$0xff]
      %v3386 = vld [vmem:[%s3371 + $0x70] sm:$0xff]
      %v3387 = vld [vmem:[%s3371 + $0x78] sm:$0xff]
      %v3388 = vld [vmem:[%s3371 + $0x80] sm:$0xff]
      %v3389 = vld [vmem:[%s3371 + $0x88] sm:$0xff]
      %v3390 = vld [vmem:[%s3371 + $0x90] sm:$0xff]
      %v3391 = vld [vmem:[%s3371 + $0x98] sm:$0xff]
      %v3392 = vld [vmem:[%s3371 + $0xa0] sm:$0xff]
      %v3393 = vld [vmem:[%s3371 + $0xa8] sm:$0xff]
      %v3394 = vld [vmem:[%s3371 + $0xb0] sm:$0xff]
      %v3395 = vld [vmem:[%s3371 + $0xb8] sm:$0xff]
      %v3396 = vpack.c.bf16 %v3373, %v3372
      %v3397 = vpack.c.bf16 %v3375, %v3374
      %v3398 = vpack.c.bf16 %v3377, %v3376
      %v3399 = vpack.c.bf16 %v3379, %v3378
      %v3400 = vpack.c.bf16 %v3381, %v3380
      %v3401 = vpack.c.bf16 %v3383, %v3382
      %v3402 = vpack.c.bf16 %v3385, %v3384
      %v3403 = vpack.c.bf16 %v3387, %v3386
      %v3404 = vpack.c.bf16 %v3389, %v3388
      %v3405 = vpack.c.bf16 %v3391, %v3390
      %v3406 = vpack.c.bf16 %v3393, %v3392
      %v3407 = vpack.c.bf16 %v3395, %v3394
      %v3420 = vunpack.c.l.b16 %v3396
      %v3421 = vunpack.c.h.b16 %v3396
      %v3422 = vunpack.c.l.b16 %v3397
      %v3423 = vunpack.c.h.b16 %v3397
      %v3424 = vunpack.c.l.b16 %v3398
      %v3425 = vunpack.c.h.b16 %v3398
      %v3426 = vunpack.c.l.b16 %v3399
      %v3427 = vunpack.c.h.b16 %v3399
      %v3428 = vunpack.c.l.b16 %v3400
      %v3429 = vunpack.c.h.b16 %v3400
      %v3430 = vunpack.c.l.b16 %v3401
      %v3431 = vunpack.c.h.b16 %v3401
      %v3432 = vunpack.c.l.b16 %v3402
      %v3433 = vunpack.c.h.b16 %v3402
      %v3434 = vunpack.c.l.b16 %v3403
      %v3435 = vunpack.c.h.b16 %v3403
      %v3436 = vunpack.c.l.b16 %v3404
      %v3437 = vunpack.c.h.b16 %v3404
      %v3438 = vunpack.c.l.b16 %v3405
      %v3439 = vunpack.c.h.b16 %v3405
      %v3440 = vunpack.c.l.b16 %v3406
      %v3441 = vunpack.c.h.b16 %v3406
      %v3442 = vunpack.c.l.b16 %v3407
      %v3443 = vunpack.c.h.b16 %v3407
      %v3444 = vpack.c.b16 %v3422, %v3420
      %v3445 = vpack.c.b16 %v3423, %v3421
      %v3446 = vpack.c.b16 %v3426, %v3424
      %v3447 = vpack.c.b16 %v3427, %v3425
      %v3448 = vpack.c.b16 %v3430, %v3428
      %v3449 = vpack.c.b16 %v3431, %v3429
      %v3450 = vpack.c.b16 %v3434, %v3432
      %v3451 = vpack.c.b16 %v3435, %v3433
      %v3452 = vpack.c.b16 %v3438, %v3436
      %v3453 = vpack.c.b16 %v3439, %v3437
      %v3454 = vpack.c.b16 %v3442, %v3440
      %v3455 = vpack.c.b16 %v3443, %v3441
      %3456 = vrot.lane.b32.xlu0 %v3444, 127
      %v3457 = vpop.permute.xlu0 %3456
      %3458 = vrot.lane.b32.xlu0 %v3445, 127
      %v3459 = vpop.permute.xlu0 %3458
      %3460 = vrot.lane.b32.xlu0 %v3446, 127
      %v3461 = vpop.permute.xlu0 %3460
      %3462 = vrot.lane.b32.xlu0 %v3447, 127
      %v3463 = vpop.permute.xlu0 %3462
      %3464 = vrot.lane.b32.xlu0 %v3448, 127
      %v3465 = vpop.permute.xlu0 %3464
      %3466 = vrot.lane.b32.xlu0 %v3449, 127
      %v3467 = vpop.permute.xlu0 %3466
      %3468 = vrot.lane.b32.xlu0 %v3450, 127
      %v3469 = vpop.permute.xlu0 %3468
      %3470 = vrot.lane.b32.xlu0 %v3451, 127
      %v3471 = vpop.permute.xlu0 %3470
      %3472 = vrot.lane.b32.xlu0 %v3452, 127
      %v3473 = vpop.permute.xlu0 %3472
      %3474 = vrot.lane.b32.xlu0 %v3453, 127
      %v3475 = vpop.permute.xlu0 %3474
      %3476 = vrot.lane.b32.xlu0 %v3454, 127
      %v3477 = vpop.permute.xlu0 %3476
      %3478 = vrot.lane.b32.xlu0 %v3455, 127
      %v3479 = vpop.permute.xlu0 %3478
      %v3480 = vsel %vm456, %v3457, %v3459
      %v3481 = vsel %vm456, %v3461, %v3463
      %v3482 = vsel %vm456, %v3465, %v3467
      %v3483 = vsel %vm456, %v3469, %v3471
      %v3484 = vsel %vm456, %v3473, %v3475
      %v3485 = vsel %vm456, %v3477, %v3479
      %3492 = vmatpush.bf16.msra.mxu0 0
      %3493 = vmatpush.bf16.msra.mxu0 0
      %3494 = vmatpush.bf16.msra.mxu0 %v3485
      %3495 = vmatpush.bf16.msra.mxu0 %v3484
      %3496 = vmatpush.bf16.msra.mxu0 %v3483
      %3497 = vmatpush.bf16.msra.mxu0 %v3482
      %3498 = vmatpush.bf16.msra.mxu0 %v3481
      %3499 = vmatpush.bf16.msra.mxu0 %v3480
      %3500 = vmatmul.bf16.gmra.mxu0 %v471
      %v3501 = vpop.f32.mrf.mxu0
      %v3502 = vadd.f32 0.0, %v3501
      %v3503 = vpop.f32.mrf.mxu0
      %v3504 = vadd.f32 0.0, %v3503
      %3505 = vmatmul.bf16.gmra.mxu0 %v474
      %v3506 = vpop.f32.mrf.mxu0
      %v3507 = vadd.f32 0.0, %v3506
      %v3508 = vpop.f32.mrf.mxu0
      %v3509 = vadd.f32 0.0, %v3508
      %3510 = vdwg.mxu0
      %3517 = vmatpush.bf16.msra.mxu0 0
      %3518 = vmatpush.bf16.msra.mxu0 0
      %3519 = vmatpush.bf16.msra.mxu0 %v3454
      %3520 = vmatpush.bf16.msra.mxu0 %v3452
      %3521 = vmatpush.bf16.msra.mxu0 %v3450
      %3522 = vmatpush.bf16.msra.mxu0 %v3448
      %3523 = vmatpush.bf16.msra.mxu0 %v3446
      %3524 = vmatpush.bf16.msra.mxu0 %v3444
      %3525 = vmatmul.bf16.gmra.mxu0 %v512
      %v3526 = vpop.f32.mrf.mxu0
      %v3527 = vadd.f32 %v3502, %v3526
      %v3528 = vpop.f32.mrf.mxu0
      %v3529 = vadd.f32 %v3504, %v3528
      %3530 = vmatmul.bf16.gmra.mxu0 %v515
      %v3531 = vpop.f32.mrf.mxu0
      %v3532 = vadd.f32 %v3507, %v3531
      %v3533 = vpop.f32.mrf.mxu0
      %v3534 = vadd.f32 %v3509, %v3533
      %3535 = vdwg.mxu0
      %3536 = vrot.lane.b32.xlu0 %v3444, 126
      %v3537 = vpop.permute.xlu0 %3536
      %3538 = vrot.lane.b32.xlu0 %v3445, 126
      %v3539 = vpop.permute.xlu0 %3538
      %3540 = vrot.lane.b32.xlu0 %v3446, 126
      %v3541 = vpop.permute.xlu0 %3540
      %3542 = vrot.lane.b32.xlu0 %v3447, 126
      %v3543 = vpop.permute.xlu0 %3542
      %3544 = vrot.lane.b32.xlu0 %v3448, 126
      %v3545 = vpop.permute.xlu0 %3544
      %3546 = vrot.lane.b32.xlu0 %v3449, 126
      %v3547 = vpop.permute.xlu0 %3546
      %3548 = vrot.lane.b32.xlu0 %v3450, 126
      %v3549 = vpop.permute.xlu0 %3548
      %3550 = vrot.lane.b32.xlu0 %v3451, 126
      %v3551 = vpop.permute.xlu0 %3550
      %3552 = vrot.lane.b32.xlu0 %v3452, 126
      %v3553 = vpop.permute.xlu0 %3552
      %3554 = vrot.lane.b32.xlu0 %v3453, 126
      %v3555 = vpop.permute.xlu0 %3554
      %3556 = vrot.lane.b32.xlu0 %v3454, 126
      %v3557 = vpop.permute.xlu0 %3556
      %3558 = vrot.lane.b32.xlu0 %v3455, 126
      %v3559 = vpop.permute.xlu0 %3558
      %v3560 = vsel %vm570, %v3537, %v3539
      %v3561 = vsel %vm570, %v3541, %v3543
      %v3562 = vsel %vm570, %v3545, %v3547
      %v3563 = vsel %vm570, %v3549, %v3551
      %v3564 = vsel %vm570, %v3553, %v3555
      %v3565 = vsel %vm570, %v3557, %v3559
      %3572 = vmatpush.bf16.msra.mxu0 0
      %3573 = vmatpush.bf16.msra.mxu0 0
      %3574 = vmatpush.bf16.msra.mxu0 %v3565
      %3575 = vmatpush.bf16.msra.mxu0 %v3564
      %3576 = vmatpush.bf16.msra.mxu0 %v3563
      %3577 = vmatpush.bf16.msra.mxu0 %v3562
      %3578 = vmatpush.bf16.msra.mxu0 %v3561
      %3579 = vmatpush.bf16.msra.mxu0 %v3560
      %3580 = vmatmul.bf16.gmra.mxu0 %v584
      %v3581 = vpop.f32.mrf.mxu0
      %v3582 = vadd.f32 0.0, %v3581
      %v3583 = vpop.f32.mrf.mxu0
      %v3584 = vadd.f32 0.0, %v3583
      %3585 = vmatmul.bf16.gmra.mxu0 %v587
      %v3586 = vpop.f32.mrf.mxu0
      %v3587 = vadd.f32 0.0, %v3586
      %v3588 = vpop.f32.mrf.mxu0
      %v3589 = vadd.f32 0.0, %v3588
      %3590 = vdwg.mxu0
      %v3591 = vadd.f32 %v3527, %v3582
      %v3592 = vadd.f32 %v3529, %v3584
      %v3593 = vadd.f32 %v3532, %v3587
      %v3594 = vadd.f32 %v3534, %v3589
      %v3595 = vadd.f32 %v3591, %v615
      %v3596 = vadd.f32 %v3592, %v620
      %v3597 = vadd.f32 %v3593, %v625
      %v3598 = vadd.f32 %v3594, %v630
      %v3599 = vmax.f32 %v3595, 0.0
      %v3600 = vmax.f32 %v3596, 0.0
      %v3601 = vmax.f32 %v3597, 0.0
      %v3602 = vmax.f32 %v3598, 0.0
      %v3603 = vmul.f32 %v3599, %v262
      %v3604 = vmul.f32 %v3600, %v262
      %v3605 = vmul.f32 %v3601, %v262
      %v3606 = vmul.f32 %v3602, %v262
      %v3607 = vpack.c.bf16 %v3603, %v3603
      %v3608 = vpack.c.bf16 %v3604, %v3604
      %v3609 = vpack.c.bf16 %v3605, %v3605
      %v3610 = vpack.c.bf16 %v3606, %v3606
      %3615 = vrot.lane.b32.xlu0 %v3607, 1
      %v3616 = vpop.permute.xlu0 %3615
      %3617 = vrot.lane.b32.xlu0 %v3608, 1
      %v3618 = vpop.permute.xlu0 %3617
      %3619 = vrot.lane.b32.xlu0 %v3609, 1
      %v3620 = vpop.permute.xlu0 %3619
      %3621 = vrot.lane.b32.xlu0 %v3610, 1
      %v3622 = vpop.permute.xlu0 %3621
      %v3623 = vrot.slane %v3616, 4
      %v3624 = vrot.slane %v3618, 4
      %v3625 = vrot.slane %v3620, 4
      %v3626 = vrot.slane %v3622, 4
      %v3627 = vsel %vm664, %v3623, %v3616
      %v3628 = vsel %vm664, %v3624, %v3618
      %v3629 = vsel %vm664, %v3625, %v3620
      %v3630 = vsel %vm664, %v3626, %v3622
      %s3635 = scalar_lea.vmem [#allocation2], 384
      %3636 = vst.msk [vmem:[%s3635] sm:$0xff] %vm676, %v3627
      %3637 = vst.msk [vmem:[%s3635 + $0x8] sm:$0xff] %vm676, %v3628
      %3638 = vst.msk [vmem:[%s3635 + $0x10] sm:$0xff] %vm676, %v3629
      %3639 = vst.msk [vmem:[%s3635 + $0x18] sm:$0xff] %vm676, %v3630
      %s3640 = scalar_lea.vmem %s219, 768
      %v3641 = vld [vmem:[%s3640] sm:$0xff]
      %v3642 = vld [vmem:[%s3640 + $0x8] sm:$0xff]
      %v3643 = vld [vmem:[%s3640 + $0x10] sm:$0xff]
      %v3644 = vld [vmem:[%s3640 + $0x18] sm:$0xff]
      %v3645 = vld [vmem:[%s3640 + $0x20] sm:$0xff]
      %v3646 = vld [vmem:[%s3640 + $0x28] sm:$0xff]
      %v3647 = vld [vmem:[%s3640 + $0x30] sm:$0xff]
      %v3648 = vld [vmem:[%s3640 + $0x38] sm:$0xff]
      %v3649 = vld [vmem:[%s3640 + $0x40] sm:$0xff]
      %v3650 = vld [vmem:[%s3640 + $0x48] sm:$0xff]
      %v3651 = vld [vmem:[%s3640 + $0x50] sm:$0xff]
      %v3652 = vld [vmem:[%s3640 + $0x58] sm:$0xff]
      %v3653 = vld [vmem:[%s3640 + $0x60] sm:$0xff]
      %v3654 = vld [vmem:[%s3640 + $0x68] sm:$0xff]
      %v3655 = vld [vmem:[%s3640 + $0x70] sm:$0xff]
      %v3656 = vld [vmem:[%s3640 + $0x78] sm:$0xff]
      %v3657 = vld [vmem:[%s3640 + $0x80] sm:$0xff]
      %v3658 = vld [vmem:[%s3640 + $0x88] sm:$0xff]
      %v3659 = vld [vmem:[%s3640 + $0x90] sm:$0xff]
      %v3660 = vld [vmem:[%s3640 + $0x98] sm:$0xff]
      %v3661 = vld [vmem:[%s3640 + $0xa0] sm:$0xff]
      %v3662 = vld [vmem:[%s3640 + $0xa8] sm:$0xff]
      %v3663 = vld [vmem:[%s3640 + $0xb0] sm:$0xff]
      %v3664 = vld [vmem:[%s3640 + $0xb8] sm:$0xff]
      %v3665 = vpack.c.bf16 %v3642, %v3641
      %v3666 = vpack.c.bf16 %v3644, %v3643
      %v3667 = vpack.c.bf16 %v3646, %v3645
      %v3668 = vpack.c.bf16 %v3648, %v3647
      %v3669 = vpack.c.bf16 %v3650, %v3649
      %v3670 = vpack.c.bf16 %v3652, %v3651
      %v3671 = vpack.c.bf16 %v3654, %v3653
      %v3672 = vpack.c.bf16 %v3656, %v3655
      %v3673 = vpack.c.bf16 %v3658, %v3657
      %v3674 = vpack.c.bf16 %v3660, %v3659
      %v3675 = vpack.c.bf16 %v3662, %v3661
      %v3676 = vpack.c.bf16 %v3664, %v3663
      %v3689 = vunpack.c.l.b16 %v3665
      %v3690 = vunpack.c.h.b16 %v3665
      %v3691 = vunpack.c.l.b16 %v3666
      %v3692 = vunpack.c.h.b16 %v3666
      %v3693 = vunpack.c.l.b16 %v3667
      %v3694 = vunpack.c.h.b16 %v3667
      %v3695 = vunpack.c.l.b16 %v3668
      %v3696 = vunpack.c.h.b16 %v3668
      %v3697 = vunpack.c.l.b16 %v3669
      %v3698 = vunpack.c.h.b16 %v3669
      %v3699 = vunpack.c.l.b16 %v3670
      %v3700 = vunpack.c.h.b16 %v3670
      %v3701 = vunpack.c.l.b16 %v3671
      %v3702 = vunpack.c.h.b16 %v3671
      %v3703 = vunpack.c.l.b16 %v3672
      %v3704 = vunpack.c.h.b16 %v3672
      %v3705 = vunpack.c.l.b16 %v3673
      %v3706 = vunpack.c.h.b16 %v3673
      %v3707 = vunpack.c.l.b16 %v3674
      %v3708 = vunpack.c.h.b16 %v3674
      %v3709 = vunpack.c.l.b16 %v3675
      %v3710 = vunpack.c.h.b16 %v3675
      %v3711 = vunpack.c.l.b16 %v3676
      %v3712 = vunpack.c.h.b16 %v3676
      %v3713 = vpack.c.b16 %v3691, %v3689
      %v3714 = vpack.c.b16 %v3692, %v3690
      %v3715 = vpack.c.b16 %v3695, %v3693
      %v3716 = vpack.c.b16 %v3696, %v3694
      %v3717 = vpack.c.b16 %v3699, %v3697
      %v3718 = vpack.c.b16 %v3700, %v3698
      %v3719 = vpack.c.b16 %v3703, %v3701
      %v3720 = vpack.c.b16 %v3704, %v3702
      %v3721 = vpack.c.b16 %v3707, %v3705
      %v3722 = vpack.c.b16 %v3708, %v3706
      %v3723 = vpack.c.b16 %v3711, %v3709
      %v3724 = vpack.c.b16 %v3712, %v3710
      %3725 = vrot.lane.b32.xlu0 %v3713, 127
      %v3726 = vpop.permute.xlu0 %3725
      %3727 = vrot.lane.b32.xlu0 %v3714, 127
      %v3728 = vpop.permute.xlu0 %3727
      %3729 = vrot.lane.b32.xlu0 %v3715, 127
      %v3730 = vpop.permute.xlu0 %3729
      %3731 = vrot.lane.b32.xlu0 %v3716, 127
      %v3732 = vpop.permute.xlu0 %3731
      %3733 = vrot.lane.b32.xlu0 %v3717, 127
      %v3734 = vpop.permute.xlu0 %3733
      %3735 = vrot.lane.b32.xlu0 %v3718, 127
      %v3736 = vpop.permute.xlu0 %3735
      %3737 = vrot.lane.b32.xlu0 %v3719, 127
      %v3738 = vpop.permute.xlu0 %3737
      %3739 = vrot.lane.b32.xlu0 %v3720, 127
      %v3740 = vpop.permute.xlu0 %3739
      %3741 = vrot.lane.b32.xlu0 %v3721, 127
      %v3742 = vpop.permute.xlu0 %3741
      %3743 = vrot.lane.b32.xlu0 %v3722, 127
      %v3744 = vpop.permute.xlu0 %3743
      %3745 = vrot.lane.b32.xlu0 %v3723, 127
      %v3746 = vpop.permute.xlu0 %3745
      %3747 = vrot.lane.b32.xlu0 %v3724, 127
      %v3748 = vpop.permute.xlu0 %3747
      %v3749 = vsel %vm456, %v3726, %v3728
      %v3750 = vsel %vm456, %v3730, %v3732
      %v3751 = vsel %vm456, %v3734, %v3736
      %v3752 = vsel %vm456, %v3738, %v3740
      %v3753 = vsel %vm456, %v3742, %v3744
      %v3754 = vsel %vm456, %v3746, %v3748
      %3761 = vmatpush.bf16.msra.mxu0 0
      %3762 = vmatpush.bf16.msra.mxu0 0
      %3763 = vmatpush.bf16.msra.mxu0 %v3754
      %3764 = vmatpush.bf16.msra.mxu0 %v3753
      %3765 = vmatpush.bf16.msra.mxu0 %v3752
      %3766 = vmatpush.bf16.msra.mxu0 %v3751
      %3767 = vmatpush.bf16.msra.mxu0 %v3750
      %3768 = vmatpush.bf16.msra.mxu0 %v3749
      %3769 = vmatmul.bf16.gmra.mxu0 %v471
      %v3770 = vpop.f32.mrf.mxu0
      %v3771 = vadd.f32 0.0, %v3770
      %v3772 = vpop.f32.mrf.mxu0
      %v3773 = vadd.f32 0.0, %v3772
      %3774 = vmatmul.bf16.gmra.mxu0 %v474
      %v3775 = vpop.f32.mrf.mxu0
      %v3776 = vadd.f32 0.0, %v3775
      %v3777 = vpop.f32.mrf.mxu0
      %v3778 = vadd.f32 0.0, %v3777
      %3779 = vdwg.mxu0
      %3786 = vmatpush.bf16.msra.mxu0 0
      %3787 = vmatpush.bf16.msra.mxu0 0
      %3788 = vmatpush.bf16.msra.mxu0 %v3723
      %3789 = vmatpush.bf16.msra.mxu0 %v3721
      %3790 = vmatpush.bf16.msra.mxu0 %v3719
      %3791 = vmatpush.bf16.msra.mxu0 %v3717
      %3792 = vmatpush.bf16.msra.mxu0 %v3715
      %3793 = vmatpush.bf16.msra.mxu0 %v3713
      %3794 = vmatmul.bf16.gmra.mxu0 %v512
      %v3795 = vpop.f32.mrf.mxu0
      %v3796 = vadd.f32 %v3771, %v3795
      %v3797 = vpop.f32.mrf.mxu0
      %v3798 = vadd.f32 %v3773, %v3797
      %3799 = vmatmul.bf16.gmra.mxu0 %v515
      %v3800 = vpop.f32.mrf.mxu0
      %v3801 = vadd.f32 %v3776, %v3800
      %v3802 = vpop.f32.mrf.mxu0
      %v3803 = vadd.f32 %v3778, %v3802
      %3804 = vdwg.mxu0
      %3805 = vrot.lane.b32.xlu0 %v3713, 126
      %v3806 = vpop.permute.xlu0 %3805
      %3807 = vrot.lane.b32.xlu0 %v3714, 126
      %v3808 = vpop.permute.xlu0 %3807
      %3809 = vrot.lane.b32.xlu0 %v3715, 126
      %v3810 = vpop.permute.xlu0 %3809
      %3811 = vrot.lane.b32.xlu0 %v3716, 126
      %v3812 = vpop.permute.xlu0 %3811
      %3813 = vrot.lane.b32.xlu0 %v3717, 126
      %v3814 = vpop.permute.xlu0 %3813
      %3815 = vrot.lane.b32.xlu0 %v3718, 126
      %v3816 = vpop.permute.xlu0 %3815
      %3817 = vrot.lane.b32.xlu0 %v3719, 126
      %v3818 = vpop.permute.xlu0 %3817
      %3819 = vrot.lane.b32.xlu0 %v3720, 126
      %v3820 = vpop.permute.xlu0 %3819
      %3821 = vrot.lane.b32.xlu0 %v3721, 126
      %v3822 = vpop.permute.xlu0 %3821
      %3823 = vrot.lane.b32.xlu0 %v3722, 126
      %v3824 = vpop.permute.xlu0 %3823
      %3825 = vrot.lane.b32.xlu0 %v3723, 126
      %v3826 = vpop.permute.xlu0 %3825
      %3827 = vrot.lane.b32.xlu0 %v3724, 126
      %v3828 = vpop.permute.xlu0 %3827
      %v3829 = vsel %vm570, %v3806, %v3808
      %v3830 = vsel %vm570, %v3810, %v3812
      %v3831 = vsel %vm570, %v3814, %v3816
      %v3832 = vsel %vm570, %v3818, %v3820
      %v3833 = vsel %vm570, %v3822, %v3824
      %v3834 = vsel %vm570, %v3826, %v3828
      %3841 = vmatpush.bf16.msra.mxu0 0
      %3842 = vmatpush.bf16.msra.mxu0 0
      %3843 = vmatpush.bf16.msra.mxu0 %v3834
      %3844 = vmatpush.bf16.msra.mxu0 %v3833
      %3845 = vmatpush.bf16.msra.mxu0 %v3832
      %3846 = vmatpush.bf16.msra.mxu0 %v3831
      %3847 = vmatpush.bf16.msra.mxu0 %v3830
      %3848 = vmatpush.bf16.msra.mxu0 %v3829
      %3849 = vmatmul.bf16.gmra.mxu0 %v584
      %v3850 = vpop.f32.mrf.mxu0
      %v3851 = vadd.f32 0.0, %v3850
      %v3852 = vpop.f32.mrf.mxu0
      %v3853 = vadd.f32 0.0, %v3852
      %3854 = vmatmul.bf16.gmra.mxu0 %v587
      %v3855 = vpop.f32.mrf.mxu0
      %v3856 = vadd.f32 0.0, %v3855
      %v3857 = vpop.f32.mrf.mxu0
      %v3858 = vadd.f32 0.0, %v3857
      %3859 = vdwg.mxu0
      %v3860 = vadd.f32 %v3796, %v3851
      %v3861 = vadd.f32 %v3798, %v3853
      %v3862 = vadd.f32 %v3801, %v3856
      %v3863 = vadd.f32 %v3803, %v3858
      %v3864 = vadd.f32 %v3860, %v615
      %v3865 = vadd.f32 %v3861, %v620
      %v3866 = vadd.f32 %v3862, %v625
      %v3867 = vadd.f32 %v3863, %v630
      %v3868 = vmax.f32 %v3864, 0.0
      %v3869 = vmax.f32 %v3865, 0.0
      %v3870 = vmax.f32 %v3866, 0.0
      %v3871 = vmax.f32 %v3867, 0.0
      %v3872 = vmul.f32 %v3868, %v262
      %v3873 = vmul.f32 %v3869, %v262
      %v3874 = vmul.f32 %v3870, %v262
      %v3875 = vmul.f32 %v3871, %v262
      %v3876 = vpack.c.bf16 %v3872, %v3872
      %v3877 = vpack.c.bf16 %v3873, %v3873
      %v3878 = vpack.c.bf16 %v3874, %v3874
      %v3879 = vpack.c.bf16 %v3875, %v3875
      %3884 = vrot.lane.b32.xlu0 %v3876, 1
      %v3885 = vpop.permute.xlu0 %3884
      %3886 = vrot.lane.b32.xlu0 %v3877, 1
      %v3887 = vpop.permute.xlu0 %3886
      %3888 = vrot.lane.b32.xlu0 %v3878, 1
      %v3889 = vpop.permute.xlu0 %3888
      %3890 = vrot.lane.b32.xlu0 %v3879, 1
      %v3891 = vpop.permute.xlu0 %3890
      %v3892 = vrot.slane %v3885, 4
      %v3893 = vrot.slane %v3887, 4
      %v3894 = vrot.slane %v3889, 4
      %v3895 = vrot.slane %v3891, 4
      %v3896 = vsel %vm664, %v3892, %v3885
      %v3897 = vsel %vm664, %v3893, %v3887
      %v3898 = vsel %vm664, %v3894, %v3889
      %v3899 = vsel %vm664, %v3895, %v3891
      %s3904 = scalar_lea.vmem [#allocation2], 416
      %3905 = vst.msk [vmem:[%s3904] sm:$0xff] %vm676, %v3896
      %3906 = vst.msk [vmem:[%s3904 + $0x8] sm:$0xff] %vm676, %v3897
      %3907 = vst.msk [vmem:[%s3904 + $0x10] sm:$0xff] %vm676, %v3898
      %3908 = vst.msk [vmem:[%s3904 + $0x18] sm:$0xff] %vm676, %v3899
      %s3909 = scalar_lea.vmem %s219, 832
      %v3910 = vld [vmem:[%s3909] sm:$0xff]
      %v3911 = vld [vmem:[%s3909 + $0x8] sm:$0xff]
      %v3912 = vld [vmem:[%s3909 + $0x10] sm:$0xff]
      %v3913 = vld [vmem:[%s3909 + $0x18] sm:$0xff]
      %v3914 = vld [vmem:[%s3909 + $0x20] sm:$0xff]
      %v3915 = vld [vmem:[%s3909 + $0x28] sm:$0xff]
      %v3916 = vld [vmem:[%s3909 + $0x30] sm:$0xff]
      %v3917 = vld [vmem:[%s3909 + $0x38] sm:$0xff]
      %v3918 = vld [vmem:[%s3909 + $0x40] sm:$0xff]
      %v3919 = vld [vmem:[%s3909 + $0x48] sm:$0xff]
      %v3920 = vld [vmem:[%s3909 + $0x50] sm:$0xff]
      %v3921 = vld [vmem:[%s3909 + $0x58] sm:$0xff]
      %v3922 = vld [vmem:[%s3909 + $0x60] sm:$0xff]
      %v3923 = vld [vmem:[%s3909 + $0x68] sm:$0xff]
      %v3924 = vld [vmem:[%s3909 + $0x70] sm:$0xff]
      %v3925 = vld [vmem:[%s3909 + $0x78] sm:$0xff]
      %v3926 = vld [vmem:[%s3909 + $0x80] sm:$0xff]
      %v3927 = vld [vmem:[%s3909 + $0x88] sm:$0xff]
      %v3928 = vld [vmem:[%s3909 + $0x90] sm:$0xff]
      %v3929 = vld [vmem:[%s3909 + $0x98] sm:$0xff]
      %v3930 = vld [vmem:[%s3909 + $0xa0] sm:$0xff]
      %v3931 = vld [vmem:[%s3909 + $0xa8] sm:$0xff]
      %v3932 = vld [vmem:[%s3909 + $0xb0] sm:$0xff]
      %v3933 = vld [vmem:[%s3909 + $0xb8] sm:$0xff]
      %v3934 = vpack.c.bf16 %v3911, %v3910
      %v3935 = vpack.c.bf16 %v3913, %v3912
      %v3936 = vpack.c.bf16 %v3915, %v3914
      %v3937 = vpack.c.bf16 %v3917, %v3916
      %v3938 = vpack.c.bf16 %v3919, %v3918
      %v3939 = vpack.c.bf16 %v3921, %v3920
      %v3940 = vpack.c.bf16 %v3923, %v3922
      %v3941 = vpack.c.bf16 %v3925, %v3924
      %v3942 = vpack.c.bf16 %v3927, %v3926
      %v3943 = vpack.c.bf16 %v3929, %v3928
      %v3944 = vpack.c.bf16 %v3931, %v3930
      %v3945 = vpack.c.bf16 %v3933, %v3932
      %v3958 = vunpack.c.l.b16 %v3934
      %v3959 = vunpack.c.h.b16 %v3934
      %v3960 = vunpack.c.l.b16 %v3935
      %v3961 = vunpack.c.h.b16 %v3935
      %v3962 = vunpack.c.l.b16 %v3936
      %v3963 = vunpack.c.h.b16 %v3936
      %v3964 = vunpack.c.l.b16 %v3937
      %v3965 = vunpack.c.h.b16 %v3937
      %v3966 = vunpack.c.l.b16 %v3938
      %v3967 = vunpack.c.h.b16 %v3938
      %v3968 = vunpack.c.l.b16 %v3939
      %v3969 = vunpack.c.h.b16 %v3939
      %v3970 = vunpack.c.l.b16 %v3940
      %v3971 = vunpack.c.h.b16 %v3940
      %v3972 = vunpack.c.l.b16 %v3941
      %v3973 = vunpack.c.h.b16 %v3941
      %v3974 = vunpack.c.l.b16 %v3942
      %v3975 = vunpack.c.h.b16 %v3942
      %v3976 = vunpack.c.l.b16 %v3943
      %v3977 = vunpack.c.h.b16 %v3943
      %v3978 = vunpack.c.l.b16 %v3944
      %v3979 = vunpack.c.h.b16 %v3944
      %v3980 = vunpack.c.l.b16 %v3945
      %v3981 = vunpack.c.h.b16 %v3945
      %v3982 = vpack.c.b16 %v3960, %v3958
      %v3983 = vpack.c.b16 %v3961, %v3959
      %v3984 = vpack.c.b16 %v3964, %v3962
      %v3985 = vpack.c.b16 %v3965, %v3963
      %v3986 = vpack.c.b16 %v3968, %v3966
      %v3987 = vpack.c.b16 %v3969, %v3967
      %v3988 = vpack.c.b16 %v3972, %v3970
      %v3989 = vpack.c.b16 %v3973, %v3971
      %v3990 = vpack.c.b16 %v3976, %v3974
      %v3991 = vpack.c.b16 %v3977, %v3975
      %v3992 = vpack.c.b16 %v3980, %v3978
      %v3993 = vpack.c.b16 %v3981, %v3979
      %3994 = vrot.lane.b32.xlu0 %v3982, 127
      %v3995 = vpop.permute.xlu0 %3994
      %3996 = vrot.lane.b32.xlu0 %v3983, 127
      %v3997 = vpop.permute.xlu0 %3996
      %3998 = vrot.lane.b32.xlu0 %v3984, 127
      %v3999 = vpop.permute.xlu0 %3998
      %4000 = vrot.lane.b32.xlu0 %v3985, 127
      %v4001 = vpop.permute.xlu0 %4000
      %4002 = vrot.lane.b32.xlu0 %v3986, 127
      %v4003 = vpop.permute.xlu0 %4002
      %4004 = vrot.lane.b32.xlu0 %v3987, 127
      %v4005 = vpop.permute.xlu0 %4004
      %4006 = vrot.lane.b32.xlu0 %v3988, 127
      %v4007 = vpop.permute.xlu0 %4006
      %4008 = vrot.lane.b32.xlu0 %v3989, 127
      %v4009 = vpop.permute.xlu0 %4008
      %4010 = vrot.lane.b32.xlu0 %v3990, 127
      %v4011 = vpop.permute.xlu0 %4010
      %4012 = vrot.lane.b32.xlu0 %v3991, 127
      %v4013 = vpop.permute.xlu0 %4012
      %4014 = vrot.lane.b32.xlu0 %v3992, 127
      %v4015 = vpop.permute.xlu0 %4014
      %4016 = vrot.lane.b32.xlu0 %v3993, 127
      %v4017 = vpop.permute.xlu0 %4016
      %v4018 = vsel %vm456, %v3995, %v3997
      %v4019 = vsel %vm456, %v3999, %v4001
      %v4020 = vsel %vm456, %v4003, %v4005
      %v4021 = vsel %vm456, %v4007, %v4009
      %v4022 = vsel %vm456, %v4011, %v4013
      %v4023 = vsel %vm456, %v4015, %v4017
      %4030 = vmatpush.bf16.msra.mxu0 0
      %4031 = vmatpush.bf16.msra.mxu0 0
      %4032 = vmatpush.bf16.msra.mxu0 %v4023
      %4033 = vmatpush.bf16.msra.mxu0 %v4022
      %4034 = vmatpush.bf16.msra.mxu0 %v4021
      %4035 = vmatpush.bf16.msra.mxu0 %v4020
      %4036 = vmatpush.bf16.msra.mxu0 %v4019
      %4037 = vmatpush.bf16.msra.mxu0 %v4018
      %4038 = vmatmul.bf16.gmra.mxu0 %v471
      %v4039 = vpop.f32.mrf.mxu0
      %v4040 = vadd.f32 0.0, %v4039
      %v4041 = vpop.f32.mrf.mxu0
      %v4042 = vadd.f32 0.0, %v4041
      %4043 = vmatmul.bf16.gmra.mxu0 %v474
      %v4044 = vpop.f32.mrf.mxu0
      %v4045 = vadd.f32 0.0, %v4044
      %v4046 = vpop.f32.mrf.mxu0
      %v4047 = vadd.f32 0.0, %v4046
      %4048 = vdwg.mxu0
      %4055 = vmatpush.bf16.msra.mxu0 0
      %4056 = vmatpush.bf16.msra.mxu0 0
      %4057 = vmatpush.bf16.msra.mxu0 %v3992
      %4058 = vmatpush.bf16.msra.mxu0 %v3990
      %4059 = vmatpush.bf16.msra.mxu0 %v3988
      %4060 = vmatpush.bf16.msra.mxu0 %v3986
      %4061 = vmatpush.bf16.msra.mxu0 %v3984
      %4062 = vmatpush.bf16.msra.mxu0 %v3982
      %4063 = vmatmul.bf16.gmra.mxu0 %v512
      %v4064 = vpop.f32.mrf.mxu0
      %v4065 = vadd.f32 %v4040, %v4064
      %v4066 = vpop.f32.mrf.mxu0
      %v4067 = vadd.f32 %v4042, %v4066
      %4068 = vmatmul.bf16.gmra.mxu0 %v515
      %v4069 = vpop.f32.mrf.mxu0
      %v4070 = vadd.f32 %v4045, %v4069
      %v4071 = vpop.f32.mrf.mxu0
      %v4072 = vadd.f32 %v4047, %v4071
      %4073 = vdwg.mxu0
      %4074 = vrot.lane.b32.xlu0 %v3982, 126
      %v4075 = vpop.permute.xlu0 %4074
      %4076 = vrot.lane.b32.xlu0 %v3983, 126
      %v4077 = vpop.permute.xlu0 %4076
      %4078 = vrot.lane.b32.xlu0 %v3984, 126
      %v4079 = vpop.permute.xlu0 %4078
      %4080 = vrot.lane.b32.xlu0 %v3985, 126
      %v4081 = vpop.permute.xlu0 %4080
      %4082 = vrot.lane.b32.xlu0 %v3986, 126
      %v4083 = vpop.permute.xlu0 %4082
      %4084 = vrot.lane.b32.xlu0 %v3987, 126
      %v4085 = vpop.permute.xlu0 %4084
      %4086 = vrot.lane.b32.xlu0 %v3988, 126
      %v4087 = vpop.permute.xlu0 %4086
      %4088 = vrot.lane.b32.xlu0 %v3989, 126
      %v4089 = vpop.permute.xlu0 %4088
      %4090 = vrot.lane.b32.xlu0 %v3990, 126
      %v4091 = vpop.permute.xlu0 %4090
      %4092 = vrot.lane.b32.xlu0 %v3991, 126
      %v4093 = vpop.permute.xlu0 %4092
      %4094 = vrot.lane.b32.xlu0 %v3992, 126
      %v4095 = vpop.permute.xlu0 %4094
      %4096 = vrot.lane.b32.xlu0 %v3993, 126
      %v4097 = vpop.permute.xlu0 %4096
      %v4098 = vsel %vm570, %v4075, %v4077
      %v4099 = vsel %vm570, %v4079, %v4081
      %v4100 = vsel %vm570, %v4083, %v4085
      %v4101 = vsel %vm570, %v4087, %v4089
      %v4102 = vsel %vm570, %v4091, %v4093
      %v4103 = vsel %vm570, %v4095, %v4097
      %4110 = vmatpush.bf16.msra.mxu0 0
      %4111 = vmatpush.bf16.msra.mxu0 0
      %4112 = vmatpush.bf16.msra.mxu0 %v4103
      %4113 = vmatpush.bf16.msra.mxu0 %v4102
      %4114 = vmatpush.bf16.msra.mxu0 %v4101
      %4115 = vmatpush.bf16.msra.mxu0 %v4100
      %4116 = vmatpush.bf16.msra.mxu0 %v4099
      %4117 = vmatpush.bf16.msra.mxu0 %v4098
      %4118 = vmatmul.bf16.gmra.mxu0 %v584
      %v4119 = vpop.f32.mrf.mxu0
      %v4120 = vadd.f32 0.0, %v4119
      %v4121 = vpop.f32.mrf.mxu0
      %v4122 = vadd.f32 0.0, %v4121
      %4123 = vmatmul.bf16.gmra.mxu0 %v587
      %v4124 = vpop.f32.mrf.mxu0
      %v4125 = vadd.f32 0.0, %v4124
      %v4126 = vpop.f32.mrf.mxu0
      %v4127 = vadd.f32 0.0, %v4126
      %4128 = vdwg.mxu0
      %v4129 = vadd.f32 %v4065, %v4120
      %v4130 = vadd.f32 %v4067, %v4122
      %v4131 = vadd.f32 %v4070, %v4125
      %v4132 = vadd.f32 %v4072, %v4127
      %v4133 = vadd.f32 %v4129, %v615
      %v4134 = vadd.f32 %v4130, %v620
      %v4135 = vadd.f32 %v4131, %v625
      %v4136 = vadd.f32 %v4132, %v630
      %v4137 = vmax.f32 %v4133, 0.0
      %v4138 = vmax.f32 %v4134, 0.0
      %v4139 = vmax.f32 %v4135, 0.0
      %v4140 = vmax.f32 %v4136, 0.0
      %v4141 = vmul.f32 %v4137, %v262
      %v4142 = vmul.f32 %v4138, %v262
      %v4143 = vmul.f32 %v4139, %v262
      %v4144 = vmul.f32 %v4140, %v262
      %v4145 = vpack.c.bf16 %v4141, %v4141
      %v4146 = vpack.c.bf16 %v4142, %v4142
      %v4147 = vpack.c.bf16 %v4143, %v4143
      %v4148 = vpack.c.bf16 %v4144, %v4144
      %4153 = vrot.lane.b32.xlu0 %v4145, 1
      %v4154 = vpop.permute.xlu0 %4153
      %4155 = vrot.lane.b32.xlu0 %v4146, 1
      %v4156 = vpop.permute.xlu0 %4155
      %4157 = vrot.lane.b32.xlu0 %v4147, 1
      %v4158 = vpop.permute.xlu0 %4157
      %4159 = vrot.lane.b32.xlu0 %v4148, 1
      %v4160 = vpop.permute.xlu0 %4159
      %v4161 = vrot.slane %v4154, 4
      %v4162 = vrot.slane %v4156, 4
      %v4163 = vrot.slane %v4158, 4
      %v4164 = vrot.slane %v4160, 4
      %v4165 = vsel %vm664, %v4161, %v4154
      %v4166 = vsel %vm664, %v4162, %v4156
      %v4167 = vsel %vm664, %v4163, %v4158
      %v4168 = vsel %vm664, %v4164, %v4160
      %s4173 = scalar_lea.vmem [#allocation2], 448
      %4174 = vst.msk [vmem:[%s4173] sm:$0xff] %vm676, %v4165
      %4175 = vst.msk [vmem:[%s4173 + $0x8] sm:$0xff] %vm676, %v4166
      %4176 = vst.msk [vmem:[%s4173 + $0x10] sm:$0xff] %vm676, %v4167
      %4177 = vst.msk [vmem:[%s4173 + $0x18] sm:$0xff] %vm676, %v4168
      %s4178 = scalar_lea.vmem %s219, 896
      %v4179 = vld [vmem:[%s4178] sm:$0xff]
      %v4180 = vld [vmem:[%s4178 + $0x8] sm:$0xff]
      %v4181 = vld [vmem:[%s4178 + $0x10] sm:$0xff]
      %v4182 = vld [vmem:[%s4178 + $0x18] sm:$0xff]
      %v4183 = vld [vmem:[%s4178 + $0x20] sm:$0xff]
      %v4184 = vld [vmem:[%s4178 + $0x28] sm:$0xff]
      %v4185 = vld [vmem:[%s4178 + $0x30] sm:$0xff]
      %v4186 = vld [vmem:[%s4178 + $0x38] sm:$0xff]
      %v4187 = vld [vmem:[%s4178 + $0x40] sm:$0xff]
      %v4188 = vld [vmem:[%s4178 + $0x48] sm:$0xff]
      %v4189 = vld [vmem:[%s4178 + $0x50] sm:$0xff]
      %v4190 = vld [vmem:[%s4178 + $0x58] sm:$0xff]
      %v4191 = vld [vmem:[%s4178 + $0x60] sm:$0xff]
      %v4192 = vld [vmem:[%s4178 + $0x68] sm:$0xff]
      %v4193 = vld [vmem:[%s4178 + $0x70] sm:$0xff]
      %v4194 = vld [vmem:[%s4178 + $0x78] sm:$0xff]
      %v4195 = vld [vmem:[%s4178 + $0x80] sm:$0xff]
      %v4196 = vld [vmem:[%s4178 + $0x88] sm:$0xff]
      %v4197 = vld [vmem:[%s4178 + $0x90] sm:$0xff]
      %v4198 = vld [vmem:[%s4178 + $0x98] sm:$0xff]
      %v4199 = vld [vmem:[%s4178 + $0xa0] sm:$0xff]
      %v4200 = vld [vmem:[%s4178 + $0xa8] sm:$0xff]
      %v4201 = vld [vmem:[%s4178 + $0xb0] sm:$0xff]
      %v4202 = vld [vmem:[%s4178 + $0xb8] sm:$0xff]
      %v4203 = vpack.c.bf16 %v4180, %v4179
      %v4204 = vpack.c.bf16 %v4182, %v4181
      %v4205 = vpack.c.bf16 %v4184, %v4183
      %v4206 = vpack.c.bf16 %v4186, %v4185
      %v4207 = vpack.c.bf16 %v4188, %v4187
      %v4208 = vpack.c.bf16 %v4190, %v4189
      %v4209 = vpack.c.bf16 %v4192, %v4191
      %v4210 = vpack.c.bf16 %v4194, %v4193
      %v4211 = vpack.c.bf16 %v4196, %v4195
      %v4212 = vpack.c.bf16 %v4198, %v4197
      %v4213 = vpack.c.bf16 %v4200, %v4199
      %v4214 = vpack.c.bf16 %v4202, %v4201
      %v4227 = vunpack.c.l.b16 %v4203
      %v4228 = vunpack.c.h.b16 %v4203
      %v4229 = vunpack.c.l.b16 %v4204
      %v4230 = vunpack.c.h.b16 %v4204
      %v4231 = vunpack.c.l.b16 %v4205
      %v4232 = vunpack.c.h.b16 %v4205
      %v4233 = vunpack.c.l.b16 %v4206
      %v4234 = vunpack.c.h.b16 %v4206
      %v4235 = vunpack.c.l.b16 %v4207
      %v4236 = vunpack.c.h.b16 %v4207
      %v4237 = vunpack.c.l.b16 %v4208
      %v4238 = vunpack.c.h.b16 %v4208
      %v4239 = vunpack.c.l.b16 %v4209
      %v4240 = vunpack.c.h.b16 %v4209
      %v4241 = vunpack.c.l.b16 %v4210
      %v4242 = vunpack.c.h.b16 %v4210
      %v4243 = vunpack.c.l.b16 %v4211
      %v4244 = vunpack.c.h.b16 %v4211
      %v4245 = vunpack.c.l.b16 %v4212
      %v4246 = vunpack.c.h.b16 %v4212
      %v4247 = vunpack.c.l.b16 %v4213
      %v4248 = vunpack.c.h.b16 %v4213
      %v4249 = vunpack.c.l.b16 %v4214
      %v4250 = vunpack.c.h.b16 %v4214
      %v4251 = vpack.c.b16 %v4229, %v4227
      %v4252 = vpack.c.b16 %v4230, %v4228
      %v4253 = vpack.c.b16 %v4233, %v4231
      %v4254 = vpack.c.b16 %v4234, %v4232
      %v4255 = vpack.c.b16 %v4237, %v4235
      %v4256 = vpack.c.b16 %v4238, %v4236
      %v4257 = vpack.c.b16 %v4241, %v4239
      %v4258 = vpack.c.b16 %v4242, %v4240
      %v4259 = vpack.c.b16 %v4245, %v4243
      %v4260 = vpack.c.b16 %v4246, %v4244
      %v4261 = vpack.c.b16 %v4249, %v4247
      %v4262 = vpack.c.b16 %v4250, %v4248
      %4263 = vrot.lane.b32.xlu0 %v4251, 127
      %v4264 = vpop.permute.xlu0 %4263
      %4265 = vrot.lane.b32.xlu0 %v4252, 127
      %v4266 = vpop.permute.xlu0 %4265
      %4267 = vrot.lane.b32.xlu0 %v4253, 127
      %v4268 = vpop.permute.xlu0 %4267
      %4269 = vrot.lane.b32.xlu0 %v4254, 127
      %v4270 = vpop.permute.xlu0 %4269
      %4271 = vrot.lane.b32.xlu0 %v4255, 127
      %v4272 = vpop.permute.xlu0 %4271
      %4273 = vrot.lane.b32.xlu0 %v4256, 127
      %v4274 = vpop.permute.xlu0 %4273
      %4275 = vrot.lane.b32.xlu0 %v4257, 127
      %v4276 = vpop.permute.xlu0 %4275
      %4277 = vrot.lane.b32.xlu0 %v4258, 127
      %v4278 = vpop.permute.xlu0 %4277
      %4279 = vrot.lane.b32.xlu0 %v4259, 127
      %v4280 = vpop.permute.xlu0 %4279
      %4281 = vrot.lane.b32.xlu0 %v4260, 127
      %v4282 = vpop.permute.xlu0 %4281
      %4283 = vrot.lane.b32.xlu0 %v4261, 127
      %v4284 = vpop.permute.xlu0 %4283
      %4285 = vrot.lane.b32.xlu0 %v4262, 127
      %v4286 = vpop.permute.xlu0 %4285
      %v4287 = vsel %vm456, %v4264, %v4266
      %v4288 = vsel %vm456, %v4268, %v4270
      %v4289 = vsel %vm456, %v4272, %v4274
      %v4290 = vsel %vm456, %v4276, %v4278
      %v4291 = vsel %vm456, %v4280, %v4282
      %v4292 = vsel %vm456, %v4284, %v4286
      %4299 = vmatpush.bf16.msra.mxu0 0
      %4300 = vmatpush.bf16.msra.mxu0 0
      %4301 = vmatpush.bf16.msra.mxu0 %v4292
      %4302 = vmatpush.bf16.msra.mxu0 %v4291
      %4303 = vmatpush.bf16.msra.mxu0 %v4290
      %4304 = vmatpush.bf16.msra.mxu0 %v4289
      %4305 = vmatpush.bf16.msra.mxu0 %v4288
      %4306 = vmatpush.bf16.msra.mxu0 %v4287
      %4307 = vmatmul.bf16.gmra.mxu0 %v471
      %v4308 = vpop.f32.mrf.mxu0
      %v4309 = vadd.f32 0.0, %v4308
      %v4310 = vpop.f32.mrf.mxu0
      %v4311 = vadd.f32 0.0, %v4310
      %4312 = vmatmul.bf16.gmra.mxu0 %v474
      %v4313 = vpop.f32.mrf.mxu0
      %v4314 = vadd.f32 0.0, %v4313
      %v4315 = vpop.f32.mrf.mxu0
      %v4316 = vadd.f32 0.0, %v4315
      %4317 = vdwg.mxu0
      %4324 = vmatpush.bf16.msra.mxu0 0
      %4325 = vmatpush.bf16.msra.mxu0 0
      %4326 = vmatpush.bf16.msra.mxu0 %v4261
      %4327 = vmatpush.bf16.msra.mxu0 %v4259
      %4328 = vmatpush.bf16.msra.mxu0 %v4257
      %4329 = vmatpush.bf16.msra.mxu0 %v4255
      %4330 = vmatpush.bf16.msra.mxu0 %v4253
      %4331 = vmatpush.bf16.msra.mxu0 %v4251
      %4332 = vmatmul.bf16.gmra.mxu0 %v512
      %v4333 = vpop.f32.mrf.mxu0
      %v4334 = vadd.f32 %v4309, %v4333
      %v4335 = vpop.f32.mrf.mxu0
      %v4336 = vadd.f32 %v4311, %v4335
      %4337 = vmatmul.bf16.gmra.mxu0 %v515
      %v4338 = vpop.f32.mrf.mxu0
      %v4339 = vadd.f32 %v4314, %v4338
      %v4340 = vpop.f32.mrf.mxu0
      %v4341 = vadd.f32 %v4316, %v4340
      %4342 = vdwg.mxu0
      %4343 = vrot.lane.b32.xlu0 %v4251, 126
      %v4344 = vpop.permute.xlu0 %4343
      %4345 = vrot.lane.b32.xlu0 %v4252, 126
      %v4346 = vpop.permute.xlu0 %4345
      %4347 = vrot.lane.b32.xlu0 %v4253, 126
      %v4348 = vpop.permute.xlu0 %4347
      %4349 = vrot.lane.b32.xlu0 %v4254, 126
      %v4350 = vpop.permute.xlu0 %4349
      %4351 = vrot.lane.b32.xlu0 %v4255, 126
      %v4352 = vpop.permute.xlu0 %4351
      %4353 = vrot.lane.b32.xlu0 %v4256, 126
      %v4354 = vpop.permute.xlu0 %4353
      %4355 = vrot.lane.b32.xlu0 %v4257, 126
      %v4356 = vpop.permute.xlu0 %4355
      %4357 = vrot.lane.b32.xlu0 %v4258, 126
      %v4358 = vpop.permute.xlu0 %4357
      %4359 = vrot.lane.b32.xlu0 %v4259, 126
      %v4360 = vpop.permute.xlu0 %4359
      %4361 = vrot.lane.b32.xlu0 %v4260, 126
      %v4362 = vpop.permute.xlu0 %4361
      %4363 = vrot.lane.b32.xlu0 %v4261, 126
      %v4364 = vpop.permute.xlu0 %4363
      %4365 = vrot.lane.b32.xlu0 %v4262, 126
      %v4366 = vpop.permute.xlu0 %4365
      %v4367 = vsel %vm570, %v4344, %v4346
      %v4368 = vsel %vm570, %v4348, %v4350
      %v4369 = vsel %vm570, %v4352, %v4354
      %v4370 = vsel %vm570, %v4356, %v4358
      %v4371 = vsel %vm570, %v4360, %v4362
      %v4372 = vsel %vm570, %v4364, %v4366
      %4379 = vmatpush.bf16.msra.mxu0 0
      %4380 = vmatpush.bf16.msra.mxu0 0
      %4381 = vmatpush.bf16.msra.mxu0 %v4372
      %4382 = vmatpush.bf16.msra.mxu0 %v4371
      %4383 = vmatpush.bf16.msra.mxu0 %v4370
      %4384 = vmatpush.bf16.msra.mxu0 %v4369
      %4385 = vmatpush.bf16.msra.mxu0 %v4368
      %4386 = vmatpush.bf16.msra.mxu0 %v4367
      %4387 = vmatmul.bf16.gmra.mxu0 %v584
      %v4388 = vpop.f32.mrf.mxu0
      %v4389 = vadd.f32 0.0, %v4388
      %v4390 = vpop.f32.mrf.mxu0
      %v4391 = vadd.f32 0.0, %v4390
      %4392 = vmatmul.bf16.gmra.mxu0 %v587
      %v4393 = vpop.f32.mrf.mxu0
      %v4394 = vadd.f32 0.0, %v4393
      %v4395 = vpop.f32.mrf.mxu0
      %v4396 = vadd.f32 0.0, %v4395
      %4397 = vdwg.mxu0
      %v4398 = vadd.f32 %v4334, %v4389
      %v4399 = vadd.f32 %v4336, %v4391
      %v4400 = vadd.f32 %v4339, %v4394
      %v4401 = vadd.f32 %v4341, %v4396
      %v4402 = vadd.f32 %v4398, %v615
      %v4403 = vadd.f32 %v4399, %v620
      %v4404 = vadd.f32 %v4400, %v625
      %v4405 = vadd.f32 %v4401, %v630
      %v4406 = vmax.f32 %v4402, 0.0
      %v4407 = vmax.f32 %v4403, 0.0
      %v4408 = vmax.f32 %v4404, 0.0
      %v4409 = vmax.f32 %v4405, 0.0
      %v4410 = vmul.f32 %v4406, %v262
      %v4411 = vmul.f32 %v4407, %v262
      %v4412 = vmul.f32 %v4408, %v262
      %v4413 = vmul.f32 %v4409, %v262
      %v4414 = vpack.c.bf16 %v4410, %v4410
      %v4415 = vpack.c.bf16 %v4411, %v4411
      %v4416 = vpack.c.bf16 %v4412, %v4412
      %v4417 = vpack.c.bf16 %v4413, %v4413
      %4422 = vrot.lane.b32.xlu0 %v4414, 1
      %v4423 = vpop.permute.xlu0 %4422
      %4424 = vrot.lane.b32.xlu0 %v4415, 1
      %v4425 = vpop.permute.xlu0 %4424
      %4426 = vrot.lane.b32.xlu0 %v4416, 1
      %v4427 = vpop.permute.xlu0 %4426
      %4428 = vrot.lane.b32.xlu0 %v4417, 1
      %v4429 = vpop.permute.xlu0 %4428
      %v4430 = vrot.slane %v4423, 4
      %v4431 = vrot.slane %v4425, 4
      %v4432 = vrot.slane %v4427, 4
      %v4433 = vrot.slane %v4429, 4
      %v4434 = vsel %vm664, %v4430, %v4423
      %v4435 = vsel %vm664, %v4431, %v4425
      %v4436 = vsel %vm664, %v4432, %v4427
      %v4437 = vsel %vm664, %v4433, %v4429
      %s4442 = scalar_lea.vmem [#allocation2], 480
      %4443 = vst.msk [vmem:[%s4442] sm:$0xff] %vm676, %v4434
      %4444 = vst.msk [vmem:[%s4442 + $0x8] sm:$0xff] %vm676, %v4435
      %4445 = vst.msk [vmem:[%s4442 + $0x10] sm:$0xff] %vm676, %v4436
      %4446 = vst.msk [vmem:[%s4442 + $0x18] sm:$0xff] %vm676, %v4437
      %s4447 = scalar_lea.vmem %s219, 960
      %v4448 = vld [vmem:[%s4447] sm:$0xff]
      %v4449 = vld [vmem:[%s4447 + $0x8] sm:$0xff]
      %v4450 = vld [vmem:[%s4447 + $0x10] sm:$0xff]
      %v4451 = vld [vmem:[%s4447 + $0x18] sm:$0xff]
      %v4452 = vld [vmem:[%s4447 + $0x20] sm:$0xff]
      %v4453 = vld [vmem:[%s4447 + $0x28] sm:$0xff]
      %v4454 = vld [vmem:[%s4447 + $0x30] sm:$0xff]
      %v4455 = vld [vmem:[%s4447 + $0x38] sm:$0xff]
      %v4456 = vld [vmem:[%s4447 + $0x40] sm:$0xff]
      %v4457 = vld [vmem:[%s4447 + $0x48] sm:$0xff]
      %v4458 = vld [vmem:[%s4447 + $0x50] sm:$0xff]
      %v4459 = vld [vmem:[%s4447 + $0x58] sm:$0xff]
      %v4460 = vld [vmem:[%s4447 + $0x60] sm:$0xff]
      %v4461 = vld [vmem:[%s4447 + $0x68] sm:$0xff]
      %v4462 = vld [vmem:[%s4447 + $0x70] sm:$0xff]
      %v4463 = vld [vmem:[%s4447 + $0x78] sm:$0xff]
      %v4464 = vld [vmem:[%s4447 + $0x80] sm:$0xff]
      %v4465 = vld [vmem:[%s4447 + $0x88] sm:$0xff]
      %v4466 = vld [vmem:[%s4447 + $0x90] sm:$0xff]
      %v4467 = vld [vmem:[%s4447 + $0x98] sm:$0xff]
      %v4468 = vld [vmem:[%s4447 + $0xa0] sm:$0xff]
      %v4469 = vld [vmem:[%s4447 + $0xa8] sm:$0xff]
      %v4470 = vld [vmem:[%s4447 + $0xb0] sm:$0xff]
      %v4471 = vld [vmem:[%s4447 + $0xb8] sm:$0xff]
      %v4472 = vpack.c.bf16 %v4449, %v4448
      %v4473 = vpack.c.bf16 %v4451, %v4450
      %v4474 = vpack.c.bf16 %v4453, %v4452
      %v4475 = vpack.c.bf16 %v4455, %v4454
      %v4476 = vpack.c.bf16 %v4457, %v4456
      %v4477 = vpack.c.bf16 %v4459, %v4458
      %v4478 = vpack.c.bf16 %v4461, %v4460
      %v4479 = vpack.c.bf16 %v4463, %v4462
      %v4480 = vpack.c.bf16 %v4465, %v4464
      %v4481 = vpack.c.bf16 %v4467, %v4466
      %v4482 = vpack.c.bf16 %v4469, %v4468
      %v4483 = vpack.c.bf16 %v4471, %v4470
      %v4496 = vunpack.c.l.b16 %v4472
      %v4497 = vunpack.c.h.b16 %v4472
      %v4498 = vunpack.c.l.b16 %v4473
      %v4499 = vunpack.c.h.b16 %v4473
      %v4500 = vunpack.c.l.b16 %v4474
      %v4501 = vunpack.c.h.b16 %v4474
      %v4502 = vunpack.c.l.b16 %v4475
      %v4503 = vunpack.c.h.b16 %v4475
      %v4504 = vunpack.c.l.b16 %v4476
      %v4505 = vunpack.c.h.b16 %v4476
      %v4506 = vunpack.c.l.b16 %v4477
      %v4507 = vunpack.c.h.b16 %v4477
      %v4508 = vunpack.c.l.b16 %v4478
      %v4509 = vunpack.c.h.b16 %v4478
      %v4510 = vunpack.c.l.b16 %v4479
      %v4511 = vunpack.c.h.b16 %v4479
      %v4512 = vunpack.c.l.b16 %v4480
      %v4513 = vunpack.c.h.b16 %v4480
      %v4514 = vunpack.c.l.b16 %v4481
      %v4515 = vunpack.c.h.b16 %v4481
      %v4516 = vunpack.c.l.b16 %v4482
      %v4517 = vunpack.c.h.b16 %v4482
      %v4518 = vunpack.c.l.b16 %v4483
      %v4519 = vunpack.c.h.b16 %v4483
      %v4520 = vpack.c.b16 %v4498, %v4496
      %v4521 = vpack.c.b16 %v4499, %v4497
      %v4522 = vpack.c.b16 %v4502, %v4500
      %v4523 = vpack.c.b16 %v4503, %v4501
      %v4524 = vpack.c.b16 %v4506, %v4504
      %v4525 = vpack.c.b16 %v4507, %v4505
      %v4526 = vpack.c.b16 %v4510, %v4508
      %v4527 = vpack.c.b16 %v4511, %v4509
      %v4528 = vpack.c.b16 %v4514, %v4512
      %v4529 = vpack.c.b16 %v4515, %v4513
      %v4530 = vpack.c.b16 %v4518, %v4516
      %v4531 = vpack.c.b16 %v4519, %v4517
      %4532 = vrot.lane.b32.xlu0 %v4520, 127
      %v4533 = vpop.permute.xlu0 %4532
      %4534 = vrot.lane.b32.xlu0 %v4521, 127
      %v4535 = vpop.permute.xlu0 %4534
      %4536 = vrot.lane.b32.xlu0 %v4522, 127
      %v4537 = vpop.permute.xlu0 %4536
      %4538 = vrot.lane.b32.xlu0 %v4523, 127
      %v4539 = vpop.permute.xlu0 %4538
      %4540 = vrot.lane.b32.xlu0 %v4524, 127
      %v4541 = vpop.permute.xlu0 %4540
      %4542 = vrot.lane.b32.xlu0 %v4525, 127
      %v4543 = vpop.permute.xlu0 %4542
      %4544 = vrot.lane.b32.xlu0 %v4526, 127
      %v4545 = vpop.permute.xlu0 %4544
      %4546 = vrot.lane.b32.xlu0 %v4527, 127
      %v4547 = vpop.permute.xlu0 %4546
      %4548 = vrot.lane.b32.xlu0 %v4528, 127
      %v4549 = vpop.permute.xlu0 %4548
      %4550 = vrot.lane.b32.xlu0 %v4529, 127
      %v4551 = vpop.permute.xlu0 %4550
      %4552 = vrot.lane.b32.xlu0 %v4530, 127
      %v4553 = vpop.permute.xlu0 %4552
      %4554 = vrot.lane.b32.xlu0 %v4531, 127
      %v4555 = vpop.permute.xlu0 %4554
      %v4556 = vsel %vm456, %v4533, %v4535
      %v4557 = vsel %vm456, %v4537, %v4539
      %v4558 = vsel %vm456, %v4541, %v4543
      %v4559 = vsel %vm456, %v4545, %v4547
      %v4560 = vsel %vm456, %v4549, %v4551
      %v4561 = vsel %vm456, %v4553, %v4555
      %4568 = vmatpush.bf16.msra.mxu0 0
      %4569 = vmatpush.bf16.msra.mxu0 0
      %4570 = vmatpush.bf16.msra.mxu0 %v4561
      %4571 = vmatpush.bf16.msra.mxu0 %v4560
      %4572 = vmatpush.bf16.msra.mxu0 %v4559
      %4573 = vmatpush.bf16.msra.mxu0 %v4558
      %4574 = vmatpush.bf16.msra.mxu0 %v4557
      %4575 = vmatpush.bf16.msra.mxu0 %v4556
      %4576 = vmatmul.bf16.gmra.mxu0 %v471
      %v4577 = vpop.f32.mrf.mxu0
      %v4578 = vadd.f32 0.0, %v4577
      %v4579 = vpop.f32.mrf.mxu0
      %v4580 = vadd.f32 0.0, %v4579
      %4581 = vmatmul.bf16.gmra.mxu0 %v474
      %v4582 = vpop.f32.mrf.mxu0
      %v4583 = vadd.f32 0.0, %v4582
      %v4584 = vpop.f32.mrf.mxu0
      %v4585 = vadd.f32 0.0, %v4584
      %4586 = vdwg.mxu0
      %4593 = vmatpush.bf16.msra.mxu0 0
      %4594 = vmatpush.bf16.msra.mxu0 0
      %4595 = vmatpush.bf16.msra.mxu0 %v4530
      %4596 = vmatpush.bf16.msra.mxu0 %v4528
      %4597 = vmatpush.bf16.msra.mxu0 %v4526
      %4598 = vmatpush.bf16.msra.mxu0 %v4524
      %4599 = vmatpush.bf16.msra.mxu0 %v4522
      %4600 = vmatpush.bf16.msra.mxu0 %v4520
      %4601 = vmatmul.bf16.gmra.mxu0 %v512
      %v4602 = vpop.f32.mrf.mxu0
      %v4603 = vadd.f32 %v4578, %v4602
      %v4604 = vpop.f32.mrf.mxu0
      %v4605 = vadd.f32 %v4580, %v4604
      %4606 = vmatmul.bf16.gmra.mxu0 %v515
      %v4607 = vpop.f32.mrf.mxu0
      %v4608 = vadd.f32 %v4583, %v4607
      %v4609 = vpop.f32.mrf.mxu0
      %v4610 = vadd.f32 %v4585, %v4609
      %4611 = vdwg.mxu0
      %4612 = vrot.lane.b32.xlu0 %v4520, 126
      %v4613 = vpop.permute.xlu0 %4612
      %4614 = vrot.lane.b32.xlu0 %v4521, 126
      %v4615 = vpop.permute.xlu0 %4614
      %4616 = vrot.lane.b32.xlu0 %v4522, 126
      %v4617 = vpop.permute.xlu0 %4616
      %4618 = vrot.lane.b32.xlu0 %v4523, 126
      %v4619 = vpop.permute.xlu0 %4618
      %4620 = vrot.lane.b32.xlu0 %v4524, 126
      %v4621 = vpop.permute.xlu0 %4620
      %4622 = vrot.lane.b32.xlu0 %v4525, 126
      %v4623 = vpop.permute.xlu0 %4622
      %4624 = vrot.lane.b32.xlu0 %v4526, 126
      %v4625 = vpop.permute.xlu0 %4624
      %4626 = vrot.lane.b32.xlu0 %v4527, 126
      %v4627 = vpop.permute.xlu0 %4626
      %4628 = vrot.lane.b32.xlu0 %v4528, 126
      %v4629 = vpop.permute.xlu0 %4628
      %4630 = vrot.lane.b32.xlu0 %v4529, 126
      %v4631 = vpop.permute.xlu0 %4630
      %4632 = vrot.lane.b32.xlu0 %v4530, 126
      %v4633 = vpop.permute.xlu0 %4632
      %4634 = vrot.lane.b32.xlu0 %v4531, 126
      %v4635 = vpop.permute.xlu0 %4634
      %v4636 = vsel %vm570, %v4613, %v4615
      %v4637 = vsel %vm570, %v4617, %v4619
      %v4638 = vsel %vm570, %v4621, %v4623
      %v4639 = vsel %vm570, %v4625, %v4627
      %v4640 = vsel %vm570, %v4629, %v4631
      %v4641 = vsel %vm570, %v4633, %v4635
      %4648 = vmatpush.bf16.msra.mxu0 0
      %4649 = vmatpush.bf16.msra.mxu0 0
      %4650 = vmatpush.bf16.msra.mxu0 %v4641
      %4651 = vmatpush.bf16.msra.mxu0 %v4640
      %4652 = vmatpush.bf16.msra.mxu0 %v4639
      %4653 = vmatpush.bf16.msra.mxu0 %v4638
      %4654 = vmatpush.bf16.msra.mxu0 %v4637
      %4655 = vmatpush.bf16.msra.mxu0 %v4636
      %4656 = vmatmul.bf16.gmra.mxu0 %v584
      %v4657 = vpop.f32.mrf.mxu0
      %v4658 = vadd.f32 0.0, %v4657
      %v4659 = vpop.f32.mrf.mxu0
      %v4660 = vadd.f32 0.0, %v4659
      %4661 = vmatmul.bf16.gmra.mxu0 %v587
      %v4662 = vpop.f32.mrf.mxu0
      %v4663 = vadd.f32 0.0, %v4662
      %v4664 = vpop.f32.mrf.mxu0
      %v4665 = vadd.f32 0.0, %v4664
      %4666 = vdwg.mxu0
      %v4667 = vadd.f32 %v4603, %v4658
      %v4668 = vadd.f32 %v4605, %v4660
      %v4669 = vadd.f32 %v4608, %v4663
      %v4670 = vadd.f32 %v4610, %v4665
      %v4671 = vadd.f32 %v4667, %v615
      %v4672 = vadd.f32 %v4668, %v620
      %v4673 = vadd.f32 %v4669, %v625
      %v4674 = vadd.f32 %v4670, %v630
      %v4675 = vmax.f32 %v4671, 0.0
      %v4676 = vmax.f32 %v4672, 0.0
      %v4677 = vmax.f32 %v4673, 0.0
      %v4678 = vmax.f32 %v4674, 0.0
      %v4679 = vmul.f32 %v4675, %v262
      %v4680 = vmul.f32 %v4676, %v262
      %v4681 = vmul.f32 %v4677, %v262
      %v4682 = vmul.f32 %v4678, %v262
      %v4683 = vpack.c.bf16 %v4679, %v4679
      %v4684 = vpack.c.bf16 %v4680, %v4680
      %v4685 = vpack.c.bf16 %v4681, %v4681
      %v4686 = vpack.c.bf16 %v4682, %v4682
      %4691 = vrot.lane.b32.xlu0 %v4683, 1
      %v4692 = vpop.permute.xlu0 %4691
      %4693 = vrot.lane.b32.xlu0 %v4684, 1
      %v4694 = vpop.permute.xlu0 %4693
      %4695 = vrot.lane.b32.xlu0 %v4685, 1
      %v4696 = vpop.permute.xlu0 %4695
      %4697 = vrot.lane.b32.xlu0 %v4686, 1
      %v4698 = vpop.permute.xlu0 %4697
      %v4699 = vrot.slane %v4692, 4
      %v4700 = vrot.slane %v4694, 4
      %v4701 = vrot.slane %v4696, 4
      %v4702 = vrot.slane %v4698, 4
      %v4703 = vsel %vm664, %v4699, %v4692
      %v4704 = vsel %vm664, %v4700, %v4694
      %v4705 = vsel %vm664, %v4701, %v4696
      %v4706 = vsel %vm664, %v4702, %v4698
      %s4711 = scalar_lea.vmem [#allocation2], 512
      %4712 = vst.msk [vmem:[%s4711] sm:$0xff] %vm676, %v4703
      %4713 = vst.msk [vmem:[%s4711 + $0x8] sm:$0xff] %vm676, %v4704
      %4714 = vst.msk [vmem:[%s4711 + $0x10] sm:$0xff] %vm676, %v4705
      %4715 = vst.msk [vmem:[%s4711 + $0x18] sm:$0xff] %vm676, %v4706
      %v4716 = vld [vmem:[#allocation2] sm:$0xff]
      %v4717 = vld [vmem:[#allocation2 + $0x8] sm:$0xff]
      %v4718 = vld [vmem:[#allocation2 + $0x10] sm:$0xff]
      %v4719 = vld [vmem:[#allocation2 + $0x18] sm:$0xff]
      %v4720 = vld [vmem:[#allocation2 + $0x20] sm:$0xff]
      %v4721 = vld [vmem:[#allocation2 + $0x28] sm:$0xff]
      %v4722 = vld [vmem:[#allocation2 + $0x30] sm:$0xff]
      %v4723 = vld [vmem:[#allocation2 + $0x38] sm:$0xff]
      %v4724 = vld [vmem:[#allocation2 + $0x40] sm:$0xff]
      %v4725 = vld [vmem:[#allocation2 + $0x48] sm:$0xff]
      %v4726 = vld [vmem:[#allocation2 + $0x50] sm:$0xff]
      %v4727 = vld [vmem:[#allocation2 + $0x58] sm:$0xff]
      %v4732 = vunpack.c.l.b16 %v242
      %v4733 = vunpack.c.l.b16 %v243
      %v4734 = vunpack.c.l.b16 %v244
      %v4735 = vunpack.c.l.b16 %v245
      %v4736 = vpack.c.b16 %v4733, %v4732
      %v4737 = vpack.c.b16 %v4735, %v4734
      %v4750 = vunpack.c.l.b16 %v4716
      %v4751 = vunpack.c.h.b16 %v4716
      %v4752 = vunpack.c.l.b16 %v4717
      %v4753 = vunpack.c.h.b16 %v4717
      %v4754 = vunpack.c.l.b16 %v4718
      %v4755 = vunpack.c.h.b16 %v4718
      %v4756 = vunpack.c.l.b16 %v4719
      %v4757 = vunpack.c.h.b16 %v4719
      %v4758 = vunpack.c.l.b16 %v4720
      %v4759 = vunpack.c.h.b16 %v4720
      %v4760 = vunpack.c.l.b16 %v4721
      %v4761 = vunpack.c.h.b16 %v4721
      %v4762 = vunpack.c.l.b16 %v4722
      %v4763 = vunpack.c.h.b16 %v4722
      %v4764 = vunpack.c.l.b16 %v4723
      %v4765 = vunpack.c.h.b16 %v4723
      %v4766 = vunpack.c.l.b16 %v4724
      %v4767 = vunpack.c.h.b16 %v4724
      %v4768 = vunpack.c.l.b16 %v4725
      %v4769 = vunpack.c.h.b16 %v4725
      %v4770 = vunpack.c.l.b16 %v4726
      %v4771 = vunpack.c.h.b16 %v4726
      %v4772 = vunpack.c.l.b16 %v4727
      %v4773 = vunpack.c.h.b16 %v4727
      %v4774 = vpack.c.b16 %v4752, %v4750
      %v4775 = vpack.c.b16 %v4753, %v4751
      %v4776 = vpack.c.b16 %v4756, %v4754
      %v4777 = vpack.c.b16 %v4757, %v4755
      %v4778 = vpack.c.b16 %v4760, %v4758
      %v4779 = vpack.c.b16 %v4761, %v4759
      %v4780 = vpack.c.b16 %v4764, %v4762
      %v4781 = vpack.c.b16 %v4765, %v4763
      %v4782 = vpack.c.b16 %v4768, %v4766
      %v4783 = vpack.c.b16 %v4769, %v4767
      %v4784 = vpack.c.b16 %v4772, %v4770
      %v4785 = vpack.c.b16 %v4773, %v4771
      %4786 = vrot.lane.b32.xlu0 %v4774, 127
      %v4787 = vpop.permute.xlu0 %4786
      %4788 = vrot.lane.b32.xlu0 %v4775, 127
      %v4789 = vpop.permute.xlu0 %4788
      %4790 = vrot.lane.b32.xlu0 %v4776, 127
      %v4791 = vpop.permute.xlu0 %4790
      %4792 = vrot.lane.b32.xlu0 %v4777, 127
      %v4793 = vpop.permute.xlu0 %4792
      %4794 = vrot.lane.b32.xlu0 %v4778, 127
      %v4795 = vpop.permute.xlu0 %4794
      %4796 = vrot.lane.b32.xlu0 %v4779, 127
      %v4797 = vpop.permute.xlu0 %4796
      %4798 = vrot.lane.b32.xlu0 %v4780, 127
      %v4799 = vpop.permute.xlu0 %4798
      %4800 = vrot.lane.b32.xlu0 %v4781, 127
      %v4801 = vpop.permute.xlu0 %4800
      %4802 = vrot.lane.b32.xlu0 %v4782, 127
      %v4803 = vpop.permute.xlu0 %4802
      %4804 = vrot.lane.b32.xlu0 %v4783, 127
      %v4805 = vpop.permute.xlu0 %4804
      %4806 = vrot.lane.b32.xlu0 %v4784, 127
      %v4807 = vpop.permute.xlu0 %4806
      %4808 = vrot.lane.b32.xlu0 %v4785, 127
      %v4809 = vpop.permute.xlu0 %4808
      %v4810 = vsel %vm456, %v4787, %v4789
      %v4811 = vsel %vm456, %v4791, %v4793
      %v4812 = vsel %vm456, %v4795, %v4797
      %v4813 = vsel %vm456, %v4799, %v4801
      %v4814 = vsel %vm456, %v4803, %v4805
      %v4815 = vsel %vm456, %v4807, %v4809
      %v4823 = vsel %vm469, %v4736, 0
      %v4826 = vsel %vm469, %v4737, 0
      %4828 = vmatpush.bf16.msra.mxu0 0
      %4829 = vmatpush.bf16.msra.mxu0 0
      %4830 = vmatpush.bf16.msra.mxu0 %v4815
      %4831 = vmatpush.bf16.msra.mxu0 %v4814
      %4832 = vmatpush.bf16.msra.mxu0 %v4813
      %4833 = vmatpush.bf16.msra.mxu0 %v4812
      %4834 = vmatpush.bf16.msra.mxu0 %v4811
      %4835 = vmatpush.bf16.msra.mxu0 %v4810
      %4836 = vmatmul.bf16.gmra.mxu0 %v4823
      %v4837 = vpop.f32.mrf.mxu0
      %v4838 = vadd.f32 0.0, %v4837
      %v4839 = vpop.f32.mrf.mxu0
      %v4840 = vadd.f32 0.0, %v4839
      %4841 = vmatmul.bf16.gmra.mxu0 %v4826
      %v4842 = vpop.f32.mrf.mxu0
      %v4843 = vadd.f32 0.0, %v4842
      %v4844 = vpop.f32.mrf.mxu0
      %v4845 = vadd.f32 0.0, %v4844
      %4846 = vdwg.mxu0
      %v4851 = vunpack.c.l.b16 %v238
      %v4852 = vunpack.c.l.b16 %v239
      %v4853 = vunpack.c.l.b16 %v240
      %v4854 = vunpack.c.l.b16 %v241
      %v4855 = vpack.c.b16 %v4852, %v4851
      %v4856 = vpack.c.b16 %v4854, %v4853
      %v4864 = vsel %vm469, %v4855, 0
      %v4867 = vsel %vm469, %v4856, 0
      %4869 = vmatpush.bf16.msra.mxu0 0
      %4870 = vmatpush.bf16.msra.mxu0 0
      %4871 = vmatpush.bf16.msra.mxu0 %v4784
      %4872 = vmatpush.bf16.msra.mxu0 %v4782
      %4873 = vmatpush.bf16.msra.mxu0 %v4780
      %4874 = vmatpush.bf16.msra.mxu0 %v4778
      %4875 = vmatpush.bf16.msra.mxu0 %v4776
      %4876 = vmatpush.bf16.msra.mxu0 %v4774
      %4877 = vmatmul.bf16.gmra.mxu0 %v4864
      %v4878 = vpop.f32.mrf.mxu0
      %v4879 = vadd.f32 %v4838, %v4878
      %v4880 = vpop.f32.mrf.mxu0
      %v4881 = vadd.f32 %v4840, %v4880
      %4882 = vmatmul.bf16.gmra.mxu0 %v4867
      %v4883 = vpop.f32.mrf.mxu0
      %v4884 = vadd.f32 %v4843, %v4883
      %v4885 = vpop.f32.mrf.mxu0
      %v4886 = vadd.f32 %v4845, %v4885
      %4887 = vdwg.mxu0
      %v4892 = vunpack.c.l.b16 %v246
      %v4893 = vunpack.c.l.b16 %v247
      %v4894 = vunpack.c.l.b16 %v248
      %v4895 = vunpack.c.l.b16 %v249
      %v4896 = vpack.c.b16 %v4893, %v4892
      %v4897 = vpack.c.b16 %v4895, %v4894
      %4898 = vrot.lane.b32.xlu0 %v4774, 126
      %v4899 = vpop.permute.xlu0 %4898
      %4900 = vrot.lane.b32.xlu0 %v4775, 126
      %v4901 = vpop.permute.xlu0 %4900
      %4902 = vrot.lane.b32.xlu0 %v4776, 126
      %v4903 = vpop.permute.xlu0 %4902
      %4904 = vrot.lane.b32.xlu0 %v4777, 126
      %v4905 = vpop.permute.xlu0 %4904
      %4906 = vrot.lane.b32.xlu0 %v4778, 126
      %v4907 = vpop.permute.xlu0 %4906
      %4908 = vrot.lane.b32.xlu0 %v4779, 126
      %v4909 = vpop.permute.xlu0 %4908
      %4910 = vrot.lane.b32.xlu0 %v4780, 126
      %v4911 = vpop.permute.xlu0 %4910
      %4912 = vrot.lane.b32.xlu0 %v4781, 126
      %v4913 = vpop.permute.xlu0 %4912
      %4914 = vrot.lane.b32.xlu0 %v4782, 126
      %v4915 = vpop.permute.xlu0 %4914
      %4916 = vrot.lane.b32.xlu0 %v4783, 126
      %v4917 = vpop.permute.xlu0 %4916
      %4918 = vrot.lane.b32.xlu0 %v4784, 126
      %v4919 = vpop.permute.xlu0 %4918
      %4920 = vrot.lane.b32.xlu0 %v4785, 126
      %v4921 = vpop.permute.xlu0 %4920
      %v4922 = vsel %vm570, %v4899, %v4901
      %v4923 = vsel %vm570, %v4903, %v4905
      %v4924 = vsel %vm570, %v4907, %v4909
      %v4925 = vsel %vm570, %v4911, %v4913
      %v4926 = vsel %vm570, %v4915, %v4917
      %v4927 = vsel %vm570, %v4919, %v4921
      %v4935 = vsel %vm469, %v4896, 0
      %v4938 = vsel %vm469, %v4897, 0
      %4940 = vmatpush.bf16.msra.mxu0 0
      %4941 = vmatpush.bf16.msra.mxu0 0
      %4942 = vmatpush.bf16.msra.mxu0 %v4927
      %4943 = vmatpush.bf16.msra.mxu0 %v4926
      %4944 = vmatpush.bf16.msra.mxu0 %v4925
      %4945 = vmatpush.bf16.msra.mxu0 %v4924
      %4946 = vmatpush.bf16.msra.mxu0 %v4923
      %4947 = vmatpush.bf16.msra.mxu0 %v4922
      %4948 = vmatmul.bf16.gmra.mxu0 %v4935
      %v4949 = vpop.f32.mrf.mxu0
      %v4950 = vadd.f32 0.0, %v4949
      %v4951 = vpop.f32.mrf.mxu0
      %v4952 = vadd.f32 0.0, %v4951
      %4953 = vmatmul.bf16.gmra.mxu0 %v4938
      %v4954 = vpop.f32.mrf.mxu0
      %v4955 = vadd.f32 0.0, %v4954
      %v4956 = vpop.f32.mrf.mxu0
      %v4957 = vadd.f32 0.0, %v4956
      %4958 = vdwg.mxu0
      %v4959 = vadd.f32 %v4879, %v4950
      %v4960 = vadd.f32 %v4881, %v4952
      %v4961 = vadd.f32 %v4884, %v4955
      %v4962 = vadd.f32 %v4886, %v4957
      %v4963 = vld [vmem:[%s681] sm:$0xff]
      %v4964 = vld [vmem:[%s681 + $0x8] sm:$0xff]
      %v4965 = vld [vmem:[%s681 + $0x10] sm:$0xff]
      %v4966 = vld [vmem:[%s681 + $0x18] sm:$0xff]
      %v4967 = vld [vmem:[%s681 + $0x20] sm:$0xff]
      %v4968 = vld [vmem:[%s681 + $0x28] sm:$0xff]
      %v4969 = vld [vmem:[%s681 + $0x30] sm:$0xff]
      %v4970 = vld [vmem:[%s681 + $0x38] sm:$0xff]
      %4972 = vset.pattern.permute.xlu0 0
      %4973 = vperm.xlu0 %4972, %v254
      %v4974 = vpop.permute.xlu0 %4973
      %4977 = vset.pattern.permute.xlu0 0
      %4978 = vperm.xlu0 %4977, %v255
      %v4979 = vpop.permute.xlu0 %4978
      %4982 = vset.pattern.permute.xlu0 0
      %4983 = vperm.xlu0 %4982, %v256
      %v4984 = vpop.permute.xlu0 %4983
      %4987 = vset.pattern.permute.xlu0 0
      %4988 = vperm.xlu0 %4987, %v257
      %v4989 = vpop.permute.xlu0 %4988
      %v4991 = vadd.f32 %v4959, %v4974
      %v4992 = vadd.f32 %v4960, %v4979
      %v4993 = vadd.f32 %v4961, %v4984
      %v4994 = vadd.f32 %v4962, %v4989
      %5003 = vrot.lane.b32.xlu0 %v4963, 127
      %v5004 = vpop.permute.xlu0 %5003
      %5005 = vrot.lane.b32.xlu0 %v4964, 127
      %v5006 = vpop.permute.xlu0 %5005
      %5007 = vrot.lane.b32.xlu0 %v4965, 127
      %v5008 = vpop.permute.xlu0 %5007
      %5009 = vrot.lane.b32.xlu0 %v4966, 127
      %v5010 = vpop.permute.xlu0 %5009
      %5011 = vrot.lane.b32.xlu0 %v4967, 127
      %v5012 = vpop.permute.xlu0 %5011
      %5013 = vrot.lane.b32.xlu0 %v4968, 127
      %v5014 = vpop.permute.xlu0 %5013
      %5015 = vrot.lane.b32.xlu0 %v4969, 127
      %v5016 = vpop.permute.xlu0 %5015
      %5017 = vrot.lane.b32.xlu0 %v4970, 127
      %v5018 = vpop.permute.xlu0 %5017
      %vm5019 = vcmask 1039360
      %v5020 = vsel %vm5019, %v5004, %v5006
      %v5021 = vsel %vm5019, %v5008, %v5010
      %v5022 = vsel %vm5019, %v5012, %v5014
      %v5023 = vsel %vm5019, %v5016, %v5018
      %v5028 = vadd.f32 %v4991, %v5020
      %v5029 = vadd.f32 %v4992, %v5021
      %v5030 = vadd.f32 %v4993, %v5022
      %v5031 = vadd.f32 %v4994, %v5023
      %v5032 = vmax.f32 %v5028, 0.0
      %v5033 = vmax.f32 %v5029, 0.0
      %v5034 = vmax.f32 %v5030, 0.0
      %v5035 = vmax.f32 %v5031, 0.0
      %5036 = vst [vmem:[%s224] sm:$0xff] %v5032
      %5037 = vst [vmem:[%s224 + $0x8] sm:$0xff] %v5033
      %5038 = vst [vmem:[%s224 + $0x10] sm:$0xff] %v5034
      %5039 = vst [vmem:[%s224 + $0x18] sm:$0xff] %v5035
      %v5040 = vld [vmem:[%s673] sm:$0xff]
      %v5041 = vld [vmem:[%s673 + $0x8] sm:$0xff]
      %v5042 = vld [vmem:[%s673 + $0x10] sm:$0xff]
      %v5043 = vld [vmem:[%s673 + $0x18] sm:$0xff]
      %v5044 = vld [vmem:[%s673 + $0x20] sm:$0xff]
      %v5045 = vld [vmem:[%s673 + $0x28] sm:$0xff]
      %v5046 = vld [vmem:[%s673 + $0x30] sm:$0xff]
      %v5047 = vld [vmem:[%s673 + $0x38] sm:$0xff]
      %v5048 = vld [vmem:[%s673 + $0x40] sm:$0xff]
      %v5049 = vld [vmem:[%s673 + $0x48] sm:$0xff]
      %v5050 = vld [vmem:[%s673 + $0x50] sm:$0xff]
      %v5051 = vld [vmem:[%s673 + $0x58] sm:$0xff]
      %v5064 = vunpack.c.l.b16 %v5040
      %v5065 = vunpack.c.h.b16 %v5040
      %v5066 = vunpack.c.l.b16 %v5041
      %v5067 = vunpack.c.h.b16 %v5041
      %v5068 = vunpack.c.l.b16 %v5042
      %v5069 = vunpack.c.h.b16 %v5042
      %v5070 = vunpack.c.l.b16 %v5043
      %v5071 = vunpack.c.h.b16 %v5043
      %v5072 = vunpack.c.l.b16 %v5044
      %v5073 = vunpack.c.h.b16 %v5044
      %v5074 = vunpack.c.l.b16 %v5045
      %v5075 = vunpack.c.h.b16 %v5045
      %v5076 = vunpack.c.l.b16 %v5046
      %v5077 = vunpack.c.h.b16 %v5046
      %v5078 = vunpack.c.l.b16 %v5047
      %v5079 = vunpack.c.h.b16 %v5047
      %v5080 = vunpack.c.l.b16 %v5048
      %v5081 = vunpack.c.h.b16 %v5048
      %v5082 = vunpack.c.l.b16 %v5049
      %v5083 = vunpack.c.h.b16 %v5049
      %v5084 = vunpack.c.l.b16 %v5050
      %v5085 = vunpack.c.h.b16 %v5050
      %v5086 = vunpack.c.l.b16 %v5051
      %v5087 = vunpack.c.h.b16 %v5051
      %v5088 = vpack.c.b16 %v5066, %v5064
      %v5089 = vpack.c.b16 %v5067, %v5065
      %v5090 = vpack.c.b16 %v5070, %v5068
      %v5091 = vpack.c.b16 %v5071, %v5069
      %v5092 = vpack.c.b16 %v5074, %v5072
      %v5093 = vpack.c.b16 %v5075, %v5073
      %v5094 = vpack.c.b16 %v5078, %v5076
      %v5095 = vpack.c.b16 %v5079, %v5077
      %v5096 = vpack.c.b16 %v5082, %v5080
      %v5097 = vpack.c.b16 %v5083, %v5081
      %v5098 = vpack.c.b16 %v5086, %v5084
      %v5099 = vpack.c.b16 %v5087, %v5085
      %5100 = vrot.lane.b32.xlu0 %v5088, 127
      %v5101 = vpop.permute.xlu0 %5100
      %5102 = vrot.lane.b32.xlu0 %v5089, 127
      %v5103 = vpop.permute.xlu0 %5102
      %5104 = vrot.lane.b32.xlu0 %v5090, 127
      %v5105 = vpop.permute.xlu0 %5104
      %5106 = vrot.lane.b32.xlu0 %v5091, 127
      %v5107 = vpop.permute.xlu0 %5106
      %5108 = vrot.lane.b32.xlu0 %v5092, 127
      %v5109 = vpop.permute.xlu0 %5108
      %5110 = vrot.lane.b32.xlu0 %v5093, 127
      %v5111 = vpop.permute.xlu0 %5110
      %5112 = vrot.lane.b32.xlu0 %v5094, 127
      %v5113 = vpop.permute.xlu0 %5112
      %5114 = vrot.lane.b32.xlu0 %v5095, 127
      %v5115 = vpop.permute.xlu0 %5114
      %5116 = vrot.lane.b32.xlu0 %v5096, 127
      %v5117 = vpop.permute.xlu0 %5116
      %5118 = vrot.lane.b32.xlu0 %v5097, 127
      %v5119 = vpop.permute.xlu0 %5118
      %5120 = vrot.lane.b32.xlu0 %v5098, 127
      %v5121 = vpop.permute.xlu0 %5120
      %5122 = vrot.lane.b32.xlu0 %v5099, 127
      %v5123 = vpop.permute.xlu0 %5122
      %v5124 = vsel %vm456, %v5101, %v5103
      %v5125 = vsel %vm456, %v5105, %v5107
      %v5126 = vsel %vm456, %v5109, %v5111
      %v5127 = vsel %vm456, %v5113, %v5115
      %v5128 = vsel %vm456, %v5117, %v5119
      %v5129 = vsel %vm456, %v5121, %v5123
      %5136 = vmatpush.bf16.msra.mxu0 0
      %5137 = vmatpush.bf16.msra.mxu0 0
      %5138 = vmatpush.bf16.msra.mxu0 %v5129
      %5139 = vmatpush.bf16.msra.mxu0 %v5128
      %5140 = vmatpush.bf16.msra.mxu0 %v5127
      %5141 = vmatpush.bf16.msra.mxu0 %v5126
      %5142 = vmatpush.bf16.msra.mxu0 %v5125
      %5143 = vmatpush.bf16.msra.mxu0 %v5124
      %5144 = vmatmul.bf16.gmra.mxu0 %v4823
      %v5145 = vpop.f32.mrf.mxu0
      %v5146 = vadd.f32 0.0, %v5145
      %v5147 = vpop.f32.mrf.mxu0
      %v5148 = vadd.f32 0.0, %v5147
      %5149 = vmatmul.bf16.gmra.mxu0 %v4826
      %v5150 = vpop.f32.mrf.mxu0
      %v5151 = vadd.f32 0.0, %v5150
      %v5152 = vpop.f32.mrf.mxu0
      %v5153 = vadd.f32 0.0, %v5152
      %5154 = vdwg.mxu0
      %5161 = vmatpush.bf16.msra.mxu0 0
      %5162 = vmatpush.bf16.msra.mxu0 0
      %5163 = vmatpush.bf16.msra.mxu0 %v5098
      %5164 = vmatpush.bf16.msra.mxu0 %v5096
      %5165 = vmatpush.bf16.msra.mxu0 %v5094
      %5166 = vmatpush.bf16.msra.mxu0 %v5092
      %5167 = vmatpush.bf16.msra.mxu0 %v5090
      %5168 = vmatpush.bf16.msra.mxu0 %v5088
      %5169 = vmatmul.bf16.gmra.mxu0 %v4864
      %v5170 = vpop.f32.mrf.mxu0
      %v5171 = vadd.f32 %v5146, %v5170
      %v5172 = vpop.f32.mrf.mxu0
      %v5173 = vadd.f32 %v5148, %v5172
      %5174 = vmatmul.bf16.gmra.mxu0 %v4867
      %v5175 = vpop.f32.mrf.mxu0
      %v5176 = vadd.f32 %v5151, %v5175
      %v5177 = vpop.f32.mrf.mxu0
      %v5178 = vadd.f32 %v5153, %v5177
      %5179 = vdwg.mxu0
      %5180 = vrot.lane.b32.xlu0 %v5088, 126
      %v5181 = vpop.permute.xlu0 %5180
      %5182 = vrot.lane.b32.xlu0 %v5089, 126
      %v5183 = vpop.permute.xlu0 %5182
      %5184 = vrot.lane.b32.xlu0 %v5090, 126
      %v5185 = vpop.permute.xlu0 %5184
      %5186 = vrot.lane.b32.xlu0 %v5091, 126
      %v5187 = vpop.permute.xlu0 %5186
      %5188 = vrot.lane.b32.xlu0 %v5092, 126
      %v5189 = vpop.permute.xlu0 %5188
      %5190 = vrot.lane.b32.xlu0 %v5093, 126
      %v5191 = vpop.permute.xlu0 %5190
      %5192 = vrot.lane.b32.xlu0 %v5094, 126
      %v5193 = vpop.permute.xlu0 %5192
      %5194 = vrot.lane.b32.xlu0 %v5095, 126
      %v5195 = vpop.permute.xlu0 %5194
      %5196 = vrot.lane.b32.xlu0 %v5096, 126
      %v5197 = vpop.permute.xlu0 %5196
      %5198 = vrot.lane.b32.xlu0 %v5097, 126
      %v5199 = vpop.permute.xlu0 %5198
      %5200 = vrot.lane.b32.xlu0 %v5098, 126
      %v5201 = vpop.permute.xlu0 %5200
      %5202 = vrot.lane.b32.xlu0 %v5099, 126
      %v5203 = vpop.permute.xlu0 %5202
      %v5204 = vsel %vm570, %v5181, %v5183
      %v5205 = vsel %vm570, %v5185, %v5187
      %v5206 = vsel %vm570, %v5189, %v5191
      %v5207 = vsel %vm570, %v5193, %v5195
      %v5208 = vsel %vm570, %v5197, %v5199
      %v5209 = vsel %vm570, %v5201, %v5203
      %5216 = vmatpush.bf16.msra.mxu0 0
      %5217 = vmatpush.bf16.msra.mxu0 0
      %5218 = vmatpush.bf16.msra.mxu0 %v5209
      %5219 = vmatpush.bf16.msra.mxu0 %v5208
      %5220 = vmatpush.bf16.msra.mxu0 %v5207
      %5221 = vmatpush.bf16.msra.mxu0 %v5206
      %5222 = vmatpush.bf16.msra.mxu0 %v5205
      %5223 = vmatpush.bf16.msra.mxu0 %v5204
      %5224 = vmatmul.bf16.gmra.mxu0 %v4935
      %v5225 = vpop.f32.mrf.mxu0
      %v5226 = vadd.f32 0.0, %v5225
      %v5227 = vpop.f32.mrf.mxu0
      %v5228 = vadd.f32 0.0, %v5227
      %5229 = vmatmul.bf16.gmra.mxu0 %v4938
      %v5230 = vpop.f32.mrf.mxu0
      %v5231 = vadd.f32 0.0, %v5230
      %v5232 = vpop.f32.mrf.mxu0
      %v5233 = vadd.f32 0.0, %v5232
      %5234 = vdwg.mxu0
      %v5235 = vadd.f32 %v5171, %v5226
      %v5236 = vadd.f32 %v5173, %v5228
      %v5237 = vadd.f32 %v5176, %v5231
      %v5238 = vadd.f32 %v5178, %v5233
      %v5239 = vld [vmem:[%s950] sm:$0xff]
      %v5240 = vld [vmem:[%s950 + $0x8] sm:$0xff]
      %v5241 = vld [vmem:[%s950 + $0x10] sm:$0xff]
      %v5242 = vld [vmem:[%s950 + $0x18] sm:$0xff]
      %v5243 = vld [vmem:[%s950 + $0x20] sm:$0xff]
      %v5244 = vld [vmem:[%s950 + $0x28] sm:$0xff]
      %v5245 = vld [vmem:[%s950 + $0x30] sm:$0xff]
      %v5246 = vld [vmem:[%s950 + $0x38] sm:$0xff]
      %v5247 = vadd.f32 %v5235, %v4974
      %v5248 = vadd.f32 %v5236, %v4979
      %v5249 = vadd.f32 %v5237, %v4984
      %v5250 = vadd.f32 %v5238, %v4989
      %5259 = vrot.lane.b32.xlu0 %v5239, 127
      %v5260 = vpop.permute.xlu0 %5259
      %5261 = vrot.lane.b32.xlu0 %v5240, 127
      %v5262 = vpop.permute.xlu0 %5261
      %5263 = vrot.lane.b32.xlu0 %v5241, 127
      %v5264 = vpop.permute.xlu0 %5263
      %5265 = vrot.lane.b32.xlu0 %v5242, 127
      %v5266 = vpop.permute.xlu0 %5265
      %5267 = vrot.lane.b32.xlu0 %v5243, 127
      %v5268 = vpop.permute.xlu0 %5267
      %5269 = vrot.lane.b32.xlu0 %v5244, 127
      %v5270 = vpop.permute.xlu0 %5269
      %5271 = vrot.lane.b32.xlu0 %v5245, 127
      %v5272 = vpop.permute.xlu0 %5271
      %5273 = vrot.lane.b32.xlu0 %v5246, 127
      %v5274 = vpop.permute.xlu0 %5273
      %v5275 = vsel %vm5019, %v5260, %v5262
      %v5276 = vsel %vm5019, %v5264, %v5266
      %v5277 = vsel %vm5019, %v5268, %v5270
      %v5278 = vsel %vm5019, %v5272, %v5274
      %v5283 = vadd.f32 %v5247, %v5275
      %v5284 = vadd.f32 %v5248, %v5276
      %v5285 = vadd.f32 %v5249, %v5277
      %v5286 = vadd.f32 %v5250, %v5278
      %v5287 = vmax.f32 %v5283, 0.0
      %v5288 = vmax.f32 %v5284, 0.0
      %v5289 = vmax.f32 %v5285, 0.0
      %v5290 = vmax.f32 %v5286, 0.0
      %s5291 = scalar_lea.vmem %s224, 32
      %5292 = vst [vmem:[%s5291] sm:$0xff] %v5287
      %5293 = vst [vmem:[%s5291 + $0x8] sm:$0xff] %v5288
      %5294 = vst [vmem:[%s5291 + $0x10] sm:$0xff] %v5289
      %5295 = vst [vmem:[%s5291 + $0x18] sm:$0xff] %v5290
      %v5296 = vld [vmem:[%s945] sm:$0xff]
      %v5297 = vld [vmem:[%s945 + $0x8] sm:$0xff]
      %v5298 = vld [vmem:[%s945 + $0x10] sm:$0xff]
      %v5299 = vld [vmem:[%s945 + $0x18] sm:$0xff]
      %v5300 = vld [vmem:[%s945 + $0x20] sm:$0xff]
      %v5301 = vld [vmem:[%s945 + $0x28] sm:$0xff]
      %v5302 = vld [vmem:[%s945 + $0x30] sm:$0xff]
      %v5303 = vld [vmem:[%s945 + $0x38] sm:$0xff]
      %v5304 = vld [vmem:[%s945 + $0x40] sm:$0xff]
      %v5305 = vld [vmem:[%s945 + $0x48] sm:$0xff]
      %v5306 = vld [vmem:[%s945 + $0x50] sm:$0xff]
      %v5307 = vld [vmem:[%s945 + $0x58] sm:$0xff]
      %v5320 = vunpack.c.l.b16 %v5296
      %v5321 = vunpack.c.h.b16 %v5296
      %v5322 = vunpack.c.l.b16 %v5297
      %v5323 = vunpack.c.h.b16 %v5297
      %v5324 = vunpack.c.l.b16 %v5298
      %v5325 = vunpack.c.h.b16 %v5298
      %v5326 = vunpack.c.l.b16 %v5299
      %v5327 = vunpack.c.h.b16 %v5299
      %v5328 = vunpack.c.l.b16 %v5300
      %v5329 = vunpack.c.h.b16 %v5300
      %v5330 = vunpack.c.l.b16 %v5301
      %v5331 = vunpack.c.h.b16 %v5301
      %v5332 = vunpack.c.l.b16 %v5302
      %v5333 = vunpack.c.h.b16 %v5302
      %v5334 = vunpack.c.l.b16 %v5303
      %v5335 = vunpack.c.h.b16 %v5303
      %v5336 = vunpack.c.l.b16 %v5304
      %v5337 = vunpack.c.h.b16 %v5304
      %v5338 = vunpack.c.l.b16 %v5305
      %v5339 = vunpack.c.h.b16 %v5305
      %v5340 = vunpack.c.l.b16 %v5306
      %v5341 = vunpack.c.h.b16 %v5306
      %v5342 = vunpack.c.l.b16 %v5307
      %v5343 = vunpack.c.h.b16 %v5307
      %v5344 = vpack.c.b16 %v5322, %v5320
      %v5345 = vpack.c.b16 %v5323, %v5321
      %v5346 = vpack.c.b16 %v5326, %v5324
      %v5347 = vpack.c.b16 %v5327, %v5325
      %v5348 = vpack.c.b16 %v5330, %v5328
      %v5349 = vpack.c.b16 %v5331, %v5329
      %v5350 = vpack.c.b16 %v5334, %v5332
      %v5351 = vpack.c.b16 %v5335, %v5333
      %v5352 = vpack.c.b16 %v5338, %v5336
      %v5353 = vpack.c.b16 %v5339, %v5337
      %v5354 = vpack.c.b16 %v5342, %v5340
      %v5355 = vpack.c.b16 %v5343, %v5341
      %5356 = vrot.lane.b32.xlu0 %v5344, 127
      %v5357 = vpop.permute.xlu0 %5356
      %5358 = vrot.lane.b32.xlu0 %v5345, 127
      %v5359 = vpop.permute.xlu0 %5358
      %5360 = vrot.lane.b32.xlu0 %v5346, 127
      %v5361 = vpop.permute.xlu0 %5360
      %5362 = vrot.lane.b32.xlu0 %v5347, 127
      %v5363 = vpop.permute.xlu0 %5362
      %5364 = vrot.lane.b32.xlu0 %v5348, 127
      %v5365 = vpop.permute.xlu0 %5364
      %5366 = vrot.lane.b32.xlu0 %v5349, 127
      %v5367 = vpop.permute.xlu0 %5366
      %5368 = vrot.lane.b32.xlu0 %v5350, 127
      %v5369 = vpop.permute.xlu0 %5368
      %5370 = vrot.lane.b32.xlu0 %v5351, 127
      %v5371 = vpop.permute.xlu0 %5370
      %5372 = vrot.lane.b32.xlu0 %v5352, 127
      %v5373 = vpop.permute.xlu0 %5372
      %5374 = vrot.lane.b32.xlu0 %v5353, 127
      %v5375 = vpop.permute.xlu0 %5374
      %5376 = vrot.lane.b32.xlu0 %v5354, 127
      %v5377 = vpop.permute.xlu0 %5376
      %5378 = vrot.lane.b32.xlu0 %v5355, 127
      %v5379 = vpop.permute.xlu0 %5378
      %v5380 = vsel %vm456, %v5357, %v5359
      %v5381 = vsel %vm456, %v5361, %v5363
      %v5382 = vsel %vm456, %v5365, %v5367
      %v5383 = vsel %vm456, %v5369, %v5371
      %v5384 = vsel %vm456, %v5373, %v5375
      %v5385 = vsel %vm456, %v5377, %v5379
      %5392 = vmatpush.bf16.msra.mxu0 0
      %5393 = vmatpush.bf16.msra.mxu0 0
      %5394 = vmatpush.bf16.msra.mxu0 %v5385
      %5395 = vmatpush.bf16.msra.mxu0 %v5384
      %5396 = vmatpush.bf16.msra.mxu0 %v5383
      %5397 = vmatpush.bf16.msra.mxu0 %v5382
      %5398 = vmatpush.bf16.msra.mxu0 %v5381
      %5399 = vmatpush.bf16.msra.mxu0 %v5380
      %5400 = vmatmul.bf16.gmra.mxu0 %v4823
      %v5401 = vpop.f32.mrf.mxu0
      %v5402 = vadd.f32 0.0, %v5401
      %v5403 = vpop.f32.mrf.mxu0
      %v5404 = vadd.f32 0.0, %v5403
      %5405 = vmatmul.bf16.gmra.mxu0 %v4826
      %v5406 = vpop.f32.mrf.mxu0
      %v5407 = vadd.f32 0.0, %v5406
      %v5408 = vpop.f32.mrf.mxu0
      %v5409 = vadd.f32 0.0, %v5408
      %5410 = vdwg.mxu0
      %5417 = vmatpush.bf16.msra.mxu0 0
      %5418 = vmatpush.bf16.msra.mxu0 0
      %5419 = vmatpush.bf16.msra.mxu0 %v5354
      %5420 = vmatpush.bf16.msra.mxu0 %v5352
      %5421 = vmatpush.bf16.msra.mxu0 %v5350
      %5422 = vmatpush.bf16.msra.mxu0 %v5348
      %5423 = vmatpush.bf16.msra.mxu0 %v5346
      %5424 = vmatpush.bf16.msra.mxu0 %v5344
      %5425 = vmatmul.bf16.gmra.mxu0 %v4864
      %v5426 = vpop.f32.mrf.mxu0
      %v5427 = vadd.f32 %v5402, %v5426
      %v5428 = vpop.f32.mrf.mxu0
      %v5429 = vadd.f32 %v5404, %v5428
      %5430 = vmatmul.bf16.gmra.mxu0 %v4867
      %v5431 = vpop.f32.mrf.mxu0
      %v5432 = vadd.f32 %v5407, %v5431
      %v5433 = vpop.f32.mrf.mxu0
      %v5434 = vadd.f32 %v5409, %v5433
      %5435 = vdwg.mxu0
      %5436 = vrot.lane.b32.xlu0 %v5344, 126
      %v5437 = vpop.permute.xlu0 %5436
      %5438 = vrot.lane.b32.xlu0 %v5345, 126
      %v5439 = vpop.permute.xlu0 %5438
      %5440 = vrot.lane.b32.xlu0 %v5346, 126
      %v5441 = vpop.permute.xlu0 %5440
      %5442 = vrot.lane.b32.xlu0 %v5347, 126
      %v5443 = vpop.permute.xlu0 %5442
      %5444 = vrot.lane.b32.xlu0 %v5348, 126
      %v5445 = vpop.permute.xlu0 %5444
      %5446 = vrot.lane.b32.xlu0 %v5349, 126
      %v5447 = vpop.permute.xlu0 %5446
      %5448 = vrot.lane.b32.xlu0 %v5350, 126
      %v5449 = vpop.permute.xlu0 %5448
      %5450 = vrot.lane.b32.xlu0 %v5351, 126
      %v5451 = vpop.permute.xlu0 %5450
      %5452 = vrot.lane.b32.xlu0 %v5352, 126
      %v5453 = vpop.permute.xlu0 %5452
      %5454 = vrot.lane.b32.xlu0 %v5353, 126
      %v5455 = vpop.permute.xlu0 %5454
      %5456 = vrot.lane.b32.xlu0 %v5354, 126
      %v5457 = vpop.permute.xlu0 %5456
      %5458 = vrot.lane.b32.xlu0 %v5355, 126
      %v5459 = vpop.permute.xlu0 %5458
      %v5460 = vsel %vm570, %v5437, %v5439
      %v5461 = vsel %vm570, %v5441, %v5443
      %v5462 = vsel %vm570, %v5445, %v5447
      %v5463 = vsel %vm570, %v5449, %v5451
      %v5464 = vsel %vm570, %v5453, %v5455
      %v5465 = vsel %vm570, %v5457, %v5459
      %5472 = vmatpush.bf16.msra.mxu0 0
      %5473 = vmatpush.bf16.msra.mxu0 0
      %5474 = vmatpush.bf16.msra.mxu0 %v5465
      %5475 = vmatpush.bf16.msra.mxu0 %v5464
      %5476 = vmatpush.bf16.msra.mxu0 %v5463
      %5477 = vmatpush.bf16.msra.mxu0 %v5462
      %5478 = vmatpush.bf16.msra.mxu0 %v5461
      %5479 = vmatpush.bf16.msra.mxu0 %v5460
      %5480 = vmatmul.bf16.gmra.mxu0 %v4935
      %v5481 = vpop.f32.mrf.mxu0
      %v5482 = vadd.f32 0.0, %v5481
      %v5483 = vpop.f32.mrf.mxu0
      %v5484 = vadd.f32 0.0, %v5483
      %5485 = vmatmul.bf16.gmra.mxu0 %v4938
      %v5486 = vpop.f32.mrf.mxu0
      %v5487 = vadd.f32 0.0, %v5486
      %v5488 = vpop.f32.mrf.mxu0
      %v5489 = vadd.f32 0.0, %v5488
      %5490 = vdwg.mxu0
      %v5491 = vadd.f32 %v5427, %v5482
      %v5492 = vadd.f32 %v5429, %v5484
      %v5493 = vadd.f32 %v5432, %v5487
      %v5494 = vadd.f32 %v5434, %v5489
      %v5495 = vld [vmem:[%s1219] sm:$0xff]
      %v5496 = vld [vmem:[%s1219 + $0x8] sm:$0xff]
      %v5497 = vld [vmem:[%s1219 + $0x10] sm:$0xff]
      %v5498 = vld [vmem:[%s1219 + $0x18] sm:$0xff]
      %v5499 = vld [vmem:[%s1219 + $0x20] sm:$0xff]
      %v5500 = vld [vmem:[%s1219 + $0x28] sm:$0xff]
      %v5501 = vld [vmem:[%s1219 + $0x30] sm:$0xff]
      %v5502 = vld [vmem:[%s1219 + $0x38] sm:$0xff]
      %v5503 = vadd.f32 %v5491, %v4974
      %v5504 = vadd.f32 %v5492, %v4979
      %v5505 = vadd.f32 %v5493, %v4984
      %v5506 = vadd.f32 %v5494, %v4989
      %5515 = vrot.lane.b32.xlu0 %v5495, 127
      %v5516 = vpop.permute.xlu0 %5515
      %5517 = vrot.lane.b32.xlu0 %v5496, 127
      %v5518 = vpop.permute.xlu0 %5517
      %5519 = vrot.lane.b32.xlu0 %v5497, 127
      %v5520 = vpop.permute.xlu0 %5519
      %5521 = vrot.lane.b32.xlu0 %v5498, 127
      %v5522 = vpop.permute.xlu0 %5521
      %5523 = vrot.lane.b32.xlu0 %v5499, 127
      %v5524 = vpop.permute.xlu0 %5523
      %5525 = vrot.lane.b32.xlu0 %v5500, 127
      %v5526 = vpop.permute.xlu0 %5525
      %5527 = vrot.lane.b32.xlu0 %v5501, 127
      %v5528 = vpop.permute.xlu0 %5527
      %5529 = vrot.lane.b32.xlu0 %v5502, 127
      %v5530 = vpop.permute.xlu0 %5529
      %v5531 = vsel %vm5019, %v5516, %v5518
      %v5532 = vsel %vm5019, %v5520, %v5522
      %v5533 = vsel %vm5019, %v5524, %v5526
      %v5534 = vsel %vm5019, %v5528, %v5530
      %v5539 = vadd.f32 %v5503, %v5531
      %v5540 = vadd.f32 %v5504, %v5532
      %v5541 = vadd.f32 %v5505, %v5533
      %v5542 = vadd.f32 %v5506, %v5534
      %v5543 = vmax.f32 %v5539, 0.0
      %v5544 = vmax.f32 %v5540, 0.0
      %v5545 = vmax.f32 %v5541, 0.0
      %v5546 = vmax.f32 %v5542, 0.0
      %s5547 = scalar_lea.vmem %s224, 64
      %5548 = vst [vmem:[%s5547] sm:$0xff] %v5543
      %5549 = vst [vmem:[%s5547 + $0x8] sm:$0xff] %v5544
      %5550 = vst [vmem:[%s5547 + $0x10] sm:$0xff] %v5545
      %5551 = vst [vmem:[%s5547 + $0x18] sm:$0xff] %v5546
      %v5552 = vld [vmem:[%s1214] sm:$0xff]
      %v5553 = vld [vmem:[%s1214 + $0x8] sm:$0xff]
      %v5554 = vld [vmem:[%s1214 + $0x10] sm:$0xff]
      %v5555 = vld [vmem:[%s1214 + $0x18] sm:$0xff]
      %v5556 = vld [vmem:[%s1214 + $0x20] sm:$0xff]
      %v5557 = vld [vmem:[%s1214 + $0x28] sm:$0xff]
      %v5558 = vld [vmem:[%s1214 + $0x30] sm:$0xff]
      %v5559 = vld [vmem:[%s1214 + $0x38] sm:$0xff]
      %v5560 = vld [vmem:[%s1214 + $0x40] sm:$0xff]
      %v5561 = vld [vmem:[%s1214 + $0x48] sm:$0xff]
      %v5562 = vld [vmem:[%s1214 + $0x50] sm:$0xff]
      %v5563 = vld [vmem:[%s1214 + $0x58] sm:$0xff]
      %v5576 = vunpack.c.l.b16 %v5552
      %v5577 = vunpack.c.h.b16 %v5552
      %v5578 = vunpack.c.l.b16 %v5553
      %v5579 = vunpack.c.h.b16 %v5553
      %v5580 = vunpack.c.l.b16 %v5554
      %v5581 = vunpack.c.h.b16 %v5554
      %v5582 = vunpack.c.l.b16 %v5555
      %v5583 = vunpack.c.h.b16 %v5555
      %v5584 = vunpack.c.l.b16 %v5556
      %v5585 = vunpack.c.h.b16 %v5556
      %v5586 = vunpack.c.l.b16 %v5557
      %v5587 = vunpack.c.h.b16 %v5557
      %v5588 = vunpack.c.l.b16 %v5558
      %v5589 = vunpack.c.h.b16 %v5558
      %v5590 = vunpack.c.l.b16 %v5559
      %v5591 = vunpack.c.h.b16 %v5559
      %v5592 = vunpack.c.l.b16 %v5560
      %v5593 = vunpack.c.h.b16 %v5560
      %v5594 = vunpack.c.l.b16 %v5561
      %v5595 = vunpack.c.h.b16 %v5561
      %v5596 = vunpack.c.l.b16 %v5562
      %v5597 = vunpack.c.h.b16 %v5562
      %v5598 = vunpack.c.l.b16 %v5563
      %v5599 = vunpack.c.h.b16 %v5563
      %v5600 = vpack.c.b16 %v5578, %v5576
      %v5601 = vpack.c.b16 %v5579, %v5577
      %v5602 = vpack.c.b16 %v5582, %v5580
      %v5603 = vpack.c.b16 %v5583, %v5581
      %v5604 = vpack.c.b16 %v5586, %v5584
      %v5605 = vpack.c.b16 %v5587, %v5585
      %v5606 = vpack.c.b16 %v5590, %v5588
      %v5607 = vpack.c.b16 %v5591, %v5589
      %v5608 = vpack.c.b16 %v5594, %v5592
      %v5609 = vpack.c.b16 %v5595, %v5593
      %v5610 = vpack.c.b16 %v5598, %v5596
      %v5611 = vpack.c.b16 %v5599, %v5597
      %5612 = vrot.lane.b32.xlu0 %v5600, 127
      %v5613 = vpop.permute.xlu0 %5612
      %5614 = vrot.lane.b32.xlu0 %v5601, 127
      %v5615 = vpop.permute.xlu0 %5614
      %5616 = vrot.lane.b32.xlu0 %v5602, 127
      %v5617 = vpop.permute.xlu0 %5616
      %5618 = vrot.lane.b32.xlu0 %v5603, 127
      %v5619 = vpop.permute.xlu0 %5618
      %5620 = vrot.lane.b32.xlu0 %v5604, 127
      %v5621 = vpop.permute.xlu0 %5620
      %5622 = vrot.lane.b32.xlu0 %v5605, 127
      %v5623 = vpop.permute.xlu0 %5622
      %5624 = vrot.lane.b32.xlu0 %v5606, 127
      %v5625 = vpop.permute.xlu0 %5624
      %5626 = vrot.lane.b32.xlu0 %v5607, 127
      %v5627 = vpop.permute.xlu0 %5626
      %5628 = vrot.lane.b32.xlu0 %v5608, 127
      %v5629 = vpop.permute.xlu0 %5628
      %5630 = vrot.lane.b32.xlu0 %v5609, 127
      %v5631 = vpop.permute.xlu0 %5630
      %5632 = vrot.lane.b32.xlu0 %v5610, 127
      %v5633 = vpop.permute.xlu0 %5632
      %5634 = vrot.lane.b32.xlu0 %v5611, 127
      %v5635 = vpop.permute.xlu0 %5634
      %v5636 = vsel %vm456, %v5613, %v5615
      %v5637 = vsel %vm456, %v5617, %v5619
      %v5638 = vsel %vm456, %v5621, %v5623
      %v5639 = vsel %vm456, %v5625, %v5627
      %v5640 = vsel %vm456, %v5629, %v5631
      %v5641 = vsel %vm456, %v5633, %v5635
      %5648 = vmatpush.bf16.msra.mxu0 0
      %5649 = vmatpush.bf16.msra.mxu0 0
      %5650 = vmatpush.bf16.msra.mxu0 %v5641
      %5651 = vmatpush.bf16.msra.mxu0 %v5640
      %5652 = vmatpush.bf16.msra.mxu0 %v5639
      %5653 = vmatpush.bf16.msra.mxu0 %v5638
      %5654 = vmatpush.bf16.msra.mxu0 %v5637
      %5655 = vmatpush.bf16.msra.mxu0 %v5636
      %5656 = vmatmul.bf16.gmra.mxu0 %v4823
      %v5657 = vpop.f32.mrf.mxu0
      %v5658 = vadd.f32 0.0, %v5657
      %v5659 = vpop.f32.mrf.mxu0
      %v5660 = vadd.f32 0.0, %v5659
      %5661 = vmatmul.bf16.gmra.mxu0 %v4826
      %v5662 = vpop.f32.mrf.mxu0
      %v5663 = vadd.f32 0.0, %v5662
      %v5664 = vpop.f32.mrf.mxu0
      %v5665 = vadd.f32 0.0, %v5664
      %5666 = vdwg.mxu0
      %5673 = vmatpush.bf16.msra.mxu0 0
      %5674 = vmatpush.bf16.msra.mxu0 0
      %5675 = vmatpush.bf16.msra.mxu0 %v5610
      %5676 = vmatpush.bf16.msra.mxu0 %v5608
      %5677 = vmatpush.bf16.msra.mxu0 %v5606
      %5678 = vmatpush.bf16.msra.mxu0 %v5604
      %5679 = vmatpush.bf16.msra.mxu0 %v5602
      %5680 = vmatpush.bf16.msra.mxu0 %v5600
      %5681 = vmatmul.bf16.gmra.mxu0 %v4864
      %v5682 = vpop.f32.mrf.mxu0
      %v5683 = vadd.f32 %v5658, %v5682
      %v5684 = vpop.f32.mrf.mxu0
      %v5685 = vadd.f32 %v5660, %v5684
      %5686 = vmatmul.bf16.gmra.mxu0 %v4867
      %v5687 = vpop.f32.mrf.mxu0
      %v5688 = vadd.f32 %v5663, %v5687
      %v5689 = vpop.f32.mrf.mxu0
      %v5690 = vadd.f32 %v5665, %v5689
      %5691 = vdwg.mxu0
      %5692 = vrot.lane.b32.xlu0 %v5600, 126
      %v5693 = vpop.permute.xlu0 %5692
      %5694 = vrot.lane.b32.xlu0 %v5601, 126
      %v5695 = vpop.permute.xlu0 %5694
      %5696 = vrot.lane.b32.xlu0 %v5602, 126
      %v5697 = vpop.permute.xlu0 %5696
      %5698 = vrot.lane.b32.xlu0 %v5603, 126
      %v5699 = vpop.permute.xlu0 %5698
      %5700 = vrot.lane.b32.xlu0 %v5604, 126
      %v5701 = vpop.permute.xlu0 %5700
      %5702 = vrot.lane.b32.xlu0 %v5605, 126
      %v5703 = vpop.permute.xlu0 %5702
      %5704 = vrot.lane.b32.xlu0 %v5606, 126
      %v5705 = vpop.permute.xlu0 %5704
      %5706 = vrot.lane.b32.xlu0 %v5607, 126
      %v5707 = vpop.permute.xlu0 %5706
      %5708 = vrot.lane.b32.xlu0 %v5608, 126
      %v5709 = vpop.permute.xlu0 %5708
      %5710 = vrot.lane.b32.xlu0 %v5609, 126
      %v5711 = vpop.permute.xlu0 %5710
      %5712 = vrot.lane.b32.xlu0 %v5610, 126
      %v5713 = vpop.permute.xlu0 %5712
      %5714 = vrot.lane.b32.xlu0 %v5611, 126
      %v5715 = vpop.permute.xlu0 %5714
      %v5716 = vsel %vm570, %v5693, %v5695
      %v5717 = vsel %vm570, %v5697, %v5699
      %v5718 = vsel %vm570, %v5701, %v5703
      %v5719 = vsel %vm570, %v5705, %v5707
      %v5720 = vsel %vm570, %v5709, %v5711
      %v5721 = vsel %vm570, %v5713, %v5715
      %5728 = vmatpush.bf16.msra.mxu0 0
      %5729 = vmatpush.bf16.msra.mxu0 0
      %5730 = vmatpush.bf16.msra.mxu0 %v5721
      %5731 = vmatpush.bf16.msra.mxu0 %v5720
      %5732 = vmatpush.bf16.msra.mxu0 %v5719
      %5733 = vmatpush.bf16.msra.mxu0 %v5718
      %5734 = vmatpush.bf16.msra.mxu0 %v5717
      %5735 = vmatpush.bf16.msra.mxu0 %v5716
      %5736 = vmatmul.bf16.gmra.mxu0 %v4935
      %v5737 = vpop.f32.mrf.mxu0
      %v5738 = vadd.f32 0.0, %v5737
      %v5739 = vpop.f32.mrf.mxu0
      %v5740 = vadd.f32 0.0, %v5739
      %5741 = vmatmul.bf16.gmra.mxu0 %v4938
      %v5742 = vpop.f32.mrf.mxu0
      %v5743 = vadd.f32 0.0, %v5742
      %v5744 = vpop.f32.mrf.mxu0
      %v5745 = vadd.f32 0.0, %v5744
      %5746 = vdwg.mxu0
      %v5747 = vadd.f32 %v5683, %v5738
      %v5748 = vadd.f32 %v5685, %v5740
      %v5749 = vadd.f32 %v5688, %v5743
      %v5750 = vadd.f32 %v5690, %v5745
      %v5751 = vld [vmem:[%s1488] sm:$0xff]
      %v5752 = vld [vmem:[%s1488 + $0x8] sm:$0xff]
      %v5753 = vld [vmem:[%s1488 + $0x10] sm:$0xff]
      %v5754 = vld [vmem:[%s1488 + $0x18] sm:$0xff]
      %v5755 = vld [vmem:[%s1488 + $0x20] sm:$0xff]
      %v5756 = vld [vmem:[%s1488 + $0x28] sm:$0xff]
      %v5757 = vld [vmem:[%s1488 + $0x30] sm:$0xff]
      %v5758 = vld [vmem:[%s1488 + $0x38] sm:$0xff]
      %v5759 = vadd.f32 %v5747, %v4974
      %v5760 = vadd.f32 %v5748, %v4979
      %v5761 = vadd.f32 %v5749, %v4984
      %v5762 = vadd.f32 %v5750, %v4989
      %5771 = vrot.lane.b32.xlu0 %v5751, 127
      %v5772 = vpop.permute.xlu0 %5771
      %5773 = vrot.lane.b32.xlu0 %v5752, 127
      %v5774 = vpop.permute.xlu0 %5773
      %5775 = vrot.lane.b32.xlu0 %v5753, 127
      %v5776 = vpop.permute.xlu0 %5775
      %5777 = vrot.lane.b32.xlu0 %v5754, 127
      %v5778 = vpop.permute.xlu0 %5777
      %5779 = vrot.lane.b32.xlu0 %v5755, 127
      %v5780 = vpop.permute.xlu0 %5779
      %5781 = vrot.lane.b32.xlu0 %v5756, 127
      %v5782 = vpop.permute.xlu0 %5781
      %5783 = vrot.lane.b32.xlu0 %v5757, 127
      %v5784 = vpop.permute.xlu0 %5783
      %5785 = vrot.lane.b32.xlu0 %v5758, 127
      %v5786 = vpop.permute.xlu0 %5785
      %v5787 = vsel %vm5019, %v5772, %v5774
      %v5788 = vsel %vm5019, %v5776, %v5778
      %v5789 = vsel %vm5019, %v5780, %v5782
      %v5790 = vsel %vm5019, %v5784, %v5786
      %v5795 = vadd.f32 %v5759, %v5787
      %v5796 = vadd.f32 %v5760, %v5788
      %v5797 = vadd.f32 %v5761, %v5789
      %v5798 = vadd.f32 %v5762, %v5790
      %v5799 = vmax.f32 %v5795, 0.0
      %v5800 = vmax.f32 %v5796, 0.0
      %v5801 = vmax.f32 %v5797, 0.0
      %v5802 = vmax.f32 %v5798, 0.0
      %s5803 = scalar_lea.vmem %s224, 96
      %5804 = vst [vmem:[%s5803] sm:$0xff] %v5799
      %5805 = vst [vmem:[%s5803 + $0x8] sm:$0xff] %v5800
      %5806 = vst [vmem:[%s5803 + $0x10] sm:$0xff] %v5801
      %5807 = vst [vmem:[%s5803 + $0x18] sm:$0xff] %v5802
      %v5808 = vld [vmem:[%s1483] sm:$0xff]
      %v5809 = vld [vmem:[%s1483 + $0x8] sm:$0xff]
      %v5810 = vld [vmem:[%s1483 + $0x10] sm:$0xff]
      %v5811 = vld [vmem:[%s1483 + $0x18] sm:$0xff]
      %v5812 = vld [vmem:[%s1483 + $0x20] sm:$0xff]
      %v5813 = vld [vmem:[%s1483 + $0x28] sm:$0xff]
      %v5814 = vld [vmem:[%s1483 + $0x30] sm:$0xff]
      %v5815 = vld [vmem:[%s1483 + $0x38] sm:$0xff]
      %v5816 = vld [vmem:[%s1483 + $0x40] sm:$0xff]
      %v5817 = vld [vmem:[%s1483 + $0x48] sm:$0xff]
      %v5818 = vld [vmem:[%s1483 + $0x50] sm:$0xff]
      %v5819 = vld [vmem:[%s1483 + $0x58] sm:$0xff]
      %v5832 = vunpack.c.l.b16 %v5808
      %v5833 = vunpack.c.h.b16 %v5808
      %v5834 = vunpack.c.l.b16 %v5809
      %v5835 = vunpack.c.h.b16 %v5809
      %v5836 = vunpack.c.l.b16 %v5810
      %v5837 = vunpack.c.h.b16 %v5810
      %v5838 = vunpack.c.l.b16 %v5811
      %v5839 = vunpack.c.h.b16 %v5811
      %v5840 = vunpack.c.l.b16 %v5812
      %v5841 = vunpack.c.h.b16 %v5812
      %v5842 = vunpack.c.l.b16 %v5813
      %v5843 = vunpack.c.h.b16 %v5813
      %v5844 = vunpack.c.l.b16 %v5814
      %v5845 = vunpack.c.h.b16 %v5814
      %v5846 = vunpack.c.l.b16 %v5815
      %v5847 = vunpack.c.h.b16 %v5815
      %v5848 = vunpack.c.l.b16 %v5816
      %v5849 = vunpack.c.h.b16 %v5816
      %v5850 = vunpack.c.l.b16 %v5817
      %v5851 = vunpack.c.h.b16 %v5817
      %v5852 = vunpack.c.l.b16 %v5818
      %v5853 = vunpack.c.h.b16 %v5818
      %v5854 = vunpack.c.l.b16 %v5819
      %v5855 = vunpack.c.h.b16 %v5819
      %v5856 = vpack.c.b16 %v5834, %v5832
      %v5857 = vpack.c.b16 %v5835, %v5833
      %v5858 = vpack.c.b16 %v5838, %v5836
      %v5859 = vpack.c.b16 %v5839, %v5837
      %v5860 = vpack.c.b16 %v5842, %v5840
      %v5861 = vpack.c.b16 %v5843, %v5841
      %v5862 = vpack.c.b16 %v5846, %v5844
      %v5863 = vpack.c.b16 %v5847, %v5845
      %v5864 = vpack.c.b16 %v5850, %v5848
      %v5865 = vpack.c.b16 %v5851, %v5849
      %v5866 = vpack.c.b16 %v5854, %v5852
      %v5867 = vpack.c.b16 %v5855, %v5853
      %5868 = vrot.lane.b32.xlu0 %v5856, 127
      %v5869 = vpop.permute.xlu0 %5868
      %5870 = vrot.lane.b32.xlu0 %v5857, 127
      %v5871 = vpop.permute.xlu0 %5870
      %5872 = vrot.lane.b32.xlu0 %v5858, 127
      %v5873 = vpop.permute.xlu0 %5872
      %5874 = vrot.lane.b32.xlu0 %v5859, 127
      %v5875 = vpop.permute.xlu0 %5874
      %5876 = vrot.lane.b32.xlu0 %v5860, 127
      %v5877 = vpop.permute.xlu0 %5876
      %5878 = vrot.lane.b32.xlu0 %v5861, 127
      %v5879 = vpop.permute.xlu0 %5878
      %5880 = vrot.lane.b32.xlu0 %v5862, 127
      %v5881 = vpop.permute.xlu0 %5880
      %5882 = vrot.lane.b32.xlu0 %v5863, 127
      %v5883 = vpop.permute.xlu0 %5882
      %5884 = vrot.lane.b32.xlu0 %v5864, 127
      %v5885 = vpop.permute.xlu0 %5884
      %5886 = vrot.lane.b32.xlu0 %v5865, 127
      %v5887 = vpop.permute.xlu0 %5886
      %5888 = vrot.lane.b32.xlu0 %v5866, 127
      %v5889 = vpop.permute.xlu0 %5888
      %5890 = vrot.lane.b32.xlu0 %v5867, 127
      %v5891 = vpop.permute.xlu0 %5890
      %v5892 = vsel %vm456, %v5869, %v5871
      %v5893 = vsel %vm456, %v5873, %v5875
      %v5894 = vsel %vm456, %v5877, %v5879
      %v5895 = vsel %vm456, %v5881, %v5883
      %v5896 = vsel %vm456, %v5885, %v5887
      %v5897 = vsel %vm456, %v5889, %v5891
      %5904 = vmatpush.bf16.msra.mxu0 0
      %5905 = vmatpush.bf16.msra.mxu0 0
      %5906 = vmatpush.bf16.msra.mxu0 %v5897
      %5907 = vmatpush.bf16.msra.mxu0 %v5896
      %5908 = vmatpush.bf16.msra.mxu0 %v5895
      %5909 = vmatpush.bf16.msra.mxu0 %v5894
      %5910 = vmatpush.bf16.msra.mxu0 %v5893
      %5911 = vmatpush.bf16.msra.mxu0 %v5892
      %5912 = vmatmul.bf16.gmra.mxu0 %v4823
      %v5913 = vpop.f32.mrf.mxu0
      %v5914 = vadd.f32 0.0, %v5913
      %v5915 = vpop.f32.mrf.mxu0
      %v5916 = vadd.f32 0.0, %v5915
      %5917 = vmatmul.bf16.gmra.mxu0 %v4826
      %v5918 = vpop.f32.mrf.mxu0
      %v5919 = vadd.f32 0.0, %v5918
      %v5920 = vpop.f32.mrf.mxu0
      %v5921 = vadd.f32 0.0, %v5920
      %5922 = vdwg.mxu0
      %5929 = vmatpush.bf16.msra.mxu0 0
      %5930 = vmatpush.bf16.msra.mxu0 0
      %5931 = vmatpush.bf16.msra.mxu0 %v5866
      %5932 = vmatpush.bf16.msra.mxu0 %v5864
      %5933 = vmatpush.bf16.msra.mxu0 %v5862
      %5934 = vmatpush.bf16.msra.mxu0 %v5860
      %5935 = vmatpush.bf16.msra.mxu0 %v5858
      %5936 = vmatpush.bf16.msra.mxu0 %v5856
      %5937 = vmatmul.bf16.gmra.mxu0 %v4864
      %v5938 = vpop.f32.mrf.mxu0
      %v5939 = vadd.f32 %v5914, %v5938
      %v5940 = vpop.f32.mrf.mxu0
      %v5941 = vadd.f32 %v5916, %v5940
      %5942 = vmatmul.bf16.gmra.mxu0 %v4867
      %v5943 = vpop.f32.mrf.mxu0
      %v5944 = vadd.f32 %v5919, %v5943
      %v5945 = vpop.f32.mrf.mxu0
      %v5946 = vadd.f32 %v5921, %v5945
      %5947 = vdwg.mxu0
      %5948 = vrot.lane.b32.xlu0 %v5856, 126
      %v5949 = vpop.permute.xlu0 %5948
      %5950 = vrot.lane.b32.xlu0 %v5857, 126
      %v5951 = vpop.permute.xlu0 %5950
      %5952 = vrot.lane.b32.xlu0 %v5858, 126
      %v5953 = vpop.permute.xlu0 %5952
      %5954 = vrot.lane.b32.xlu0 %v5859, 126
      %v5955 = vpop.permute.xlu0 %5954
      %5956 = vrot.lane.b32.xlu0 %v5860, 126
      %v5957 = vpop.permute.xlu0 %5956
      %5958 = vrot.lane.b32.xlu0 %v5861, 126
      %v5959 = vpop.permute.xlu0 %5958
      %5960 = vrot.lane.b32.xlu0 %v5862, 126
      %v5961 = vpop.permute.xlu0 %5960
      %5962 = vrot.lane.b32.xlu0 %v5863, 126
      %v5963 = vpop.permute.xlu0 %5962
      %5964 = vrot.lane.b32.xlu0 %v5864, 126
      %v5965 = vpop.permute.xlu0 %5964
      %5966 = vrot.lane.b32.xlu0 %v5865, 126
      %v5967 = vpop.permute.xlu0 %5966
      %5968 = vrot.lane.b32.xlu0 %v5866, 126
      %v5969 = vpop.permute.xlu0 %5968
      %5970 = vrot.lane.b32.xlu0 %v5867, 126
      %v5971 = vpop.permute.xlu0 %5970
      %v5972 = vsel %vm570, %v5949, %v5951
      %v5973 = vsel %vm570, %v5953, %v5955
      %v5974 = vsel %vm570, %v5957, %v5959
      %v5975 = vsel %vm570, %v5961, %v5963
      %v5976 = vsel %vm570, %v5965, %v5967
      %v5977 = vsel %vm570, %v5969, %v5971
      %5984 = vmatpush.bf16.msra.mxu0 0
      %5985 = vmatpush.bf16.msra.mxu0 0
      %5986 = vmatpush.bf16.msra.mxu0 %v5977
      %5987 = vmatpush.bf16.msra.mxu0 %v5976
      %5988 = vmatpush.bf16.msra.mxu0 %v5975
      %5989 = vmatpush.bf16.msra.mxu0 %v5974
      %5990 = vmatpush.bf16.msra.mxu0 %v5973
      %5991 = vmatpush.bf16.msra.mxu0 %v5972
      %5992 = vmatmul.bf16.gmra.mxu0 %v4935
      %v5993 = vpop.f32.mrf.mxu0
      %v5994 = vadd.f32 0.0, %v5993
      %v5995 = vpop.f32.mrf.mxu0
      %v5996 = vadd.f32 0.0, %v5995
      %5997 = vmatmul.bf16.gmra.mxu0 %v4938
      %v5998 = vpop.f32.mrf.mxu0
      %v5999 = vadd.f32 0.0, %v5998
      %v6000 = vpop.f32.mrf.mxu0
      %v6001 = vadd.f32 0.0, %v6000
      %6002 = vdwg.mxu0
      %v6003 = vadd.f32 %v5939, %v5994
      %v6004 = vadd.f32 %v5941, %v5996
      %v6005 = vadd.f32 %v5944, %v5999
      %v6006 = vadd.f32 %v5946, %v6001
      %v6007 = vld [vmem:[%s1757] sm:$0xff]
      %v6008 = vld [vmem:[%s1757 + $0x8] sm:$0xff]
      %v6009 = vld [vmem:[%s1757 + $0x10] sm:$0xff]
      %v6010 = vld [vmem:[%s1757 + $0x18] sm:$0xff]
      %v6011 = vld [vmem:[%s1757 + $0x20] sm:$0xff]
      %v6012 = vld [vmem:[%s1757 + $0x28] sm:$0xff]
      %v6013 = vld [vmem:[%s1757 + $0x30] sm:$0xff]
      %v6014 = vld [vmem:[%s1757 + $0x38] sm:$0xff]
      %v6015 = vadd.f32 %v6003, %v4974
      %v6016 = vadd.f32 %v6004, %v4979
      %v6017 = vadd.f32 %v6005, %v4984
      %v6018 = vadd.f32 %v6006, %v4989
      %6027 = vrot.lane.b32.xlu0 %v6007, 127
      %v6028 = vpop.permute.xlu0 %6027
      %6029 = vrot.lane.b32.xlu0 %v6008, 127
      %v6030 = vpop.permute.xlu0 %6029
      %6031 = vrot.lane.b32.xlu0 %v6009, 127
      %v6032 = vpop.permute.xlu0 %6031
      %6033 = vrot.lane.b32.xlu0 %v6010, 127
      %v6034 = vpop.permute.xlu0 %6033
      %6035 = vrot.lane.b32.xlu0 %v6011, 127
      %v6036 = vpop.permute.xlu0 %6035
      %6037 = vrot.lane.b32.xlu0 %v6012, 127
      %v6038 = vpop.permute.xlu0 %6037
      %6039 = vrot.lane.b32.xlu0 %v6013, 127
      %v6040 = vpop.permute.xlu0 %6039
      %6041 = vrot.lane.b32.xlu0 %v6014, 127
      %v6042 = vpop.permute.xlu0 %6041
      %v6043 = vsel %vm5019, %v6028, %v6030
      %v6044 = vsel %vm5019, %v6032, %v6034
      %v6045 = vsel %vm5019, %v6036, %v6038
      %v6046 = vsel %vm5019, %v6040, %v6042
      %v6051 = vadd.f32 %v6015, %v6043
      %v6052 = vadd.f32 %v6016, %v6044
      %v6053 = vadd.f32 %v6017, %v6045
      %v6054 = vadd.f32 %v6018, %v6046
      %v6055 = vmax.f32 %v6051, 0.0
      %v6056 = vmax.f32 %v6052, 0.0
      %v6057 = vmax.f32 %v6053, 0.0
      %v6058 = vmax.f32 %v6054, 0.0
      %s6059 = scalar_lea.vmem %s224, 128
      %6060 = vst [vmem:[%s6059] sm:$0xff] %v6055
      %6061 = vst [vmem:[%s6059 + $0x8] sm:$0xff] %v6056
      %6062 = vst [vmem:[%s6059 + $0x10] sm:$0xff] %v6057
      %6063 = vst [vmem:[%s6059 + $0x18] sm:$0xff] %v6058
      %v6064 = vld [vmem:[%s1752] sm:$0xff]
      %v6065 = vld [vmem:[%s1752 + $0x8] sm:$0xff]
      %v6066 = vld [vmem:[%s1752 + $0x10] sm:$0xff]
      %v6067 = vld [vmem:[%s1752 + $0x18] sm:$0xff]
      %v6068 = vld [vmem:[%s1752 + $0x20] sm:$0xff]
      %v6069 = vld [vmem:[%s1752 + $0x28] sm:$0xff]
      %v6070 = vld [vmem:[%s1752 + $0x30] sm:$0xff]
      %v6071 = vld [vmem:[%s1752 + $0x38] sm:$0xff]
      %v6072 = vld [vmem:[%s1752 + $0x40] sm:$0xff]
      %v6073 = vld [vmem:[%s1752 + $0x48] sm:$0xff]
      %v6074 = vld [vmem:[%s1752 + $0x50] sm:$0xff]
      %v6075 = vld [vmem:[%s1752 + $0x58] sm:$0xff]
      %v6088 = vunpack.c.l.b16 %v6064
      %v6089 = vunpack.c.h.b16 %v6064
      %v6090 = vunpack.c.l.b16 %v6065
      %v6091 = vunpack.c.h.b16 %v6065
      %v6092 = vunpack.c.l.b16 %v6066
      %v6093 = vunpack.c.h.b16 %v6066
      %v6094 = vunpack.c.l.b16 %v6067
      %v6095 = vunpack.c.h.b16 %v6067
      %v6096 = vunpack.c.l.b16 %v6068
      %v6097 = vunpack.c.h.b16 %v6068
      %v6098 = vunpack.c.l.b16 %v6069
      %v6099 = vunpack.c.h.b16 %v6069
      %v6100 = vunpack.c.l.b16 %v6070
      %v6101 = vunpack.c.h.b16 %v6070
      %v6102 = vunpack.c.l.b16 %v6071
      %v6103 = vunpack.c.h.b16 %v6071
      %v6104 = vunpack.c.l.b16 %v6072
      %v6105 = vunpack.c.h.b16 %v6072
      %v6106 = vunpack.c.l.b16 %v6073
      %v6107 = vunpack.c.h.b16 %v6073
      %v6108 = vunpack.c.l.b16 %v6074
      %v6109 = vunpack.c.h.b16 %v6074
      %v6110 = vunpack.c.l.b16 %v6075
      %v6111 = vunpack.c.h.b16 %v6075
      %v6112 = vpack.c.b16 %v6090, %v6088
      %v6113 = vpack.c.b16 %v6091, %v6089
      %v6114 = vpack.c.b16 %v6094, %v6092
      %v6115 = vpack.c.b16 %v6095, %v6093
      %v6116 = vpack.c.b16 %v6098, %v6096
      %v6117 = vpack.c.b16 %v6099, %v6097
      %v6118 = vpack.c.b16 %v6102, %v6100
      %v6119 = vpack.c.b16 %v6103, %v6101
      %v6120 = vpack.c.b16 %v6106, %v6104
      %v6121 = vpack.c.b16 %v6107, %v6105
      %v6122 = vpack.c.b16 %v6110, %v6108
      %v6123 = vpack.c.b16 %v6111, %v6109
      %6124 = vrot.lane.b32.xlu0 %v6112, 127
      %v6125 = vpop.permute.xlu0 %6124
      %6126 = vrot.lane.b32.xlu0 %v6113, 127
      %v6127 = vpop.permute.xlu0 %6126
      %6128 = vrot.lane.b32.xlu0 %v6114, 127
      %v6129 = vpop.permute.xlu0 %6128
      %6130 = vrot.lane.b32.xlu0 %v6115, 127
      %v6131 = vpop.permute.xlu0 %6130
      %6132 = vrot.lane.b32.xlu0 %v6116, 127
      %v6133 = vpop.permute.xlu0 %6132
      %6134 = vrot.lane.b32.xlu0 %v6117, 127
      %v6135 = vpop.permute.xlu0 %6134
      %6136 = vrot.lane.b32.xlu0 %v6118, 127
      %v6137 = vpop.permute.xlu0 %6136
      %6138 = vrot.lane.b32.xlu0 %v6119, 127
      %v6139 = vpop.permute.xlu0 %6138
      %6140 = vrot.lane.b32.xlu0 %v6120, 127
      %v6141 = vpop.permute.xlu0 %6140
      %6142 = vrot.lane.b32.xlu0 %v6121, 127
      %v6143 = vpop.permute.xlu0 %6142
      %6144 = vrot.lane.b32.xlu0 %v6122, 127
      %v6145 = vpop.permute.xlu0 %6144
      %6146 = vrot.lane.b32.xlu0 %v6123, 127
      %v6147 = vpop.permute.xlu0 %6146
      %v6148 = vsel %vm456, %v6125, %v6127
      %v6149 = vsel %vm456, %v6129, %v6131
      %v6150 = vsel %vm456, %v6133, %v6135
      %v6151 = vsel %vm456, %v6137, %v6139
      %v6152 = vsel %vm456, %v6141, %v6143
      %v6153 = vsel %vm456, %v6145, %v6147
      %6160 = vmatpush.bf16.msra.mxu0 0
      %6161 = vmatpush.bf16.msra.mxu0 0
      %6162 = vmatpush.bf16.msra.mxu0 %v6153
      %6163 = vmatpush.bf16.msra.mxu0 %v6152
      %6164 = vmatpush.bf16.msra.mxu0 %v6151
      %6165 = vmatpush.bf16.msra.mxu0 %v6150
      %6166 = vmatpush.bf16.msra.mxu0 %v6149
      %6167 = vmatpush.bf16.msra.mxu0 %v6148
      %6168 = vmatmul.bf16.gmra.mxu0 %v4823
      %v6169 = vpop.f32.mrf.mxu0
      %v6170 = vadd.f32 0.0, %v6169
      %v6171 = vpop.f32.mrf.mxu0
      %v6172 = vadd.f32 0.0, %v6171
      %6173 = vmatmul.bf16.gmra.mxu0 %v4826
      %v6174 = vpop.f32.mrf.mxu0
      %v6175 = vadd.f32 0.0, %v6174
      %v6176 = vpop.f32.mrf.mxu0
      %v6177 = vadd.f32 0.0, %v6176
      %6178 = vdwg.mxu0
      %6185 = vmatpush.bf16.msra.mxu0 0
      %6186 = vmatpush.bf16.msra.mxu0 0
      %6187 = vmatpush.bf16.msra.mxu0 %v6122
      %6188 = vmatpush.bf16.msra.mxu0 %v6120
      %6189 = vmatpush.bf16.msra.mxu0 %v6118
      %6190 = vmatpush.bf16.msra.mxu0 %v6116
      %6191 = vmatpush.bf16.msra.mxu0 %v6114
      %6192 = vmatpush.bf16.msra.mxu0 %v6112
      %6193 = vmatmul.bf16.gmra.mxu0 %v4864
      %v6194 = vpop.f32.mrf.mxu0
      %v6195 = vadd.f32 %v6170, %v6194
      %v6196 = vpop.f32.mrf.mxu0
      %v6197 = vadd.f32 %v6172, %v6196
      %6198 = vmatmul.bf16.gmra.mxu0 %v4867
      %v6199 = vpop.f32.mrf.mxu0
      %v6200 = vadd.f32 %v6175, %v6199
      %v6201 = vpop.f32.mrf.mxu0
      %v6202 = vadd.f32 %v6177, %v6201
      %6203 = vdwg.mxu0
      %6204 = vrot.lane.b32.xlu0 %v6112, 126
      %v6205 = vpop.permute.xlu0 %6204
      %6206 = vrot.lane.b32.xlu0 %v6113, 126
      %v6207 = vpop.permute.xlu0 %6206
      %6208 = vrot.lane.b32.xlu0 %v6114, 126
      %v6209 = vpop.permute.xlu0 %6208
      %6210 = vrot.lane.b32.xlu0 %v6115, 126
      %v6211 = vpop.permute.xlu0 %6210
      %6212 = vrot.lane.b32.xlu0 %v6116, 126
      %v6213 = vpop.permute.xlu0 %6212
      %6214 = vrot.lane.b32.xlu0 %v6117, 126
      %v6215 = vpop.permute.xlu0 %6214
      %6216 = vrot.lane.b32.xlu0 %v6118, 126
      %v6217 = vpop.permute.xlu0 %6216
      %6218 = vrot.lane.b32.xlu0 %v6119, 126
      %v6219 = vpop.permute.xlu0 %6218
      %6220 = vrot.lane.b32.xlu0 %v6120, 126
      %v6221 = vpop.permute.xlu0 %6220
      %6222 = vrot.lane.b32.xlu0 %v6121, 126
      %v6223 = vpop.permute.xlu0 %6222
      %6224 = vrot.lane.b32.xlu0 %v6122, 126
      %v6225 = vpop.permute.xlu0 %6224
      %6226 = vrot.lane.b32.xlu0 %v6123, 126
      %v6227 = vpop.permute.xlu0 %6226
      %v6228 = vsel %vm570, %v6205, %v6207
      %v6229 = vsel %vm570, %v6209, %v6211
      %v6230 = vsel %vm570, %v6213, %v6215
      %v6231 = vsel %vm570, %v6217, %v6219
      %v6232 = vsel %vm570, %v6221, %v6223
      %v6233 = vsel %vm570, %v6225, %v6227
      %6240 = vmatpush.bf16.msra.mxu0 0
      %6241 = vmatpush.bf16.msra.mxu0 0
      %6242 = vmatpush.bf16.msra.mxu0 %v6233
      %6243 = vmatpush.bf16.msra.mxu0 %v6232
      %6244 = vmatpush.bf16.msra.mxu0 %v6231
      %6245 = vmatpush.bf16.msra.mxu0 %v6230
      %6246 = vmatpush.bf16.msra.mxu0 %v6229
      %6247 = vmatpush.bf16.msra.mxu0 %v6228
      %6248 = vmatmul.bf16.gmra.mxu0 %v4935
      %v6249 = vpop.f32.mrf.mxu0
      %v6250 = vadd.f32 0.0, %v6249
      %v6251 = vpop.f32.mrf.mxu0
      %v6252 = vadd.f32 0.0, %v6251
      %6253 = vmatmul.bf16.gmra.mxu0 %v4938
      %v6254 = vpop.f32.mrf.mxu0
      %v6255 = vadd.f32 0.0, %v6254
      %v6256 = vpop.f32.mrf.mxu0
      %v6257 = vadd.f32 0.0, %v6256
      %6258 = vdwg.mxu0
      %v6259 = vadd.f32 %v6195, %v6250
      %v6260 = vadd.f32 %v6197, %v6252
      %v6261 = vadd.f32 %v6200, %v6255
      %v6262 = vadd.f32 %v6202, %v6257
      %v6263 = vld [vmem:[%s2026] sm:$0xff]
      %v6264 = vld [vmem:[%s2026 + $0x8] sm:$0xff]
      %v6265 = vld [vmem:[%s2026 + $0x10] sm:$0xff]
      %v6266 = vld [vmem:[%s2026 + $0x18] sm:$0xff]
      %v6267 = vld [vmem:[%s2026 + $0x20] sm:$0xff]
      %v6268 = vld [vmem:[%s2026 + $0x28] sm:$0xff]
      %v6269 = vld [vmem:[%s2026 + $0x30] sm:$0xff]
      %v6270 = vld [vmem:[%s2026 + $0x38] sm:$0xff]
      %v6271 = vadd.f32 %v6259, %v4974
      %v6272 = vadd.f32 %v6260, %v4979
      %v6273 = vadd.f32 %v6261, %v4984
      %v6274 = vadd.f32 %v6262, %v4989
      %6283 = vrot.lane.b32.xlu0 %v6263, 127
      %v6284 = vpop.permute.xlu0 %6283
      %6285 = vrot.lane.b32.xlu0 %v6264, 127
      %v6286 = vpop.permute.xlu0 %6285
      %6287 = vrot.lane.b32.xlu0 %v6265, 127
      %v6288 = vpop.permute.xlu0 %6287
      %6289 = vrot.lane.b32.xlu0 %v6266, 127
      %v6290 = vpop.permute.xlu0 %6289
      %6291 = vrot.lane.b32.xlu0 %v6267, 127
      %v6292 = vpop.permute.xlu0 %6291
      %6293 = vrot.lane.b32.xlu0 %v6268, 127
      %v6294 = vpop.permute.xlu0 %6293
      %6295 = vrot.lane.b32.xlu0 %v6269, 127
      %v6296 = vpop.permute.xlu0 %6295
      %6297 = vrot.lane.b32.xlu0 %v6270, 127
      %v6298 = vpop.permute.xlu0 %6297
      %v6299 = vsel %vm5019, %v6284, %v6286
      %v6300 = vsel %vm5019, %v6288, %v6290
      %v6301 = vsel %vm5019, %v6292, %v6294
      %v6302 = vsel %vm5019, %v6296, %v6298
      %v6307 = vadd.f32 %v6271, %v6299
      %v6308 = vadd.f32 %v6272, %v6300
      %v6309 = vadd.f32 %v6273, %v6301
      %v6310 = vadd.f32 %v6274, %v6302
      %v6311 = vmax.f32 %v6307, 0.0
      %v6312 = vmax.f32 %v6308, 0.0
      %v6313 = vmax.f32 %v6309, 0.0
      %v6314 = vmax.f32 %v6310, 0.0
      %s6315 = scalar_lea.vmem %s224, 160
      %6316 = vst [vmem:[%s6315] sm:$0xff] %v6311
      %6317 = vst [vmem:[%s6315 + $0x8] sm:$0xff] %v6312
      %6318 = vst [vmem:[%s6315 + $0x10] sm:$0xff] %v6313
      %6319 = vst [vmem:[%s6315 + $0x18] sm:$0xff] %v6314
      %v6320 = vld [vmem:[%s2021] sm:$0xff]
      %v6321 = vld [vmem:[%s2021 + $0x8] sm:$0xff]
      %v6322 = vld [vmem:[%s2021 + $0x10] sm:$0xff]
      %v6323 = vld [vmem:[%s2021 + $0x18] sm:$0xff]
      %v6324 = vld [vmem:[%s2021 + $0x20] sm:$0xff]
      %v6325 = vld [vmem:[%s2021 + $0x28] sm:$0xff]
      %v6326 = vld [vmem:[%s2021 + $0x30] sm:$0xff]
      %v6327 = vld [vmem:[%s2021 + $0x38] sm:$0xff]
      %v6328 = vld [vmem:[%s2021 + $0x40] sm:$0xff]
      %v6329 = vld [vmem:[%s2021 + $0x48] sm:$0xff]
      %v6330 = vld [vmem:[%s2021 + $0x50] sm:$0xff]
      %v6331 = vld [vmem:[%s2021 + $0x58] sm:$0xff]
      %v6344 = vunpack.c.l.b16 %v6320
      %v6345 = vunpack.c.h.b16 %v6320
      %v6346 = vunpack.c.l.b16 %v6321
      %v6347 = vunpack.c.h.b16 %v6321
      %v6348 = vunpack.c.l.b16 %v6322
      %v6349 = vunpack.c.h.b16 %v6322
      %v6350 = vunpack.c.l.b16 %v6323
      %v6351 = vunpack.c.h.b16 %v6323
      %v6352 = vunpack.c.l.b16 %v6324
      %v6353 = vunpack.c.h.b16 %v6324
      %v6354 = vunpack.c.l.b16 %v6325
      %v6355 = vunpack.c.h.b16 %v6325
      %v6356 = vunpack.c.l.b16 %v6326
      %v6357 = vunpack.c.h.b16 %v6326
      %v6358 = vunpack.c.l.b16 %v6327
      %v6359 = vunpack.c.h.b16 %v6327
      %v6360 = vunpack.c.l.b16 %v6328
      %v6361 = vunpack.c.h.b16 %v6328
      %v6362 = vunpack.c.l.b16 %v6329
      %v6363 = vunpack.c.h.b16 %v6329
      %v6364 = vunpack.c.l.b16 %v6330
      %v6365 = vunpack.c.h.b16 %v6330
      %v6366 = vunpack.c.l.b16 %v6331
      %v6367 = vunpack.c.h.b16 %v6331
      %v6368 = vpack.c.b16 %v6346, %v6344
      %v6369 = vpack.c.b16 %v6347, %v6345
      %v6370 = vpack.c.b16 %v6350, %v6348
      %v6371 = vpack.c.b16 %v6351, %v6349
      %v6372 = vpack.c.b16 %v6354, %v6352
      %v6373 = vpack.c.b16 %v6355, %v6353
      %v6374 = vpack.c.b16 %v6358, %v6356
      %v6375 = vpack.c.b16 %v6359, %v6357
      %v6376 = vpack.c.b16 %v6362, %v6360
      %v6377 = vpack.c.b16 %v6363, %v6361
      %v6378 = vpack.c.b16 %v6366, %v6364
      %v6379 = vpack.c.b16 %v6367, %v6365
      %6380 = vrot.lane.b32.xlu0 %v6368, 127
      %v6381 = vpop.permute.xlu0 %6380
      %6382 = vrot.lane.b32.xlu0 %v6369, 127
      %v6383 = vpop.permute.xlu0 %6382
      %6384 = vrot.lane.b32.xlu0 %v6370, 127
      %v6385 = vpop.permute.xlu0 %6384
      %6386 = vrot.lane.b32.xlu0 %v6371, 127
      %v6387 = vpop.permute.xlu0 %6386
      %6388 = vrot.lane.b32.xlu0 %v6372, 127
      %v6389 = vpop.permute.xlu0 %6388
      %6390 = vrot.lane.b32.xlu0 %v6373, 127
      %v6391 = vpop.permute.xlu0 %6390
      %6392 = vrot.lane.b32.xlu0 %v6374, 127
      %v6393 = vpop.permute.xlu0 %6392
      %6394 = vrot.lane.b32.xlu0 %v6375, 127
      %v6395 = vpop.permute.xlu0 %6394
      %6396 = vrot.lane.b32.xlu0 %v6376, 127
      %v6397 = vpop.permute.xlu0 %6396
      %6398 = vrot.lane.b32.xlu0 %v6377, 127
      %v6399 = vpop.permute.xlu0 %6398
      %6400 = vrot.lane.b32.xlu0 %v6378, 127
      %v6401 = vpop.permute.xlu0 %6400
      %6402 = vrot.lane.b32.xlu0 %v6379, 127
      %v6403 = vpop.permute.xlu0 %6402
      %v6404 = vsel %vm456, %v6381, %v6383
      %v6405 = vsel %vm456, %v6385, %v6387
      %v6406 = vsel %vm456, %v6389, %v6391
      %v6407 = vsel %vm456, %v6393, %v6395
      %v6408 = vsel %vm456, %v6397, %v6399
      %v6409 = vsel %vm456, %v6401, %v6403
      %6416 = vmatpush.bf16.msra.mxu0 0
      %6417 = vmatpush.bf16.msra.mxu0 0
      %6418 = vmatpush.bf16.msra.mxu0 %v6409
      %6419 = vmatpush.bf16.msra.mxu0 %v6408
      %6420 = vmatpush.bf16.msra.mxu0 %v6407
      %6421 = vmatpush.bf16.msra.mxu0 %v6406
      %6422 = vmatpush.bf16.msra.mxu0 %v6405
      %6423 = vmatpush.bf16.msra.mxu0 %v6404
      %6424 = vmatmul.bf16.gmra.mxu0 %v4823
      %v6425 = vpop.f32.mrf.mxu0
      %v6426 = vadd.f32 0.0, %v6425
      %v6427 = vpop.f32.mrf.mxu0
      %v6428 = vadd.f32 0.0, %v6427
      %6429 = vmatmul.bf16.gmra.mxu0 %v4826
      %v6430 = vpop.f32.mrf.mxu0
      %v6431 = vadd.f32 0.0, %v6430
      %v6432 = vpop.f32.mrf.mxu0
      %v6433 = vadd.f32 0.0, %v6432
      %6434 = vdwg.mxu0
      %6441 = vmatpush.bf16.msra.mxu0 0
      %6442 = vmatpush.bf16.msra.mxu0 0
      %6443 = vmatpush.bf16.msra.mxu0 %v6378
      %6444 = vmatpush.bf16.msra.mxu0 %v6376
      %6445 = vmatpush.bf16.msra.mxu0 %v6374
      %6446 = vmatpush.bf16.msra.mxu0 %v6372
      %6447 = vmatpush.bf16.msra.mxu0 %v6370
      %6448 = vmatpush.bf16.msra.mxu0 %v6368
      %6449 = vmatmul.bf16.gmra.mxu0 %v4864
      %v6450 = vpop.f32.mrf.mxu0
      %v6451 = vadd.f32 %v6426, %v6450
      %v6452 = vpop.f32.mrf.mxu0
      %v6453 = vadd.f32 %v6428, %v6452
      %6454 = vmatmul.bf16.gmra.mxu0 %v4867
      %v6455 = vpop.f32.mrf.mxu0
      %v6456 = vadd.f32 %v6431, %v6455
      %v6457 = vpop.f32.mrf.mxu0
      %v6458 = vadd.f32 %v6433, %v6457
      %6459 = vdwg.mxu0
      %6460 = vrot.lane.b32.xlu0 %v6368, 126
      %v6461 = vpop.permute.xlu0 %6460
      %6462 = vrot.lane.b32.xlu0 %v6369, 126
      %v6463 = vpop.permute.xlu0 %6462
      %6464 = vrot.lane.b32.xlu0 %v6370, 126
      %v6465 = vpop.permute.xlu0 %6464
      %6466 = vrot.lane.b32.xlu0 %v6371, 126
      %v6467 = vpop.permute.xlu0 %6466
      %6468 = vrot.lane.b32.xlu0 %v6372, 126
      %v6469 = vpop.permute.xlu0 %6468
      %6470 = vrot.lane.b32.xlu0 %v6373, 126
      %v6471 = vpop.permute.xlu0 %6470
      %6472 = vrot.lane.b32.xlu0 %v6374, 126
      %v6473 = vpop.permute.xlu0 %6472
      %6474 = vrot.lane.b32.xlu0 %v6375, 126
      %v6475 = vpop.permute.xlu0 %6474
      %6476 = vrot.lane.b32.xlu0 %v6376, 126
      %v6477 = vpop.permute.xlu0 %6476
      %6478 = vrot.lane.b32.xlu0 %v6377, 126
      %v6479 = vpop.permute.xlu0 %6478
      %6480 = vrot.lane.b32.xlu0 %v6378, 126
      %v6481 = vpop.permute.xlu0 %6480
      %6482 = vrot.lane.b32.xlu0 %v6379, 126
      %v6483 = vpop.permute.xlu0 %6482
      %v6484 = vsel %vm570, %v6461, %v6463
      %v6485 = vsel %vm570, %v6465, %v6467
      %v6486 = vsel %vm570, %v6469, %v6471
      %v6487 = vsel %vm570, %v6473, %v6475
      %v6488 = vsel %vm570, %v6477, %v6479
      %v6489 = vsel %vm570, %v6481, %v6483
      %6496 = vmatpush.bf16.msra.mxu0 0
      %6497 = vmatpush.bf16.msra.mxu0 0
      %6498 = vmatpush.bf16.msra.mxu0 %v6489
      %6499 = vmatpush.bf16.msra.mxu0 %v6488
      %6500 = vmatpush.bf16.msra.mxu0 %v6487
      %6501 = vmatpush.bf16.msra.mxu0 %v6486
      %6502 = vmatpush.bf16.msra.mxu0 %v6485
      %6503 = vmatpush.bf16.msra.mxu0 %v6484
      %6504 = vmatmul.bf16.gmra.mxu0 %v4935
      %v6505 = vpop.f32.mrf.mxu0
      %v6506 = vadd.f32 0.0, %v6505
      %v6507 = vpop.f32.mrf.mxu0
      %v6508 = vadd.f32 0.0, %v6507
      %6509 = vmatmul.bf16.gmra.mxu0 %v4938
      %v6510 = vpop.f32.mrf.mxu0
      %v6511 = vadd.f32 0.0, %v6510
      %v6512 = vpop.f32.mrf.mxu0
      %v6513 = vadd.f32 0.0, %v6512
      %6514 = vdwg.mxu0
      %v6515 = vadd.f32 %v6451, %v6506
      %v6516 = vadd.f32 %v6453, %v6508
      %v6517 = vadd.f32 %v6456, %v6511
      %v6518 = vadd.f32 %v6458, %v6513
      %v6519 = vld [vmem:[%s2295] sm:$0xff]
      %v6520 = vld [vmem:[%s2295 + $0x8] sm:$0xff]
      %v6521 = vld [vmem:[%s2295 + $0x10] sm:$0xff]
      %v6522 = vld [vmem:[%s2295 + $0x18] sm:$0xff]
      %v6523 = vld [vmem:[%s2295 + $0x20] sm:$0xff]
      %v6524 = vld [vmem:[%s2295 + $0x28] sm:$0xff]
      %v6525 = vld [vmem:[%s2295 + $0x30] sm:$0xff]
      %v6526 = vld [vmem:[%s2295 + $0x38] sm:$0xff]
      %v6527 = vadd.f32 %v6515, %v4974
      %v6528 = vadd.f32 %v6516, %v4979
      %v6529 = vadd.f32 %v6517, %v4984
      %v6530 = vadd.f32 %v6518, %v4989
      %6539 = vrot.lane.b32.xlu0 %v6519, 127
      %v6540 = vpop.permute.xlu0 %6539
      %6541 = vrot.lane.b32.xlu0 %v6520, 127
      %v6542 = vpop.permute.xlu0 %6541
      %6543 = vrot.lane.b32.xlu0 %v6521, 127
      %v6544 = vpop.permute.xlu0 %6543
      %6545 = vrot.lane.b32.xlu0 %v6522, 127
      %v6546 = vpop.permute.xlu0 %6545
      %6547 = vrot.lane.b32.xlu0 %v6523, 127
      %v6548 = vpop.permute.xlu0 %6547
      %6549 = vrot.lane.b32.xlu0 %v6524, 127
      %v6550 = vpop.permute.xlu0 %6549
      %6551 = vrot.lane.b32.xlu0 %v6525, 127
      %v6552 = vpop.permute.xlu0 %6551
      %6553 = vrot.lane.b32.xlu0 %v6526, 127
      %v6554 = vpop.permute.xlu0 %6553
      %v6555 = vsel %vm5019, %v6540, %v6542
      %v6556 = vsel %vm5019, %v6544, %v6546
      %v6557 = vsel %vm5019, %v6548, %v6550
      %v6558 = vsel %vm5019, %v6552, %v6554
      %v6563 = vadd.f32 %v6527, %v6555
      %v6564 = vadd.f32 %v6528, %v6556
      %v6565 = vadd.f32 %v6529, %v6557
      %v6566 = vadd.f32 %v6530, %v6558
      %v6567 = vmax.f32 %v6563, 0.0
      %v6568 = vmax.f32 %v6564, 0.0
      %v6569 = vmax.f32 %v6565, 0.0
      %v6570 = vmax.f32 %v6566, 0.0
      %s6571 = scalar_lea.vmem %s224, 192
      %6572 = vst [vmem:[%s6571] sm:$0xff] %v6567
      %6573 = vst [vmem:[%s6571 + $0x8] sm:$0xff] %v6568
      %6574 = vst [vmem:[%s6571 + $0x10] sm:$0xff] %v6569
      %6575 = vst [vmem:[%s6571 + $0x18] sm:$0xff] %v6570
      %v6576 = vld [vmem:[%s2290] sm:$0xff]
      %v6577 = vld [vmem:[%s2290 + $0x8] sm:$0xff]
      %v6578 = vld [vmem:[%s2290 + $0x10] sm:$0xff]
      %v6579 = vld [vmem:[%s2290 + $0x18] sm:$0xff]
      %v6580 = vld [vmem:[%s2290 + $0x20] sm:$0xff]
      %v6581 = vld [vmem:[%s2290 + $0x28] sm:$0xff]
      %v6582 = vld [vmem:[%s2290 + $0x30] sm:$0xff]
      %v6583 = vld [vmem:[%s2290 + $0x38] sm:$0xff]
      %v6584 = vld [vmem:[%s2290 + $0x40] sm:$0xff]
      %v6585 = vld [vmem:[%s2290 + $0x48] sm:$0xff]
      %v6586 = vld [vmem:[%s2290 + $0x50] sm:$0xff]
      %v6587 = vld [vmem:[%s2290 + $0x58] sm:$0xff]
      %v6600 = vunpack.c.l.b16 %v6576
      %v6601 = vunpack.c.h.b16 %v6576
      %v6602 = vunpack.c.l.b16 %v6577
      %v6603 = vunpack.c.h.b16 %v6577
      %v6604 = vunpack.c.l.b16 %v6578
      %v6605 = vunpack.c.h.b16 %v6578
      %v6606 = vunpack.c.l.b16 %v6579
      %v6607 = vunpack.c.h.b16 %v6579
      %v6608 = vunpack.c.l.b16 %v6580
      %v6609 = vunpack.c.h.b16 %v6580
      %v6610 = vunpack.c.l.b16 %v6581
      %v6611 = vunpack.c.h.b16 %v6581
      %v6612 = vunpack.c.l.b16 %v6582
      %v6613 = vunpack.c.h.b16 %v6582
      %v6614 = vunpack.c.l.b16 %v6583
      %v6615 = vunpack.c.h.b16 %v6583
      %v6616 = vunpack.c.l.b16 %v6584
      %v6617 = vunpack.c.h.b16 %v6584
      %v6618 = vunpack.c.l.b16 %v6585
      %v6619 = vunpack.c.h.b16 %v6585
      %v6620 = vunpack.c.l.b16 %v6586
      %v6621 = vunpack.c.h.b16 %v6586
      %v6622 = vunpack.c.l.b16 %v6587
      %v6623 = vunpack.c.h.b16 %v6587
      %v6624 = vpack.c.b16 %v6602, %v6600
      %v6625 = vpack.c.b16 %v6603, %v6601
      %v6626 = vpack.c.b16 %v6606, %v6604
      %v6627 = vpack.c.b16 %v6607, %v6605
      %v6628 = vpack.c.b16 %v6610, %v6608
      %v6629 = vpack.c.b16 %v6611, %v6609
      %v6630 = vpack.c.b16 %v6614, %v6612
      %v6631 = vpack.c.b16 %v6615, %v6613
      %v6632 = vpack.c.b16 %v6618, %v6616
      %v6633 = vpack.c.b16 %v6619, %v6617
      %v6634 = vpack.c.b16 %v6622, %v6620
      %v6635 = vpack.c.b16 %v6623, %v6621
      %6636 = vrot.lane.b32.xlu0 %v6624, 127
      %v6637 = vpop.permute.xlu0 %6636
      %6638 = vrot.lane.b32.xlu0 %v6625, 127
      %v6639 = vpop.permute.xlu0 %6638
      %6640 = vrot.lane.b32.xlu0 %v6626, 127
      %v6641 = vpop.permute.xlu0 %6640
      %6642 = vrot.lane.b32.xlu0 %v6627, 127
      %v6643 = vpop.permute.xlu0 %6642
      %6644 = vrot.lane.b32.xlu0 %v6628, 127
      %v6645 = vpop.permute.xlu0 %6644
      %6646 = vrot.lane.b32.xlu0 %v6629, 127
      %v6647 = vpop.permute.xlu0 %6646
      %6648 = vrot.lane.b32.xlu0 %v6630, 127
      %v6649 = vpop.permute.xlu0 %6648
      %6650 = vrot.lane.b32.xlu0 %v6631, 127
      %v6651 = vpop.permute.xlu0 %6650
      %6652 = vrot.lane.b32.xlu0 %v6632, 127
      %v6653 = vpop.permute.xlu0 %6652
      %6654 = vrot.lane.b32.xlu0 %v6633, 127
      %v6655 = vpop.permute.xlu0 %6654
      %6656 = vrot.lane.b32.xlu0 %v6634, 127
      %v6657 = vpop.permute.xlu0 %6656
      %6658 = vrot.lane.b32.xlu0 %v6635, 127
      %v6659 = vpop.permute.xlu0 %6658
      %v6660 = vsel %vm456, %v6637, %v6639
      %v6661 = vsel %vm456, %v6641, %v6643
      %v6662 = vsel %vm456, %v6645, %v6647
      %v6663 = vsel %vm456, %v6649, %v6651
      %v6664 = vsel %vm456, %v6653, %v6655
      %v6665 = vsel %vm456, %v6657, %v6659
      %6672 = vmatpush.bf16.msra.mxu0 0
      %6673 = vmatpush.bf16.msra.mxu0 0
      %6674 = vmatpush.bf16.msra.mxu0 %v6665
      %6675 = vmatpush.bf16.msra.mxu0 %v6664
      %6676 = vmatpush.bf16.msra.mxu0 %v6663
      %6677 = vmatpush.bf16.msra.mxu0 %v6662
      %6678 = vmatpush.bf16.msra.mxu0 %v6661
      %6679 = vmatpush.bf16.msra.mxu0 %v6660
      %6680 = vmatmul.bf16.gmra.mxu0 %v4823
      %v6681 = vpop.f32.mrf.mxu0
      %v6682 = vadd.f32 0.0, %v6681
      %v6683 = vpop.f32.mrf.mxu0
      %v6684 = vadd.f32 0.0, %v6683
      %6685 = vmatmul.bf16.gmra.mxu0 %v4826
      %v6686 = vpop.f32.mrf.mxu0
      %v6687 = vadd.f32 0.0, %v6686
      %v6688 = vpop.f32.mrf.mxu0
      %v6689 = vadd.f32 0.0, %v6688
      %6690 = vdwg.mxu0
      %6697 = vmatpush.bf16.msra.mxu0 0
      %6698 = vmatpush.bf16.msra.mxu0 0
      %6699 = vmatpush.bf16.msra.mxu0 %v6634
      %6700 = vmatpush.bf16.msra.mxu0 %v6632
      %6701 = vmatpush.bf16.msra.mxu0 %v6630
      %6702 = vmatpush.bf16.msra.mxu0 %v6628
      %6703 = vmatpush.bf16.msra.mxu0 %v6626
      %6704 = vmatpush.bf16.msra.mxu0 %v6624
      %6705 = vmatmul.bf16.gmra.mxu0 %v4864
      %v6706 = vpop.f32.mrf.mxu0
      %v6707 = vadd.f32 %v6682, %v6706
      %v6708 = vpop.f32.mrf.mxu0
      %v6709 = vadd.f32 %v6684, %v6708
      %6710 = vmatmul.bf16.gmra.mxu0 %v4867
      %v6711 = vpop.f32.mrf.mxu0
      %v6712 = vadd.f32 %v6687, %v6711
      %v6713 = vpop.f32.mrf.mxu0
      %v6714 = vadd.f32 %v6689, %v6713
      %6715 = vdwg.mxu0
      %6716 = vrot.lane.b32.xlu0 %v6624, 126
      %v6717 = vpop.permute.xlu0 %6716
      %6718 = vrot.lane.b32.xlu0 %v6625, 126
      %v6719 = vpop.permute.xlu0 %6718
      %6720 = vrot.lane.b32.xlu0 %v6626, 126
      %v6721 = vpop.permute.xlu0 %6720
      %6722 = vrot.lane.b32.xlu0 %v6627, 126
      %v6723 = vpop.permute.xlu0 %6722
      %6724 = vrot.lane.b32.xlu0 %v6628, 126
      %v6725 = vpop.permute.xlu0 %6724
      %6726 = vrot.lane.b32.xlu0 %v6629, 126
      %v6727 = vpop.permute.xlu0 %6726
      %6728 = vrot.lane.b32.xlu0 %v6630, 126
      %v6729 = vpop.permute.xlu0 %6728
      %6730 = vrot.lane.b32.xlu0 %v6631, 126
      %v6731 = vpop.permute.xlu0 %6730
      %6732 = vrot.lane.b32.xlu0 %v6632, 126
      %v6733 = vpop.permute.xlu0 %6732
      %6734 = vrot.lane.b32.xlu0 %v6633, 126
      %v6735 = vpop.permute.xlu0 %6734
      %6736 = vrot.lane.b32.xlu0 %v6634, 126
      %v6737 = vpop.permute.xlu0 %6736
      %6738 = vrot.lane.b32.xlu0 %v6635, 126
      %v6739 = vpop.permute.xlu0 %6738
      %v6740 = vsel %vm570, %v6717, %v6719
      %v6741 = vsel %vm570, %v6721, %v6723
      %v6742 = vsel %vm570, %v6725, %v6727
      %v6743 = vsel %vm570, %v6729, %v6731
      %v6744 = vsel %vm570, %v6733, %v6735
      %v6745 = vsel %vm570, %v6737, %v6739
      %6752 = vmatpush.bf16.msra.mxu0 0
      %6753 = vmatpush.bf16.msra.mxu0 0
      %6754 = vmatpush.bf16.msra.mxu0 %v6745
      %6755 = vmatpush.bf16.msra.mxu0 %v6744
      %6756 = vmatpush.bf16.msra.mxu0 %v6743
      %6757 = vmatpush.bf16.msra.mxu0 %v6742
      %6758 = vmatpush.bf16.msra.mxu0 %v6741
      %6759 = vmatpush.bf16.msra.mxu0 %v6740
      %6760 = vmatmul.bf16.gmra.mxu0 %v4935
      %v6761 = vpop.f32.mrf.mxu0
      %v6762 = vadd.f32 0.0, %v6761
      %v6763 = vpop.f32.mrf.mxu0
      %v6764 = vadd.f32 0.0, %v6763
      %6765 = vmatmul.bf16.gmra.mxu0 %v4938
      %v6766 = vpop.f32.mrf.mxu0
      %v6767 = vadd.f32 0.0, %v6766
      %v6768 = vpop.f32.mrf.mxu0
      %v6769 = vadd.f32 0.0, %v6768
      %6770 = vdwg.mxu0
      %v6771 = vadd.f32 %v6707, %v6762
      %v6772 = vadd.f32 %v6709, %v6764
      %v6773 = vadd.f32 %v6712, %v6767
      %v6774 = vadd.f32 %v6714, %v6769
      %v6775 = vld [vmem:[%s2564] sm:$0xff]
      %v6776 = vld [vmem:[%s2564 + $0x8] sm:$0xff]
      %v6777 = vld [vmem:[%s2564 + $0x10] sm:$0xff]
      %v6778 = vld [vmem:[%s2564 + $0x18] sm:$0xff]
      %v6779 = vld [vmem:[%s2564 + $0x20] sm:$0xff]
      %v6780 = vld [vmem:[%s2564 + $0x28] sm:$0xff]
      %v6781 = vld [vmem:[%s2564 + $0x30] sm:$0xff]
      %v6782 = vld [vmem:[%s2564 + $0x38] sm:$0xff]
      %v6783 = vadd.f32 %v6771, %v4974
      %v6784 = vadd.f32 %v6772, %v4979
      %v6785 = vadd.f32 %v6773, %v4984
      %v6786 = vadd.f32 %v6774, %v4989
      %6795 = vrot.lane.b32.xlu0 %v6775, 127
      %v6796 = vpop.permute.xlu0 %6795
      %6797 = vrot.lane.b32.xlu0 %v6776, 127
      %v6798 = vpop.permute.xlu0 %6797
      %6799 = vrot.lane.b32.xlu0 %v6777, 127
      %v6800 = vpop.permute.xlu0 %6799
      %6801 = vrot.lane.b32.xlu0 %v6778, 127
      %v6802 = vpop.permute.xlu0 %6801
      %6803 = vrot.lane.b32.xlu0 %v6779, 127
      %v6804 = vpop.permute.xlu0 %6803
      %6805 = vrot.lane.b32.xlu0 %v6780, 127
      %v6806 = vpop.permute.xlu0 %6805
      %6807 = vrot.lane.b32.xlu0 %v6781, 127
      %v6808 = vpop.permute.xlu0 %6807
      %6809 = vrot.lane.b32.xlu0 %v6782, 127
      %v6810 = vpop.permute.xlu0 %6809
      %v6811 = vsel %vm5019, %v6796, %v6798
      %v6812 = vsel %vm5019, %v6800, %v6802
      %v6813 = vsel %vm5019, %v6804, %v6806
      %v6814 = vsel %vm5019, %v6808, %v6810
      %v6819 = vadd.f32 %v6783, %v6811
      %v6820 = vadd.f32 %v6784, %v6812
      %v6821 = vadd.f32 %v6785, %v6813
      %v6822 = vadd.f32 %v6786, %v6814
      %v6823 = vmax.f32 %v6819, 0.0
      %v6824 = vmax.f32 %v6820, 0.0
      %v6825 = vmax.f32 %v6821, 0.0
      %v6826 = vmax.f32 %v6822, 0.0
      %s6827 = scalar_lea.vmem %s224, 224
      %6828 = vst [vmem:[%s6827] sm:$0xff] %v6823
      %6829 = vst [vmem:[%s6827 + $0x8] sm:$0xff] %v6824
      %6830 = vst [vmem:[%s6827 + $0x10] sm:$0xff] %v6825
      %6831 = vst [vmem:[%s6827 + $0x18] sm:$0xff] %v6826
      %v6832 = vld [vmem:[%s2559] sm:$0xff]
      %v6833 = vld [vmem:[%s2559 + $0x8] sm:$0xff]
      %v6834 = vld [vmem:[%s2559 + $0x10] sm:$0xff]
      %v6835 = vld [vmem:[%s2559 + $0x18] sm:$0xff]
      %v6836 = vld [vmem:[%s2559 + $0x20] sm:$0xff]
      %v6837 = vld [vmem:[%s2559 + $0x28] sm:$0xff]
      %v6838 = vld [vmem:[%s2559 + $0x30] sm:$0xff]
      %v6839 = vld [vmem:[%s2559 + $0x38] sm:$0xff]
      %v6840 = vld [vmem:[%s2559 + $0x40] sm:$0xff]
      %v6841 = vld [vmem:[%s2559 + $0x48] sm:$0xff]
      %v6842 = vld [vmem:[%s2559 + $0x50] sm:$0xff]
      %v6843 = vld [vmem:[%s2559 + $0x58] sm:$0xff]
      %v6856 = vunpack.c.l.b16 %v6832
      %v6857 = vunpack.c.h.b16 %v6832
      %v6858 = vunpack.c.l.b16 %v6833
      %v6859 = vunpack.c.h.b16 %v6833
      %v6860 = vunpack.c.l.b16 %v6834
      %v6861 = vunpack.c.h.b16 %v6834
      %v6862 = vunpack.c.l.b16 %v6835
      %v6863 = vunpack.c.h.b16 %v6835
      %v6864 = vunpack.c.l.b16 %v6836
      %v6865 = vunpack.c.h.b16 %v6836
      %v6866 = vunpack.c.l.b16 %v6837
      %v6867 = vunpack.c.h.b16 %v6837
      %v6868 = vunpack.c.l.b16 %v6838
      %v6869 = vunpack.c.h.b16 %v6838
      %v6870 = vunpack.c.l.b16 %v6839
      %v6871 = vunpack.c.h.b16 %v6839
      %v6872 = vunpack.c.l.b16 %v6840
      %v6873 = vunpack.c.h.b16 %v6840
      %v6874 = vunpack.c.l.b16 %v6841
      %v6875 = vunpack.c.h.b16 %v6841
      %v6876 = vunpack.c.l.b16 %v6842
      %v6877 = vunpack.c.h.b16 %v6842
      %v6878 = vunpack.c.l.b16 %v6843
      %v6879 = vunpack.c.h.b16 %v6843
      %v6880 = vpack.c.b16 %v6858, %v6856
      %v6881 = vpack.c.b16 %v6859, %v6857
      %v6882 = vpack.c.b16 %v6862, %v6860
      %v6883 = vpack.c.b16 %v6863, %v6861
      %v6884 = vpack.c.b16 %v6866, %v6864
      %v6885 = vpack.c.b16 %v6867, %v6865
      %v6886 = vpack.c.b16 %v6870, %v6868
      %v6887 = vpack.c.b16 %v6871, %v6869
      %v6888 = vpack.c.b16 %v6874, %v6872
      %v6889 = vpack.c.b16 %v6875, %v6873
      %v6890 = vpack.c.b16 %v6878, %v6876
      %v6891 = vpack.c.b16 %v6879, %v6877
      %6892 = vrot.lane.b32.xlu0 %v6880, 127
      %v6893 = vpop.permute.xlu0 %6892
      %6894 = vrot.lane.b32.xlu0 %v6881, 127
      %v6895 = vpop.permute.xlu0 %6894
      %6896 = vrot.lane.b32.xlu0 %v6882, 127
      %v6897 = vpop.permute.xlu0 %6896
      %6898 = vrot.lane.b32.xlu0 %v6883, 127
      %v6899 = vpop.permute.xlu0 %6898
      %6900 = vrot.lane.b32.xlu0 %v6884, 127
      %v6901 = vpop.permute.xlu0 %6900
      %6902 = vrot.lane.b32.xlu0 %v6885, 127
      %v6903 = vpop.permute.xlu0 %6902
      %6904 = vrot.lane.b32.xlu0 %v6886, 127
      %v6905 = vpop.permute.xlu0 %6904
      %6906 = vrot.lane.b32.xlu0 %v6887, 127
      %v6907 = vpop.permute.xlu0 %6906
      %6908 = vrot.lane.b32.xlu0 %v6888, 127
      %v6909 = vpop.permute.xlu0 %6908
      %6910 = vrot.lane.b32.xlu0 %v6889, 127
      %v6911 = vpop.permute.xlu0 %6910
      %6912 = vrot.lane.b32.xlu0 %v6890, 127
      %v6913 = vpop.permute.xlu0 %6912
      %6914 = vrot.lane.b32.xlu0 %v6891, 127
      %v6915 = vpop.permute.xlu0 %6914
      %v6916 = vsel %vm456, %v6893, %v6895
      %v6917 = vsel %vm456, %v6897, %v6899
      %v6918 = vsel %vm456, %v6901, %v6903
      %v6919 = vsel %vm456, %v6905, %v6907
      %v6920 = vsel %vm456, %v6909, %v6911
      %v6921 = vsel %vm456, %v6913, %v6915
      %6928 = vmatpush.bf16.msra.mxu0 0
      %6929 = vmatpush.bf16.msra.mxu0 0
      %6930 = vmatpush.bf16.msra.mxu0 %v6921
      %6931 = vmatpush.bf16.msra.mxu0 %v6920
      %6932 = vmatpush.bf16.msra.mxu0 %v6919
      %6933 = vmatpush.bf16.msra.mxu0 %v6918
      %6934 = vmatpush.bf16.msra.mxu0 %v6917
      %6935 = vmatpush.bf16.msra.mxu0 %v6916
      %6936 = vmatmul.bf16.gmra.mxu0 %v4823
      %v6937 = vpop.f32.mrf.mxu0
      %v6938 = vadd.f32 0.0, %v6937
      %v6939 = vpop.f32.mrf.mxu0
      %v6940 = vadd.f32 0.0, %v6939
      %6941 = vmatmul.bf16.gmra.mxu0 %v4826
      %v6942 = vpop.f32.mrf.mxu0
      %v6943 = vadd.f32 0.0, %v6942
      %v6944 = vpop.f32.mrf.mxu0
      %v6945 = vadd.f32 0.0, %v6944
      %6946 = vdwg.mxu0
      %6953 = vmatpush.bf16.msra.mxu0 0
      %6954 = vmatpush.bf16.msra.mxu0 0
      %6955 = vmatpush.bf16.msra.mxu0 %v6890
      %6956 = vmatpush.bf16.msra.mxu0 %v6888
      %6957 = vmatpush.bf16.msra.mxu0 %v6886
      %6958 = vmatpush.bf16.msra.mxu0 %v6884
      %6959 = vmatpush.bf16.msra.mxu0 %v6882
      %6960 = vmatpush.bf16.msra.mxu0 %v6880
      %6961 = vmatmul.bf16.gmra.mxu0 %v4864
      %v6962 = vpop.f32.mrf.mxu0
      %v6963 = vadd.f32 %v6938, %v6962
      %v6964 = vpop.f32.mrf.mxu0
      %v6965 = vadd.f32 %v6940, %v6964
      %6966 = vmatmul.bf16.gmra.mxu0 %v4867
      %v6967 = vpop.f32.mrf.mxu0
      %v6968 = vadd.f32 %v6943, %v6967
      %v6969 = vpop.f32.mrf.mxu0
      %v6970 = vadd.f32 %v6945, %v6969
      %6971 = vdwg.mxu0
      %6972 = vrot.lane.b32.xlu0 %v6880, 126
      %v6973 = vpop.permute.xlu0 %6972
      %6974 = vrot.lane.b32.xlu0 %v6881, 126
      %v6975 = vpop.permute.xlu0 %6974
      %6976 = vrot.lane.b32.xlu0 %v6882, 126
      %v6977 = vpop.permute.xlu0 %6976
      %6978 = vrot.lane.b32.xlu0 %v6883, 126
      %v6979 = vpop.permute.xlu0 %6978
      %6980 = vrot.lane.b32.xlu0 %v6884, 126
      %v6981 = vpop.permute.xlu0 %6980
      %6982 = vrot.lane.b32.xlu0 %v6885, 126
      %v6983 = vpop.permute.xlu0 %6982
      %6984 = vrot.lane.b32.xlu0 %v6886, 126
      %v6985 = vpop.permute.xlu0 %6984
      %6986 = vrot.lane.b32.xlu0 %v6887, 126
      %v6987 = vpop.permute.xlu0 %6986
      %6988 = vrot.lane.b32.xlu0 %v6888, 126
      %v6989 = vpop.permute.xlu0 %6988
      %6990 = vrot.lane.b32.xlu0 %v6889, 126
      %v6991 = vpop.permute.xlu0 %6990
      %6992 = vrot.lane.b32.xlu0 %v6890, 126
      %v6993 = vpop.permute.xlu0 %6992
      %6994 = vrot.lane.b32.xlu0 %v6891, 126
      %v6995 = vpop.permute.xlu0 %6994
      %v6996 = vsel %vm570, %v6973, %v6975
      %v6997 = vsel %vm570, %v6977, %v6979
      %v6998 = vsel %vm570, %v6981, %v6983
      %v6999 = vsel %vm570, %v6985, %v6987
      %v7000 = vsel %vm570, %v6989, %v6991
      %v7001 = vsel %vm570, %v6993, %v6995
      %7008 = vmatpush.bf16.msra.mxu0 0
      %7009 = vmatpush.bf16.msra.mxu0 0
      %7010 = vmatpush.bf16.msra.mxu0 %v7001
      %7011 = vmatpush.bf16.msra.mxu0 %v7000
      %7012 = vmatpush.bf16.msra.mxu0 %v6999
      %7013 = vmatpush.bf16.msra.mxu0 %v6998
      %7014 = vmatpush.bf16.msra.mxu0 %v6997
      %7015 = vmatpush.bf16.msra.mxu0 %v6996
      %7016 = vmatmul.bf16.gmra.mxu0 %v4935
      %v7017 = vpop.f32.mrf.mxu0
      %v7018 = vadd.f32 0.0, %v7017
      %v7019 = vpop.f32.mrf.mxu0
      %v7020 = vadd.f32 0.0, %v7019
      %7021 = vmatmul.bf16.gmra.mxu0 %v4938
      %v7022 = vpop.f32.mrf.mxu0
      %v7023 = vadd.f32 0.0, %v7022
      %v7024 = vpop.f32.mrf.mxu0
      %v7025 = vadd.f32 0.0, %v7024
      %7026 = vdwg.mxu0
      %v7027 = vadd.f32 %v6963, %v7018
      %v7028 = vadd.f32 %v6965, %v7020
      %v7029 = vadd.f32 %v6968, %v7023
      %v7030 = vadd.f32 %v6970, %v7025
      %v7031 = vld [vmem:[%s2833] sm:$0xff]
      %v7032 = vld [vmem:[%s2833 + $0x8] sm:$0xff]
      %v7033 = vld [vmem:[%s2833 + $0x10] sm:$0xff]
      %v7034 = vld [vmem:[%s2833 + $0x18] sm:$0xff]
      %v7035 = vld [vmem:[%s2833 + $0x20] sm:$0xff]
      %v7036 = vld [vmem:[%s2833 + $0x28] sm:$0xff]
      %v7037 = vld [vmem:[%s2833 + $0x30] sm:$0xff]
      %v7038 = vld [vmem:[%s2833 + $0x38] sm:$0xff]
      %v7039 = vadd.f32 %v7027, %v4974
      %v7040 = vadd.f32 %v7028, %v4979
      %v7041 = vadd.f32 %v7029, %v4984
      %v7042 = vadd.f32 %v7030, %v4989
      %7051 = vrot.lane.b32.xlu0 %v7031, 127
      %v7052 = vpop.permute.xlu0 %7051
      %7053 = vrot.lane.b32.xlu0 %v7032, 127
      %v7054 = vpop.permute.xlu0 %7053
      %7055 = vrot.lane.b32.xlu0 %v7033, 127
      %v7056 = vpop.permute.xlu0 %7055
      %7057 = vrot.lane.b32.xlu0 %v7034, 127
      %v7058 = vpop.permute.xlu0 %7057
      %7059 = vrot.lane.b32.xlu0 %v7035, 127
      %v7060 = vpop.permute.xlu0 %7059
      %7061 = vrot.lane.b32.xlu0 %v7036, 127
      %v7062 = vpop.permute.xlu0 %7061
      %7063 = vrot.lane.b32.xlu0 %v7037, 127
      %v7064 = vpop.permute.xlu0 %7063
      %7065 = vrot.lane.b32.xlu0 %v7038, 127
      %v7066 = vpop.permute.xlu0 %7065
      %v7067 = vsel %vm5019, %v7052, %v7054
      %v7068 = vsel %vm5019, %v7056, %v7058
      %v7069 = vsel %vm5019, %v7060, %v7062
      %v7070 = vsel %vm5019, %v7064, %v7066
      %v7075 = vadd.f32 %v7039, %v7067
      %v7076 = vadd.f32 %v7040, %v7068
      %v7077 = vadd.f32 %v7041, %v7069
      %v7078 = vadd.f32 %v7042, %v7070
      %v7079 = vmax.f32 %v7075, 0.0
      %v7080 = vmax.f32 %v7076, 0.0
      %v7081 = vmax.f32 %v7077, 0.0
      %v7082 = vmax.f32 %v7078, 0.0
      %s7083 = scalar_lea.vmem %s224, 256
      %7084 = vst [vmem:[%s7083] sm:$0xff] %v7079
      %7085 = vst [vmem:[%s7083 + $0x8] sm:$0xff] %v7080
      %7086 = vst [vmem:[%s7083 + $0x10] sm:$0xff] %v7081
      %7087 = vst [vmem:[%s7083 + $0x18] sm:$0xff] %v7082
      %v7088 = vld [vmem:[%s2828] sm:$0xff]
      %v7089 = vld [vmem:[%s2828 + $0x8] sm:$0xff]
      %v7090 = vld [vmem:[%s2828 + $0x10] sm:$0xff]
      %v7091 = vld [vmem:[%s2828 + $0x18] sm:$0xff]
      %v7092 = vld [vmem:[%s2828 + $0x20] sm:$0xff]
      %v7093 = vld [vmem:[%s2828 + $0x28] sm:$0xff]
      %v7094 = vld [vmem:[%s2828 + $0x30] sm:$0xff]
      %v7095 = vld [vmem:[%s2828 + $0x38] sm:$0xff]
      %v7096 = vld [vmem:[%s2828 + $0x40] sm:$0xff]
      %v7097 = vld [vmem:[%s2828 + $0x48] sm:$0xff]
      %v7098 = vld [vmem:[%s2828 + $0x50] sm:$0xff]
      %v7099 = vld [vmem:[%s2828 + $0x58] sm:$0xff]
      %v7112 = vunpack.c.l.b16 %v7088
      %v7113 = vunpack.c.h.b16 %v7088
      %v7114 = vunpack.c.l.b16 %v7089
      %v7115 = vunpack.c.h.b16 %v7089
      %v7116 = vunpack.c.l.b16 %v7090
      %v7117 = vunpack.c.h.b16 %v7090
      %v7118 = vunpack.c.l.b16 %v7091
      %v7119 = vunpack.c.h.b16 %v7091
      %v7120 = vunpack.c.l.b16 %v7092
      %v7121 = vunpack.c.h.b16 %v7092
      %v7122 = vunpack.c.l.b16 %v7093
      %v7123 = vunpack.c.h.b16 %v7093
      %v7124 = vunpack.c.l.b16 %v7094
      %v7125 = vunpack.c.h.b16 %v7094
      %v7126 = vunpack.c.l.b16 %v7095
      %v7127 = vunpack.c.h.b16 %v7095
      %v7128 = vunpack.c.l.b16 %v7096
      %v7129 = vunpack.c.h.b16 %v7096
      %v7130 = vunpack.c.l.b16 %v7097
      %v7131 = vunpack.c.h.b16 %v7097
      %v7132 = vunpack.c.l.b16 %v7098
      %v7133 = vunpack.c.h.b16 %v7098
      %v7134 = vunpack.c.l.b16 %v7099
      %v7135 = vunpack.c.h.b16 %v7099
      %v7136 = vpack.c.b16 %v7114, %v7112
      %v7137 = vpack.c.b16 %v7115, %v7113
      %v7138 = vpack.c.b16 %v7118, %v7116
      %v7139 = vpack.c.b16 %v7119, %v7117
      %v7140 = vpack.c.b16 %v7122, %v7120
      %v7141 = vpack.c.b16 %v7123, %v7121
      %v7142 = vpack.c.b16 %v7126, %v7124
      %v7143 = vpack.c.b16 %v7127, %v7125
      %v7144 = vpack.c.b16 %v7130, %v7128
      %v7145 = vpack.c.b16 %v7131, %v7129
      %v7146 = vpack.c.b16 %v7134, %v7132
      %v7147 = vpack.c.b16 %v7135, %v7133
      %7148 = vrot.lane.b32.xlu0 %v7136, 127
      %v7149 = vpop.permute.xlu0 %7148
      %7150 = vrot.lane.b32.xlu0 %v7137, 127
      %v7151 = vpop.permute.xlu0 %7150
      %7152 = vrot.lane.b32.xlu0 %v7138, 127
      %v7153 = vpop.permute.xlu0 %7152
      %7154 = vrot.lane.b32.xlu0 %v7139, 127
      %v7155 = vpop.permute.xlu0 %7154
      %7156 = vrot.lane.b32.xlu0 %v7140, 127
      %v7157 = vpop.permute.xlu0 %7156
      %7158 = vrot.lane.b32.xlu0 %v7141, 127
      %v7159 = vpop.permute.xlu0 %7158
      %7160 = vrot.lane.b32.xlu0 %v7142, 127
      %v7161 = vpop.permute.xlu0 %7160
      %7162 = vrot.lane.b32.xlu0 %v7143, 127
      %v7163 = vpop.permute.xlu0 %7162
      %7164 = vrot.lane.b32.xlu0 %v7144, 127
      %v7165 = vpop.permute.xlu0 %7164
      %7166 = vrot.lane.b32.xlu0 %v7145, 127
      %v7167 = vpop.permute.xlu0 %7166
      %7168 = vrot.lane.b32.xlu0 %v7146, 127
      %v7169 = vpop.permute.xlu0 %7168
      %7170 = vrot.lane.b32.xlu0 %v7147, 127
      %v7171 = vpop.permute.xlu0 %7170
      %v7172 = vsel %vm456, %v7149, %v7151
      %v7173 = vsel %vm456, %v7153, %v7155
      %v7174 = vsel %vm456, %v7157, %v7159
      %v7175 = vsel %vm456, %v7161, %v7163
      %v7176 = vsel %vm456, %v7165, %v7167
      %v7177 = vsel %vm456, %v7169, %v7171
      %7184 = vmatpush.bf16.msra.mxu0 0
      %7185 = vmatpush.bf16.msra.mxu0 0
      %7186 = vmatpush.bf16.msra.mxu0 %v7177
      %7187 = vmatpush.bf16.msra.mxu0 %v7176
      %7188 = vmatpush.bf16.msra.mxu0 %v7175
      %7189 = vmatpush.bf16.msra.mxu0 %v7174
      %7190 = vmatpush.bf16.msra.mxu0 %v7173
      %7191 = vmatpush.bf16.msra.mxu0 %v7172
      %7192 = vmatmul.bf16.gmra.mxu0 %v4823
      %v7193 = vpop.f32.mrf.mxu0
      %v7194 = vadd.f32 0.0, %v7193
      %v7195 = vpop.f32.mrf.mxu0
      %v7196 = vadd.f32 0.0, %v7195
      %7197 = vmatmul.bf16.gmra.mxu0 %v4826
      %v7198 = vpop.f32.mrf.mxu0
      %v7199 = vadd.f32 0.0, %v7198
      %v7200 = vpop.f32.mrf.mxu0
      %v7201 = vadd.f32 0.0, %v7200
      %7202 = vdwg.mxu0
      %7209 = vmatpush.bf16.msra.mxu0 0
      %7210 = vmatpush.bf16.msra.mxu0 0
      %7211 = vmatpush.bf16.msra.mxu0 %v7146
      %7212 = vmatpush.bf16.msra.mxu0 %v7144
      %7213 = vmatpush.bf16.msra.mxu0 %v7142
      %7214 = vmatpush.bf16.msra.mxu0 %v7140
      %7215 = vmatpush.bf16.msra.mxu0 %v7138
      %7216 = vmatpush.bf16.msra.mxu0 %v7136
      %7217 = vmatmul.bf16.gmra.mxu0 %v4864
      %v7218 = vpop.f32.mrf.mxu0
      %v7219 = vadd.f32 %v7194, %v7218
      %v7220 = vpop.f32.mrf.mxu0
      %v7221 = vadd.f32 %v7196, %v7220
      %7222 = vmatmul.bf16.gmra.mxu0 %v4867
      %v7223 = vpop.f32.mrf.mxu0
      %v7224 = vadd.f32 %v7199, %v7223
      %v7225 = vpop.f32.mrf.mxu0
      %v7226 = vadd.f32 %v7201, %v7225
      %7227 = vdwg.mxu0
      %7228 = vrot.lane.b32.xlu0 %v7136, 126
      %v7229 = vpop.permute.xlu0 %7228
      %7230 = vrot.lane.b32.xlu0 %v7137, 126
      %v7231 = vpop.permute.xlu0 %7230
      %7232 = vrot.lane.b32.xlu0 %v7138, 126
      %v7233 = vpop.permute.xlu0 %7232
      %7234 = vrot.lane.b32.xlu0 %v7139, 126
      %v7235 = vpop.permute.xlu0 %7234
      %7236 = vrot.lane.b32.xlu0 %v7140, 126
      %v7237 = vpop.permute.xlu0 %7236
      %7238 = vrot.lane.b32.xlu0 %v7141, 126
      %v7239 = vpop.permute.xlu0 %7238
      %7240 = vrot.lane.b32.xlu0 %v7142, 126
      %v7241 = vpop.permute.xlu0 %7240
      %7242 = vrot.lane.b32.xlu0 %v7143, 126
      %v7243 = vpop.permute.xlu0 %7242
      %7244 = vrot.lane.b32.xlu0 %v7144, 126
      %v7245 = vpop.permute.xlu0 %7244
      %7246 = vrot.lane.b32.xlu0 %v7145, 126
      %v7247 = vpop.permute.xlu0 %7246
      %7248 = vrot.lane.b32.xlu0 %v7146, 126
      %v7249 = vpop.permute.xlu0 %7248
      %7250 = vrot.lane.b32.xlu0 %v7147, 126
      %v7251 = vpop.permute.xlu0 %7250
      %v7252 = vsel %vm570, %v7229, %v7231
      %v7253 = vsel %vm570, %v7233, %v7235
      %v7254 = vsel %vm570, %v7237, %v7239
      %v7255 = vsel %vm570, %v7241, %v7243
      %v7256 = vsel %vm570, %v7245, %v7247
      %v7257 = vsel %vm570, %v7249, %v7251
      %7264 = vmatpush.bf16.msra.mxu0 0
      %7265 = vmatpush.bf16.msra.mxu0 0
      %7266 = vmatpush.bf16.msra.mxu0 %v7257
      %7267 = vmatpush.bf16.msra.mxu0 %v7256
      %7268 = vmatpush.bf16.msra.mxu0 %v7255
      %7269 = vmatpush.bf16.msra.mxu0 %v7254
      %7270 = vmatpush.bf16.msra.mxu0 %v7253
      %7271 = vmatpush.bf16.msra.mxu0 %v7252
      %7272 = vmatmul.bf16.gmra.mxu0 %v4935
      %v7273 = vpop.f32.mrf.mxu0
      %v7274 = vadd.f32 0.0, %v7273
      %v7275 = vpop.f32.mrf.mxu0
      %v7276 = vadd.f32 0.0, %v7275
      %7277 = vmatmul.bf16.gmra.mxu0 %v4938
      %v7278 = vpop.f32.mrf.mxu0
      %v7279 = vadd.f32 0.0, %v7278
      %v7280 = vpop.f32.mrf.mxu0
      %v7281 = vadd.f32 0.0, %v7280
      %7282 = vdwg.mxu0
      %v7283 = vadd.f32 %v7219, %v7274
      %v7284 = vadd.f32 %v7221, %v7276
      %v7285 = vadd.f32 %v7224, %v7279
      %v7286 = vadd.f32 %v7226, %v7281
      %v7287 = vld [vmem:[%s3102] sm:$0xff]
      %v7288 = vld [vmem:[%s3102 + $0x8] sm:$0xff]
      %v7289 = vld [vmem:[%s3102 + $0x10] sm:$0xff]
      %v7290 = vld [vmem:[%s3102 + $0x18] sm:$0xff]
      %v7291 = vld [vmem:[%s3102 + $0x20] sm:$0xff]
      %v7292 = vld [vmem:[%s3102 + $0x28] sm:$0xff]
      %v7293 = vld [vmem:[%s3102 + $0x30] sm:$0xff]
      %v7294 = vld [vmem:[%s3102 + $0x38] sm:$0xff]
      %v7295 = vadd.f32 %v7283, %v4974
      %v7296 = vadd.f32 %v7284, %v4979
      %v7297 = vadd.f32 %v7285, %v4984
      %v7298 = vadd.f32 %v7286, %v4989
      %7307 = vrot.lane.b32.xlu0 %v7287, 127
      %v7308 = vpop.permute.xlu0 %7307
      %7309 = vrot.lane.b32.xlu0 %v7288, 127
      %v7310 = vpop.permute.xlu0 %7309
      %7311 = vrot.lane.b32.xlu0 %v7289, 127
      %v7312 = vpop.permute.xlu0 %7311
      %7313 = vrot.lane.b32.xlu0 %v7290, 127
      %v7314 = vpop.permute.xlu0 %7313
      %7315 = vrot.lane.b32.xlu0 %v7291, 127
      %v7316 = vpop.permute.xlu0 %7315
      %7317 = vrot.lane.b32.xlu0 %v7292, 127
      %v7318 = vpop.permute.xlu0 %7317
      %7319 = vrot.lane.b32.xlu0 %v7293, 127
      %v7320 = vpop.permute.xlu0 %7319
      %7321 = vrot.lane.b32.xlu0 %v7294, 127
      %v7322 = vpop.permute.xlu0 %7321
      %v7323 = vsel %vm5019, %v7308, %v7310
      %v7324 = vsel %vm5019, %v7312, %v7314
      %v7325 = vsel %vm5019, %v7316, %v7318
      %v7326 = vsel %vm5019, %v7320, %v7322
      %v7331 = vadd.f32 %v7295, %v7323
      %v7332 = vadd.f32 %v7296, %v7324
      %v7333 = vadd.f32 %v7297, %v7325
      %v7334 = vadd.f32 %v7298, %v7326
      %v7335 = vmax.f32 %v7331, 0.0
      %v7336 = vmax.f32 %v7332, 0.0
      %v7337 = vmax.f32 %v7333, 0.0
      %v7338 = vmax.f32 %v7334, 0.0
      %s7339 = scalar_lea.vmem %s224, 288
      %7340 = vst [vmem:[%s7339] sm:$0xff] %v7335
      %7341 = vst [vmem:[%s7339 + $0x8] sm:$0xff] %v7336
      %7342 = vst [vmem:[%s7339 + $0x10] sm:$0xff] %v7337
      %7343 = vst [vmem:[%s7339 + $0x18] sm:$0xff] %v7338
      %v7344 = vld [vmem:[%s3097] sm:$0xff]
      %v7345 = vld [vmem:[%s3097 + $0x8] sm:$0xff]
      %v7346 = vld [vmem:[%s3097 + $0x10] sm:$0xff]
      %v7347 = vld [vmem:[%s3097 + $0x18] sm:$0xff]
      %v7348 = vld [vmem:[%s3097 + $0x20] sm:$0xff]
      %v7349 = vld [vmem:[%s3097 + $0x28] sm:$0xff]
      %v7350 = vld [vmem:[%s3097 + $0x30] sm:$0xff]
      %v7351 = vld [vmem:[%s3097 + $0x38] sm:$0xff]
      %v7352 = vld [vmem:[%s3097 + $0x40] sm:$0xff]
      %v7353 = vld [vmem:[%s3097 + $0x48] sm:$0xff]
      %v7354 = vld [vmem:[%s3097 + $0x50] sm:$0xff]
      %v7355 = vld [vmem:[%s3097 + $0x58] sm:$0xff]
      %v7368 = vunpack.c.l.b16 %v7344
      %v7369 = vunpack.c.h.b16 %v7344
      %v7370 = vunpack.c.l.b16 %v7345
      %v7371 = vunpack.c.h.b16 %v7345
      %v7372 = vunpack.c.l.b16 %v7346
      %v7373 = vunpack.c.h.b16 %v7346
      %v7374 = vunpack.c.l.b16 %v7347
      %v7375 = vunpack.c.h.b16 %v7347
      %v7376 = vunpack.c.l.b16 %v7348
      %v7377 = vunpack.c.h.b16 %v7348
      %v7378 = vunpack.c.l.b16 %v7349
      %v7379 = vunpack.c.h.b16 %v7349
      %v7380 = vunpack.c.l.b16 %v7350
      %v7381 = vunpack.c.h.b16 %v7350
      %v7382 = vunpack.c.l.b16 %v7351
      %v7383 = vunpack.c.h.b16 %v7351
      %v7384 = vunpack.c.l.b16 %v7352
      %v7385 = vunpack.c.h.b16 %v7352
      %v7386 = vunpack.c.l.b16 %v7353
      %v7387 = vunpack.c.h.b16 %v7353
      %v7388 = vunpack.c.l.b16 %v7354
      %v7389 = vunpack.c.h.b16 %v7354
      %v7390 = vunpack.c.l.b16 %v7355
      %v7391 = vunpack.c.h.b16 %v7355
      %v7392 = vpack.c.b16 %v7370, %v7368
      %v7393 = vpack.c.b16 %v7371, %v7369
      %v7394 = vpack.c.b16 %v7374, %v7372
      %v7395 = vpack.c.b16 %v7375, %v7373
      %v7396 = vpack.c.b16 %v7378, %v7376
      %v7397 = vpack.c.b16 %v7379, %v7377
      %v7398 = vpack.c.b16 %v7382, %v7380
      %v7399 = vpack.c.b16 %v7383, %v7381
      %v7400 = vpack.c.b16 %v7386, %v7384
      %v7401 = vpack.c.b16 %v7387, %v7385
      %v7402 = vpack.c.b16 %v7390, %v7388
      %v7403 = vpack.c.b16 %v7391, %v7389
      %7404 = vrot.lane.b32.xlu0 %v7392, 127
      %v7405 = vpop.permute.xlu0 %7404
      %7406 = vrot.lane.b32.xlu0 %v7393, 127
      %v7407 = vpop.permute.xlu0 %7406
      %7408 = vrot.lane.b32.xlu0 %v7394, 127
      %v7409 = vpop.permute.xlu0 %7408
      %7410 = vrot.lane.b32.xlu0 %v7395, 127
      %v7411 = vpop.permute.xlu0 %7410
      %7412 = vrot.lane.b32.xlu0 %v7396, 127
      %v7413 = vpop.permute.xlu0 %7412
      %7414 = vrot.lane.b32.xlu0 %v7397, 127
      %v7415 = vpop.permute.xlu0 %7414
      %7416 = vrot.lane.b32.xlu0 %v7398, 127
      %v7417 = vpop.permute.xlu0 %7416
      %7418 = vrot.lane.b32.xlu0 %v7399, 127
      %v7419 = vpop.permute.xlu0 %7418
      %7420 = vrot.lane.b32.xlu0 %v7400, 127
      %v7421 = vpop.permute.xlu0 %7420
      %7422 = vrot.lane.b32.xlu0 %v7401, 127
      %v7423 = vpop.permute.xlu0 %7422
      %7424 = vrot.lane.b32.xlu0 %v7402, 127
      %v7425 = vpop.permute.xlu0 %7424
      %7426 = vrot.lane.b32.xlu0 %v7403, 127
      %v7427 = vpop.permute.xlu0 %7426
      %v7428 = vsel %vm456, %v7405, %v7407
      %v7429 = vsel %vm456, %v7409, %v7411
      %v7430 = vsel %vm456, %v7413, %v7415
      %v7431 = vsel %vm456, %v7417, %v7419
      %v7432 = vsel %vm456, %v7421, %v7423
      %v7433 = vsel %vm456, %v7425, %v7427
      %7440 = vmatpush.bf16.msra.mxu0 0
      %7441 = vmatpush.bf16.msra.mxu0 0
      %7442 = vmatpush.bf16.msra.mxu0 %v7433
      %7443 = vmatpush.bf16.msra.mxu0 %v7432
      %7444 = vmatpush.bf16.msra.mxu0 %v7431
      %7445 = vmatpush.bf16.msra.mxu0 %v7430
      %7446 = vmatpush.bf16.msra.mxu0 %v7429
      %7447 = vmatpush.bf16.msra.mxu0 %v7428
      %7448 = vmatmul.bf16.gmra.mxu0 %v4823
      %v7449 = vpop.f32.mrf.mxu0
      %v7450 = vadd.f32 0.0, %v7449
      %v7451 = vpop.f32.mrf.mxu0
      %v7452 = vadd.f32 0.0, %v7451
      %7453 = vmatmul.bf16.gmra.mxu0 %v4826
      %v7454 = vpop.f32.mrf.mxu0
      %v7455 = vadd.f32 0.0, %v7454
      %v7456 = vpop.f32.mrf.mxu0
      %v7457 = vadd.f32 0.0, %v7456
      %7458 = vdwg.mxu0
      %7465 = vmatpush.bf16.msra.mxu0 0
      %7466 = vmatpush.bf16.msra.mxu0 0
      %7467 = vmatpush.bf16.msra.mxu0 %v7402
      %7468 = vmatpush.bf16.msra.mxu0 %v7400
      %7469 = vmatpush.bf16.msra.mxu0 %v7398
      %7470 = vmatpush.bf16.msra.mxu0 %v7396
      %7471 = vmatpush.bf16.msra.mxu0 %v7394
      %7472 = vmatpush.bf16.msra.mxu0 %v7392
      %7473 = vmatmul.bf16.gmra.mxu0 %v4864
      %v7474 = vpop.f32.mrf.mxu0
      %v7475 = vadd.f32 %v7450, %v7474
      %v7476 = vpop.f32.mrf.mxu0
      %v7477 = vadd.f32 %v7452, %v7476
      %7478 = vmatmul.bf16.gmra.mxu0 %v4867
      %v7479 = vpop.f32.mrf.mxu0
      %v7480 = vadd.f32 %v7455, %v7479
      %v7481 = vpop.f32.mrf.mxu0
      %v7482 = vadd.f32 %v7457, %v7481
      %7483 = vdwg.mxu0
      %7484 = vrot.lane.b32.xlu0 %v7392, 126
      %v7485 = vpop.permute.xlu0 %7484
      %7486 = vrot.lane.b32.xlu0 %v7393, 126
      %v7487 = vpop.permute.xlu0 %7486
      %7488 = vrot.lane.b32.xlu0 %v7394, 126
      %v7489 = vpop.permute.xlu0 %7488
      %7490 = vrot.lane.b32.xlu0 %v7395, 126
      %v7491 = vpop.permute.xlu0 %7490
      %7492 = vrot.lane.b32.xlu0 %v7396, 126
      %v7493 = vpop.permute.xlu0 %7492
      %7494 = vrot.lane.b32.xlu0 %v7397, 126
      %v7495 = vpop.permute.xlu0 %7494
      %7496 = vrot.lane.b32.xlu0 %v7398, 126
      %v7497 = vpop.permute.xlu0 %7496
      %7498 = vrot.lane.b32.xlu0 %v7399, 126
      %v7499 = vpop.permute.xlu0 %7498
      %7500 = vrot.lane.b32.xlu0 %v7400, 126
      %v7501 = vpop.permute.xlu0 %7500
      %7502 = vrot.lane.b32.xlu0 %v7401, 126
      %v7503 = vpop.permute.xlu0 %7502
      %7504 = vrot.lane.b32.xlu0 %v7402, 126
      %v7505 = vpop.permute.xlu0 %7504
      %7506 = vrot.lane.b32.xlu0 %v7403, 126
      %v7507 = vpop.permute.xlu0 %7506
      %v7508 = vsel %vm570, %v7485, %v7487
      %v7509 = vsel %vm570, %v7489, %v7491
      %v7510 = vsel %vm570, %v7493, %v7495
      %v7511 = vsel %vm570, %v7497, %v7499
      %v7512 = vsel %vm570, %v7501, %v7503
      %v7513 = vsel %vm570, %v7505, %v7507
      %7520 = vmatpush.bf16.msra.mxu0 0
      %7521 = vmatpush.bf16.msra.mxu0 0
      %7522 = vmatpush.bf16.msra.mxu0 %v7513
      %7523 = vmatpush.bf16.msra.mxu0 %v7512
      %7524 = vmatpush.bf16.msra.mxu0 %v7511
      %7525 = vmatpush.bf16.msra.mxu0 %v7510
      %7526 = vmatpush.bf16.msra.mxu0 %v7509
      %7527 = vmatpush.bf16.msra.mxu0 %v7508
      %7528 = vmatmul.bf16.gmra.mxu0 %v4935
      %v7529 = vpop.f32.mrf.mxu0
      %v7530 = vadd.f32 0.0, %v7529
      %v7531 = vpop.f32.mrf.mxu0
      %v7532 = vadd.f32 0.0, %v7531
      %7533 = vmatmul.bf16.gmra.mxu0 %v4938
      %v7534 = vpop.f32.mrf.mxu0
      %v7535 = vadd.f32 0.0, %v7534
      %v7536 = vpop.f32.mrf.mxu0
      %v7537 = vadd.f32 0.0, %v7536
      %7538 = vdwg.mxu0
      %v7539 = vadd.f32 %v7475, %v7530
      %v7540 = vadd.f32 %v7477, %v7532
      %v7541 = vadd.f32 %v7480, %v7535
      %v7542 = vadd.f32 %v7482, %v7537
      %v7543 = vld [vmem:[%s3371] sm:$0xff]
      %v7544 = vld [vmem:[%s3371 + $0x8] sm:$0xff]
      %v7545 = vld [vmem:[%s3371 + $0x10] sm:$0xff]
      %v7546 = vld [vmem:[%s3371 + $0x18] sm:$0xff]
      %v7547 = vld [vmem:[%s3371 + $0x20] sm:$0xff]
      %v7548 = vld [vmem:[%s3371 + $0x28] sm:$0xff]
      %v7549 = vld [vmem:[%s3371 + $0x30] sm:$0xff]
      %v7550 = vld [vmem:[%s3371 + $0x38] sm:$0xff]
      %v7551 = vadd.f32 %v7539, %v4974
      %v7552 = vadd.f32 %v7540, %v4979
      %v7553 = vadd.f32 %v7541, %v4984
      %v7554 = vadd.f32 %v7542, %v4989
      %7563 = vrot.lane.b32.xlu0 %v7543, 127
      %v7564 = vpop.permute.xlu0 %7563
      %7565 = vrot.lane.b32.xlu0 %v7544, 127
      %v7566 = vpop.permute.xlu0 %7565
      %7567 = vrot.lane.b32.xlu0 %v7545, 127
      %v7568 = vpop.permute.xlu0 %7567
      %7569 = vrot.lane.b32.xlu0 %v7546, 127
      %v7570 = vpop.permute.xlu0 %7569
      %7571 = vrot.lane.b32.xlu0 %v7547, 127
      %v7572 = vpop.permute.xlu0 %7571
      %7573 = vrot.lane.b32.xlu0 %v7548, 127
      %v7574 = vpop.permute.xlu0 %7573
      %7575 = vrot.lane.b32.xlu0 %v7549, 127
      %v7576 = vpop.permute.xlu0 %7575
      %7577 = vrot.lane.b32.xlu0 %v7550, 127
      %v7578 = vpop.permute.xlu0 %7577
      %v7579 = vsel %vm5019, %v7564, %v7566
      %v7580 = vsel %vm5019, %v7568, %v7570
      %v7581 = vsel %vm5019, %v7572, %v7574
      %v7582 = vsel %vm5019, %v7576, %v7578
      %v7587 = vadd.f32 %v7551, %v7579
      %v7588 = vadd.f32 %v7552, %v7580
      %v7589 = vadd.f32 %v7553, %v7581
      %v7590 = vadd.f32 %v7554, %v7582
      %v7591 = vmax.f32 %v7587, 0.0
      %v7592 = vmax.f32 %v7588, 0.0
      %v7593 = vmax.f32 %v7589, 0.0
      %v7594 = vmax.f32 %v7590, 0.0
      %s7595 = scalar_lea.vmem %s224, 320
      %7596 = vst [vmem:[%s7595] sm:$0xff] %v7591
      %7597 = vst [vmem:[%s7595 + $0x8] sm:$0xff] %v7592
      %7598 = vst [vmem:[%s7595 + $0x10] sm:$0xff] %v7593
      %7599 = vst [vmem:[%s7595 + $0x18] sm:$0xff] %v7594
      %v7600 = vld [vmem:[%s3366] sm:$0xff]
      %v7601 = vld [vmem:[%s3366 + $0x8] sm:$0xff]
      %v7602 = vld [vmem:[%s3366 + $0x10] sm:$0xff]
      %v7603 = vld [vmem:[%s3366 + $0x18] sm:$0xff]
      %v7604 = vld [vmem:[%s3366 + $0x20] sm:$0xff]
      %v7605 = vld [vmem:[%s3366 + $0x28] sm:$0xff]
      %v7606 = vld [vmem:[%s3366 + $0x30] sm:$0xff]
      %v7607 = vld [vmem:[%s3366 + $0x38] sm:$0xff]
      %v7608 = vld [vmem:[%s3366 + $0x40] sm:$0xff]
      %v7609 = vld [vmem:[%s3366 + $0x48] sm:$0xff]
      %v7610 = vld [vmem:[%s3366 + $0x50] sm:$0xff]
      %v7611 = vld [vmem:[%s3366 + $0x58] sm:$0xff]
      %v7624 = vunpack.c.l.b16 %v7600
      %v7625 = vunpack.c.h.b16 %v7600
      %v7626 = vunpack.c.l.b16 %v7601
      %v7627 = vunpack.c.h.b16 %v7601
      %v7628 = vunpack.c.l.b16 %v7602
      %v7629 = vunpack.c.h.b16 %v7602
      %v7630 = vunpack.c.l.b16 %v7603
      %v7631 = vunpack.c.h.b16 %v7603
      %v7632 = vunpack.c.l.b16 %v7604
      %v7633 = vunpack.c.h.b16 %v7604
      %v7634 = vunpack.c.l.b16 %v7605
      %v7635 = vunpack.c.h.b16 %v7605
      %v7636 = vunpack.c.l.b16 %v7606
      %v7637 = vunpack.c.h.b16 %v7606
      %v7638 = vunpack.c.l.b16 %v7607
      %v7639 = vunpack.c.h.b16 %v7607
      %v7640 = vunpack.c.l.b16 %v7608
      %v7641 = vunpack.c.h.b16 %v7608
      %v7642 = vunpack.c.l.b16 %v7609
      %v7643 = vunpack.c.h.b16 %v7609
      %v7644 = vunpack.c.l.b16 %v7610
      %v7645 = vunpack.c.h.b16 %v7610
      %v7646 = vunpack.c.l.b16 %v7611
      %v7647 = vunpack.c.h.b16 %v7611
      %v7648 = vpack.c.b16 %v7626, %v7624
      %v7649 = vpack.c.b16 %v7627, %v7625
      %v7650 = vpack.c.b16 %v7630, %v7628
      %v7651 = vpack.c.b16 %v7631, %v7629
      %v7652 = vpack.c.b16 %v7634, %v7632
      %v7653 = vpack.c.b16 %v7635, %v7633
      %v7654 = vpack.c.b16 %v7638, %v7636
      %v7655 = vpack.c.b16 %v7639, %v7637
      %v7656 = vpack.c.b16 %v7642, %v7640
      %v7657 = vpack.c.b16 %v7643, %v7641
      %v7658 = vpack.c.b16 %v7646, %v7644
      %v7659 = vpack.c.b16 %v7647, %v7645
      %7660 = vrot.lane.b32.xlu0 %v7648, 127
      %v7661 = vpop.permute.xlu0 %7660
      %7662 = vrot.lane.b32.xlu0 %v7649, 127
      %v7663 = vpop.permute.xlu0 %7662
      %7664 = vrot.lane.b32.xlu0 %v7650, 127
      %v7665 = vpop.permute.xlu0 %7664
      %7666 = vrot.lane.b32.xlu0 %v7651, 127
      %v7667 = vpop.permute.xlu0 %7666
      %7668 = vrot.lane.b32.xlu0 %v7652, 127
      %v7669 = vpop.permute.xlu0 %7668
      %7670 = vrot.lane.b32.xlu0 %v7653, 127
      %v7671 = vpop.permute.xlu0 %7670
      %7672 = vrot.lane.b32.xlu0 %v7654, 127
      %v7673 = vpop.permute.xlu0 %7672
      %7674 = vrot.lane.b32.xlu0 %v7655, 127
      %v7675 = vpop.permute.xlu0 %7674
      %7676 = vrot.lane.b32.xlu0 %v7656, 127
      %v7677 = vpop.permute.xlu0 %7676
      %7678 = vrot.lane.b32.xlu0 %v7657, 127
      %v7679 = vpop.permute.xlu0 %7678
      %7680 = vrot.lane.b32.xlu0 %v7658, 127
      %v7681 = vpop.permute.xlu0 %7680
      %7682 = vrot.lane.b32.xlu0 %v7659, 127
      %v7683 = vpop.permute.xlu0 %7682
      %v7684 = vsel %vm456, %v7661, %v7663
      %v7685 = vsel %vm456, %v7665, %v7667
      %v7686 = vsel %vm456, %v7669, %v7671
      %v7687 = vsel %vm456, %v7673, %v7675
      %v7688 = vsel %vm456, %v7677, %v7679
      %v7689 = vsel %vm456, %v7681, %v7683
      %7696 = vmatpush.bf16.msra.mxu0 0
      %7697 = vmatpush.bf16.msra.mxu0 0
      %7698 = vmatpush.bf16.msra.mxu0 %v7689
      %7699 = vmatpush.bf16.msra.mxu0 %v7688
      %7700 = vmatpush.bf16.msra.mxu0 %v7687
      %7701 = vmatpush.bf16.msra.mxu0 %v7686
      %7702 = vmatpush.bf16.msra.mxu0 %v7685
      %7703 = vmatpush.bf16.msra.mxu0 %v7684
      %7704 = vmatmul.bf16.gmra.mxu0 %v4823
      %v7705 = vpop.f32.mrf.mxu0
      %v7706 = vadd.f32 0.0, %v7705
      %v7707 = vpop.f32.mrf.mxu0
      %v7708 = vadd.f32 0.0, %v7707
      %7709 = vmatmul.bf16.gmra.mxu0 %v4826
      %v7710 = vpop.f32.mrf.mxu0
      %v7711 = vadd.f32 0.0, %v7710
      %v7712 = vpop.f32.mrf.mxu0
      %v7713 = vadd.f32 0.0, %v7712
      %7714 = vdwg.mxu0
      %7721 = vmatpush.bf16.msra.mxu0 0
      %7722 = vmatpush.bf16.msra.mxu0 0
      %7723 = vmatpush.bf16.msra.mxu0 %v7658
      %7724 = vmatpush.bf16.msra.mxu0 %v7656
      %7725 = vmatpush.bf16.msra.mxu0 %v7654
      %7726 = vmatpush.bf16.msra.mxu0 %v7652
      %7727 = vmatpush.bf16.msra.mxu0 %v7650
      %7728 = vmatpush.bf16.msra.mxu0 %v7648
      %7729 = vmatmul.bf16.gmra.mxu0 %v4864
      %v7730 = vpop.f32.mrf.mxu0
      %v7731 = vadd.f32 %v7706, %v7730
      %v7732 = vpop.f32.mrf.mxu0
      %v7733 = vadd.f32 %v7708, %v7732
      %7734 = vmatmul.bf16.gmra.mxu0 %v4867
      %v7735 = vpop.f32.mrf.mxu0
      %v7736 = vadd.f32 %v7711, %v7735
      %v7737 = vpop.f32.mrf.mxu0
      %v7738 = vadd.f32 %v7713, %v7737
      %7739 = vdwg.mxu0
      %7740 = vrot.lane.b32.xlu0 %v7648, 126
      %v7741 = vpop.permute.xlu0 %7740
      %7742 = vrot.lane.b32.xlu0 %v7649, 126
      %v7743 = vpop.permute.xlu0 %7742
      %7744 = vrot.lane.b32.xlu0 %v7650, 126
      %v7745 = vpop.permute.xlu0 %7744
      %7746 = vrot.lane.b32.xlu0 %v7651, 126
      %v7747 = vpop.permute.xlu0 %7746
      %7748 = vrot.lane.b32.xlu0 %v7652, 126
      %v7749 = vpop.permute.xlu0 %7748
      %7750 = vrot.lane.b32.xlu0 %v7653, 126
      %v7751 = vpop.permute.xlu0 %7750
      %7752 = vrot.lane.b32.xlu0 %v7654, 126
      %v7753 = vpop.permute.xlu0 %7752
      %7754 = vrot.lane.b32.xlu0 %v7655, 126
      %v7755 = vpop.permute.xlu0 %7754
      %7756 = vrot.lane.b32.xlu0 %v7656, 126
      %v7757 = vpop.permute.xlu0 %7756
      %7758 = vrot.lane.b32.xlu0 %v7657, 126
      %v7759 = vpop.permute.xlu0 %7758
      %7760 = vrot.lane.b32.xlu0 %v7658, 126
      %v7761 = vpop.permute.xlu0 %7760
      %7762 = vrot.lane.b32.xlu0 %v7659, 126
      %v7763 = vpop.permute.xlu0 %7762
      %v7764 = vsel %vm570, %v7741, %v7743
      %v7765 = vsel %vm570, %v7745, %v7747
      %v7766 = vsel %vm570, %v7749, %v7751
      %v7767 = vsel %vm570, %v7753, %v7755
      %v7768 = vsel %vm570, %v7757, %v7759
      %v7769 = vsel %vm570, %v7761, %v7763
      %7776 = vmatpush.bf16.msra.mxu0 0
      %7777 = vmatpush.bf16.msra.mxu0 0
      %7778 = vmatpush.bf16.msra.mxu0 %v7769
      %7779 = vmatpush.bf16.msra.mxu0 %v7768
      %7780 = vmatpush.bf16.msra.mxu0 %v7767
      %7781 = vmatpush.bf16.msra.mxu0 %v7766
      %7782 = vmatpush.bf16.msra.mxu0 %v7765
      %7783 = vmatpush.bf16.msra.mxu0 %v7764
      %7784 = vmatmul.bf16.gmra.mxu0 %v4935
      %v7785 = vpop.f32.mrf.mxu0
      %v7786 = vadd.f32 0.0, %v7785
      %v7787 = vpop.f32.mrf.mxu0
      %v7788 = vadd.f32 0.0, %v7787
      %7789 = vmatmul.bf16.gmra.mxu0 %v4938
      %v7790 = vpop.f32.mrf.mxu0
      %v7791 = vadd.f32 0.0, %v7790
      %v7792 = vpop.f32.mrf.mxu0
      %v7793 = vadd.f32 0.0, %v7792
      %7794 = vdwg.mxu0
      %v7795 = vadd.f32 %v7731, %v7786
      %v7796 = vadd.f32 %v7733, %v7788
      %v7797 = vadd.f32 %v7736, %v7791
      %v7798 = vadd.f32 %v7738, %v7793
      %v7799 = vld [vmem:[%s3640] sm:$0xff]
      %v7800 = vld [vmem:[%s3640 + $0x8] sm:$0xff]
      %v7801 = vld [vmem:[%s3640 + $0x10] sm:$0xff]
      %v7802 = vld [vmem:[%s3640 + $0x18] sm:$0xff]
      %v7803 = vld [vmem:[%s3640 + $0x20] sm:$0xff]
      %v7804 = vld [vmem:[%s3640 + $0x28] sm:$0xff]
      %v7805 = vld [vmem:[%s3640 + $0x30] sm:$0xff]
      %v7806 = vld [vmem:[%s3640 + $0x38] sm:$0xff]
      %v7807 = vadd.f32 %v7795, %v4974
      %v7808 = vadd.f32 %v7796, %v4979
      %v7809 = vadd.f32 %v7797, %v4984
      %v7810 = vadd.f32 %v7798, %v4989
      %7819 = vrot.lane.b32.xlu0 %v7799, 127
      %v7820 = vpop.permute.xlu0 %7819
      %7821 = vrot.lane.b32.xlu0 %v7800, 127
      %v7822 = vpop.permute.xlu0 %7821
      %7823 = vrot.lane.b32.xlu0 %v7801, 127
      %v7824 = vpop.permute.xlu0 %7823
      %7825 = vrot.lane.b32.xlu0 %v7802, 127
      %v7826 = vpop.permute.xlu0 %7825
      %7827 = vrot.lane.b32.xlu0 %v7803, 127
      %v7828 = vpop.permute.xlu0 %7827
      %7829 = vrot.lane.b32.xlu0 %v7804, 127
      %v7830 = vpop.permute.xlu0 %7829
      %7831 = vrot.lane.b32.xlu0 %v7805, 127
      %v7832 = vpop.permute.xlu0 %7831
      %7833 = vrot.lane.b32.xlu0 %v7806, 127
      %v7834 = vpop.permute.xlu0 %7833
      %v7835 = vsel %vm5019, %v7820, %v7822
      %v7836 = vsel %vm5019, %v7824, %v7826
      %v7837 = vsel %vm5019, %v7828, %v7830
      %v7838 = vsel %vm5019, %v7832, %v7834
      %v7843 = vadd.f32 %v7807, %v7835
      %v7844 = vadd.f32 %v7808, %v7836
      %v7845 = vadd.f32 %v7809, %v7837
      %v7846 = vadd.f32 %v7810, %v7838
      %v7847 = vmax.f32 %v7843, 0.0
      %v7848 = vmax.f32 %v7844, 0.0
      %v7849 = vmax.f32 %v7845, 0.0
      %v7850 = vmax.f32 %v7846, 0.0
      %s7851 = scalar_lea.vmem %s224, 352
      %7852 = vst [vmem:[%s7851] sm:$0xff] %v7847
      %7853 = vst [vmem:[%s7851 + $0x8] sm:$0xff] %v7848
      %7854 = vst [vmem:[%s7851 + $0x10] sm:$0xff] %v7849
      %7855 = vst [vmem:[%s7851 + $0x18] sm:$0xff] %v7850
      %v7856 = vld [vmem:[%s3635] sm:$0xff]
      %v7857 = vld [vmem:[%s3635 + $0x8] sm:$0xff]
      %v7858 = vld [vmem:[%s3635 + $0x10] sm:$0xff]
      %v7859 = vld [vmem:[%s3635 + $0x18] sm:$0xff]
      %v7860 = vld [vmem:[%s3635 + $0x20] sm:$0xff]
      %v7861 = vld [vmem:[%s3635 + $0x28] sm:$0xff]
      %v7862 = vld [vmem:[%s3635 + $0x30] sm:$0xff]
      %v7863 = vld [vmem:[%s3635 + $0x38] sm:$0xff]
      %v7864 = vld [vmem:[%s3635 + $0x40] sm:$0xff]
      %v7865 = vld [vmem:[%s3635 + $0x48] sm:$0xff]
      %v7866 = vld [vmem:[%s3635 + $0x50] sm:$0xff]
      %v7867 = vld [vmem:[%s3635 + $0x58] sm:$0xff]
      %v7880 = vunpack.c.l.b16 %v7856
      %v7881 = vunpack.c.h.b16 %v7856
      %v7882 = vunpack.c.l.b16 %v7857
      %v7883 = vunpack.c.h.b16 %v7857
      %v7884 = vunpack.c.l.b16 %v7858
      %v7885 = vunpack.c.h.b16 %v7858
      %v7886 = vunpack.c.l.b16 %v7859
      %v7887 = vunpack.c.h.b16 %v7859
      %v7888 = vunpack.c.l.b16 %v7860
      %v7889 = vunpack.c.h.b16 %v7860
      %v7890 = vunpack.c.l.b16 %v7861
      %v7891 = vunpack.c.h.b16 %v7861
      %v7892 = vunpack.c.l.b16 %v7862
      %v7893 = vunpack.c.h.b16 %v7862
      %v7894 = vunpack.c.l.b16 %v7863
      %v7895 = vunpack.c.h.b16 %v7863
      %v7896 = vunpack.c.l.b16 %v7864
      %v7897 = vunpack.c.h.b16 %v7864
      %v7898 = vunpack.c.l.b16 %v7865
      %v7899 = vunpack.c.h.b16 %v7865
      %v7900 = vunpack.c.l.b16 %v7866
      %v7901 = vunpack.c.h.b16 %v7866
      %v7902 = vunpack.c.l.b16 %v7867
      %v7903 = vunpack.c.h.b16 %v7867
      %v7904 = vpack.c.b16 %v7882, %v7880
      %v7905 = vpack.c.b16 %v7883, %v7881
      %v7906 = vpack.c.b16 %v7886, %v7884
      %v7907 = vpack.c.b16 %v7887, %v7885
      %v7908 = vpack.c.b16 %v7890, %v7888
      %v7909 = vpack.c.b16 %v7891, %v7889
      %v7910 = vpack.c.b16 %v7894, %v7892
      %v7911 = vpack.c.b16 %v7895, %v7893
      %v7912 = vpack.c.b16 %v7898, %v7896
      %v7913 = vpack.c.b16 %v7899, %v7897
      %v7914 = vpack.c.b16 %v7902, %v7900
      %v7915 = vpack.c.b16 %v7903, %v7901
      %7916 = vrot.lane.b32.xlu0 %v7904, 127
      %v7917 = vpop.permute.xlu0 %7916
      %7918 = vrot.lane.b32.xlu0 %v7905, 127
      %v7919 = vpop.permute.xlu0 %7918
      %7920 = vrot.lane.b32.xlu0 %v7906, 127
      %v7921 = vpop.permute.xlu0 %7920
      %7922 = vrot.lane.b32.xlu0 %v7907, 127
      %v7923 = vpop.permute.xlu0 %7922
      %7924 = vrot.lane.b32.xlu0 %v7908, 127
      %v7925 = vpop.permute.xlu0 %7924
      %7926 = vrot.lane.b32.xlu0 %v7909, 127
      %v7927 = vpop.permute.xlu0 %7926
      %7928 = vrot.lane.b32.xlu0 %v7910, 127
      %v7929 = vpop.permute.xlu0 %7928
      %7930 = vrot.lane.b32.xlu0 %v7911, 127
      %v7931 = vpop.permute.xlu0 %7930
      %7932 = vrot.lane.b32.xlu0 %v7912, 127
      %v7933 = vpop.permute.xlu0 %7932
      %7934 = vrot.lane.b32.xlu0 %v7913, 127
      %v7935 = vpop.permute.xlu0 %7934
      %7936 = vrot.lane.b32.xlu0 %v7914, 127
      %v7937 = vpop.permute.xlu0 %7936
      %7938 = vrot.lane.b32.xlu0 %v7915, 127
      %v7939 = vpop.permute.xlu0 %7938
      %v7940 = vsel %vm456, %v7917, %v7919
      %v7941 = vsel %vm456, %v7921, %v7923
      %v7942 = vsel %vm456, %v7925, %v7927
      %v7943 = vsel %vm456, %v7929, %v7931
      %v7944 = vsel %vm456, %v7933, %v7935
      %v7945 = vsel %vm456, %v7937, %v7939
      %7952 = vmatpush.bf16.msra.mxu0 0
      %7953 = vmatpush.bf16.msra.mxu0 0
      %7954 = vmatpush.bf16.msra.mxu0 %v7945
      %7955 = vmatpush.bf16.msra.mxu0 %v7944
      %7956 = vmatpush.bf16.msra.mxu0 %v7943
      %7957 = vmatpush.bf16.msra.mxu0 %v7942
      %7958 = vmatpush.bf16.msra.mxu0 %v7941
      %7959 = vmatpush.bf16.msra.mxu0 %v7940
      %7960 = vmatmul.bf16.gmra.mxu0 %v4823
      %v7961 = vpop.f32.mrf.mxu0
      %v7962 = vadd.f32 0.0, %v7961
      %v7963 = vpop.f32.mrf.mxu0
      %v7964 = vadd.f32 0.0, %v7963
      %7965 = vmatmul.bf16.gmra.mxu0 %v4826
      %v7966 = vpop.f32.mrf.mxu0
      %v7967 = vadd.f32 0.0, %v7966
      %v7968 = vpop.f32.mrf.mxu0
      %v7969 = vadd.f32 0.0, %v7968
      %7970 = vdwg.mxu0
      %7977 = vmatpush.bf16.msra.mxu0 0
      %7978 = vmatpush.bf16.msra.mxu0 0
      %7979 = vmatpush.bf16.msra.mxu0 %v7914
      %7980 = vmatpush.bf16.msra.mxu0 %v7912
      %7981 = vmatpush.bf16.msra.mxu0 %v7910
      %7982 = vmatpush.bf16.msra.mxu0 %v7908
      %7983 = vmatpush.bf16.msra.mxu0 %v7906
      %7984 = vmatpush.bf16.msra.mxu0 %v7904
      %7985 = vmatmul.bf16.gmra.mxu0 %v4864
      %v7986 = vpop.f32.mrf.mxu0
      %v7987 = vadd.f32 %v7962, %v7986
      %v7988 = vpop.f32.mrf.mxu0
      %v7989 = vadd.f32 %v7964, %v7988
      %7990 = vmatmul.bf16.gmra.mxu0 %v4867
      %v7991 = vpop.f32.mrf.mxu0
      %v7992 = vadd.f32 %v7967, %v7991
      %v7993 = vpop.f32.mrf.mxu0
      %v7994 = vadd.f32 %v7969, %v7993
      %7995 = vdwg.mxu0
      %7996 = vrot.lane.b32.xlu0 %v7904, 126
      %v7997 = vpop.permute.xlu0 %7996
      %7998 = vrot.lane.b32.xlu0 %v7905, 126
      %v7999 = vpop.permute.xlu0 %7998
      %8000 = vrot.lane.b32.xlu0 %v7906, 126
      %v8001 = vpop.permute.xlu0 %8000
      %8002 = vrot.lane.b32.xlu0 %v7907, 126
      %v8003 = vpop.permute.xlu0 %8002
      %8004 = vrot.lane.b32.xlu0 %v7908, 126
      %v8005 = vpop.permute.xlu0 %8004
      %8006 = vrot.lane.b32.xlu0 %v7909, 126
      %v8007 = vpop.permute.xlu0 %8006
      %8008 = vrot.lane.b32.xlu0 %v7910, 126
      %v8009 = vpop.permute.xlu0 %8008
      %8010 = vrot.lane.b32.xlu0 %v7911, 126
      %v8011 = vpop.permute.xlu0 %8010
      %8012 = vrot.lane.b32.xlu0 %v7912, 126
      %v8013 = vpop.permute.xlu0 %8012
      %8014 = vrot.lane.b32.xlu0 %v7913, 126
      %v8015 = vpop.permute.xlu0 %8014
      %8016 = vrot.lane.b32.xlu0 %v7914, 126
      %v8017 = vpop.permute.xlu0 %8016
      %8018 = vrot.lane.b32.xlu0 %v7915, 126
      %v8019 = vpop.permute.xlu0 %8018
      %v8020 = vsel %vm570, %v7997, %v7999
      %v8021 = vsel %vm570, %v8001, %v8003
      %v8022 = vsel %vm570, %v8005, %v8007
      %v8023 = vsel %vm570, %v8009, %v8011
      %v8024 = vsel %vm570, %v8013, %v8015
      %v8025 = vsel %vm570, %v8017, %v8019
      %8032 = vmatpush.bf16.msra.mxu0 0
      %8033 = vmatpush.bf16.msra.mxu0 0
      %8034 = vmatpush.bf16.msra.mxu0 %v8025
      %8035 = vmatpush.bf16.msra.mxu0 %v8024
      %8036 = vmatpush.bf16.msra.mxu0 %v8023
      %8037 = vmatpush.bf16.msra.mxu0 %v8022
      %8038 = vmatpush.bf16.msra.mxu0 %v8021
      %8039 = vmatpush.bf16.msra.mxu0 %v8020
      %8040 = vmatmul.bf16.gmra.mxu0 %v4935
      %v8041 = vpop.f32.mrf.mxu0
      %v8042 = vadd.f32 0.0, %v8041
      %v8043 = vpop.f32.mrf.mxu0
      %v8044 = vadd.f32 0.0, %v8043
      %8045 = vmatmul.bf16.gmra.mxu0 %v4938
      %v8046 = vpop.f32.mrf.mxu0
      %v8047 = vadd.f32 0.0, %v8046
      %v8048 = vpop.f32.mrf.mxu0
      %v8049 = vadd.f32 0.0, %v8048
      %8050 = vdwg.mxu0
      %v8051 = vadd.f32 %v7987, %v8042
      %v8052 = vadd.f32 %v7989, %v8044
      %v8053 = vadd.f32 %v7992, %v8047
      %v8054 = vadd.f32 %v7994, %v8049
      %v8055 = vld [vmem:[%s3909] sm:$0xff]
      %v8056 = vld [vmem:[%s3909 + $0x8] sm:$0xff]
      %v8057 = vld [vmem:[%s3909 + $0x10] sm:$0xff]
      %v8058 = vld [vmem:[%s3909 + $0x18] sm:$0xff]
      %v8059 = vld [vmem:[%s3909 + $0x20] sm:$0xff]
      %v8060 = vld [vmem:[%s3909 + $0x28] sm:$0xff]
      %v8061 = vld [vmem:[%s3909 + $0x30] sm:$0xff]
      %v8062 = vld [vmem:[%s3909 + $0x38] sm:$0xff]
      %v8063 = vadd.f32 %v8051, %v4974
      %v8064 = vadd.f32 %v8052, %v4979
      %v8065 = vadd.f32 %v8053, %v4984
      %v8066 = vadd.f32 %v8054, %v4989
      %8075 = vrot.lane.b32.xlu0 %v8055, 127
      %v8076 = vpop.permute.xlu0 %8075
      %8077 = vrot.lane.b32.xlu0 %v8056, 127
      %v8078 = vpop.permute.xlu0 %8077
      %8079 = vrot.lane.b32.xlu0 %v8057, 127
      %v8080 = vpop.permute.xlu0 %8079
      %8081 = vrot.lane.b32.xlu0 %v8058, 127
      %v8082 = vpop.permute.xlu0 %8081
      %8083 = vrot.lane.b32.xlu0 %v8059, 127
      %v8084 = vpop.permute.xlu0 %8083
      %8085 = vrot.lane.b32.xlu0 %v8060, 127
      %v8086 = vpop.permute.xlu0 %8085
      %8087 = vrot.lane.b32.xlu0 %v8061, 127
      %v8088 = vpop.permute.xlu0 %8087
      %8089 = vrot.lane.b32.xlu0 %v8062, 127
      %v8090 = vpop.permute.xlu0 %8089
      %v8091 = vsel %vm5019, %v8076, %v8078
      %v8092 = vsel %vm5019, %v8080, %v8082
      %v8093 = vsel %vm5019, %v8084, %v8086
      %v8094 = vsel %vm5019, %v8088, %v8090
      %v8099 = vadd.f32 %v8063, %v8091
      %v8100 = vadd.f32 %v8064, %v8092
      %v8101 = vadd.f32 %v8065, %v8093
      %v8102 = vadd.f32 %v8066, %v8094
      %v8103 = vmax.f32 %v8099, 0.0
      %v8104 = vmax.f32 %v8100, 0.0
      %v8105 = vmax.f32 %v8101, 0.0
      %v8106 = vmax.f32 %v8102, 0.0
      %s8107 = scalar_lea.vmem %s224, 384
      %8108 = vst [vmem:[%s8107] sm:$0xff] %v8103
      %8109 = vst [vmem:[%s8107 + $0x8] sm:$0xff] %v8104
      %8110 = vst [vmem:[%s8107 + $0x10] sm:$0xff] %v8105
      %8111 = vst [vmem:[%s8107 + $0x18] sm:$0xff] %v8106
      %v8112 = vld [vmem:[%s3904] sm:$0xff]
      %v8113 = vld [vmem:[%s3904 + $0x8] sm:$0xff]
      %v8114 = vld [vmem:[%s3904 + $0x10] sm:$0xff]
      %v8115 = vld [vmem:[%s3904 + $0x18] sm:$0xff]
      %v8116 = vld [vmem:[%s3904 + $0x20] sm:$0xff]
      %v8117 = vld [vmem:[%s3904 + $0x28] sm:$0xff]
      %v8118 = vld [vmem:[%s3904 + $0x30] sm:$0xff]
      %v8119 = vld [vmem:[%s3904 + $0x38] sm:$0xff]
      %v8120 = vld [vmem:[%s3904 + $0x40] sm:$0xff]
      %v8121 = vld [vmem:[%s3904 + $0x48] sm:$0xff]
      %v8122 = vld [vmem:[%s3904 + $0x50] sm:$0xff]
      %v8123 = vld [vmem:[%s3904 + $0x58] sm:$0xff]
      %v8136 = vunpack.c.l.b16 %v8112
      %v8137 = vunpack.c.h.b16 %v8112
      %v8138 = vunpack.c.l.b16 %v8113
      %v8139 = vunpack.c.h.b16 %v8113
      %v8140 = vunpack.c.l.b16 %v8114
      %v8141 = vunpack.c.h.b16 %v8114
      %v8142 = vunpack.c.l.b16 %v8115
      %v8143 = vunpack.c.h.b16 %v8115
      %v8144 = vunpack.c.l.b16 %v8116
      %v8145 = vunpack.c.h.b16 %v8116
      %v8146 = vunpack.c.l.b16 %v8117
      %v8147 = vunpack.c.h.b16 %v8117
      %v8148 = vunpack.c.l.b16 %v8118
      %v8149 = vunpack.c.h.b16 %v8118
      %v8150 = vunpack.c.l.b16 %v8119
      %v8151 = vunpack.c.h.b16 %v8119
      %v8152 = vunpack.c.l.b16 %v8120
      %v8153 = vunpack.c.h.b16 %v8120
      %v8154 = vunpack.c.l.b16 %v8121
      %v8155 = vunpack.c.h.b16 %v8121
      %v8156 = vunpack.c.l.b16 %v8122
      %v8157 = vunpack.c.h.b16 %v8122
      %v8158 = vunpack.c.l.b16 %v8123
      %v8159 = vunpack.c.h.b16 %v8123
      %v8160 = vpack.c.b16 %v8138, %v8136
      %v8161 = vpack.c.b16 %v8139, %v8137
      %v8162 = vpack.c.b16 %v8142, %v8140
      %v8163 = vpack.c.b16 %v8143, %v8141
      %v8164 = vpack.c.b16 %v8146, %v8144
      %v8165 = vpack.c.b16 %v8147, %v8145
      %v8166 = vpack.c.b16 %v8150, %v8148
      %v8167 = vpack.c.b16 %v8151, %v8149
      %v8168 = vpack.c.b16 %v8154, %v8152
      %v8169 = vpack.c.b16 %v8155, %v8153
      %v8170 = vpack.c.b16 %v8158, %v8156
      %v8171 = vpack.c.b16 %v8159, %v8157
      %8172 = vrot.lane.b32.xlu0 %v8160, 127
      %v8173 = vpop.permute.xlu0 %8172
      %8174 = vrot.lane.b32.xlu0 %v8161, 127
      %v8175 = vpop.permute.xlu0 %8174
      %8176 = vrot.lane.b32.xlu0 %v8162, 127
      %v8177 = vpop.permute.xlu0 %8176
      %8178 = vrot.lane.b32.xlu0 %v8163, 127
      %v8179 = vpop.permute.xlu0 %8178
      %8180 = vrot.lane.b32.xlu0 %v8164, 127
      %v8181 = vpop.permute.xlu0 %8180
      %8182 = vrot.lane.b32.xlu0 %v8165, 127
      %v8183 = vpop.permute.xlu0 %8182
      %8184 = vrot.lane.b32.xlu0 %v8166, 127
      %v8185 = vpop.permute.xlu0 %8184
      %8186 = vrot.lane.b32.xlu0 %v8167, 127
      %v8187 = vpop.permute.xlu0 %8186
      %8188 = vrot.lane.b32.xlu0 %v8168, 127
      %v8189 = vpop.permute.xlu0 %8188
      %8190 = vrot.lane.b32.xlu0 %v8169, 127
      %v8191 = vpop.permute.xlu0 %8190
      %8192 = vrot.lane.b32.xlu0 %v8170, 127
      %v8193 = vpop.permute.xlu0 %8192
      %8194 = vrot.lane.b32.xlu0 %v8171, 127
      %v8195 = vpop.permute.xlu0 %8194
      %v8196 = vsel %vm456, %v8173, %v8175
      %v8197 = vsel %vm456, %v8177, %v8179
      %v8198 = vsel %vm456, %v8181, %v8183
      %v8199 = vsel %vm456, %v8185, %v8187
      %v8200 = vsel %vm456, %v8189, %v8191
      %v8201 = vsel %vm456, %v8193, %v8195
      %8208 = vmatpush.bf16.msra.mxu0 0
      %8209 = vmatpush.bf16.msra.mxu0 0
      %8210 = vmatpush.bf16.msra.mxu0 %v8201
      %8211 = vmatpush.bf16.msra.mxu0 %v8200
      %8212 = vmatpush.bf16.msra.mxu0 %v8199
      %8213 = vmatpush.bf16.msra.mxu0 %v8198
      %8214 = vmatpush.bf16.msra.mxu0 %v8197
      %8215 = vmatpush.bf16.msra.mxu0 %v8196
      %8216 = vmatmul.bf16.gmra.mxu0 %v4823
      %v8217 = vpop.f32.mrf.mxu0
      %v8218 = vadd.f32 0.0, %v8217
      %v8219 = vpop.f32.mrf.mxu0
      %v8220 = vadd.f32 0.0, %v8219
      %8221 = vmatmul.bf16.gmra.mxu0 %v4826
      %v8222 = vpop.f32.mrf.mxu0
      %v8223 = vadd.f32 0.0, %v8222
      %v8224 = vpop.f32.mrf.mxu0
      %v8225 = vadd.f32 0.0, %v8224
      %8226 = vdwg.mxu0
      %8233 = vmatpush.bf16.msra.mxu0 0
      %8234 = vmatpush.bf16.msra.mxu0 0
      %8235 = vmatpush.bf16.msra.mxu0 %v8170
      %8236 = vmatpush.bf16.msra.mxu0 %v8168
      %8237 = vmatpush.bf16.msra.mxu0 %v8166
      %8238 = vmatpush.bf16.msra.mxu0 %v8164
      %8239 = vmatpush.bf16.msra.mxu0 %v8162
      %8240 = vmatpush.bf16.msra.mxu0 %v8160
      %8241 = vmatmul.bf16.gmra.mxu0 %v4864
      %v8242 = vpop.f32.mrf.mxu0
      %v8243 = vadd.f32 %v8218, %v8242
      %v8244 = vpop.f32.mrf.mxu0
      %v8245 = vadd.f32 %v8220, %v8244
      %8246 = vmatmul.bf16.gmra.mxu0 %v4867
      %v8247 = vpop.f32.mrf.mxu0
      %v8248 = vadd.f32 %v8223, %v8247
      %v8249 = vpop.f32.mrf.mxu0
      %v8250 = vadd.f32 %v8225, %v8249
      %8251 = vdwg.mxu0
      %8252 = vrot.lane.b32.xlu0 %v8160, 126
      %v8253 = vpop.permute.xlu0 %8252
      %8254 = vrot.lane.b32.xlu0 %v8161, 126
      %v8255 = vpop.permute.xlu0 %8254
      %8256 = vrot.lane.b32.xlu0 %v8162, 126
      %v8257 = vpop.permute.xlu0 %8256
      %8258 = vrot.lane.b32.xlu0 %v8163, 126
      %v8259 = vpop.permute.xlu0 %8258
      %8260 = vrot.lane.b32.xlu0 %v8164, 126
      %v8261 = vpop.permute.xlu0 %8260
      %8262 = vrot.lane.b32.xlu0 %v8165, 126
      %v8263 = vpop.permute.xlu0 %8262
      %8264 = vrot.lane.b32.xlu0 %v8166, 126
      %v8265 = vpop.permute.xlu0 %8264
      %8266 = vrot.lane.b32.xlu0 %v8167, 126
      %v8267 = vpop.permute.xlu0 %8266
      %8268 = vrot.lane.b32.xlu0 %v8168, 126
      %v8269 = vpop.permute.xlu0 %8268
      %8270 = vrot.lane.b32.xlu0 %v8169, 126
      %v8271 = vpop.permute.xlu0 %8270
      %8272 = vrot.lane.b32.xlu0 %v8170, 126
      %v8273 = vpop.permute.xlu0 %8272
      %8274 = vrot.lane.b32.xlu0 %v8171, 126
      %v8275 = vpop.permute.xlu0 %8274
      %v8276 = vsel %vm570, %v8253, %v8255
      %v8277 = vsel %vm570, %v8257, %v8259
      %v8278 = vsel %vm570, %v8261, %v8263
      %v8279 = vsel %vm570, %v8265, %v8267
      %v8280 = vsel %vm570, %v8269, %v8271
      %v8281 = vsel %vm570, %v8273, %v8275
      %8288 = vmatpush.bf16.msra.mxu0 0
      %8289 = vmatpush.bf16.msra.mxu0 0
      %8290 = vmatpush.bf16.msra.mxu0 %v8281
      %8291 = vmatpush.bf16.msra.mxu0 %v8280
      %8292 = vmatpush.bf16.msra.mxu0 %v8279
      %8293 = vmatpush.bf16.msra.mxu0 %v8278
      %8294 = vmatpush.bf16.msra.mxu0 %v8277
      %8295 = vmatpush.bf16.msra.mxu0 %v8276
      %8296 = vmatmul.bf16.gmra.mxu0 %v4935
      %v8297 = vpop.f32.mrf.mxu0
      %v8298 = vadd.f32 0.0, %v8297
      %v8299 = vpop.f32.mrf.mxu0
      %v8300 = vadd.f32 0.0, %v8299
      %8301 = vmatmul.bf16.gmra.mxu0 %v4938
      %v8302 = vpop.f32.mrf.mxu0
      %v8303 = vadd.f32 0.0, %v8302
      %v8304 = vpop.f32.mrf.mxu0
      %v8305 = vadd.f32 0.0, %v8304
      %8306 = vdwg.mxu0
      %v8307 = vadd.f32 %v8243, %v8298
      %v8308 = vadd.f32 %v8245, %v8300
      %v8309 = vadd.f32 %v8248, %v8303
      %v8310 = vadd.f32 %v8250, %v8305
      %v8311 = vld [vmem:[%s4178] sm:$0xff]
      %v8312 = vld [vmem:[%s4178 + $0x8] sm:$0xff]
      %v8313 = vld [vmem:[%s4178 + $0x10] sm:$0xff]
      %v8314 = vld [vmem:[%s4178 + $0x18] sm:$0xff]
      %v8315 = vld [vmem:[%s4178 + $0x20] sm:$0xff]
      %v8316 = vld [vmem:[%s4178 + $0x28] sm:$0xff]
      %v8317 = vld [vmem:[%s4178 + $0x30] sm:$0xff]
      %v8318 = vld [vmem:[%s4178 + $0x38] sm:$0xff]
      %v8319 = vadd.f32 %v8307, %v4974
      %v8320 = vadd.f32 %v8308, %v4979
      %v8321 = vadd.f32 %v8309, %v4984
      %v8322 = vadd.f32 %v8310, %v4989
      %8331 = vrot.lane.b32.xlu0 %v8311, 127
      %v8332 = vpop.permute.xlu0 %8331
      %8333 = vrot.lane.b32.xlu0 %v8312, 127
      %v8334 = vpop.permute.xlu0 %8333
      %8335 = vrot.lane.b32.xlu0 %v8313, 127
      %v8336 = vpop.permute.xlu0 %8335
      %8337 = vrot.lane.b32.xlu0 %v8314, 127
      %v8338 = vpop.permute.xlu0 %8337
      %8339 = vrot.lane.b32.xlu0 %v8315, 127
      %v8340 = vpop.permute.xlu0 %8339
      %8341 = vrot.lane.b32.xlu0 %v8316, 127
      %v8342 = vpop.permute.xlu0 %8341
      %8343 = vrot.lane.b32.xlu0 %v8317, 127
      %v8344 = vpop.permute.xlu0 %8343
      %8345 = vrot.lane.b32.xlu0 %v8318, 127
      %v8346 = vpop.permute.xlu0 %8345
      %v8347 = vsel %vm5019, %v8332, %v8334
      %v8348 = vsel %vm5019, %v8336, %v8338
      %v8349 = vsel %vm5019, %v8340, %v8342
      %v8350 = vsel %vm5019, %v8344, %v8346
      %v8355 = vadd.f32 %v8319, %v8347
      %v8356 = vadd.f32 %v8320, %v8348
      %v8357 = vadd.f32 %v8321, %v8349
      %v8358 = vadd.f32 %v8322, %v8350
      %v8359 = vmax.f32 %v8355, 0.0
      %v8360 = vmax.f32 %v8356, 0.0
      %v8361 = vmax.f32 %v8357, 0.0
      %v8362 = vmax.f32 %v8358, 0.0
      %s8363 = scalar_lea.vmem %s224, 416
      %8364 = vst [vmem:[%s8363] sm:$0xff] %v8359
      %8365 = vst [vmem:[%s8363 + $0x8] sm:$0xff] %v8360
      %8366 = vst [vmem:[%s8363 + $0x10] sm:$0xff] %v8361
      %8367 = vst [vmem:[%s8363 + $0x18] sm:$0xff] %v8362
      %v8368 = vld [vmem:[%s4173] sm:$0xff]
      %v8369 = vld [vmem:[%s4173 + $0x8] sm:$0xff]
      %v8370 = vld [vmem:[%s4173 + $0x10] sm:$0xff]
      %v8371 = vld [vmem:[%s4173 + $0x18] sm:$0xff]
      %v8372 = vld [vmem:[%s4173 + $0x20] sm:$0xff]
      %v8373 = vld [vmem:[%s4173 + $0x28] sm:$0xff]
      %v8374 = vld [vmem:[%s4173 + $0x30] sm:$0xff]
      %v8375 = vld [vmem:[%s4173 + $0x38] sm:$0xff]
      %v8376 = vld [vmem:[%s4173 + $0x40] sm:$0xff]
      %v8377 = vld [vmem:[%s4173 + $0x48] sm:$0xff]
      %v8378 = vld [vmem:[%s4173 + $0x50] sm:$0xff]
      %v8379 = vld [vmem:[%s4173 + $0x58] sm:$0xff]
      %v8392 = vunpack.c.l.b16 %v8368
      %v8393 = vunpack.c.h.b16 %v8368
      %v8394 = vunpack.c.l.b16 %v8369
      %v8395 = vunpack.c.h.b16 %v8369
      %v8396 = vunpack.c.l.b16 %v8370
      %v8397 = vunpack.c.h.b16 %v8370
      %v8398 = vunpack.c.l.b16 %v8371
      %v8399 = vunpack.c.h.b16 %v8371
      %v8400 = vunpack.c.l.b16 %v8372
      %v8401 = vunpack.c.h.b16 %v8372
      %v8402 = vunpack.c.l.b16 %v8373
      %v8403 = vunpack.c.h.b16 %v8373
      %v8404 = vunpack.c.l.b16 %v8374
      %v8405 = vunpack.c.h.b16 %v8374
      %v8406 = vunpack.c.l.b16 %v8375
      %v8407 = vunpack.c.h.b16 %v8375
      %v8408 = vunpack.c.l.b16 %v8376
      %v8409 = vunpack.c.h.b16 %v8376
      %v8410 = vunpack.c.l.b16 %v8377
      %v8411 = vunpack.c.h.b16 %v8377
      %v8412 = vunpack.c.l.b16 %v8378
      %v8413 = vunpack.c.h.b16 %v8378
      %v8414 = vunpack.c.l.b16 %v8379
      %v8415 = vunpack.c.h.b16 %v8379
      %v8416 = vpack.c.b16 %v8394, %v8392
      %v8417 = vpack.c.b16 %v8395, %v8393
      %v8418 = vpack.c.b16 %v8398, %v8396
      %v8419 = vpack.c.b16 %v8399, %v8397
      %v8420 = vpack.c.b16 %v8402, %v8400
      %v8421 = vpack.c.b16 %v8403, %v8401
      %v8422 = vpack.c.b16 %v8406, %v8404
      %v8423 = vpack.c.b16 %v8407, %v8405
      %v8424 = vpack.c.b16 %v8410, %v8408
      %v8425 = vpack.c.b16 %v8411, %v8409
      %v8426 = vpack.c.b16 %v8414, %v8412
      %v8427 = vpack.c.b16 %v8415, %v8413
      %8428 = vrot.lane.b32.xlu0 %v8416, 127
      %v8429 = vpop.permute.xlu0 %8428
      %8430 = vrot.lane.b32.xlu0 %v8417, 127
      %v8431 = vpop.permute.xlu0 %8430
      %8432 = vrot.lane.b32.xlu0 %v8418, 127
      %v8433 = vpop.permute.xlu0 %8432
      %8434 = vrot.lane.b32.xlu0 %v8419, 127
      %v8435 = vpop.permute.xlu0 %8434
      %8436 = vrot.lane.b32.xlu0 %v8420, 127
      %v8437 = vpop.permute.xlu0 %8436
      %8438 = vrot.lane.b32.xlu0 %v8421, 127
      %v8439 = vpop.permute.xlu0 %8438
      %8440 = vrot.lane.b32.xlu0 %v8422, 127
      %v8441 = vpop.permute.xlu0 %8440
      %8442 = vrot.lane.b32.xlu0 %v8423, 127
      %v8443 = vpop.permute.xlu0 %8442
      %8444 = vrot.lane.b32.xlu0 %v8424, 127
      %v8445 = vpop.permute.xlu0 %8444
      %8446 = vrot.lane.b32.xlu0 %v8425, 127
      %v8447 = vpop.permute.xlu0 %8446
      %8448 = vrot.lane.b32.xlu0 %v8426, 127
      %v8449 = vpop.permute.xlu0 %8448
      %8450 = vrot.lane.b32.xlu0 %v8427, 127
      %v8451 = vpop.permute.xlu0 %8450
      %v8452 = vsel %vm456, %v8429, %v8431
      %v8453 = vsel %vm456, %v8433, %v8435
      %v8454 = vsel %vm456, %v8437, %v8439
      %v8455 = vsel %vm456, %v8441, %v8443
      %v8456 = vsel %vm456, %v8445, %v8447
      %v8457 = vsel %vm456, %v8449, %v8451
      %8464 = vmatpush.bf16.msra.mxu0 0
      %8465 = vmatpush.bf16.msra.mxu0 0
      %8466 = vmatpush.bf16.msra.mxu0 %v8457
      %8467 = vmatpush.bf16.msra.mxu0 %v8456
      %8468 = vmatpush.bf16.msra.mxu0 %v8455
      %8469 = vmatpush.bf16.msra.mxu0 %v8454
      %8470 = vmatpush.bf16.msra.mxu0 %v8453
      %8471 = vmatpush.bf16.msra.mxu0 %v8452
      %8472 = vmatmul.bf16.gmra.mxu0 %v4823
      %v8473 = vpop.f32.mrf.mxu0
      %v8474 = vadd.f32 0.0, %v8473
      %v8475 = vpop.f32.mrf.mxu0
      %v8476 = vadd.f32 0.0, %v8475
      %8477 = vmatmul.bf16.gmra.mxu0 %v4826
      %v8478 = vpop.f32.mrf.mxu0
      %v8479 = vadd.f32 0.0, %v8478
      %v8480 = vpop.f32.mrf.mxu0
      %v8481 = vadd.f32 0.0, %v8480
      %8482 = vdwg.mxu0
      %8489 = vmatpush.bf16.msra.mxu0 0
      %8490 = vmatpush.bf16.msra.mxu0 0
      %8491 = vmatpush.bf16.msra.mxu0 %v8426
      %8492 = vmatpush.bf16.msra.mxu0 %v8424
      %8493 = vmatpush.bf16.msra.mxu0 %v8422
      %8494 = vmatpush.bf16.msra.mxu0 %v8420
      %8495 = vmatpush.bf16.msra.mxu0 %v8418
      %8496 = vmatpush.bf16.msra.mxu0 %v8416
      %8497 = vmatmul.bf16.gmra.mxu0 %v4864
      %v8498 = vpop.f32.mrf.mxu0
      %v8499 = vadd.f32 %v8474, %v8498
      %v8500 = vpop.f32.mrf.mxu0
      %v8501 = vadd.f32 %v8476, %v8500
      %8502 = vmatmul.bf16.gmra.mxu0 %v4867
      %v8503 = vpop.f32.mrf.mxu0
      %v8504 = vadd.f32 %v8479, %v8503
      %v8505 = vpop.f32.mrf.mxu0
      %v8506 = vadd.f32 %v8481, %v8505
      %8507 = vdwg.mxu0
      %8508 = vrot.lane.b32.xlu0 %v8416, 126
      %v8509 = vpop.permute.xlu0 %8508
      %8510 = vrot.lane.b32.xlu0 %v8417, 126
      %v8511 = vpop.permute.xlu0 %8510
      %8512 = vrot.lane.b32.xlu0 %v8418, 126
      %v8513 = vpop.permute.xlu0 %8512
      %8514 = vrot.lane.b32.xlu0 %v8419, 126
      %v8515 = vpop.permute.xlu0 %8514
      %8516 = vrot.lane.b32.xlu0 %v8420, 126
      %v8517 = vpop.permute.xlu0 %8516
      %8518 = vrot.lane.b32.xlu0 %v8421, 126
      %v8519 = vpop.permute.xlu0 %8518
      %8520 = vrot.lane.b32.xlu0 %v8422, 126
      %v8521 = vpop.permute.xlu0 %8520
      %8522 = vrot.lane.b32.xlu0 %v8423, 126
      %v8523 = vpop.permute.xlu0 %8522
      %8524 = vrot.lane.b32.xlu0 %v8424, 126
      %v8525 = vpop.permute.xlu0 %8524
      %8526 = vrot.lane.b32.xlu0 %v8425, 126
      %v8527 = vpop.permute.xlu0 %8526
      %8528 = vrot.lane.b32.xlu0 %v8426, 126
      %v8529 = vpop.permute.xlu0 %8528
      %8530 = vrot.lane.b32.xlu0 %v8427, 126
      %v8531 = vpop.permute.xlu0 %8530
      %v8532 = vsel %vm570, %v8509, %v8511
      %v8533 = vsel %vm570, %v8513, %v8515
      %v8534 = vsel %vm570, %v8517, %v8519
      %v8535 = vsel %vm570, %v8521, %v8523
      %v8536 = vsel %vm570, %v8525, %v8527
      %v8537 = vsel %vm570, %v8529, %v8531
      %8544 = vmatpush.bf16.msra.mxu0 0
      %8545 = vmatpush.bf16.msra.mxu0 0
      %8546 = vmatpush.bf16.msra.mxu0 %v8537
      %8547 = vmatpush.bf16.msra.mxu0 %v8536
      %8548 = vmatpush.bf16.msra.mxu0 %v8535
      %8549 = vmatpush.bf16.msra.mxu0 %v8534
      %8550 = vmatpush.bf16.msra.mxu0 %v8533
      %8551 = vmatpush.bf16.msra.mxu0 %v8532
      %8552 = vmatmul.bf16.gmra.mxu0 %v4935
      %v8553 = vpop.f32.mrf.mxu0
      %v8554 = vadd.f32 0.0, %v8553
      %v8555 = vpop.f32.mrf.mxu0
      %v8556 = vadd.f32 0.0, %v8555
      %8557 = vmatmul.bf16.gmra.mxu0 %v4938
      %v8558 = vpop.f32.mrf.mxu0
      %v8559 = vadd.f32 0.0, %v8558
      %v8560 = vpop.f32.mrf.mxu0
      %v8561 = vadd.f32 0.0, %v8560
      %8562 = vdwg.mxu0
      %v8563 = vadd.f32 %v8499, %v8554
      %v8564 = vadd.f32 %v8501, %v8556
      %v8565 = vadd.f32 %v8504, %v8559
      %v8566 = vadd.f32 %v8506, %v8561
      %v8567 = vld [vmem:[%s4447] sm:$0xff]
      %v8568 = vld [vmem:[%s4447 + $0x8] sm:$0xff]
      %v8569 = vld [vmem:[%s4447 + $0x10] sm:$0xff]
      %v8570 = vld [vmem:[%s4447 + $0x18] sm:$0xff]
      %v8571 = vld [vmem:[%s4447 + $0x20] sm:$0xff]
      %v8572 = vld [vmem:[%s4447 + $0x28] sm:$0xff]
      %v8573 = vld [vmem:[%s4447 + $0x30] sm:$0xff]
      %v8574 = vld [vmem:[%s4447 + $0x38] sm:$0xff]
      %v8575 = vadd.f32 %v8563, %v4974
      %v8576 = vadd.f32 %v8564, %v4979
      %v8577 = vadd.f32 %v8565, %v4984
      %v8578 = vadd.f32 %v8566, %v4989
      %8587 = vrot.lane.b32.xlu0 %v8567, 127
      %v8588 = vpop.permute.xlu0 %8587
      %8589 = vrot.lane.b32.xlu0 %v8568, 127
      %v8590 = vpop.permute.xlu0 %8589
      %8591 = vrot.lane.b32.xlu0 %v8569, 127
      %v8592 = vpop.permute.xlu0 %8591
      %8593 = vrot.lane.b32.xlu0 %v8570, 127
      %v8594 = vpop.permute.xlu0 %8593
      %8595 = vrot.lane.b32.xlu0 %v8571, 127
      %v8596 = vpop.permute.xlu0 %8595
      %8597 = vrot.lane.b32.xlu0 %v8572, 127
      %v8598 = vpop.permute.xlu0 %8597
      %8599 = vrot.lane.b32.xlu0 %v8573, 127
      %v8600 = vpop.permute.xlu0 %8599
      %8601 = vrot.lane.b32.xlu0 %v8574, 127
      %v8602 = vpop.permute.xlu0 %8601
      %v8603 = vsel %vm5019, %v8588, %v8590
      %v8604 = vsel %vm5019, %v8592, %v8594
      %v8605 = vsel %vm5019, %v8596, %v8598
      %v8606 = vsel %vm5019, %v8600, %v8602
      %v8611 = vadd.f32 %v8575, %v8603
      %v8612 = vadd.f32 %v8576, %v8604
      %v8613 = vadd.f32 %v8577, %v8605
      %v8614 = vadd.f32 %v8578, %v8606
      %v8615 = vmax.f32 %v8611, 0.0
      %v8616 = vmax.f32 %v8612, 0.0
      %v8617 = vmax.f32 %v8613, 0.0
      %v8618 = vmax.f32 %v8614, 0.0
      %s8619 = scalar_lea.vmem %s224, 448
      %8620 = vst [vmem:[%s8619] sm:$0xff] %v8615
      %8621 = vst [vmem:[%s8619 + $0x8] sm:$0xff] %v8616
      %8622 = vst [vmem:[%s8619 + $0x10] sm:$0xff] %v8617
      %8623 = vst [vmem:[%s8619 + $0x18] sm:$0xff] %v8618
      %v8624 = vld [vmem:[%s4442] sm:$0xff]
      %v8625 = vld [vmem:[%s4442 + $0x8] sm:$0xff]
      %v8626 = vld [vmem:[%s4442 + $0x10] sm:$0xff]
      %v8627 = vld [vmem:[%s4442 + $0x18] sm:$0xff]
      %v8628 = vld [vmem:[%s4442 + $0x20] sm:$0xff]
      %v8629 = vld [vmem:[%s4442 + $0x28] sm:$0xff]
      %v8630 = vld [vmem:[%s4442 + $0x30] sm:$0xff]
      %v8631 = vld [vmem:[%s4442 + $0x38] sm:$0xff]
      %v8632 = vld [vmem:[%s4442 + $0x40] sm:$0xff]
      %v8633 = vld [vmem:[%s4442 + $0x48] sm:$0xff]
      %v8634 = vld [vmem:[%s4442 + $0x50] sm:$0xff]
      %v8635 = vld [vmem:[%s4442 + $0x58] sm:$0xff]
      %v8648 = vunpack.c.l.b16 %v8624
      %v8649 = vunpack.c.h.b16 %v8624
      %v8650 = vunpack.c.l.b16 %v8625
      %v8651 = vunpack.c.h.b16 %v8625
      %v8652 = vunpack.c.l.b16 %v8626
      %v8653 = vunpack.c.h.b16 %v8626
      %v8654 = vunpack.c.l.b16 %v8627
      %v8655 = vunpack.c.h.b16 %v8627
      %v8656 = vunpack.c.l.b16 %v8628
      %v8657 = vunpack.c.h.b16 %v8628
      %v8658 = vunpack.c.l.b16 %v8629
      %v8659 = vunpack.c.h.b16 %v8629
      %v8660 = vunpack.c.l.b16 %v8630
      %v8661 = vunpack.c.h.b16 %v8630
      %v8662 = vunpack.c.l.b16 %v8631
      %v8663 = vunpack.c.h.b16 %v8631
      %v8664 = vunpack.c.l.b16 %v8632
      %v8665 = vunpack.c.h.b16 %v8632
      %v8666 = vunpack.c.l.b16 %v8633
      %v8667 = vunpack.c.h.b16 %v8633
      %v8668 = vunpack.c.l.b16 %v8634
      %v8669 = vunpack.c.h.b16 %v8634
      %v8670 = vunpack.c.l.b16 %v8635
      %v8671 = vunpack.c.h.b16 %v8635
      %v8672 = vpack.c.b16 %v8650, %v8648
      %v8673 = vpack.c.b16 %v8651, %v8649
      %v8674 = vpack.c.b16 %v8654, %v8652
      %v8675 = vpack.c.b16 %v8655, %v8653
      %v8676 = vpack.c.b16 %v8658, %v8656
      %v8677 = vpack.c.b16 %v8659, %v8657
      %v8678 = vpack.c.b16 %v8662, %v8660
      %v8679 = vpack.c.b16 %v8663, %v8661
      %v8680 = vpack.c.b16 %v8666, %v8664
      %v8681 = vpack.c.b16 %v8667, %v8665
      %v8682 = vpack.c.b16 %v8670, %v8668
      %v8683 = vpack.c.b16 %v8671, %v8669
      %8684 = vrot.lane.b32.xlu0 %v8672, 127
      %v8685 = vpop.permute.xlu0 %8684
      %8686 = vrot.lane.b32.xlu0 %v8673, 127
      %v8687 = vpop.permute.xlu0 %8686
      %8688 = vrot.lane.b32.xlu0 %v8674, 127
      %v8689 = vpop.permute.xlu0 %8688
      %8690 = vrot.lane.b32.xlu0 %v8675, 127
      %v8691 = vpop.permute.xlu0 %8690
      %8692 = vrot.lane.b32.xlu0 %v8676, 127
      %v8693 = vpop.permute.xlu0 %8692
      %8694 = vrot.lane.b32.xlu0 %v8677, 127
      %v8695 = vpop.permute.xlu0 %8694
      %8696 = vrot.lane.b32.xlu0 %v8678, 127
      %v8697 = vpop.permute.xlu0 %8696
      %8698 = vrot.lane.b32.xlu0 %v8679, 127
      %v8699 = vpop.permute.xlu0 %8698
      %8700 = vrot.lane.b32.xlu0 %v8680, 127
      %v8701 = vpop.permute.xlu0 %8700
      %8702 = vrot.lane.b32.xlu0 %v8681, 127
      %v8703 = vpop.permute.xlu0 %8702
      %8704 = vrot.lane.b32.xlu0 %v8682, 127
      %v8705 = vpop.permute.xlu0 %8704
      %8706 = vrot.lane.b32.xlu0 %v8683, 127
      %v8707 = vpop.permute.xlu0 %8706
      %v8708 = vsel %vm456, %v8685, %v8687
      %v8709 = vsel %vm456, %v8689, %v8691
      %v8710 = vsel %vm456, %v8693, %v8695
      %v8711 = vsel %vm456, %v8697, %v8699
      %v8712 = vsel %vm456, %v8701, %v8703
      %v8713 = vsel %vm456, %v8705, %v8707
      %8720 = vmatpush.bf16.msra.mxu0 0
      %8721 = vmatpush.bf16.msra.mxu0 0
      %8722 = vmatpush.bf16.msra.mxu0 %v8713
      %8723 = vmatpush.bf16.msra.mxu0 %v8712
      %8724 = vmatpush.bf16.msra.mxu0 %v8711
      %8725 = vmatpush.bf16.msra.mxu0 %v8710
      %8726 = vmatpush.bf16.msra.mxu0 %v8709
      %8727 = vmatpush.bf16.msra.mxu0 %v8708
      %8728 = vmatmul.bf16.gmra.mxu0 %v4823
      %v8729 = vpop.f32.mrf.mxu0
      %v8730 = vadd.f32 0.0, %v8729
      %v8731 = vpop.f32.mrf.mxu0
      %v8732 = vadd.f32 0.0, %v8731
      %8733 = vmatmul.bf16.gmra.mxu0 %v4826
      %v8734 = vpop.f32.mrf.mxu0
      %v8735 = vadd.f32 0.0, %v8734
      %v8736 = vpop.f32.mrf.mxu0
      %v8737 = vadd.f32 0.0, %v8736
      %8738 = vdwg.mxu0
      %8745 = vmatpush.bf16.msra.mxu0 0
      %8746 = vmatpush.bf16.msra.mxu0 0
      %8747 = vmatpush.bf16.msra.mxu0 %v8682
      %8748 = vmatpush.bf16.msra.mxu0 %v8680
      %8749 = vmatpush.bf16.msra.mxu0 %v8678
      %8750 = vmatpush.bf16.msra.mxu0 %v8676
      %8751 = vmatpush.bf16.msra.mxu0 %v8674
      %8752 = vmatpush.bf16.msra.mxu0 %v8672
      %8753 = vmatmul.bf16.gmra.mxu0 %v4864
      %v8754 = vpop.f32.mrf.mxu0
      %v8755 = vadd.f32 %v8730, %v8754
      %v8756 = vpop.f32.mrf.mxu0
      %v8757 = vadd.f32 %v8732, %v8756
      %8758 = vmatmul.bf16.gmra.mxu0 %v4867
      %v8759 = vpop.f32.mrf.mxu0
      %v8760 = vadd.f32 %v8735, %v8759
      %v8761 = vpop.f32.mrf.mxu0
      %v8762 = vadd.f32 %v8737, %v8761
      %8763 = vdwg.mxu0
      %8764 = vrot.lane.b32.xlu0 %v8672, 126
      %v8765 = vpop.permute.xlu0 %8764
      %8766 = vrot.lane.b32.xlu0 %v8673, 126
      %v8767 = vpop.permute.xlu0 %8766
      %8768 = vrot.lane.b32.xlu0 %v8674, 126
      %v8769 = vpop.permute.xlu0 %8768
      %8770 = vrot.lane.b32.xlu0 %v8675, 126
      %v8771 = vpop.permute.xlu0 %8770
      %8772 = vrot.lane.b32.xlu0 %v8676, 126
      %v8773 = vpop.permute.xlu0 %8772
      %8774 = vrot.lane.b32.xlu0 %v8677, 126
      %v8775 = vpop.permute.xlu0 %8774
      %8776 = vrot.lane.b32.xlu0 %v8678, 126
      %v8777 = vpop.permute.xlu0 %8776
      %8778 = vrot.lane.b32.xlu0 %v8679, 126
      %v8779 = vpop.permute.xlu0 %8778
      %8780 = vrot.lane.b32.xlu0 %v8680, 126
      %v8781 = vpop.permute.xlu0 %8780
      %8782 = vrot.lane.b32.xlu0 %v8681, 126
      %v8783 = vpop.permute.xlu0 %8782
      %8784 = vrot.lane.b32.xlu0 %v8682, 126
      %v8785 = vpop.permute.xlu0 %8784
      %8786 = vrot.lane.b32.xlu0 %v8683, 126
      %v8787 = vpop.permute.xlu0 %8786
      %v8788 = vsel %vm570, %v8765, %v8767
      %v8789 = vsel %vm570, %v8769, %v8771
      %v8790 = vsel %vm570, %v8773, %v8775
      %v8791 = vsel %vm570, %v8777, %v8779
      %v8792 = vsel %vm570, %v8781, %v8783
      %v8793 = vsel %vm570, %v8785, %v8787
      %8800 = vmatpush.bf16.msra.mxu0 0
      %8801 = vmatpush.bf16.msra.mxu0 0
      %8802 = vmatpush.bf16.msra.mxu0 %v8793
      %8803 = vmatpush.bf16.msra.mxu0 %v8792
      %8804 = vmatpush.bf16.msra.mxu0 %v8791
      %8805 = vmatpush.bf16.msra.mxu0 %v8790
      %8806 = vmatpush.bf16.msra.mxu0 %v8789
      %8807 = vmatpush.bf16.msra.mxu0 %v8788
      %8808 = vmatmul.bf16.gmra.mxu0 %v4935
      %v8809 = vpop.f32.mrf.mxu0
      %v8810 = vadd.f32 0.0, %v8809
      %v8811 = vpop.f32.mrf.mxu0
      %v8812 = vadd.f32 0.0, %v8811
      %8813 = vmatmul.bf16.gmra.mxu0 %v4938
      %v8814 = vpop.f32.mrf.mxu0
      %v8815 = vadd.f32 0.0, %v8814
      %v8816 = vpop.f32.mrf.mxu0
      %v8817 = vadd.f32 0.0, %v8816
      %8818 = vdwg.mxu0
      %v8819 = vadd.f32 %v8755, %v8810
      %v8820 = vadd.f32 %v8757, %v8812
      %v8821 = vadd.f32 %v8760, %v8815
      %v8822 = vadd.f32 %v8762, %v8817
      %s8823 = scalar_lea.vmem %s219, 1024
      %v8824 = vld [vmem:[%s8823] sm:$0xff]
      %v8825 = vld [vmem:[%s8823 + $0x8] sm:$0xff]
      %v8826 = vld [vmem:[%s8823 + $0x10] sm:$0xff]
      %v8827 = vld [vmem:[%s8823 + $0x18] sm:$0xff]
      %v8828 = vld [vmem:[%s8823 + $0x20] sm:$0xff]
      %v8829 = vld [vmem:[%s8823 + $0x28] sm:$0xff]
      %v8830 = vld [vmem:[%s8823 + $0x30] sm:$0xff]
      %v8831 = vld [vmem:[%s8823 + $0x38] sm:$0xff]
      %v8832 = vadd.f32 %v8819, %v4974
      %v8833 = vadd.f32 %v8820, %v4979
      %v8834 = vadd.f32 %v8821, %v4984
      %v8835 = vadd.f32 %v8822, %v4989
      %8844 = vrot.lane.b32.xlu0 %v8824, 127
      %v8845 = vpop.permute.xlu0 %8844
      %8846 = vrot.lane.b32.xlu0 %v8825, 127
      %v8847 = vpop.permute.xlu0 %8846
      %8848 = vrot.lane.b32.xlu0 %v8826, 127
      %v8849 = vpop.permute.xlu0 %8848
      %8850 = vrot.lane.b32.xlu0 %v8827, 127
      %v8851 = vpop.permute.xlu0 %8850
      %8852 = vrot.lane.b32.xlu0 %v8828, 127
      %v8853 = vpop.permute.xlu0 %8852
      %8854 = vrot.lane.b32.xlu0 %v8829, 127
      %v8855 = vpop.permute.xlu0 %8854
      %8856 = vrot.lane.b32.xlu0 %v8830, 127
      %v8857 = vpop.permute.xlu0 %8856
      %8858 = vrot.lane.b32.xlu0 %v8831, 127
      %v8859 = vpop.permute.xlu0 %8858
      %v8860 = vsel %vm5019, %v8845, %v8847
      %v8861 = vsel %vm5019, %v8849, %v8851
      %v8862 = vsel %vm5019, %v8853, %v8855
      %v8863 = vsel %vm5019, %v8857, %v8859
      %v8868 = vadd.f32 %v8832, %v8860
      %v8869 = vadd.f32 %v8833, %v8861
      %v8870 = vadd.f32 %v8834, %v8862
      %v8871 = vadd.f32 %v8835, %v8863
      %v8872 = vmax.f32 %v8868, 0.0
      %v8873 = vmax.f32 %v8869, 0.0
      %v8874 = vmax.f32 %v8870, 0.0
      %v8875 = vmax.f32 %v8871, 0.0
      %s8876 = scalar_lea.vmem %s224, 480
      %8877 = vst [vmem:[%s8876] sm:$0xff] %v8872
      %8878 = vst [vmem:[%s8876 + $0x8] sm:$0xff] %v8873
      %8879 = vst [vmem:[%s8876 + $0x10] sm:$0xff] %v8874
      %8880 = vst [vmem:[%s8876 + $0x18] sm:$0xff] %v8875
      %p8881 = scmp.lt.s32.totalorder %s16, 1
      %s8882 = scalar_select %p8881, %s16, 1
      %s8883 = smul.addr %s8882, 64
      %s8884 = smul.addr %s8883, 8
      %s8885 = scalar_lea.vmem %s5, %s8884
      // Predicated region
      $region41: #{basic_block_forward.1} parent=39 // pred_check
        %p8886 = pneg %p144
      $region42: #{basic_block_forward.1} parent=39 // pred_check_branch
        %8888 = sbr.rel (%p8886) target = $region44
      $region43: #{basic_block_forward.1} parent=39 // pred_region
        _
      $region44: #{basic_block_forward.1} parent=39 // pred_fallthru
        _
    $region40: #{basic_block_forward.1} parent=5 // pred_fallthru
      _
    %p8889 = scmp.le.s32.totalorder 2, %s11
    // Predicated region
    $region45: #{basic_block_forward.1} parent=5 // pred_check
      %p8890 = pneg %p8889
    $region46: #{basic_block_forward.1} parent=5 // pred_check_branch
      %8892 = sbr.rel (%p8890) target = $region48
    $region47: #{basic_block_forward.1} parent=5 // pred_region
      %s8893 = ssub.s32 %s11, 2
      // Predicated region
      $region49: #{basic_block_forward.1} parent=47 // pred_check
        %p8894 = pneg %p150
      $region50: #{basic_block_forward.1} parent=47 // pred_check_branch
        %8896 = sbr.rel (%p8894) target = $region52
      $region51: #{basic_block_forward.1} parent=47 // pred_region
        %p8897 = scmp.lt.s32.totalorder %s17, 1
        %s8898 = scalar_select %p8897, %s17, 1
        %s8899 = smul.addr %s8898, 64
        %s8900 = smul.addr %s8899, 8
        %s8901 = scalar_lea.vmem %s5, %s8900
      $region52: #{basic_block_forward.1} parent=47 // pred_fallthru
        _
    $region48: #{basic_block_forward.1} parent=5 // pred_fallthru
      _
  $region6: #{basic_block_forward.1} parent=0 // loop_footer
    %s15 = sadd.s32 1, %s11
  $region7: #{basic_block_forward.1} parent=0 // loop_footer_branch
    %10 = sbr.rel target = $region3
  $region8: #{basic_block_forward.1} parent=0 // loop_exit
    _

</llo_original>
